<compile_context>
chip_gen: v7x
topology: tpu7x:2x2x1
jax: 0.10.0
libtpu: 0.0.40
codegen_flags: <defaults>
</compile_context>

<pallas_src>
import jax
import jax.numpy as jnp
from jax import lax
from jax.experimental import pallas as pl
from jax.experimental.pallas import tpu as pltpu  # noqa: F401  (TPU backend)

# ----------------------------- model config (small) -----------------------------
VOCAB = 64
D_MODEL = 32
N_HEADS = 4
D_HEAD = D_MODEL // N_HEADS
D_FFN = 64
N_ENC = 2
N_DEC = 2
MAX_POS = 16
BATCH = 2
S_ENC = 8
S_DEC = 8

T_ENC = BATCH * S_ENC
T_DEC = BATCH * S_DEC
T_ALL = T_ENC + T_DEC
ATTN_SCALE = 1.0 / (D_HEAD ** 0.5)
NEG_INF = -1e9

# in-kernel masks use shift/and instead of div/mod -> sequence lengths must be powers of 2
assert S_ENC & (S_ENC - 1) == 0 and S_DEC & (S_DEC - 1) == 0


# ----------------------------- packed parameter layout ---------------------------
def _param_specs():
    specs = [
        ("tok_emb", VOCAB, D_MODEL),
        ("tok_emb_T", D_MODEL, VOCAB),          # tied LM head, pre-transposed copy
        ("pos_emb", MAX_POS, D_MODEL),
        ("enc_emb_ln", 2, D_MODEL),
        ("dec_emb_ln", 2, D_MODEL),
        ("final_logits_bias", 1, VOCAB),
    ]
    for l in range(N_ENC):
        specs += [
            (f"enc_wqkv_{l}", D_MODEL, 3 * D_MODEL),
            (f"enc_bqkv_{l}", 1, 3 * D_MODEL),
            (f"enc_wo_{l}", D_MODEL, D_MODEL),
            (f"enc_bo_{l}", 1, D_MODEL),
            (f"enc_ln1_{l}", 2, D_MODEL),
            (f"enc_fc1_w_{l}", D_MODEL, D_FFN),
            (f"enc_fc1_b_{l}", 1, D_FFN),
            (f"enc_fc2_w_{l}", D_FFN, D_MODEL),
            (f"enc_fc2_b_{l}", 1, D_MODEL),
            (f"enc_ln2_{l}", 2, D_MODEL),
        ]
    for l in range(N_DEC):
        specs += [
            (f"dec_sa_wqkv_{l}", D_MODEL, 3 * D_MODEL),
            (f"dec_sa_bqkv_{l}", 1, 3 * D_MODEL),
            (f"dec_sa_wo_{l}", D_MODEL, D_MODEL),
            (f"dec_sa_bo_{l}", 1, D_MODEL),
            (f"dec_ln1_{l}", 2, D_MODEL),
            (f"dec_ca_wq_{l}", D_MODEL, D_MODEL),
            (f"dec_ca_bq_{l}", 1, D_MODEL),
            (f"dec_ca_wkv_{l}", D_MODEL, 2 * D_MODEL),
            (f"dec_ca_bkv_{l}", 1, 2 * D_MODEL),
            (f"dec_ca_wo_{l}", D_MODEL, D_MODEL),
            (f"dec_ca_bo_{l}", 1, D_MODEL),
            (f"dec_lnc_{l}", 2, D_MODEL),
            (f"dec_fc1_w_{l}", D_MODEL, D_FFN),
            (f"dec_fc1_b_{l}", 1, D_FFN),
            (f"dec_fc2_w_{l}", D_FFN, D_MODEL),
            (f"dec_fc2_b_{l}", 1, D_MODEL),
            (f"dec_ln2_{l}", 2, D_MODEL),
        ]
    return specs


def _build_layout():
    layout = {}
    off = 0
    for name, r, c in _param_specs():
        layout[name] = (off, r, c)
        off += ((r + 7) // 8) * 8          # 8-sublane aligned row offsets
    return layout, off


PARAM_LAYOUT, PACK_ROWS = _build_layout()
PACK_COLS = 128                             # one lane tile; <=128-col arrays pad here anyway


def pack_params(params):
    buf = jnp.zeros((PACK_ROWS, PACK_COLS), jnp.float32)
    for name, (off, r, c) in PARAM_LAYOUT.items():
        buf = buf.at[off:off + r, 0:c].set(params[name].astype(jnp.float32))
    return buf


# ----------------------------- fused forward kernel ------------------------------
def _bart_fwd_kernel(ids_ref, p_ref, loss_ref):
    f32 = jnp.float32

    def getp(name):
        off, r, c = PARAM_LAYOUT[name]
        return p_ref[off:off + r, 0:c]       # static slice of the packed VMEM buffer

    def matmul(a, b):
        return jnp.dot(a, b, preferred_element_type=f32)

    def matmul_t(a, b):                      # a @ b.T without materializing a transpose
        return lax.dot_general(a, b, (((1,), (1,)), ((), ())),
                               preferred_element_type=f32)

    def layer_norm(h, lnp):                  # lnp: (2, D) -> row0 gamma, row1 beta
        g = lnp[0:1, :]
        b = lnp[1:2, :]
        inv_d = 1.0 / h.shape[-1]
        s1 = jnp.sum(h, axis=-1, keepdims=True)          # independent XLU reductions
        s2 = jnp.sum(h * h, axis=-1, keepdims=True)      # (one-pass variance)
        mu = s1 * inv_d
        var = s2 * inv_d - mu * mu
        return (h - mu) * lax.rsqrt(var + 1e-5) * g + b

    def block_mask(tq, tk, sq, sk, causal):
        # batch index = token >> log2(S); position = token & (S-1)  (powers of two)
        shq, shk = sq.bit_length() - 1, sk.bit_length() - 1
        r = lax.broadcasted_iota(jnp.int32, (tq, tk), 0)
        c = lax.broadcasted_iota(jnp.int32, (tq, tk), 1)
        ok = (r >> shq) == (c >> shk)        # attend only within the same batch element
        if causal:
            ok = jnp.logical_and(ok, (r & (sq - 1)) >= (c & (sk - 1)))
        return jnp.where(ok, 0.0, NEG_INF).astype(f32)

    def attend(q, k, v, mask, wo, bo):
        # per-head scores/softmax, lane-concat the contexts, ONE output projection matmul
        ctx = []
        for h in range(N_HEADS):
            sl = slice(h * D_HEAD, (h + 1) * D_HEAD)
            s = matmul_t(q[:, sl], k[:, sl]) * ATTN_SCALE + mask      # (Tq, Tk)
            s = s - jnp.max(s, axis=-1, keepdims=True)
            p = jnp.exp(s)
            p = p * pl.reciprocal(jnp.sum(p, axis=-1, keepdims=True), approx=True)
            ctx.append(matmul(p, v[:, sl]))                           # (Tq, Dh)
        ctx = jnp.concatenate(ctx, axis=-1)                           # (Tq, D) lane concat
        return matmul(ctx, wo) + bo

    # ---------------- embeddings (single fused one-hot gather for both streams) ----
    ids = ids_ref[...]                       # (T_ALL, 1) int32; [0:T_ENC)=enc, rest=dec
    tok_emb = getp("tok_emb")                # (V, D)
    onehot = (lax.broadcasted_iota(jnp.int32, (T_ALL, VOCAB), 1) == ids).astype(f32)
    tok_all = matmul(onehot, tok_emb)        # (T_ALL, D)

    pe = getp("pos_emb")[0:S_ENC, :]         # (S, D); S_ENC == S_DEC here
    pe_tiled = jnp.tile(pe, (BATCH, 1))      # (T, D), batch-major

    h_enc = layer_norm(tok_all[0:T_ENC, :] + pe_tiled, getp("enc_emb_ln"))
    h_dec = layer_norm(tok_all[T_ENC:T_ALL, :] + pe_tiled, getp("dec_emb_ln"))

    # masks built once from iota and reused by every layer (no mask tensors DMA'd)
    enc_mask = block_mask(T_ENC, T_ENC, S_ENC, S_ENC, causal=False)
    causal_mask = block_mask(T_DEC, T_DEC, S_DEC, S_DEC, causal=True)
    cross_mask = block_mask(T_DEC, T_ENC, S_DEC, S_ENC, causal=False)

    # ---------------- encoder ------------------------------------------------------
    for l in range(N_ENC):
        qkv = matmul(h_enc, getp(f"enc_wqkv_{l}")) + getp(f"enc_bqkv_{l}")   # (T, 3D)
        a = attend(qkv[:, 0:D_MODEL],
                   qkv[:, D_MODEL:2 * D_MODEL],
                   qkv[:, 2 * D_MODEL:3 * D_MODEL],
                   enc_mask, getp(f"enc_wo_{l}"), getp(f"enc_bo_{l}"))
        h_enc = layer_norm(a + h_enc, getp(f"enc_ln1_{l}"))
        z = jax.nn.gelu(matmul(h_enc, getp(f"enc_fc1_w_{l}")) + getp(f"enc_fc1_b_{l}"))
        z = matmul(z, getp(f"enc_fc2_w_{l}")) + getp(f"enc_fc2_b_{l}")
        h_enc = layer_norm(z + h_enc, getp(f"enc_ln2_{l}"))

    # ---------------- decoder ------------------------------------------------------
    for l in range(N_DEC):
        qkv = matmul(h_dec, getp(f"dec_sa_wqkv_{l}")) + getp(f"dec_sa_bqkv_{l}")
        a = attend(qkv[:, 0:D_MODEL],
                   qkv[:, D_MODEL:2 * D_MODEL],
                   qkv[:, 2 * D_MODEL:3 * D_MODEL],
                   causal_mask, getp(f"dec_sa_wo_{l}"), getp(f"dec_sa_bo_{l}"))
        h_dec = layer_norm(a + h_dec, getp(f"dec_ln1_{l}"))

        cq = matmul(h_dec, getp(f"dec_ca_wq_{l}")) + getp(f"dec_ca_bq_{l}")
        ckv = matmul(h_enc, getp(f"dec_ca_wkv_{l}")) + getp(f"dec_ca_bkv_{l}")  # (T_ENC, 2D)
        c = attend(cq, ckv[:, 0:D_MODEL], ckv[:, D_MODEL:2 * D_MODEL],
                   cross_mask, getp(f"dec_ca_wo_{l}"), getp(f"dec_ca_bo_{l}"))
        h_dec = layer_norm(c + h_dec, getp(f"dec_lnc_{l}"))

        z = jax.nn.gelu(matmul(h_dec, getp(f"dec_fc1_w_{l}")) + getp(f"dec_fc1_b_{l}"))
        z = matmul(z, getp(f"dec_fc2_w_{l}")) + getp(f"dec_fc2_b_{l}")
        h_dec = layer_norm(z + h_dec, getp(f"dec_ln2_{l}"))

    # ---------------- tied LM head (pre-transposed) + cross-entropy ----------------
    logits = matmul(h_dec, getp("tok_emb_T")) + getp("final_logits_bias")    # (T_DEC, V)
    m = jnp.max(logits, axis=-1, keepdims=True)
    lse = jnp.log(jnp.sum(jnp.exp(logits - m), axis=-1, keepdims=True)) + m  # (T_DEC, 1)
    labels = ids[T_ENC:T_ALL, :]                                             # (T_DEC, 1)
    lab_oh = (lax.broadcasted_iota(jnp.int32, (T_DEC, VOCAB), 1) == labels).astype(f32)
    picked = jnp.sum(logits * lab_oh, axis=-1, keepdims=True)                # (T_DEC, 1)
    nll = lse - picked
    loss_ref[...] = jnp.sum(nll, axis=0, keepdims=True) * (1.0 / T_DEC)      # (1, 1)


# ----------------------------- wrapper --------------------------------------------
def bart_loss(packed_params, enc_ids, dec_ids):
    # batch folded into the token axis; both streams concatenated -> one ids DMA
    ids = jnp.concatenate(
        [enc_ids.reshape(-1, 1), dec_ids.reshape(-1, 1)], axis=0).astype(jnp.int32)
    loss = pl.pallas_call(
        _bart_fwd_kernel,
        out_shape=jax.ShapeDtypeStruct((1, 1), jnp.float32),
        # gridless: the whole model (~0.6 MiB packed weights + tiny activations) is
        # VMEM-resident for the single kernel invocation; only the (1,1) loss goes to HBM.
    )(ids, packed_params)
    return loss[0, 0]


# ----------------------------- parameter init --------------------------------------
def init_params(key):
    ks = iter(jax.random.split(key, 64))

    def W(*shape):
        return (0.02 * jax.random.normal(next(ks), shape)).astype(jnp.float32)

    def Z(*shape):
        return jnp.zeros(shape, jnp.float32)

    def LN():
        return jnp.concatenate([jnp.ones((1, D_MODEL), jnp.float32),
                                jnp.zeros((1, D_MODEL), jnp.float32)], axis=0)

    p = {
        "tok_emb": W(VOCAB, D_MODEL),
        "pos_emb": W(MAX_POS, D_MODEL),
        "enc_emb_ln": LN(),
        "dec_emb_ln": LN(),
        "final_logits_bias": Z(1, VOCAB),
    }
    p["tok_emb_T"] = p["tok_emb"].T          # tied LM head weight, pre-transposed on host

    for l in range(N_ENC):
        p[f"enc_wqkv_{l}"] = W(D_MODEL, 3 * D_MODEL)
        p[f"enc_bqkv_{l}"] = Z(1, 3 * D_MODEL)
        p[f"enc_wo_{l}"] = W(D_MODEL, D_MODEL)
        p[f"enc_bo_{l}"] = Z(1, D_MODEL)
        p[f"enc_ln1_{l}"] = LN()
        p[f"enc_fc1_w_{l}"] = W(D_MODEL, D_FFN)
        p[f"enc_fc1_b_{l}"] = Z(1, D_FFN)
        p[f"enc_fc2_w_{l}"] = W(D_FFN, D_MODEL)
        p[f"enc_fc2_b_{l}"] = Z(1, D_MODEL)
        p[f"enc_ln2_{l}"] = LN()

    for l in range(N_DEC):
        p[f"dec_sa_wqkv_{l}"] = W(D_MODEL, 3 * D_MODEL)
        p[f"dec_sa_bqkv_{l}"] = Z(1, 3 * D_MODEL)
        p[f"dec_sa_wo_{l}"] = W(D_MODEL, D_MODEL)
        p[f"dec_sa_bo_{l}"] = Z(1, D_MODEL)
        p[f"dec_ln1_{l}"] = LN()
        p[f"dec_ca_wq_{l}"] = W(D_MODEL, D_MODEL)
        p[f"dec_ca_bq_{l}"] = Z(1, D_MODEL)
        p[f"dec_ca_wkv_{l}"] = W(D_MODEL, 2 * D_MODEL)
        p[f"dec_ca_bkv_{l}"] = Z(1, 2 * D_MODEL)
        p[f"dec_ca_wo_{l}"] = W(D_MODEL, D_MODEL)
        p[f"dec_ca_bo_{l}"] = Z(1, D_MODEL)
        p[f"dec_lnc_{l}"] = LN()
        p[f"dec_fc1_w_{l}"] = W(D_MODEL, D_FFN)
        p[f"dec_fc1_b_{l}"] = Z(1, D_FFN)
        p[f"dec_fc2_w_{l}"] = W(D_FFN, D_MODEL)
        p[f"dec_fc2_b_{l}"] = Z(1, D_MODEL)
        p[f"dec_ln2_{l}"] = LN()
    return p


# ----------------------------- main -------------------------------------------------
if __name__ == "__main__":
    root = jax.random.PRNGKey(0)
    k_param, k_enc, k_dec = jax.random.split(root, 3)

    params = init_params(k_param)
    packed = pack_params(params)             # single (PACK_ROWS, 128) f32 parameter buffer

    # synthetic "tokenized" sentences (the HF tokenizer is untranslatable)
    enc_ids = jax.random.randint(k_enc, (BATCH, S_ENC), 0, VOCAB, dtype=jnp.int32)
    dec_ids = jax.random.randint(k_dec, (BATCH, S_DEC), 0, VOCAB, dtype=jnp.int32)

    loss = jax.jit(bart_loss)(packed, enc_ids, dec_ids)
    loss = jax.block_until_ready(loss)

    assert loss.shape == () and jnp.isfinite(loss)
    print("KERNEL_OK")
</pallas_src>

<mosaic_0001>
module attributes {stable_mosaic.version = 11 : i64} {
  func.func @_bart_fwd_kernel(%arg0: memref<32x1xi32, #tpu.memory_space<vmem>>, %arg1: memref<1224x128xf32, #tpu.memory_space<vmem>>, %arg2: memref<1x1xf32, #tpu.memory_space<vmem>>) attributes {dimension_semantics = [], scalar_prefetch = 0 : i64, scratch_operands = 0 : i64, tpu.core_type = #tpu.core_type<tc>} {
    %c0 = arith.constant 0 : index
    %c0_0 = arith.constant 0 : index
    %0 = vector.load %arg0[%c0, %c0_0] : memref<32x1xi32, #tpu.memory_space<vmem>>, vector<32x1xi32>
    %c0_1 = arith.constant 0 : index
    %c0_2 = arith.constant 0 : index
    %1 = vector.load %arg1[%c0_1, %c0_2] : memref<1224x128xf32, #tpu.memory_space<vmem>>, vector<64x32xf32>
    %2 = tpu.iota {dimensions = array<i32: 1>} : vector<32x64xi32>
    %3 = vector.broadcast %0 : vector<32x1xi32> to vector<32x64xi32>
    %4 = arith.cmpi eq, %2, %3 : vector<32x64xi32>
    %5 = arith.extui %4 : vector<32x64xi1> to vector<32x64xi32>
    %6 = arith.sitofp %5 : vector<32x64xi32> to vector<32x64xf32>
    %cst = arith.constant dense<0.000000e+00> : vector<32x32xf32>
    %7 = tpu.matmul %6, %1, %cst {dimension_numbers = #tpu.dot_dimension_numbers<[1], [0], [0], [1], [0, 0, 1, 1], [], []>} : vector<32x64xf32>, vector<64x32xf32>, vector<32x32xf32> -> vector<32x32xf32>
    %c96 = arith.constant 96 : index
    %c0_3 = arith.constant 0 : index
    %8 = vector.load %arg1[%c96, %c0_3] : memref<1224x128xf32, #tpu.memory_space<vmem>>, vector<16x32xf32>
    %9 = vector.extract_strided_slice %8 {offsets = [0, 0], sizes = [8, 32], strides = [1, 1]} : vector<16x32xf32> to vector<8x32xf32>
    %10 = tpu.concatenate %9, %9 in 0 : vector<8x32xf32>, vector<8x32xf32> -> vector<16x32xf32>
    %11 = vector.extract_strided_slice %7 {offsets = [0, 0], sizes = [16, 32], strides = [1, 1]} : vector<32x32xf32> to vector<16x32xf32>
    %12 = arith.addf %11, %10 : vector<16x32xf32>
    %c112 = arith.constant 112 : index
    %c0_4 = arith.constant 0 : index
    %13 = vector.load %arg1[%c112, %c0_4] : memref<1224x128xf32, #tpu.memory_space<vmem>>, vector<2x32xf32>
    %14 = vector.extract_strided_slice %13 {offsets = [0, 0], sizes = [1, 32], strides = [1, 1]} : vector<2x32xf32> to vector<1x32xf32>
    %15 = vector.extract_strided_slice %13 {offsets = [1, 0], sizes = [1, 32], strides = [1, 1]} : vector<2x32xf32> to vector<1x32xf32>
    %cst_5 = arith.constant dense<0.000000e+00> : vector<16xf32>
    %16 = vector.multi_reduction <add>, %12, %cst_5 [1] : vector<16x32xf32> to vector<16xf32>
    %17 = vector.shape_cast %16 : vector<16xf32> to vector<16x1xf32>
    %18 = arith.mulf %12, %12 : vector<16x32xf32>
    %cst_6 = arith.constant dense<0.000000e+00> : vector<16xf32>
    %19 = vector.multi_reduction <add>, %18, %cst_6 [1] : vector<16x32xf32> to vector<16xf32>
    %20 = vector.shape_cast %19 : vector<16xf32> to vector<16x1xf32>
    %cst_7 = arith.constant 3.125000e-02 : f32
    %21 = vector.broadcast %cst_7 : f32 to vector<16x1xf32>
    %22 = arith.mulf %17, %21 : vector<16x1xf32>
    %cst_8 = arith.constant 3.125000e-02 : f32
    %23 = vector.broadcast %cst_8 : f32 to vector<16x1xf32>
    %24 = arith.mulf %20, %23 : vector<16x1xf32>
    %25 = arith.mulf %22, %22 : vector<16x1xf32>
    %26 = arith.subf %24, %25 : vector<16x1xf32>
    %27 = vector.broadcast %22 : vector<16x1xf32> to vector<16x32xf32>
    %28 = arith.subf %12, %27 : vector<16x32xf32>
    %cst_9 = arith.constant 9.99999974E-6 : f32
    %29 = vector.broadcast %cst_9 : f32 to vector<16x1xf32>
    %30 = arith.addf %26, %29 : vector<16x1xf32>
    %31 = math.rsqrt %30 : vector<16x1xf32>
    %32 = vector.broadcast %31 : vector<16x1xf32> to vector<16x32xf32>
    %33 = arith.mulf %28, %32 : vector<16x32xf32>
    %34 = vector.broadcast %14 : vector<1x32xf32> to vector<16x32xf32>
    %35 = arith.mulf %33, %34 : vector<16x32xf32>
    %36 = vector.broadcast %15 : vector<1x32xf32> to vector<16x32xf32>
    %37 = arith.addf %35, %36 : vector<16x32xf32>
    %38 = vector.extract_strided_slice %7 {offsets = [16, 0], sizes = [16, 32], strides = [1, 1]} : vector<32x32xf32> to vector<16x32xf32>
    %39 = arith.addf %38, %10 : vector<16x32xf32>
    %c120 = arith.constant 120 : index
    %c0_10 = arith.constant 0 : index
    %40 = vector.load %arg1[%c120, %c0_10] : memref<1224x128xf32, #tpu.memory_space<vmem>>, vector<2x32xf32>
    %41 = vector.extract_strided_slice %40 {offsets = [0, 0], sizes = [1, 32], strides = [1, 1]} : vector<2x32xf32> to vector<1x32xf32>
    %42 = vector.extract_strided_slice %40 {offsets = [1, 0], sizes = [1, 32], strides = [1, 1]} : vector<2x32xf32> to vector<1x32xf32>
    %cst_11 = arith.constant dense<0.000000e+00> : vector<16xf32>
    %43 = vector.multi_reduction <add>, %39, %cst_11 [1] : vector<16x32xf32> to vector<16xf32>
    %44 = vector.shape_cast %43 : vector<16xf32> to vector<16x1xf32>
    %45 = arith.mulf %39, %39 : vector<16x32xf32>
    %cst_12 = arith.constant dense<0.000000e+00> : vector<16xf32>
    %46 = vector.multi_reduction <add>, %45, %cst_12 [1] : vector<16x32xf32> to vector<16xf32>
    %47 = vector.shape_cast %46 : vector<16xf32> to vector<16x1xf32>
    %cst_13 = arith.constant 3.125000e-02 : f32
    %48 = vector.broadcast %cst_13 : f32 to vector<16x1xf32>
    %49 = arith.mulf %44, %48 : vector<16x1xf32>
    %cst_14 = arith.constant 3.125000e-02 : f32
    %50 = vector.broadcast %cst_14 : f32 to vector<16x1xf32>
    %51 = arith.mulf %47, %50 : vector<16x1xf32>
    %52 = arith.mulf %49, %49 : vector<16x1xf32>
    %53 = arith.subf %51, %52 : vector<16x1xf32>
    %54 = vector.broadcast %49 : vector<16x1xf32> to vector<16x32xf32>
    %55 = arith.subf %39, %54 : vector<16x32xf32>
    %cst_15 = arith.constant 9.99999974E-6 : f32
    %56 = vector.broadcast %cst_15 : f32 to vector<16x1xf32>
    %57 = arith.addf %53, %56 : vector<16x1xf32>
    %58 = math.rsqrt %57 : vector<16x1xf32>
    %59 = vector.broadcast %58 : vector<16x1xf32> to vector<16x32xf32>
    %60 = arith.mulf %55, %59 : vector<16x32xf32>
    %61 = vector.broadcast %41 : vector<1x32xf32> to vector<16x32xf32>
    %62 = arith.mulf %60, %61 : vector<16x32xf32>
    %63 = vector.broadcast %42 : vector<1x32xf32> to vector<16x32xf32>
    %64 = arith.addf %62, %63 : vector<16x32xf32>
    %65 = tpu.iota {dimensions = array<i32: 0>} : vector<16x16xi32>
    %66 = tpu.iota {dimensions = array<i32: 1>} : vector<16x16xi32>
    %c3_i32 = arith.constant 3 : i32
    %67 = vector.broadcast %c3_i32 : i32 to vector<16x16xi32>
    %68 = arith.shrsi %65, %67 : vector<16x16xi32>
    %c3_i32_16 = arith.constant 3 : i32
    %69 = vector.broadcast %c3_i32_16 : i32 to vector<16x16xi32>
    %70 = arith.shrsi %66, %69 : vector<16x16xi32>
    %71 = arith.cmpi eq, %68, %70 : vector<16x16xi32>
    %cst_17 = arith.constant 0.000000e+00 : f32
    %cst_18 = arith.constant -1.000000e+09 : f32
    %72 = vector.broadcast %cst_17 : f32 to vector<16x16xf32>
    %73 = vector.broadcast %cst_18 : f32 to vector<16x16xf32>
    %74 = arith.select %71, %72, %73 : vector<16x16xi1>, vector<16x16xf32>
    %75 = tpu.iota {dimensions = array<i32: 0>} : vector<16x16xi32>
    %76 = tpu.iota {dimensions = array<i32: 1>} : vector<16x16xi32>
    %c3_i32_19 = arith.constant 3 : i32
    %77 = vector.broadcast %c3_i32_19 : i32 to vector<16x16xi32>
    %78 = arith.shrsi %75, %77 : vector<16x16xi32>
    %c3_i32_20 = arith.constant 3 : i32
    %79 = vector.broadcast %c3_i32_20 : i32 to vector<16x16xi32>
    %80 = arith.shrsi %76, %79 : vector<16x16xi32>
    %81 = arith.cmpi eq, %78, %80 : vector<16x16xi32>
    %c7_i32 = arith.constant 7 : i32
    %82 = vector.broadcast %c7_i32 : i32 to vector<16x16xi32>
    %83 = arith.andi %75, %82 : vector<16x16xi32>
    %c7_i32_21 = arith.constant 7 : i32
    %84 = vector.broadcast %c7_i32_21 : i32 to vector<16x16xi32>
    %85 = arith.andi %76, %84 : vector<16x16xi32>
    %86 = arith.cmpi sge, %83, %85 : vector<16x16xi32>
    %87 = arith.andi %81, %86 : vector<16x16xi1>
    %cst_22 = arith.constant 0.000000e+00 : f32
    %cst_23 = arith.constant -1.000000e+09 : f32
    %88 = vector.broadcast %cst_22 : f32 to vector<16x16xf32>
    %89 = vector.broadcast %cst_23 : f32 to vector<16x16xf32>
    %90 = arith.select %87, %88, %89 : vector<16x16xi1>, vector<16x16xf32>
    %91 = tpu.iota {dimensions = array<i32: 0>} : vector<16x16xi32>
    %92 = tpu.iota {dimensions = array<i32: 1>} : vector<16x16xi32>
    %c3_i32_24 = arith.constant 3 : i32
    %93 = vector.broadcast %c3_i32_24 : i32 to vector<16x16xi32>
    %94 = arith.shrsi %91, %93 : vector<16x16xi32>
    %c3_i32_25 = arith.constant 3 : i32
    %95 = vector.broadcast %c3_i32_25 : i32 to vector<16x16xi32>
    %96 = arith.shrsi %92, %95 : vector<16x16xi32>
    %97 = arith.cmpi eq, %94, %96 : vector<16x16xi32>
    %cst_26 = arith.constant 0.000000e+00 : f32
    %cst_27 = arith.constant -1.000000e+09 : f32
    %98 = vector.broadcast %cst_26 : f32 to vector<16x16xf32>
    %99 = vector.broadcast %cst_27 : f32 to vector<16x16xf32>
    %100 = arith.select %97, %98, %99 : vector<16x16xi1>, vector<16x16xf32>
    %c136 = arith.constant 136 : index
    %c0_28 = arith.constant 0 : index
    %101 = vector.load %arg1[%c136, %c0_28] : memref<1224x128xf32, #tpu.memory_space<vmem>>, vector<32x96xf32>
    %cst_29 = arith.constant dense<0.000000e+00> : vector<16x96xf32>
    %102 = tpu.matmul %37, %101, %cst_29 {dimension_numbers = #tpu.dot_dimension_numbers<[1], [0], [0], [1], [0, 0, 1, 1], [], []>} : vector<16x32xf32>, vector<32x96xf32>, vector<16x96xf32> -> vector<16x96xf32>
    %c168 = arith.constant 168 : index
    %c0_30 = arith.constant 0 : index
    %103 = vector.load %arg1[%c168, %c0_30] : memref<1224x128xf32, #tpu.memory_space<vmem>>, vector<1x96xf32>
    %104 = vector.broadcast %103 : vector<1x96xf32> to vector<16x96xf32>
    %105 = arith.addf %102, %104 : vector<16x96xf32>
    %106 = vector.extract_strided_slice %105 {offsets = [0, 0], sizes = [16, 32], strides = [1, 1]} : vector<16x96xf32> to vector<16x32xf32>
    %107 = vector.extract_strided_slice %105 {offsets = [0, 32], sizes = [16, 32], strides = [1, 1]} : vector<16x96xf32> to vector<16x32xf32>
    %108 = vector.extract_strided_slice %105 {offsets = [0, 64], sizes = [16, 32], strides = [1, 1]} : vector<16x96xf32> to vector<16x32xf32>
    %c176 = arith.constant 176 : index
    %c0_31 = arith.constant 0 : index
    %109 = vector.load %arg1[%c176, %c0_31] : memref<1224x128xf32, #tpu.memory_space<vmem>>, vector<32x32xf32>
    %c208 = arith.constant 208 : index
    %c0_32 = arith.constant 0 : index
    %110 = vector.load %arg1[%c208, %c0_32] : memref<1224x128xf32, #tpu.memory_space<vmem>>, vector<1x32xf32>
    %111 = vector.extract_strided_slice %106 {offsets = [0, 0], sizes = [16, 8], strides = [1, 1]} : vector<16x32xf32> to vector<16x8xf32>
    %112 = vector.extract_strided_slice %107 {offsets = [0, 0], sizes = [16, 8], strides = [1, 1]} : vector<16x32xf32> to vector<16x8xf32>
    %cst_33 = arith.constant dense<0.000000e+00> : vector<16x16xf32>
    %113 = tpu.matmul %111, %112, %cst_33 {dimension_numbers = #tpu.dot_dimension_numbers<[1], [1], [0], [0], [0, 0, 1, 0], [], []>} : vector<16x8xf32>, vector<16x8xf32>, vector<16x16xf32> -> vector<16x16xf32>
    %cst_34 = arith.constant 0.353553385 : f32
    %114 = vector.broadcast %cst_34 : f32 to vector<16x16xf32>
    %115 = arith.mulf %113, %114 : vector<16x16xf32>
    %116 = arith.addf %115, %74 : vector<16x16xf32>
    %cst_35 = arith.constant dense<0xFF800000> : vector<16xf32>
    %117 = vector.multi_reduction <maximumf>, %116, %cst_35 [1] : vector<16x16xf32> to vector<16xf32>
    %118 = vector.shape_cast %117 : vector<16xf32> to vector<16x1xf32>
    %119 = vector.broadcast %118 : vector<16x1xf32> to vector<16x16xf32>
    %120 = arith.subf %116, %119 : vector<16x16xf32>
    %121 = math.exp %120 : vector<16x16xf32>
    %cst_36 = arith.constant dense<0.000000e+00> : vector<16xf32>
    %122 = vector.multi_reduction <add>, %121, %cst_36 [1] : vector<16x16xf32> to vector<16xf32>
    %123 = vector.shape_cast %122 : vector<16xf32> to vector<16x1xf32>
    %124 = tpu.reciprocal %123 {approx = true} : vector<16x1xf32> -> vector<16x1xf32>
    %125 = vector.broadcast %124 : vector<16x1xf32> to vector<16x16xf32>
    %126 = arith.mulf %121, %125 : vector<16x16xf32>
    %127 = vector.extract_strided_slice %108 {offsets = [0, 0], sizes = [16, 8], strides = [1, 1]} : vector<16x32xf32> to vector<16x8xf32>
    %cst_37 = arith.constant dense<0.000000e+00> : vector<16x8xf32>
    %128 = tpu.matmul %126, %127, %cst_37 {dimension_numbers = #tpu.dot_dimension_numbers<[1], [0], [0], [1], [0, 0, 1, 1], [], []>} : vector<16x16xf32>, vector<16x8xf32>, vector<16x8xf32> -> vector<16x8xf32>
    %129 = vector.extract_strided_slice %106 {offsets = [0, 8], sizes = [16, 8], strides = [1, 1]} : vector<16x32xf32> to vector<16x8xf32>
    %130 = vector.extract_strided_slice %107 {offsets = [0, 8], sizes = [16, 8], strides = [1, 1]} : vector<16x32xf32> to vector<16x8xf32>
    %cst_38 = arith.constant dense<0.000000e+00> : vector<16x16xf32>
    %131 = tpu.matmul %129, %130, %cst_38 {dimension_numbers = #tpu.dot_dimension_numbers<[1], [1], [0], [0], [0, 0, 1, 0], [], []>} : vector<16x8xf32>, vector<16x8xf32>, vector<16x16xf32> -> vector<16x16xf32>
    %cst_39 = arith.constant 0.353553385 : f32
    %132 = vector.broadcast %cst_39 : f32 to vector<16x16xf32>
    %133 = arith.mulf %131, %132 : vector<16x16xf32>
    %134 = arith.addf %133, %74 : vector<16x16xf32>
    %cst_40 = arith.constant dense<0xFF800000> : vector<16xf32>
    %135 = vector.multi_reduction <maximumf>, %134, %cst_40 [1] : vector<16x16xf32> to vector<16xf32>
    %136 = vector.shape_cast %135 : vector<16xf32> to vector<16x1xf32>
    %137 = vector.broadcast %136 : vector<16x1xf32> to vector<16x16xf32>
    %138 = arith.subf %134, %137 : vector<16x16xf32>
    %139 = math.exp %138 : vector<16x16xf32>
    %cst_41 = arith.constant dense<0.000000e+00> : vector<16xf32>
    %140 = vector.multi_reduction <add>, %139, %cst_41 [1] : vector<16x16xf32> to vector<16xf32>
    %141 = vector.shape_cast %140 : vector<16xf32> to vector<16x1xf32>
    %142 = tpu.reciprocal %141 {approx = true} : vector<16x1xf32> -> vector<16x1xf32>
    %143 = vector.broadcast %142 : vector<16x1xf32> to vector<16x16xf32>
    %144 = arith.mulf %139, %143 : vector<16x16xf32>
    %145 = vector.extract_strided_slice %108 {offsets = [0, 8], sizes = [16, 8], strides = [1, 1]} : vector<16x32xf32> to vector<16x8xf32>
    %cst_42 = arith.constant dense<0.000000e+00> : vector<16x8xf32>
    %146 = tpu.matmul %144, %145, %cst_42 {dimension_numbers = #tpu.dot_dimension_numbers<[1], [0], [0], [1], [0, 0, 1, 1], [], []>} : vector<16x16xf32>, vector<16x8xf32>, vector<16x8xf32> -> vector<16x8xf32>
    %147 = vector.extract_strided_slice %106 {offsets = [0, 16], sizes = [16, 8], strides = [1, 1]} : vector<16x32xf32> to vector<16x8xf32>
    %148 = vector.extract_strided_slice %107 {offsets = [0, 16], sizes = [16, 8], strides = [1, 1]} : vector<16x32xf32> to vector<16x8xf32>
    %cst_43 = arith.constant dense<0.000000e+00> : vector<16x16xf32>
    %149 = tpu.matmul %147, %148, %cst_43 {dimension_numbers = #tpu.dot_dimension_numbers<[1], [1], [0], [0], [0, 0, 1, 0], [], []>} : vector<16x8xf32>, vector<16x8xf32>, vector<16x16xf32> -> vector<16x16xf32>
    %cst_44 = arith.constant 0.353553385 : f32
    %150 = vector.broadcast %cst_44 : f32 to vector<16x16xf32>
    %151 = arith.mulf %149, %150 : vector<16x16xf32>
    %152 = arith.addf %151, %74 : vector<16x16xf32>
    %cst_45 = arith.constant dense<0xFF800000> : vector<16xf32>
    %153 = vector.multi_reduction <maximumf>, %152, %cst_45 [1] : vector<16x16xf32> to vector<16xf32>
    %154 = vector.shape_cast %153 : vector<16xf32> to vector<16x1xf32>
    %155 = vector.broadcast %154 : vector<16x1xf32> to vector<16x16xf32>
    %156 = arith.subf %152, %155 : vector<16x16xf32>
    %157 = math.exp %156 : vector<16x16xf32>
    %cst_46 = arith.constant dense<0.000000e+00> : vector<16xf32>
    %158 = vector.multi_reduction <add>, %157, %cst_46 [1] : vector<16x16xf32> to vector<16xf32>
    %159 = vector.shape_cast %158 : vector<16xf32> to vector<16x1xf32>
    %160 = tpu.reciprocal %159 {approx = true} : vector<16x1xf32> -> vector<16x1xf32>
    %161 = vector.broadcast %160 : vector<16x1xf32> to vector<16x16xf32>
    %162 = arith.mulf %157, %161 : vector<16x16xf32>
    %163 = vector.extract_strided_slice %108 {offsets = [0, 16], sizes = [16, 8], strides = [1, 1]} : vector<16x32xf32> to vector<16x8xf32>
    %cst_47 = arith.constant dense<0.000000e+00> : vector<16x8xf32>
    %164 = tpu.matmul %162, %163, %cst_47 {dimension_numbers = #tpu.dot_dimension_numbers<[1], [0], [0], [1], [0, 0, 1, 1], [], []>} : vector<16x16xf32>, vector<16x8xf32>, vector<16x8xf32> -> vector<16x8xf32>
    %165 = vector.extract_strided_slice %106 {offsets = [0, 24], sizes = [16, 8], strides = [1, 1]} : vector<16x32xf32> to vector<16x8xf32>
    %166 = vector.extract_strided_slice %107 {offsets = [0, 24], sizes = [16, 8], strides = [1, 1]} : vector<16x32xf32> to vector<16x8xf32>
    %cst_48 = arith.constant dense<0.000000e+00> : vector<16x16xf32>
    %167 = tpu.matmul %165, %166, %cst_48 {dimension_numbers = #tpu.dot_dimension_numbers<[1], [1], [0], [0], [0, 0, 1, 0], [], []>} : vector<16x8xf32>, vector<16x8xf32>, vector<16x16xf32> -> vector<16x16xf32>
    %cst_49 = arith.constant 0.353553385 : f32
    %168 = vector.broadcast %cst_49 : f32 to vector<16x16xf32>
    %169 = arith.mulf %167, %168 : vector<16x16xf32>
    %170 = arith.addf %169, %74 : vector<16x16xf32>
    %cst_50 = arith.constant dense<0xFF800000> : vector<16xf32>
    %171 = vector.multi_reduction <maximumf>, %170, %cst_50 [1] : vector<16x16xf32> to vector<16xf32>
    %172 = vector.shape_cast %171 : vector<16xf32> to vector<16x1xf32>
    %173 = vector.broadcast %172 : vector<16x1xf32> to vector<16x16xf32>
    %174 = arith.subf %170, %173 : vector<16x16xf32>
    %175 = math.exp %174 : vector<16x16xf32>
    %cst_51 = arith.constant dense<0.000000e+00> : vector<16xf32>
    %176 = vector.multi_reduction <add>, %175, %cst_51 [1] : vector<16x16xf32> to vector<16xf32>
    %177 = vector.shape_cast %176 : vector<16xf32> to vector<16x1xf32>
    %178 = tpu.reciprocal %177 {approx = true} : vector<16x1xf32> -> vector<16x1xf32>
    %179 = vector.broadcast %178 : vector<16x1xf32> to vector<16x16xf32>
    %180 = arith.mulf %175, %179 : vector<16x16xf32>
    %181 = vector.extract_strided_slice %108 {offsets = [0, 24], sizes = [16, 8], strides = [1, 1]} : vector<16x32xf32> to vector<16x8xf32>
    %cst_52 = arith.constant dense<0.000000e+00> : vector<16x8xf32>
    %182 = tpu.matmul %180, %181, %cst_52 {dimension_numbers = #tpu.dot_dimension_numbers<[1], [0], [0], [1], [0, 0, 1, 1], [], []>} : vector<16x16xf32>, vector<16x8xf32>, vector<16x8xf32> -> vector<16x8xf32>
    %183 = tpu.concatenate %128, %146, %164, %182 in 1 : vector<16x8xf32>, vector<16x8xf32>, vector<16x8xf32>, vector<16x8xf32> -> vector<16x32xf32>
    %cst_53 = arith.constant dense<0.000000e+00> : vector<16x32xf32>
    %184 = tpu.matmul %183, %109, %cst_53 {dimension_numbers = #tpu.dot_dimension_numbers<[1], [0], [0], [1], [0, 0, 1, 1], [], []>} : vector<16x32xf32>, vector<32x32xf32>, vector<16x32xf32> -> vector<16x32xf32>
    %185 = vector.broadcast %110 : vector<1x32xf32> to vector<16x32xf32>
    %186 = arith.addf %184, %185 : vector<16x32xf32>
    %187 = arith.addf %186, %37 : vector<16x32xf32>
    %c216 = arith.constant 216 : index
    %c0_54 = arith.constant 0 : index
    %188 = vector.load %arg1[%c216, %c0_54] : memref<1224x128xf32, #tpu.memory_space<vmem>>, vector<2x32xf32>
    %189 = vector.extract_strided_slice %188 {offsets = [0, 0], sizes = [1, 32], strides = [1, 1]} : vector<2x32xf32> to vector<1x32xf32>
    %190 = vector.extract_strided_slice %188 {offsets = [1, 0], sizes = [1, 32], strides = [1, 1]} : vector<2x32xf32> to vector<1x32xf32>
    %cst_55 = arith.constant dense<0.000000e+00> : vector<16xf32>
    %191 = vector.multi_reduction <add>, %187, %cst_55 [1] : vector<16x32xf32> to vector<16xf32>
    %192 = vector.shape_cast %191 : vector<16xf32> to vector<16x1xf32>
    %193 = arith.mulf %187, %187 : vector<16x32xf32>
    %cst_56 = arith.constant dense<0.000000e+00> : vector<16xf32>
    %194 = vector.multi_reduction <add>, %193, %cst_56 [1] : vector<16x32xf32> to vector<16xf32>
    %195 = vector.shape_cast %194 : vector<16xf32> to vector<16x1xf32>
    %cst_57 = arith.constant 3.125000e-02 : f32
    %196 = vector.broadcast %cst_57 : f32 to vector<16x1xf32>
    %197 = arith.mulf %192, %196 : vector<16x1xf32>
    %cst_58 = arith.constant 3.125000e-02 : f32
    %198 = vector.broadcast %cst_58 : f32 to vector<16x1xf32>
    %199 = arith.mulf %195, %198 : vector<16x1xf32>
    %200 = arith.mulf %197, %197 : vector<16x1xf32>
    %201 = arith.subf %199, %200 : vector<16x1xf32>
    %202 = vector.broadcast %197 : vector<16x1xf32> to vector<16x32xf32>
    %203 = arith.subf %187, %202 : vector<16x32xf32>
    %cst_59 = arith.constant 9.99999974E-6 : f32
    %204 = vector.broadcast %cst_59 : f32 to vector<16x1xf32>
    %205 = arith.addf %201, %204 : vector<16x1xf32>
    %206 = math.rsqrt %205 : vector<16x1xf32>
    %207 = vector.broadcast %206 : vector<16x1xf32> to vector<16x32xf32>
    %208 = arith.mulf %203, %207 : vector<16x32xf32>
    %209 = vector.broadcast %189 : vector<1x32xf32> to vector<16x32xf32>
    %210 = arith.mulf %208, %209 : vector<16x32xf32>
    %211 = vector.broadcast %190 : vector<1x32xf32> to vector<16x32xf32>
    %212 = arith.addf %210, %211 : vector<16x32xf32>
    %c224 = arith.constant 224 : index
    %c0_60 = arith.constant 0 : index
    %213 = vector.load %arg1[%c224, %c0_60] : memref<1224x128xf32, #tpu.memory_space<vmem>>, vector<32x64xf32>
    %cst_61 = arith.constant dense<0.000000e+00> : vector<16x64xf32>
    %214 = tpu.matmul %212, %213, %cst_61 {dimension_numbers = #tpu.dot_dimension_numbers<[1], [0], [0], [1], [0, 0, 1, 1], [], []>} : vector<16x32xf32>, vector<32x64xf32>, vector<16x64xf32> -> vector<16x64xf32>
    %c256 = arith.constant 256 : index
    %c0_62 = arith.constant 0 : index
    %215 = vector.load %arg1[%c256, %c0_62] : memref<1224x128xf32, #tpu.memory_space<vmem>>, vector<1x64xf32>
    %216 = vector.broadcast %215 : vector<1x64xf32> to vector<16x64xf32>
    %217 = arith.addf %214, %216 : vector<16x64xf32>
    %218 = arith.mulf %217, %217 : vector<16x64xf32>
    %219 = arith.mulf %217, %218 : vector<16x64xf32>
    %cst_63 = arith.constant 4.471500e-02 : f32
    %220 = vector.broadcast %cst_63 : f32 to vector<16x64xf32>
    %221 = arith.mulf %220, %219 : vector<16x64xf32>
    %222 = arith.addf %217, %221 : vector<16x64xf32>
    %cst_64 = arith.constant 0.797884583 : f32
    %223 = vector.broadcast %cst_64 : f32 to vector<16x64xf32>
    %224 = arith.mulf %223, %222 : vector<16x64xf32>
    %225 = math.tanh %224 : vector<16x64xf32>
    %cst_65 = arith.constant 1.000000e+00 : f32
    %226 = vector.broadcast %cst_65 : f32 to vector<16x64xf32>
    %227 = arith.addf %226, %225 : vector<16x64xf32>
    %cst_66 = arith.constant 5.000000e-01 : f32
    %228 = vector.broadcast %cst_66 : f32 to vector<16x64xf32>
    %229 = arith.mulf %228, %227 : vector<16x64xf32>
    %230 = arith.mulf %217, %229 : vector<16x64xf32>
    %c264 = arith.constant 264 : index
    %c0_67 = arith.constant 0 : index
    %231 = vector.load %arg1[%c264, %c0_67] : memref<1224x128xf32, #tpu.memory_space<vmem>>, vector<64x32xf32>
    %cst_68 = arith.constant dense<0.000000e+00> : vector<16x32xf32>
    %232 = tpu.matmul %230, %231, %cst_68 {dimension_numbers = #tpu.dot_dimension_numbers<[1], [0], [0], [1], [0, 0, 1, 1], [], []>} : vector<16x64xf32>, vector<64x32xf32>, vector<16x32xf32> -> vector<16x32xf32>
    %c328 = arith.constant 328 : index
    %c0_69 = arith.constant 0 : index
    %233 = vector.load %arg1[%c328, %c0_69] : memref<1224x128xf32, #tpu.memory_space<vmem>>, vector<1x32xf32>
    %234 = vector.broadcast %233 : vector<1x32xf32> to vector<16x32xf32>
    %235 = arith.addf %232, %234 : vector<16x32xf32>
    %236 = arith.addf %235, %212 : vector<16x32xf32>
    %c336 = arith.constant 336 : index
    %c0_70 = arith.constant 0 : index
    %237 = vector.load %arg1[%c336, %c0_70] : memref<1224x128xf32, #tpu.memory_space<vmem>>, vector<2x32xf32>
    %238 = vector.extract_strided_slice %237 {offsets = [0, 0], sizes = [1, 32], strides = [1, 1]} : vector<2x32xf32> to vector<1x32xf32>
    %239 = vector.extract_strided_slice %237 {offsets = [1, 0], sizes = [1, 32], strides = [1, 1]} : vector<2x32xf32> to vector<1x32xf32>
    %cst_71 = arith.constant dense<0.000000e+00> : vector<16xf32>
    %240 = vector.multi_reduction <add>, %236, %cst_71 [1] : vector<16x32xf32> to vector<16xf32>
    %241 = vector.shape_cast %240 : vector<16xf32> to vector<16x1xf32>
    %242 = arith.mulf %236, %236 : vector<16x32xf32>
    %cst_72 = arith.constant dense<0.000000e+00> : vector<16xf32>
    %243 = vector.multi_reduction <add>, %242, %cst_72 [1] : vector<16x32xf32> to vector<16xf32>
    %244 = vector.shape_cast %243 : vector<16xf32> to vector<16x1xf32>
    %cst_73 = arith.constant 3.125000e-02 : f32
    %245 = vector.broadcast %cst_73 : f32 to vector<16x1xf32>
    %246 = arith.mulf %241, %245 : vector<16x1xf32>
    %cst_74 = arith.constant 3.125000e-02 : f32
    %247 = vector.broadcast %cst_74 : f32 to vector<16x1xf32>
    %248 = arith.mulf %244, %247 : vector<16x1xf32>
    %249 = arith.mulf %246, %246 : vector<16x1xf32>
    %250 = arith.subf %248, %249 : vector<16x1xf32>
    %251 = vector.broadcast %246 : vector<16x1xf32> to vector<16x32xf32>
    %252 = arith.subf %236, %251 : vector<16x32xf32>
    %cst_75 = arith.constant 9.99999974E-6 : f32
    %253 = vector.broadcast %cst_75 : f32 to vector<16x1xf32>
    %254 = arith.addf %250, %253 : vector<16x1xf32>
    %255 = math.rsqrt %254 : vector<16x1xf32>
    %256 = vector.broadcast %255 : vector<16x1xf32> to vector<16x32xf32>
    %257 = arith.mulf %252, %256 : vector<16x32xf32>
    %258 = vector.broadcast %238 : vector<1x32xf32> to vector<16x32xf32>
    %259 = arith.mulf %257, %258 : vector<16x32xf32>
    %260 = vector.broadcast %239 : vector<1x32xf32> to vector<16x32xf32>
    %261 = arith.addf %259, %260 : vector<16x32xf32>
    %c344 = arith.constant 344 : index
    %c0_76 = arith.constant 0 : index
    %262 = vector.load %arg1[%c344, %c0_76] : memref<1224x128xf32, #tpu.memory_space<vmem>>, vector<32x96xf32>
    %cst_77 = arith.constant dense<0.000000e+00> : vector<16x96xf32>
    %263 = tpu.matmul %261, %262, %cst_77 {dimension_numbers = #tpu.dot_dimension_numbers<[1], [0], [0], [1], [0, 0, 1, 1], [], []>} : vector<16x32xf32>, vector<32x96xf32>, vector<16x96xf32> -> vector<16x96xf32>
    %c376 = arith.constant 376 : index
    %c0_78 = arith.constant 0 : index
    %264 = vector.load %arg1[%c376, %c0_78] : memref<1224x128xf32, #tpu.memory_space<vmem>>, vector<1x96xf32>
    %265 = vector.broadcast %264 : vector<1x96xf32> to vector<16x96xf32>
    %266 = arith.addf %263, %265 : vector<16x96xf32>
    %267 = vector.extract_strided_slice %266 {offsets = [0, 0], sizes = [16, 32], strides = [1, 1]} : vector<16x96xf32> to vector<16x32xf32>
    %268 = vector.extract_strided_slice %266 {offsets = [0, 32], sizes = [16, 32], strides = [1, 1]} : vector<16x96xf32> to vector<16x32xf32>
    %269 = vector.extract_strided_slice %266 {offsets = [0, 64], sizes = [16, 32], strides = [1, 1]} : vector<16x96xf32> to vector<16x32xf32>
    %c384 = arith.constant 384 : index
    %c0_79 = arith.constant 0 : index
    %270 = vector.load %arg1[%c384, %c0_79] : memref<1224x128xf32, #tpu.memory_space<vmem>>, vector<32x32xf32>
    %c416 = arith.constant 416 : index
    %c0_80 = arith.constant 0 : index
    %271 = vector.load %arg1[%c416, %c0_80] : memref<1224x128xf32, #tpu.memory_space<vmem>>, vector<1x32xf32>
    %272 = vector.extract_strided_slice %267 {offsets = [0, 0], sizes = [16, 8], strides = [1, 1]} : vector<16x32xf32> to vector<16x8xf32>
    %273 = vector.extract_strided_slice %268 {offsets = [0, 0], sizes = [16, 8], strides = [1, 1]} : vector<16x32xf32> to vector<16x8xf32>
    %cst_81 = arith.constant dense<0.000000e+00> : vector<16x16xf32>
    %274 = tpu.matmul %272, %273, %cst_81 {dimension_numbers = #tpu.dot_dimension_numbers<[1], [1], [0], [0], [0, 0, 1, 0], [], []>} : vector<16x8xf32>, vector<16x8xf32>, vector<16x16xf32> -> vector<16x16xf32>
    %cst_82 = arith.constant 0.353553385 : f32
    %275 = vector.broadcast %cst_82 : f32 to vector<16x16xf32>
    %276 = arith.mulf %274, %275 : vector<16x16xf32>
    %277 = arith.addf %276, %74 : vector<16x16xf32>
    %cst_83 = arith.constant dense<0xFF800000> : vector<16xf32>
    %278 = vector.multi_reduction <maximumf>, %277, %cst_83 [1] : vector<16x16xf32> to vector<16xf32>
    %279 = vector.shape_cast %278 : vector<16xf32> to vector<16x1xf32>
    %280 = vector.broadcast %279 : vector<16x1xf32> to vector<16x16xf32>
    %281 = arith.subf %277, %280 : vector<16x16xf32>
    %282 = math.exp %281 : vector<16x16xf32>
    %cst_84 = arith.constant dense<0.000000e+00> : vector<16xf32>
    %283 = vector.multi_reduction <add>, %282, %cst_84 [1] : vector<16x16xf32> to vector<16xf32>
    %284 = vector.shape_cast %283 : vector<16xf32> to vector<16x1xf32>
    %285 = tpu.reciprocal %284 {approx = true} : vector<16x1xf32> -> vector<16x1xf32>
    %286 = vector.broadcast %285 : vector<16x1xf32> to vector<16x16xf32>
    %287 = arith.mulf %282, %286 : vector<16x16xf32>
    %288 = vector.extract_strided_slice %269 {offsets = [0, 0], sizes = [16, 8], strides = [1, 1]} : vector<16x32xf32> to vector<16x8xf32>
    %cst_85 = arith.constant dense<0.000000e+00> : vector<16x8xf32>
    %289 = tpu.matmul %287, %288, %cst_85 {dimension_numbers = #tpu.dot_dimension_numbers<[1], [0], [0], [1], [0, 0, 1, 1], [], []>} : vector<16x16xf32>, vector<16x8xf32>, vector<16x8xf32> -> vector<16x8xf32>
    %290 = vector.extract_strided_slice %267 {offsets = [0, 8], sizes = [16, 8], strides = [1, 1]} : vector<16x32xf32> to vector<16x8xf32>
    %291 = vector.extract_strided_slice %268 {offsets = [0, 8], sizes = [16, 8], strides = [1, 1]} : vector<16x32xf32> to vector<16x8xf32>
    %cst_86 = arith.constant dense<0.000000e+00> : vector<16x16xf32>
    %292 = tpu.matmul %290, %291, %cst_86 {dimension_numbers = #tpu.dot_dimension_numbers<[1], [1], [0], [0], [0, 0, 1, 0], [], []>} : vector<16x8xf32>, vector<16x8xf32>, vector<16x16xf32> -> vector<16x16xf32>
    %cst_87 = arith.constant 0.353553385 : f32
    %293 = vector.broadcast %cst_87 : f32 to vector<16x16xf32>
    %294 = arith.mulf %292, %293 : vector<16x16xf32>
    %295 = arith.addf %294, %74 : vector<16x16xf32>
    %cst_88 = arith.constant dense<0xFF800000> : vector<16xf32>
    %296 = vector.multi_reduction <maximumf>, %295, %cst_88 [1] : vector<16x16xf32> to vector<16xf32>
    %297 = vector.shape_cast %296 : vector<16xf32> to vector<16x1xf32>
    %298 = vector.broadcast %297 : vector<16x1xf32> to vector<16x16xf32>
    %299 = arith.subf %295, %298 : vector<16x16xf32>
    %300 = math.exp %299 : vector<16x16xf32>
    %cst_89 = arith.constant dense<0.000000e+00> : vector<16xf32>
    %301 = vector.multi_reduction <add>, %300, %cst_89 [1] : vector<16x16xf32> to vector<16xf32>
    %302 = vector.shape_cast %301 : vector<16xf32> to vector<16x1xf32>
    %303 = tpu.reciprocal %302 {approx = true} : vector<16x1xf32> -> vector<16x1xf32>
    %304 = vector.broadcast %303 : vector<16x1xf32> to vector<16x16xf32>
    %305 = arith.mulf %300, %304 : vector<16x16xf32>
    %306 = vector.extract_strided_slice %269 {offsets = [0, 8], sizes = [16, 8], strides = [1, 1]} : vector<16x32xf32> to vector<16x8xf32>
    %cst_90 = arith.constant dense<0.000000e+00> : vector<16x8xf32>
    %307 = tpu.matmul %305, %306, %cst_90 {dimension_numbers = #tpu.dot_dimension_numbers<[1], [0], [0], [1], [0, 0, 1, 1], [], []>} : vector<16x16xf32>, vector<16x8xf32>, vector<16x8xf32> -> vector<16x8xf32>
    %308 = vector.extract_strided_slice %267 {offsets = [0, 16], sizes = [16, 8], strides = [1, 1]} : vector<16x32xf32> to vector<16x8xf32>
    %309 = vector.extract_strided_slice %268 {offsets = [0, 16], sizes = [16, 8], strides = [1, 1]} : vector<16x32xf32> to vector<16x8xf32>
    %cst_91 = arith.constant dense<0.000000e+00> : vector<16x16xf32>
    %310 = tpu.matmul %308, %309, %cst_91 {dimension_numbers = #tpu.dot_dimension_numbers<[1], [1], [0], [0], [0, 0, 1, 0], [], []>} : vector<16x8xf32>, vector<16x8xf32>, vector<16x16xf32> -> vector<16x16xf32>
    %cst_92 = arith.constant 0.353553385 : f32
    %311 = vector.broadcast %cst_92 : f32 to vector<16x16xf32>
    %312 = arith.mulf %310, %311 : vector<16x16xf32>
    %313 = arith.addf %312, %74 : vector<16x16xf32>
    %cst_93 = arith.constant dense<0xFF800000> : vector<16xf32>
    %314 = vector.multi_reduction <maximumf>, %313, %cst_93 [1] : vector<16x16xf32> to vector<16xf32>
    %315 = vector.shape_cast %314 : vector<16xf32> to vector<16x1xf32>
    %316 = vector.broadcast %315 : vector<16x1xf32> to vector<16x16xf32>
    %317 = arith.subf %313, %316 : vector<16x16xf32>
    %318 = math.exp %317 : vector<16x16xf32>
    %cst_94 = arith.constant dense<0.000000e+00> : vector<16xf32>
    %319 = vector.multi_reduction <add>, %318, %cst_94 [1] : vector<16x16xf32> to vector<16xf32>
    %320 = vector.shape_cast %319 : vector<16xf32> to vector<16x1xf32>
    %321 = tpu.reciprocal %320 {approx = true} : vector<16x1xf32> -> vector<16x1xf32>
    %322 = vector.broadcast %321 : vector<16x1xf32> to vector<16x16xf32>
    %323 = arith.mulf %318, %322 : vector<16x16xf32>
    %324 = vector.extract_strided_slice %269 {offsets = [0, 16], sizes = [16, 8], strides = [1, 1]} : vector<16x32xf32> to vector<16x8xf32>
    %cst_95 = arith.constant dense<0.000000e+00> : vector<16x8xf32>
    %325 = tpu.matmul %323, %324, %cst_95 {dimension_numbers = #tpu.dot_dimension_numbers<[1], [0], [0], [1], [0, 0, 1, 1], [], []>} : vector<16x16xf32>, vector<16x8xf32>, vector<16x8xf32> -> vector<16x8xf32>
    %326 = vector.extract_strided_slice %267 {offsets = [0, 24], sizes = [16, 8], strides = [1, 1]} : vector<16x32xf32> to vector<16x8xf32>
    %327 = vector.extract_strided_slice %268 {offsets = [0, 24], sizes = [16, 8], strides = [1, 1]} : vector<16x32xf32> to vector<16x8xf32>
    %cst_96 = arith.constant dense<0.000000e+00> : vector<16x16xf32>
    %328 = tpu.matmul %326, %327, %cst_96 {dimension_numbers = #tpu.dot_dimension_numbers<[1], [1], [0], [0], [0, 0, 1, 0], [], []>} : vector<16x8xf32>, vector<16x8xf32>, vector<16x16xf32> -> vector<16x16xf32>
    %cst_97 = arith.constant 0.353553385 : f32
    %329 = vector.broadcast %cst_97 : f32 to vector<16x16xf32>
    %330 = arith.mulf %328, %329 : vector<16x16xf32>
    %331 = arith.addf %330, %74 : vector<16x16xf32>
    %cst_98 = arith.constant dense<0xFF800000> : vector<16xf32>
    %332 = vector.multi_reduction <maximumf>, %331, %cst_98 [1] : vector<16x16xf32> to vector<16xf32>
    %333 = vector.shape_cast %332 : vector<16xf32> to vector<16x1xf32>
    %334 = vector.broadcast %333 : vector<16x1xf32> to vector<16x16xf32>
    %335 = arith.subf %331, %334 : vector<16x16xf32>
    %336 = math.exp %335 : vector<16x16xf32>
    %cst_99 = arith.constant dense<0.000000e+00> : vector<16xf32>
    %337 = vector.multi_reduction <add>, %336, %cst_99 [1] : vector<16x16xf32> to vector<16xf32>
    %338 = vector.shape_cast %337 : vector<16xf32> to vector<16x1xf32>
    %339 = tpu.reciprocal %338 {approx = true} : vector<16x1xf32> -> vector<16x1xf32>
    %340 = vector.broadcast %339 : vector<16x1xf32> to vector<16x16xf32>
    %341 = arith.mulf %336, %340 : vector<16x16xf32>
    %342 = vector.extract_strided_slice %269 {offsets = [0, 24], sizes = [16, 8], strides = [1, 1]} : vector<16x32xf32> to vector<16x8xf32>
    %cst_100 = arith.constant dense<0.000000e+00> : vector<16x8xf32>
    %343 = tpu.matmul %341, %342, %cst_100 {dimension_numbers = #tpu.dot_dimension_numbers<[1], [0], [0], [1], [0, 0, 1, 1], [], []>} : vector<16x16xf32>, vector<16x8xf32>, vector<16x8xf32> -> vector<16x8xf32>
    %344 = tpu.concatenate %289, %307, %325, %343 in 1 : vector<16x8xf32>, vector<16x8xf32>, vector<16x8xf32>, vector<16x8xf32> -> vector<16x32xf32>
    %cst_101 = arith.constant dense<0.000000e+00> : vector<16x32xf32>
    %345 = tpu.matmul %344, %270, %cst_101 {dimension_numbers = #tpu.dot_dimension_numbers<[1], [0], [0], [1], [0, 0, 1, 1], [], []>} : vector<16x32xf32>, vector<32x32xf32>, vector<16x32xf32> -> vector<16x32xf32>
    %346 = vector.broadcast %271 : vector<1x32xf32> to vector<16x32xf32>
    %347 = arith.addf %345, %346 : vector<16x32xf32>
    %348 = arith.addf %347, %261 : vector<16x32xf32>
    %c424 = arith.constant 424 : index
    %c0_102 = arith.constant 0 : index
    %349 = vector.load %arg1[%c424, %c0_102] : memref<1224x128xf32, #tpu.memory_space<vmem>>, vector<2x32xf32>
    %350 = vector.extract_strided_slice %349 {offsets = [0, 0], sizes = [1, 32], strides = [1, 1]} : vector<2x32xf32> to vector<1x32xf32>
    %351 = vector.extract_strided_slice %349 {offsets = [1, 0], sizes = [1, 32], strides = [1, 1]} : vector<2x32xf32> to vector<1x32xf32>
    %cst_103 = arith.constant dense<0.000000e+00> : vector<16xf32>
    %352 = vector.multi_reduction <add>, %348, %cst_103 [1] : vector<16x32xf32> to vector<16xf32>
    %353 = vector.shape_cast %352 : vector<16xf32> to vector<16x1xf32>
    %354 = arith.mulf %348, %348 : vector<16x32xf32>
    %cst_104 = arith.constant dense<0.000000e+00> : vector<16xf32>
    %355 = vector.multi_reduction <add>, %354, %cst_104 [1] : vector<16x32xf32> to vector<16xf32>
    %356 = vector.shape_cast %355 : vector<16xf32> to vector<16x1xf32>
    %cst_105 = arith.constant 3.125000e-02 : f32
    %357 = vector.broadcast %cst_105 : f32 to vector<16x1xf32>
    %358 = arith.mulf %353, %357 : vector<16x1xf32>
    %cst_106 = arith.constant 3.125000e-02 : f32
    %359 = vector.broadcast %cst_106 : f32 to vector<16x1xf32>
    %360 = arith.mulf %356, %359 : vector<16x1xf32>
    %361 = arith.mulf %358, %358 : vector<16x1xf32>
    %362 = arith.subf %360, %361 : vector<16x1xf32>
    %363 = vector.broadcast %358 : vector<16x1xf32> to vector<16x32xf32>
    %364 = arith.subf %348, %363 : vector<16x32xf32>
    %cst_107 = arith.constant 9.99999974E-6 : f32
    %365 = vector.broadcast %cst_107 : f32 to vector<16x1xf32>
    %366 = arith.addf %362, %365 : vector<16x1xf32>
    %367 = math.rsqrt %366 : vector<16x1xf32>
    %368 = vector.broadcast %367 : vector<16x1xf32> to vector<16x32xf32>
    %369 = arith.mulf %364, %368 : vector<16x32xf32>
    %370 = vector.broadcast %350 : vector<1x32xf32> to vector<16x32xf32>
    %371 = arith.mulf %369, %370 : vector<16x32xf32>
    %372 = vector.broadcast %351 : vector<1x32xf32> to vector<16x32xf32>
    %373 = arith.addf %371, %372 : vector<16x32xf32>
    %c432 = arith.constant 432 : index
    %c0_108 = arith.constant 0 : index
    %374 = vector.load %arg1[%c432, %c0_108] : memref<1224x128xf32, #tpu.memory_space<vmem>>, vector<32x64xf32>
    %cst_109 = arith.constant dense<0.000000e+00> : vector<16x64xf32>
    %375 = tpu.matmul %373, %374, %cst_109 {dimension_numbers = #tpu.dot_dimension_numbers<[1], [0], [0], [1], [0, 0, 1, 1], [], []>} : vector<16x32xf32>, vector<32x64xf32>, vector<16x64xf32> -> vector<16x64xf32>
    %c464 = arith.constant 464 : index
    %c0_110 = arith.constant 0 : index
    %376 = vector.load %arg1[%c464, %c0_110] : memref<1224x128xf32, #tpu.memory_space<vmem>>, vector<1x64xf32>
    %377 = vector.broadcast %376 : vector<1x64xf32> to vector<16x64xf32>
    %378 = arith.addf %375, %377 : vector<16x64xf32>
    %379 = arith.mulf %378, %378 : vector<16x64xf32>
    %380 = arith.mulf %378, %379 : vector<16x64xf32>
    %cst_111 = arith.constant 4.471500e-02 : f32
    %381 = vector.broadcast %cst_111 : f32 to vector<16x64xf32>
    %382 = arith.mulf %381, %380 : vector<16x64xf32>
    %383 = arith.addf %378, %382 : vector<16x64xf32>
    %cst_112 = arith.constant 0.797884583 : f32
    %384 = vector.broadcast %cst_112 : f32 to vector<16x64xf32>
    %385 = arith.mulf %384, %383 : vector<16x64xf32>
    %386 = math.tanh %385 : vector<16x64xf32>
    %cst_113 = arith.constant 1.000000e+00 : f32
    %387 = vector.broadcast %cst_113 : f32 to vector<16x64xf32>
    %388 = arith.addf %387, %386 : vector<16x64xf32>
    %cst_114 = arith.constant 5.000000e-01 : f32
    %389 = vector.broadcast %cst_114 : f32 to vector<16x64xf32>
    %390 = arith.mulf %389, %388 : vector<16x64xf32>
    %391 = arith.mulf %378, %390 : vector<16x64xf32>
    %c472 = arith.constant 472 : index
    %c0_115 = arith.constant 0 : index
    %392 = vector.load %arg1[%c472, %c0_115] : memref<1224x128xf32, #tpu.memory_space<vmem>>, vector<64x32xf32>
    %cst_116 = arith.constant dense<0.000000e+00> : vector<16x32xf32>
    %393 = tpu.matmul %391, %392, %cst_116 {dimension_numbers = #tpu.dot_dimension_numbers<[1], [0], [0], [1], [0, 0, 1, 1], [], []>} : vector<16x64xf32>, vector<64x32xf32>, vector<16x32xf32> -> vector<16x32xf32>
    %c536 = arith.constant 536 : index
    %c0_117 = arith.constant 0 : index
    %394 = vector.load %arg1[%c536, %c0_117] : memref<1224x128xf32, #tpu.memory_space<vmem>>, vector<1x32xf32>
    %395 = vector.broadcast %394 : vector<1x32xf32> to vector<16x32xf32>
    %396 = arith.addf %393, %395 : vector<16x32xf32>
    %397 = arith.addf %396, %373 : vector<16x32xf32>
    %c544 = arith.constant 544 : index
    %c0_118 = arith.constant 0 : index
    %398 = vector.load %arg1[%c544, %c0_118] : memref<1224x128xf32, #tpu.memory_space<vmem>>, vector<2x32xf32>
    %399 = vector.extract_strided_slice %398 {offsets = [0, 0], sizes = [1, 32], strides = [1, 1]} : vector<2x32xf32> to vector<1x32xf32>
    %400 = vector.extract_strided_slice %398 {offsets = [1, 0], sizes = [1, 32], strides = [1, 1]} : vector<2x32xf32> to vector<1x32xf32>
    %cst_119 = arith.constant dense<0.000000e+00> : vector<16xf32>
    %401 = vector.multi_reduction <add>, %397, %cst_119 [1] : vector<16x32xf32> to vector<16xf32>
    %402 = vector.shape_cast %401 : vector<16xf32> to vector<16x1xf32>
    %403 = arith.mulf %397, %397 : vector<16x32xf32>
    %cst_120 = arith.constant dense<0.000000e+00> : vector<16xf32>
    %404 = vector.multi_reduction <add>, %403, %cst_120 [1] : vector<16x32xf32> to vector<16xf32>
    %405 = vector.shape_cast %404 : vector<16xf32> to vector<16x1xf32>
    %cst_121 = arith.constant 3.125000e-02 : f32
    %406 = vector.broadcast %cst_121 : f32 to vector<16x1xf32>
    %407 = arith.mulf %402, %406 : vector<16x1xf32>
    %cst_122 = arith.constant 3.125000e-02 : f32
    %408 = vector.broadcast %cst_122 : f32 to vector<16x1xf32>
    %409 = arith.mulf %405, %408 : vector<16x1xf32>
    %410 = arith.mulf %407, %407 : vector<16x1xf32>
    %411 = arith.subf %409, %410 : vector<16x1xf32>
    %412 = vector.broadcast %407 : vector<16x1xf32> to vector<16x32xf32>
    %413 = arith.subf %397, %412 : vector<16x32xf32>
    %cst_123 = arith.constant 9.99999974E-6 : f32
    %414 = vector.broadcast %cst_123 : f32 to vector<16x1xf32>
    %415 = arith.addf %411, %414 : vector<16x1xf32>
    %416 = math.rsqrt %415 : vector<16x1xf32>
    %417 = vector.broadcast %416 : vector<16x1xf32> to vector<16x32xf32>
    %418 = arith.mulf %413, %417 : vector<16x32xf32>
    %419 = vector.broadcast %399 : vector<1x32xf32> to vector<16x32xf32>
    %420 = arith.mulf %418, %419 : vector<16x32xf32>
    %421 = vector.broadcast %400 : vector<1x32xf32> to vector<16x32xf32>
    %422 = arith.addf %420, %421 : vector<16x32xf32>
    %c552 = arith.constant 552 : index
    %c0_124 = arith.constant 0 : index
    %423 = vector.load %arg1[%c552, %c0_124] : memref<1224x128xf32, #tpu.memory_space<vmem>>, vector<32x96xf32>
    %cst_125 = arith.constant dense<0.000000e+00> : vector<16x96xf32>
    %424 = tpu.matmul %64, %423, %cst_125 {dimension_numbers = #tpu.dot_dimension_numbers<[1], [0], [0], [1], [0, 0, 1, 1], [], []>} : vector<16x32xf32>, vector<32x96xf32>, vector<16x96xf32> -> vector<16x96xf32>
    %c584 = arith.constant 584 : index
    %c0_126 = arith.constant 0 : index
    %425 = vector.load %arg1[%c584, %c0_126] : memref<1224x128xf32, #tpu.memory_space<vmem>>, vector<1x96xf32>
    %426 = vector.broadcast %425 : vector<1x96xf32> to vector<16x96xf32>
    %427 = arith.addf %424, %426 : vector<16x96xf32>
    %428 = vector.extract_strided_slice %427 {offsets = [0, 0], sizes = [16, 32], strides = [1, 1]} : vector<16x96xf32> to vector<16x32xf32>
    %429 = vector.extract_strided_slice %427 {offsets = [0, 32], sizes = [16, 32], strides = [1, 1]} : vector<16x96xf32> to vector<16x32xf32>
    %430 = vector.extract_strided_slice %427 {offsets = [0, 64], sizes = [16, 32], strides = [1, 1]} : vector<16x96xf32> to vector<16x32xf32>
    %c592 = arith.constant 592 : index
    %c0_127 = arith.constant 0 : index
    %431 = vector.load %arg1[%c592, %c0_127] : memref<1224x128xf32, #tpu.memory_space<vmem>>, vector<32x32xf32>
    %c624 = arith.constant 624 : index
    %c0_128 = arith.constant 0 : index
    %432 = vector.load %arg1[%c624, %c0_128] : memref<1224x128xf32, #tpu.memory_space<vmem>>, vector<1x32xf32>
    %433 = vector.extract_strided_slice %428 {offsets = [0, 0], sizes = [16, 8], strides = [1, 1]} : vector<16x32xf32> to vector<16x8xf32>
    %434 = vector.extract_strided_slice %429 {offsets = [0, 0], sizes = [16, 8], strides = [1, 1]} : vector<16x32xf32> to vector<16x8xf32>
    %cst_129 = arith.constant dense<0.000000e+00> : vector<16x16xf32>
    %435 = tpu.matmul %433, %434, %cst_129 {dimension_numbers = #tpu.dot_dimension_numbers<[1], [1], [0], [0], [0, 0, 1, 0], [], []>} : vector<16x8xf32>, vector<16x8xf32>, vector<16x16xf32> -> vector<16x16xf32>
    %cst_130 = arith.constant 0.353553385 : f32
    %436 = vector.broadcast %cst_130 : f32 to vector<16x16xf32>
    %437 = arith.mulf %435, %436 : vector<16x16xf32>
    %438 = arith.addf %437, %90 : vector<16x16xf32>
    %cst_131 = arith.constant dense<0xFF800000> : vector<16xf32>
    %439 = vector.multi_reduction <maximumf>, %438, %cst_131 [1] : vector<16x16xf32> to vector<16xf32>
    %440 = vector.shape_cast %439 : vector<16xf32> to vector<16x1xf32>
    %441 = vector.broadcast %440 : vector<16x1xf32> to vector<16x16xf32>
    %442 = arith.subf %438, %441 : vector<16x16xf32>
    %443 = math.exp %442 : vector<16x16xf32>
    %cst_132 = arith.constant dense<0.000000e+00> : vector<16xf32>
    %444 = vector.multi_reduction <add>, %443, %cst_132 [1] : vector<16x16xf32> to vector<16xf32>
    %445 = vector.shape_cast %444 : vector<16xf32> to vector<16x1xf32>
    %446 = tpu.reciprocal %445 {approx = true} : vector<16x1xf32> -> vector<16x1xf32>
    %447 = vector.broadcast %446 : vector<16x1xf32> to vector<16x16xf32>
    %448 = arith.mulf %443, %447 : vector<16x16xf32>
    %449 = vector.extract_strided_slice %430 {offsets = [0, 0], sizes = [16, 8], strides = [1, 1]} : vector<16x32xf32> to vector<16x8xf32>
    %cst_133 = arith.constant dense<0.000000e+00> : vector<16x8xf32>
    %450 = tpu.matmul %448, %449, %cst_133 {dimension_numbers = #tpu.dot_dimension_numbers<[1], [0], [0], [1], [0, 0, 1, 1], [], []>} : vector<16x16xf32>, vector<16x8xf32>, vector<16x8xf32> -> vector<16x8xf32>
    %451 = vector.extract_strided_slice %428 {offsets = [0, 8], sizes = [16, 8], strides = [1, 1]} : vector<16x32xf32> to vector<16x8xf32>
    %452 = vector.extract_strided_slice %429 {offsets = [0, 8], sizes = [16, 8], strides = [1, 1]} : vector<16x32xf32> to vector<16x8xf32>
    %cst_134 = arith.constant dense<0.000000e+00> : vector<16x16xf32>
    %453 = tpu.matmul %451, %452, %cst_134 {dimension_numbers = #tpu.dot_dimension_numbers<[1], [1], [0], [0], [0, 0, 1, 0], [], []>} : vector<16x8xf32>, vector<16x8xf32>, vector<16x16xf32> -> vector<16x16xf32>
    %cst_135 = arith.constant 0.353553385 : f32
    %454 = vector.broadcast %cst_135 : f32 to vector<16x16xf32>
    %455 = arith.mulf %453, %454 : vector<16x16xf32>
    %456 = arith.addf %455, %90 : vector<16x16xf32>
    %cst_136 = arith.constant dense<0xFF800000> : vector<16xf32>
    %457 = vector.multi_reduction <maximumf>, %456, %cst_136 [1] : vector<16x16xf32> to vector<16xf32>
    %458 = vector.shape_cast %457 : vector<16xf32> to vector<16x1xf32>
    %459 = vector.broadcast %458 : vector<16x1xf32> to vector<16x16xf32>
    %460 = arith.subf %456, %459 : vector<16x16xf32>
    %461 = math.exp %460 : vector<16x16xf32>
    %cst_137 = arith.constant dense<0.000000e+00> : vector<16xf32>
    %462 = vector.multi_reduction <add>, %461, %cst_137 [1] : vector<16x16xf32> to vector<16xf32>
    %463 = vector.shape_cast %462 : vector<16xf32> to vector<16x1xf32>
    %464 = tpu.reciprocal %463 {approx = true} : vector<16x1xf32> -> vector<16x1xf32>
    %465 = vector.broadcast %464 : vector<16x1xf32> to vector<16x16xf32>
    %466 = arith.mulf %461, %465 : vector<16x16xf32>
    %467 = vector.extract_strided_slice %430 {offsets = [0, 8], sizes = [16, 8], strides = [1, 1]} : vector<16x32xf32> to vector<16x8xf32>
    %cst_138 = arith.constant dense<0.000000e+00> : vector<16x8xf32>
    %468 = tpu.matmul %466, %467, %cst_138 {dimension_numbers = #tpu.dot_dimension_numbers<[1], [0], [0], [1], [0, 0, 1, 1], [], []>} : vector<16x16xf32>, vector<16x8xf32>, vector<16x8xf32> -> vector<16x8xf32>
    %469 = vector.extract_strided_slice %428 {offsets = [0, 16], sizes = [16, 8], strides = [1, 1]} : vector<16x32xf32> to vector<16x8xf32>
    %470 = vector.extract_strided_slice %429 {offsets = [0, 16], sizes = [16, 8], strides = [1, 1]} : vector<16x32xf32> to vector<16x8xf32>
    %cst_139 = arith.constant dense<0.000000e+00> : vector<16x16xf32>
    %471 = tpu.matmul %469, %470, %cst_139 {dimension_numbers = #tpu.dot_dimension_numbers<[1], [1], [0], [0], [0, 0, 1, 0], [], []>} : vector<16x8xf32>, vector<16x8xf32>, vector<16x16xf32> -> vector<16x16xf32>
    %cst_140 = arith.constant 0.353553385 : f32
    %472 = vector.broadcast %cst_140 : f32 to vector<16x16xf32>
    %473 = arith.mulf %471, %472 : vector<16x16xf32>
    %474 = arith.addf %473, %90 : vector<16x16xf32>
    %cst_141 = arith.constant dense<0xFF800000> : vector<16xf32>
    %475 = vector.multi_reduction <maximumf>, %474, %cst_141 [1] : vector<16x16xf32> to vector<16xf32>
    %476 = vector.shape_cast %475 : vector<16xf32> to vector<16x1xf32>
    %477 = vector.broadcast %476 : vector<16x1xf32> to vector<16x16xf32>
    %478 = arith.subf %474, %477 : vector<16x16xf32>
    %479 = math.exp %478 : vector<16x16xf32>
    %cst_142 = arith.constant dense<0.000000e+00> : vector<16xf32>
    %480 = vector.multi_reduction <add>, %479, %cst_142 [1] : vector<16x16xf32> to vector<16xf32>
    %481 = vector.shape_cast %480 : vector<16xf32> to vector<16x1xf32>
    %482 = tpu.reciprocal %481 {approx = true} : vector<16x1xf32> -> vector<16x1xf32>
    %483 = vector.broadcast %482 : vector<16x1xf32> to vector<16x16xf32>
    %484 = arith.mulf %479, %483 : vector<16x16xf32>
    %485 = vector.extract_strided_slice %430 {offsets = [0, 16], sizes = [16, 8], strides = [1, 1]} : vector<16x32xf32> to vector<16x8xf32>
    %cst_143 = arith.constant dense<0.000000e+00> : vector<16x8xf32>
    %486 = tpu.matmul %484, %485, %cst_143 {dimension_numbers = #tpu.dot_dimension_numbers<[1], [0], [0], [1], [0, 0, 1, 1], [], []>} : vector<16x16xf32>, vector<16x8xf32>, vector<16x8xf32> -> vector<16x8xf32>
    %487 = vector.extract_strided_slice %428 {offsets = [0, 24], sizes = [16, 8], strides = [1, 1]} : vector<16x32xf32> to vector<16x8xf32>
    %488 = vector.extract_strided_slice %429 {offsets = [0, 24], sizes = [16, 8], strides = [1, 1]} : vector<16x32xf32> to vector<16x8xf32>
    %cst_144 = arith.constant dense<0.000000e+00> : vector<16x16xf32>
    %489 = tpu.matmul %487, %488, %cst_144 {dimension_numbers = #tpu.dot_dimension_numbers<[1], [1], [0], [0], [0, 0, 1, 0], [], []>} : vector<16x8xf32>, vector<16x8xf32>, vector<16x16xf32> -> vector<16x16xf32>
    %cst_145 = arith.constant 0.353553385 : f32
    %490 = vector.broadcast %cst_145 : f32 to vector<16x16xf32>
    %491 = arith.mulf %489, %490 : vector<16x16xf32>
    %492 = arith.addf %491, %90 : vector<16x16xf32>
    %cst_146 = arith.constant dense<0xFF800000> : vector<16xf32>
    %493 = vector.multi_reduction <maximumf>, %492, %cst_146 [1] : vector<16x16xf32> to vector<16xf32>
    %494 = vector.shape_cast %493 : vector<16xf32> to vector<16x1xf32>
    %495 = vector.broadcast %494 : vector<16x1xf32> to vector<16x16xf32>
    %496 = arith.subf %492, %495 : vector<16x16xf32>
    %497 = math.exp %496 : vector<16x16xf32>
    %cst_147 = arith.constant dense<0.000000e+00> : vector<16xf32>
    %498 = vector.multi_reduction <add>, %497, %cst_147 [1] : vector<16x16xf32> to vector<16xf32>
    %499 = vector.shape_cast %498 : vector<16xf32> to vector<16x1xf32>
    %500 = tpu.reciprocal %499 {approx = true} : vector<16x1xf32> -> vector<16x1xf32>
    %501 = vector.broadcast %500 : vector<16x1xf32> to vector<16x16xf32>
    %502 = arith.mulf %497, %501 : vector<16x16xf32>
    %503 = vector.extract_strided_slice %430 {offsets = [0, 24], sizes = [16, 8], strides = [1, 1]} : vector<16x32xf32> to vector<16x8xf32>
    %cst_148 = arith.constant dense<0.000000e+00> : vector<16x8xf32>
    %504 = tpu.matmul %502, %503, %cst_148 {dimension_numbers = #tpu.dot_dimension_numbers<[1], [0], [0], [1], [0, 0, 1, 1], [], []>} : vector<16x16xf32>, vector<16x8xf32>, vector<16x8xf32> -> vector<16x8xf32>
    %505 = tpu.concatenate %450, %468, %486, %504 in 1 : vector<16x8xf32>, vector<16x8xf32>, vector<16x8xf32>, vector<16x8xf32> -> vector<16x32xf32>
    %cst_149 = arith.constant dense<0.000000e+00> : vector<16x32xf32>
    %506 = tpu.matmul %505, %431, %cst_149 {dimension_numbers = #tpu.dot_dimension_numbers<[1], [0], [0], [1], [0, 0, 1, 1], [], []>} : vector<16x32xf32>, vector<32x32xf32>, vector<16x32xf32> -> vector<16x32xf32>
    %507 = vector.broadcast %432 : vector<1x32xf32> to vector<16x32xf32>
    %508 = arith.addf %506, %507 : vector<16x32xf32>
    %509 = arith.addf %508, %64 : vector<16x32xf32>
    %c632 = arith.constant 632 : index
    %c0_150 = arith.constant 0 : index
    %510 = vector.load %arg1[%c632, %c0_150] : memref<1224x128xf32, #tpu.memory_space<vmem>>, vector<2x32xf32>
    %511 = vector.extract_strided_slice %510 {offsets = [0, 0], sizes = [1, 32], strides = [1, 1]} : vector<2x32xf32> to vector<1x32xf32>
    %512 = vector.extract_strided_slice %510 {offsets = [1, 0], sizes = [1, 32], strides = [1, 1]} : vector<2x32xf32> to vector<1x32xf32>
    %cst_151 = arith.constant dense<0.000000e+00> : vector<16xf32>
    %513 = vector.multi_reduction <add>, %509, %cst_151 [1] : vector<16x32xf32> to vector<16xf32>
    %514 = vector.shape_cast %513 : vector<16xf32> to vector<16x1xf32>
    %515 = arith.mulf %509, %509 : vector<16x32xf32>
    %cst_152 = arith.constant dense<0.000000e+00> : vector<16xf32>
    %516 = vector.multi_reduction <add>, %515, %cst_152 [1] : vector<16x32xf32> to vector<16xf32>
    %517 = vector.shape_cast %516 : vector<16xf32> to vector<16x1xf32>
    %cst_153 = arith.constant 3.125000e-02 : f32
    %518 = vector.broadcast %cst_153 : f32 to vector<16x1xf32>
    %519 = arith.mulf %514, %518 : vector<16x1xf32>
    %cst_154 = arith.constant 3.125000e-02 : f32
    %520 = vector.broadcast %cst_154 : f32 to vector<16x1xf32>
    %521 = arith.mulf %517, %520 : vector<16x1xf32>
    %522 = arith.mulf %519, %519 : vector<16x1xf32>
    %523 = arith.subf %521, %522 : vector<16x1xf32>
    %524 = vector.broadcast %519 : vector<16x1xf32> to vector<16x32xf32>
    %525 = arith.subf %509, %524 : vector<16x32xf32>
    %cst_155 = arith.constant 9.99999974E-6 : f32
    %526 = vector.broadcast %cst_155 : f32 to vector<16x1xf32>
    %527 = arith.addf %523, %526 : vector<16x1xf32>
    %528 = math.rsqrt %527 : vector<16x1xf32>
    %529 = vector.broadcast %528 : vector<16x1xf32> to vector<16x32xf32>
    %530 = arith.mulf %525, %529 : vector<16x32xf32>
    %531 = vector.broadcast %511 : vector<1x32xf32> to vector<16x32xf32>
    %532 = arith.mulf %530, %531 : vector<16x32xf32>
    %533 = vector.broadcast %512 : vector<1x32xf32> to vector<16x32xf32>
    %534 = arith.addf %532, %533 : vector<16x32xf32>
    %c640 = arith.constant 640 : index
    %c0_156 = arith.constant 0 : index
    %535 = vector.load %arg1[%c640, %c0_156] : memref<1224x128xf32, #tpu.memory_space<vmem>>, vector<32x32xf32>
    %cst_157 = arith.constant dense<0.000000e+00> : vector<16x32xf32>
    %536 = tpu.matmul %534, %535, %cst_157 {dimension_numbers = #tpu.dot_dimension_numbers<[1], [0], [0], [1], [0, 0, 1, 1], [], []>} : vector<16x32xf32>, vector<32x32xf32>, vector<16x32xf32> -> vector<16x32xf32>
    %c672 = arith.constant 672 : index
    %c0_158 = arith.constant 0 : index
    %537 = vector.load %arg1[%c672, %c0_158] : memref<1224x128xf32, #tpu.memory_space<vmem>>, vector<1x32xf32>
    %538 = vector.broadcast %537 : vector<1x32xf32> to vector<16x32xf32>
    %539 = arith.addf %536, %538 : vector<16x32xf32>
    %c680 = arith.constant 680 : index
    %c0_159 = arith.constant 0 : index
    %540 = vector.load %arg1[%c680, %c0_159] : memref<1224x128xf32, #tpu.memory_space<vmem>>, vector<32x64xf32>
    %cst_160 = arith.constant dense<0.000000e+00> : vector<16x64xf32>
    %541 = tpu.matmul %422, %540, %cst_160 {dimension_numbers = #tpu.dot_dimension_numbers<[1], [0], [0], [1], [0, 0, 1, 1], [], []>} : vector<16x32xf32>, vector<32x64xf32>, vector<16x64xf32> -> vector<16x64xf32>
    %c712 = arith.constant 712 : index
    %c0_161 = arith.constant 0 : index
    %542 = vector.load %arg1[%c712, %c0_161] : memref<1224x128xf32, #tpu.memory_space<vmem>>, vector<1x64xf32>
    %543 = vector.broadcast %542 : vector<1x64xf32> to vector<16x64xf32>
    %544 = arith.addf %541, %543 : vector<16x64xf32>
    %545 = vector.extract_strided_slice %544 {offsets = [0, 0], sizes = [16, 32], strides = [1, 1]} : vector<16x64xf32> to vector<16x32xf32>
    %546 = vector.extract_strided_slice %544 {offsets = [0, 32], sizes = [16, 32], strides = [1, 1]} : vector<16x64xf32> to vector<16x32xf32>
    %c720 = arith.constant 720 : index
    %c0_162 = arith.constant 0 : index
    %547 = vector.load %arg1[%c720, %c0_162] : memref<1224x128xf32, #tpu.memory_space<vmem>>, vector<32x32xf32>
    %c752 = arith.constant 752 : index
    %c0_163 = arith.constant 0 : index
    %548 = vector.load %arg1[%c752, %c0_163] : memref<1224x128xf32, #tpu.memory_space<vmem>>, vector<1x32xf32>
    %549 = vector.extract_strided_slice %539 {offsets = [0, 0], sizes = [16, 8], strides = [1, 1]} : vector<16x32xf32> to vector<16x8xf32>
    %550 = vector.extract_strided_slice %545 {offsets = [0, 0], sizes = [16, 8], strides = [1, 1]} : vector<16x32xf32> to vector<16x8xf32>
    %cst_164 = arith.constant dense<0.000000e+00> : vector<16x16xf32>
    %551 = tpu.matmul %549, %550, %cst_164 {dimension_numbers = #tpu.dot_dimension_numbers<[1], [1], [0], [0], [0, 0, 1, 0], [], []>} : vector<16x8xf32>, vector<16x8xf32>, vector<16x16xf32> -> vector<16x16xf32>
    %cst_165 = arith.constant 0.353553385 : f32
    %552 = vector.broadcast %cst_165 : f32 to vector<16x16xf32>
    %553 = arith.mulf %551, %552 : vector<16x16xf32>
    %554 = arith.addf %553, %100 : vector<16x16xf32>
    %cst_166 = arith.constant dense<0xFF800000> : vector<16xf32>
    %555 = vector.multi_reduction <maximumf>, %554, %cst_166 [1] : vector<16x16xf32> to vector<16xf32>
    %556 = vector.shape_cast %555 : vector<16xf32> to vector<16x1xf32>
    %557 = vector.broadcast %556 : vector<16x1xf32> to vector<16x16xf32>
    %558 = arith.subf %554, %557 : vector<16x16xf32>
    %559 = math.exp %558 : vector<16x16xf32>
    %cst_167 = arith.constant dense<0.000000e+00> : vector<16xf32>
    %560 = vector.multi_reduction <add>, %559, %cst_167 [1] : vector<16x16xf32> to vector<16xf32>
    %561 = vector.shape_cast %560 : vector<16xf32> to vector<16x1xf32>
    %562 = tpu.reciprocal %561 {approx = true} : vector<16x1xf32> -> vector<16x1xf32>
    %563 = vector.broadcast %562 : vector<16x1xf32> to vector<16x16xf32>
    %564 = arith.mulf %559, %563 : vector<16x16xf32>
    %565 = vector.extract_strided_slice %546 {offsets = [0, 0], sizes = [16, 8], strides = [1, 1]} : vector<16x32xf32> to vector<16x8xf32>
    %cst_168 = arith.constant dense<0.000000e+00> : vector<16x8xf32>
    %566 = tpu.matmul %564, %565, %cst_168 {dimension_numbers = #tpu.dot_dimension_numbers<[1], [0], [0], [1], [0, 0, 1, 1], [], []>} : vector<16x16xf32>, vector<16x8xf32>, vector<16x8xf32> -> vector<16x8xf32>
    %567 = vector.extract_strided_slice %539 {offsets = [0, 8], sizes = [16, 8], strides = [1, 1]} : vector<16x32xf32> to vector<16x8xf32>
    %568 = vector.extract_strided_slice %545 {offsets = [0, 8], sizes = [16, 8], strides = [1, 1]} : vector<16x32xf32> to vector<16x8xf32>
    %cst_169 = arith.constant dense<0.000000e+00> : vector<16x16xf32>
    %569 = tpu.matmul %567, %568, %cst_169 {dimension_numbers = #tpu.dot_dimension_numbers<[1], [1], [0], [0], [0, 0, 1, 0], [], []>} : vector<16x8xf32>, vector<16x8xf32>, vector<16x16xf32> -> vector<16x16xf32>
    %cst_170 = arith.constant 0.353553385 : f32
    %570 = vector.broadcast %cst_170 : f32 to vector<16x16xf32>
    %571 = arith.mulf %569, %570 : vector<16x16xf32>
    %572 = arith.addf %571, %100 : vector<16x16xf32>
    %cst_171 = arith.constant dense<0xFF800000> : vector<16xf32>
    %573 = vector.multi_reduction <maximumf>, %572, %cst_171 [1] : vector<16x16xf32> to vector<16xf32>
    %574 = vector.shape_cast %573 : vector<16xf32> to vector<16x1xf32>
    %575 = vector.broadcast %574 : vector<16x1xf32> to vector<16x16xf32>
    %576 = arith.subf %572, %575 : vector<16x16xf32>
    %577 = math.exp %576 : vector<16x16xf32>
    %cst_172 = arith.constant dense<0.000000e+00> : vector<16xf32>
    %578 = vector.multi_reduction <add>, %577, %cst_172 [1] : vector<16x16xf32> to vector<16xf32>
    %579 = vector.shape_cast %578 : vector<16xf32> to vector<16x1xf32>
    %580 = tpu.reciprocal %579 {approx = true} : vector<16x1xf32> -> vector<16x1xf32>
    %581 = vector.broadcast %580 : vector<16x1xf32> to vector<16x16xf32>
    %582 = arith.mulf %577, %581 : vector<16x16xf32>
    %583 = vector.extract_strided_slice %546 {offsets = [0, 8], sizes = [16, 8], strides = [1, 1]} : vector<16x32xf32> to vector<16x8xf32>
    %cst_173 = arith.constant dense<0.000000e+00> : vector<16x8xf32>
    %584 = tpu.matmul %582, %583, %cst_173 {dimension_numbers = #tpu.dot_dimension_numbers<[1], [0], [0], [1], [0, 0, 1, 1], [], []>} : vector<16x16xf32>, vector<16x8xf32>, vector<16x8xf32> -> vector<16x8xf32>
    %585 = vector.extract_strided_slice %539 {offsets = [0, 16], sizes = [16, 8], strides = [1, 1]} : vector<16x32xf32> to vector<16x8xf32>
    %586 = vector.extract_strided_slice %545 {offsets = [0, 16], sizes = [16, 8], strides = [1, 1]} : vector<16x32xf32> to vector<16x8xf32>
    %cst_174 = arith.constant dense<0.000000e+00> : vector<16x16xf32>
    %587 = tpu.matmul %585, %586, %cst_174 {dimension_numbers = #tpu.dot_dimension_numbers<[1], [1], [0], [0], [0, 0, 1, 0], [], []>} : vector<16x8xf32>, vector<16x8xf32>, vector<16x16xf32> -> vector<16x16xf32>
    %cst_175 = arith.constant 0.353553385 : f32
    %588 = vector.broadcast %cst_175 : f32 to vector<16x16xf32>
    %589 = arith.mulf %587, %588 : vector<16x16xf32>
    %590 = arith.addf %589, %100 : vector<16x16xf32>
    %cst_176 = arith.constant dense<0xFF800000> : vector<16xf32>
    %591 = vector.multi_reduction <maximumf>, %590, %cst_176 [1] : vector<16x16xf32> to vector<16xf32>
    %592 = vector.shape_cast %591 : vector<16xf32> to vector<16x1xf32>
    %593 = vector.broadcast %592 : vector<16x1xf32> to vector<16x16xf32>
    %594 = arith.subf %590, %593 : vector<16x16xf32>
    %595 = math.exp %594 : vector<16x16xf32>
    %cst_177 = arith.constant dense<0.000000e+00> : vector<16xf32>
    %596 = vector.multi_reduction <add>, %595, %cst_177 [1] : vector<16x16xf32> to vector<16xf32>
    %597 = vector.shape_cast %596 : vector<16xf32> to vector<16x1xf32>
    %598 = tpu.reciprocal %597 {approx = true} : vector<16x1xf32> -> vector<16x1xf32>
    %599 = vector.broadcast %598 : vector<16x1xf32> to vector<16x16xf32>
    %600 = arith.mulf %595, %599 : vector<16x16xf32>
    %601 = vector.extract_strided_slice %546 {offsets = [0, 16], sizes = [16, 8], strides = [1, 1]} : vector<16x32xf32> to vector<16x8xf32>
    %cst_178 = arith.constant dense<0.000000e+00> : vector<16x8xf32>
    %602 = tpu.matmul %600, %601, %cst_178 {dimension_numbers = #tpu.dot_dimension_numbers<[1], [0], [0], [1], [0, 0, 1, 1], [], []>} : vector<16x16xf32>, vector<16x8xf32>, vector<16x8xf32> -> vector<16x8xf32>
    %603 = vector.extract_strided_slice %539 {offsets = [0, 24], sizes = [16, 8], strides = [1, 1]} : vector<16x32xf32> to vector<16x8xf32>
    %604 = vector.extract_strided_slice %545 {offsets = [0, 24], sizes = [16, 8], strides = [1, 1]} : vector<16x32xf32> to vector<16x8xf32>
    %cst_179 = arith.constant dense<0.000000e+00> : vector<16x16xf32>
    %605 = tpu.matmul %603, %604, %cst_179 {dimension_numbers = #tpu.dot_dimension_numbers<[1], [1], [0], [0], [0, 0, 1, 0], [], []>} : vector<16x8xf32>, vector<16x8xf32>, vector<16x16xf32> -> vector<16x16xf32>
    %cst_180 = arith.constant 0.353553385 : f32
    %606 = vector.broadcast %cst_180 : f32 to vector<16x16xf32>
    %607 = arith.mulf %605, %606 : vector<16x16xf32>
    %608 = arith.addf %607, %100 : vector<16x16xf32>
    %cst_181 = arith.constant dense<0xFF800000> : vector<16xf32>
    %609 = vector.multi_reduction <maximumf>, %608, %cst_181 [1] : vector<16x16xf32> to vector<16xf32>
    %610 = vector.shape_cast %609 : vector<16xf32> to vector<16x1xf32>
    %611 = vector.broadcast %610 : vector<16x1xf32> to vector<16x16xf32>
    %612 = arith.subf %608, %611 : vector<16x16xf32>
    %613 = math.exp %612 : vector<16x16xf32>
    %cst_182 = arith.constant dense<0.000000e+00> : vector<16xf32>
    %614 = vector.multi_reduction <add>, %613, %cst_182 [1] : vector<16x16xf32> to vector<16xf32>
    %615 = vector.shape_cast %614 : vector<16xf32> to vector<16x1xf32>
    %616 = tpu.reciprocal %615 {approx = true} : vector<16x1xf32> -> vector<16x1xf32>
    %617 = vector.broadcast %616 : vector<16x1xf32> to vector<16x16xf32>
    %618 = arith.mulf %613, %617 : vector<16x16xf32>
    %619 = vector.extract_strided_slice %546 {offsets = [0, 24], sizes = [16, 8], strides = [1, 1]} : vector<16x32xf32> to vector<16x8xf32>
    %cst_183 = arith.constant dense<0.000000e+00> : vector<16x8xf32>
    %620 = tpu.matmul %618, %619, %cst_183 {dimension_numbers = #tpu.dot_dimension_numbers<[1], [0], [0], [1], [0, 0, 1, 1], [], []>} : vector<16x16xf32>, vector<16x8xf32>, vector<16x8xf32> -> vector<16x8xf32>
    %621 = tpu.concatenate %566, %584, %602, %620 in 1 : vector<16x8xf32>, vector<16x8xf32>, vector<16x8xf32>, vector<16x8xf32> -> vector<16x32xf32>
    %cst_184 = arith.constant dense<0.000000e+00> : vector<16x32xf32>
    %622 = tpu.matmul %621, %547, %cst_184 {dimension_numbers = #tpu.dot_dimension_numbers<[1], [0], [0], [1], [0, 0, 1, 1], [], []>} : vector<16x32xf32>, vector<32x32xf32>, vector<16x32xf32> -> vector<16x32xf32>
    %623 = vector.broadcast %548 : vector<1x32xf32> to vector<16x32xf32>
    %624 = arith.addf %622, %623 : vector<16x32xf32>
    %625 = arith.addf %624, %534 : vector<16x32xf32>
    %c760 = arith.constant 760 : index
    %c0_185 = arith.constant 0 : index
    %626 = vector.load %arg1[%c760, %c0_185] : memref<1224x128xf32, #tpu.memory_space<vmem>>, vector<2x32xf32>
    %627 = vector.extract_strided_slice %626 {offsets = [0, 0], sizes = [1, 32], strides = [1, 1]} : vector<2x32xf32> to vector<1x32xf32>
    %628 = vector.extract_strided_slice %626 {offsets = [1, 0], sizes = [1, 32], strides = [1, 1]} : vector<2x32xf32> to vector<1x32xf32>
    %cst_186 = arith.constant dense<0.000000e+00> : vector<16xf32>
    %629 = vector.multi_reduction <add>, %625, %cst_186 [1] : vector<16x32xf32> to vector<16xf32>
    %630 = vector.shape_cast %629 : vector<16xf32> to vector<16x1xf32>
    %631 = arith.mulf %625, %625 : vector<16x32xf32>
    %cst_187 = arith.constant dense<0.000000e+00> : vector<16xf32>
    %632 = vector.multi_reduction <add>, %631, %cst_187 [1] : vector<16x32xf32> to vector<16xf32>
    %633 = vector.shape_cast %632 : vector<16xf32> to vector<16x1xf32>
    %cst_188 = arith.constant 3.125000e-02 : f32
    %634 = vector.broadcast %cst_188 : f32 to vector<16x1xf32>
    %635 = arith.mulf %630, %634 : vector<16x1xf32>
    %cst_189 = arith.constant 3.125000e-02 : f32
    %636 = vector.broadcast %cst_189 : f32 to vector<16x1xf32>
    %637 = arith.mulf %633, %636 : vector<16x1xf32>
    %638 = arith.mulf %635, %635 : vector<16x1xf32>
    %639 = arith.subf %637, %638 : vector<16x1xf32>
    %640 = vector.broadcast %635 : vector<16x1xf32> to vector<16x32xf32>
    %641 = arith.subf %625, %640 : vector<16x32xf32>
    %cst_190 = arith.constant 9.99999974E-6 : f32
    %642 = vector.broadcast %cst_190 : f32 to vector<16x1xf32>
    %643 = arith.addf %639, %642 : vector<16x1xf32>
    %644 = math.rsqrt %643 : vector<16x1xf32>
    %645 = vector.broadcast %644 : vector<16x1xf32> to vector<16x32xf32>
    %646 = arith.mulf %641, %645 : vector<16x32xf32>
    %647 = vector.broadcast %627 : vector<1x32xf32> to vector<16x32xf32>
    %648 = arith.mulf %646, %647 : vector<16x32xf32>
    %649 = vector.broadcast %628 : vector<1x32xf32> to vector<16x32xf32>
    %650 = arith.addf %648, %649 : vector<16x32xf32>
    %c768 = arith.constant 768 : index
    %c0_191 = arith.constant 0 : index
    %651 = vector.load %arg1[%c768, %c0_191] : memref<1224x128xf32, #tpu.memory_space<vmem>>, vector<32x64xf32>
    %cst_192 = arith.constant dense<0.000000e+00> : vector<16x64xf32>
    %652 = tpu.matmul %650, %651, %cst_192 {dimension_numbers = #tpu.dot_dimension_numbers<[1], [0], [0], [1], [0, 0, 1, 1], [], []>} : vector<16x32xf32>, vector<32x64xf32>, vector<16x64xf32> -> vector<16x64xf32>
    %c800 = arith.constant 800 : index
    %c0_193 = arith.constant 0 : index
    %653 = vector.load %arg1[%c800, %c0_193] : memref<1224x128xf32, #tpu.memory_space<vmem>>, vector<1x64xf32>
    %654 = vector.broadcast %653 : vector<1x64xf32> to vector<16x64xf32>
    %655 = arith.addf %652, %654 : vector<16x64xf32>
    %656 = arith.mulf %655, %655 : vector<16x64xf32>
    %657 = arith.mulf %655, %656 : vector<16x64xf32>
    %cst_194 = arith.constant 4.471500e-02 : f32
    %658 = vector.broadcast %cst_194 : f32 to vector<16x64xf32>
    %659 = arith.mulf %658, %657 : vector<16x64xf32>
    %660 = arith.addf %655, %659 : vector<16x64xf32>
    %cst_195 = arith.constant 0.797884583 : f32
    %661 = vector.broadcast %cst_195 : f32 to vector<16x64xf32>
    %662 = arith.mulf %661, %660 : vector<16x64xf32>
    %663 = math.tanh %662 : vector<16x64xf32>
    %cst_196 = arith.constant 1.000000e+00 : f32
    %664 = vector.broadcast %cst_196 : f32 to vector<16x64xf32>
    %665 = arith.addf %664, %663 : vector<16x64xf32>
    %cst_197 = arith.constant 5.000000e-01 : f32
    %666 = vector.broadcast %cst_197 : f32 to vector<16x64xf32>
    %667 = arith.mulf %666, %665 : vector<16x64xf32>
    %668 = arith.mulf %655, %667 : vector<16x64xf32>
    %c808 = arith.constant 808 : index
    %c0_198 = arith.constant 0 : index
    %669 = vector.load %arg1[%c808, %c0_198] : memref<1224x128xf32, #tpu.memory_space<vmem>>, vector<64x32xf32>
    %cst_199 = arith.constant dense<0.000000e+00> : vector<16x32xf32>
    %670 = tpu.matmul %668, %669, %cst_199 {dimension_numbers = #tpu.dot_dimension_numbers<[1], [0], [0], [1], [0, 0, 1, 1], [], []>} : vector<16x64xf32>, vector<64x32xf32>, vector<16x32xf32> -> vector<16x32xf32>
    %c872 = arith.constant 872 : index
    %c0_200 = arith.constant 0 : index
    %671 = vector.load %arg1[%c872, %c0_200] : memref<1224x128xf32, #tpu.memory_space<vmem>>, vector<1x32xf32>
    %672 = vector.broadcast %671 : vector<1x32xf32> to vector<16x32xf32>
    %673 = arith.addf %670, %672 : vector<16x32xf32>
    %674 = arith.addf %673, %650 : vector<16x32xf32>
    %c880 = arith.constant 880 : index
    %c0_201 = arith.constant 0 : index
    %675 = vector.load %arg1[%c880, %c0_201] : memref<1224x128xf32, #tpu.memory_space<vmem>>, vector<2x32xf32>
    %676 = vector.extract_strided_slice %675 {offsets = [0, 0], sizes = [1, 32], strides = [1, 1]} : vector<2x32xf32> to vector<1x32xf32>
    %677 = vector.extract_strided_slice %675 {offsets = [1, 0], sizes = [1, 32], strides = [1, 1]} : vector<2x32xf32> to vector<1x32xf32>
    %cst_202 = arith.constant dense<0.000000e+00> : vector<16xf32>
    %678 = vector.multi_reduction <add>, %674, %cst_202 [1] : vector<16x32xf32> to vector<16xf32>
    %679 = vector.shape_cast %678 : vector<16xf32> to vector<16x1xf32>
    %680 = arith.mulf %674, %674 : vector<16x32xf32>
    %cst_203 = arith.constant dense<0.000000e+00> : vector<16xf32>
    %681 = vector.multi_reduction <add>, %680, %cst_203 [1] : vector<16x32xf32> to vector<16xf32>
    %682 = vector.shape_cast %681 : vector<16xf32> to vector<16x1xf32>
    %cst_204 = arith.constant 3.125000e-02 : f32
    %683 = vector.broadcast %cst_204 : f32 to vector<16x1xf32>
    %684 = arith.mulf %679, %683 : vector<16x1xf32>
    %cst_205 = arith.constant 3.125000e-02 : f32
    %685 = vector.broadcast %cst_205 : f32 to vector<16x1xf32>
    %686 = arith.mulf %682, %685 : vector<16x1xf32>
    %687 = arith.mulf %684, %684 : vector<16x1xf32>
    %688 = arith.subf %686, %687 : vector<16x1xf32>
    %689 = vector.broadcast %684 : vector<16x1xf32> to vector<16x32xf32>
    %690 = arith.subf %674, %689 : vector<16x32xf32>
    %cst_206 = arith.constant 9.99999974E-6 : f32
    %691 = vector.broadcast %cst_206 : f32 to vector<16x1xf32>
    %692 = arith.addf %688, %691 : vector<16x1xf32>
    %693 = math.rsqrt %692 : vector<16x1xf32>
    %694 = vector.broadcast %693 : vector<16x1xf32> to vector<16x32xf32>
    %695 = arith.mulf %690, %694 : vector<16x32xf32>
    %696 = vector.broadcast %676 : vector<1x32xf32> to vector<16x32xf32>
    %697 = arith.mulf %695, %696 : vector<16x32xf32>
    %698 = vector.broadcast %677 : vector<1x32xf32> to vector<16x32xf32>
    %699 = arith.addf %697, %698 : vector<16x32xf32>
    %c888 = arith.constant 888 : index
    %c0_207 = arith.constant 0 : index
    %700 = vector.load %arg1[%c888, %c0_207] : memref<1224x128xf32, #tpu.memory_space<vmem>>, vector<32x96xf32>
    %cst_208 = arith.constant dense<0.000000e+00> : vector<16x96xf32>
    %701 = tpu.matmul %699, %700, %cst_208 {dimension_numbers = #tpu.dot_dimension_numbers<[1], [0], [0], [1], [0, 0, 1, 1], [], []>} : vector<16x32xf32>, vector<32x96xf32>, vector<16x96xf32> -> vector<16x96xf32>
    %c920 = arith.constant 920 : index
    %c0_209 = arith.constant 0 : index
    %702 = vector.load %arg1[%c920, %c0_209] : memref<1224x128xf32, #tpu.memory_space<vmem>>, vector<1x96xf32>
    %703 = vector.broadcast %702 : vector<1x96xf32> to vector<16x96xf32>
    %704 = arith.addf %701, %703 : vector<16x96xf32>
    %705 = vector.extract_strided_slice %704 {offsets = [0, 0], sizes = [16, 32], strides = [1, 1]} : vector<16x96xf32> to vector<16x32xf32>
    %706 = vector.extract_strided_slice %704 {offsets = [0, 32], sizes = [16, 32], strides = [1, 1]} : vector<16x96xf32> to vector<16x32xf32>
    %707 = vector.extract_strided_slice %704 {offsets = [0, 64], sizes = [16, 32], strides = [1, 1]} : vector<16x96xf32> to vector<16x32xf32>
    %c928 = arith.constant 928 : index
    %c0_210 = arith.constant 0 : index
    %708 = vector.load %arg1[%c928, %c0_210] : memref<1224x128xf32, #tpu.memory_space<vmem>>, vector<32x32xf32>
    %c960 = arith.constant 960 : index
    %c0_211 = arith.constant 0 : index
    %709 = vector.load %arg1[%c960, %c0_211] : memref<1224x128xf32, #tpu.memory_space<vmem>>, vector<1x32xf32>
    %710 = vector.extract_strided_slice %705 {offsets = [0, 0], sizes = [16, 8], strides = [1, 1]} : vector<16x32xf32> to vector<16x8xf32>
    %711 = vector.extract_strided_slice %706 {offsets = [0, 0], sizes = [16, 8], strides = [1, 1]} : vector<16x32xf32> to vector<16x8xf32>
    %cst_212 = arith.constant dense<0.000000e+00> : vector<16x16xf32>
    %712 = tpu.matmul %710, %711, %cst_212 {dimension_numbers = #tpu.dot_dimension_numbers<[1], [1], [0], [0], [0, 0, 1, 0], [], []>} : vector<16x8xf32>, vector<16x8xf32>, vector<16x16xf32> -> vector<16x16xf32>
    %cst_213 = arith.constant 0.353553385 : f32
    %713 = vector.broadcast %cst_213 : f32 to vector<16x16xf32>
    %714 = arith.mulf %712, %713 : vector<16x16xf32>
    %715 = arith.addf %714, %90 : vector<16x16xf32>
    %cst_214 = arith.constant dense<0xFF800000> : vector<16xf32>
    %716 = vector.multi_reduction <maximumf>, %715, %cst_214 [1] : vector<16x16xf32> to vector<16xf32>
    %717 = vector.shape_cast %716 : vector<16xf32> to vector<16x1xf32>
    %718 = vector.broadcast %717 : vector<16x1xf32> to vector<16x16xf32>
    %719 = arith.subf %715, %718 : vector<16x16xf32>
    %720 = math.exp %719 : vector<16x16xf32>
    %cst_215 = arith.constant dense<0.000000e+00> : vector<16xf32>
    %721 = vector.multi_reduction <add>, %720, %cst_215 [1] : vector<16x16xf32> to vector<16xf32>
    %722 = vector.shape_cast %721 : vector<16xf32> to vector<16x1xf32>
    %723 = tpu.reciprocal %722 {approx = true} : vector<16x1xf32> -> vector<16x1xf32>
    %724 = vector.broadcast %723 : vector<16x1xf32> to vector<16x16xf32>
    %725 = arith.mulf %720, %724 : vector<16x16xf32>
    %726 = vector.extract_strided_slice %707 {offsets = [0, 0], sizes = [16, 8], strides = [1, 1]} : vector<16x32xf32> to vector<16x8xf32>
    %cst_216 = arith.constant dense<0.000000e+00> : vector<16x8xf32>
    %727 = tpu.matmul %725, %726, %cst_216 {dimension_numbers = #tpu.dot_dimension_numbers<[1], [0], [0], [1], [0, 0, 1, 1], [], []>} : vector<16x16xf32>, vector<16x8xf32>, vector<16x8xf32> -> vector<16x8xf32>
    %728 = vector.extract_strided_slice %705 {offsets = [0, 8], sizes = [16, 8], strides = [1, 1]} : vector<16x32xf32> to vector<16x8xf32>
    %729 = vector.extract_strided_slice %706 {offsets = [0, 8], sizes = [16, 8], strides = [1, 1]} : vector<16x32xf32> to vector<16x8xf32>
    %cst_217 = arith.constant dense<0.000000e+00> : vector<16x16xf32>
    %730 = tpu.matmul %728, %729, %cst_217 {dimension_numbers = #tpu.dot_dimension_numbers<[1], [1], [0], [0], [0, 0, 1, 0], [], []>} : vector<16x8xf32>, vector<16x8xf32>, vector<16x16xf32> -> vector<16x16xf32>
    %cst_218 = arith.constant 0.353553385 : f32
    %731 = vector.broadcast %cst_218 : f32 to vector<16x16xf32>
    %732 = arith.mulf %730, %731 : vector<16x16xf32>
    %733 = arith.addf %732, %90 : vector<16x16xf32>
    %cst_219 = arith.constant dense<0xFF800000> : vector<16xf32>
    %734 = vector.multi_reduction <maximumf>, %733, %cst_219 [1] : vector<16x16xf32> to vector<16xf32>
    %735 = vector.shape_cast %734 : vector<16xf32> to vector<16x1xf32>
    %736 = vector.broadcast %735 : vector<16x1xf32> to vector<16x16xf32>
    %737 = arith.subf %733, %736 : vector<16x16xf32>
    %738 = math.exp %737 : vector<16x16xf32>
    %cst_220 = arith.constant dense<0.000000e+00> : vector<16xf32>
    %739 = vector.multi_reduction <add>, %738, %cst_220 [1] : vector<16x16xf32> to vector<16xf32>
    %740 = vector.shape_cast %739 : vector<16xf32> to vector<16x1xf32>
    %741 = tpu.reciprocal %740 {approx = true} : vector<16x1xf32> -> vector<16x1xf32>
    %742 = vector.broadcast %741 : vector<16x1xf32> to vector<16x16xf32>
    %743 = arith.mulf %738, %742 : vector<16x16xf32>
    %744 = vector.extract_strided_slice %707 {offsets = [0, 8], sizes = [16, 8], strides = [1, 1]} : vector<16x32xf32> to vector<16x8xf32>
    %cst_221 = arith.constant dense<0.000000e+00> : vector<16x8xf32>
    %745 = tpu.matmul %743, %744, %cst_221 {dimension_numbers = #tpu.dot_dimension_numbers<[1], [0], [0], [1], [0, 0, 1, 1], [], []>} : vector<16x16xf32>, vector<16x8xf32>, vector<16x8xf32> -> vector<16x8xf32>
    %746 = vector.extract_strided_slice %705 {offsets = [0, 16], sizes = [16, 8], strides = [1, 1]} : vector<16x32xf32> to vector<16x8xf32>
    %747 = vector.extract_strided_slice %706 {offsets = [0, 16], sizes = [16, 8], strides = [1, 1]} : vector<16x32xf32> to vector<16x8xf32>
    %cst_222 = arith.constant dense<0.000000e+00> : vector<16x16xf32>
    %748 = tpu.matmul %746, %747, %cst_222 {dimension_numbers = #tpu.dot_dimension_numbers<[1], [1], [0], [0], [0, 0, 1, 0], [], []>} : vector<16x8xf32>, vector<16x8xf32>, vector<16x16xf32> -> vector<16x16xf32>
    %cst_223 = arith.constant 0.353553385 : f32
    %749 = vector.broadcast %cst_223 : f32 to vector<16x16xf32>
    %750 = arith.mulf %748, %749 : vector<16x16xf32>
    %751 = arith.addf %750, %90 : vector<16x16xf32>
    %cst_224 = arith.constant dense<0xFF800000> : vector<16xf32>
    %752 = vector.multi_reduction <maximumf>, %751, %cst_224 [1] : vector<16x16xf32> to vector<16xf32>
    %753 = vector.shape_cast %752 : vector<16xf32> to vector<16x1xf32>
    %754 = vector.broadcast %753 : vector<16x1xf32> to vector<16x16xf32>
    %755 = arith.subf %751, %754 : vector<16x16xf32>
    %756 = math.exp %755 : vector<16x16xf32>
    %cst_225 = arith.constant dense<0.000000e+00> : vector<16xf32>
    %757 = vector.multi_reduction <add>, %756, %cst_225 [1] : vector<16x16xf32> to vector<16xf32>
    %758 = vector.shape_cast %757 : vector<16xf32> to vector<16x1xf32>
    %759 = tpu.reciprocal %758 {approx = true} : vector<16x1xf32> -> vector<16x1xf32>
    %760 = vector.broadcast %759 : vector<16x1xf32> to vector<16x16xf32>
    %761 = arith.mulf %756, %760 : vector<16x16xf32>
    %762 = vector.extract_strided_slice %707 {offsets = [0, 16], sizes = [16, 8], strides = [1, 1]} : vector<16x32xf32> to vector<16x8xf32>
    %cst_226 = arith.constant dense<0.000000e+00> : vector<16x8xf32>
    %763 = tpu.matmul %761, %762, %cst_226 {dimension_numbers = #tpu.dot_dimension_numbers<[1], [0], [0], [1], [0, 0, 1, 1], [], []>} : vector<16x16xf32>, vector<16x8xf32>, vector<16x8xf32> -> vector<16x8xf32>
    %764 = vector.extract_strided_slice %705 {offsets = [0, 24], sizes = [16, 8], strides = [1, 1]} : vector<16x32xf32> to vector<16x8xf32>
    %765 = vector.extract_strided_slice %706 {offsets = [0, 24], sizes = [16, 8], strides = [1, 1]} : vector<16x32xf32> to vector<16x8xf32>
    %cst_227 = arith.constant dense<0.000000e+00> : vector<16x16xf32>
    %766 = tpu.matmul %764, %765, %cst_227 {dimension_numbers = #tpu.dot_dimension_numbers<[1], [1], [0], [0], [0, 0, 1, 0], [], []>} : vector<16x8xf32>, vector<16x8xf32>, vector<16x16xf32> -> vector<16x16xf32>
    %cst_228 = arith.constant 0.353553385 : f32
    %767 = vector.broadcast %cst_228 : f32 to vector<16x16xf32>
    %768 = arith.mulf %766, %767 : vector<16x16xf32>
    %769 = arith.addf %768, %90 : vector<16x16xf32>
    %cst_229 = arith.constant dense<0xFF800000> : vector<16xf32>
    %770 = vector.multi_reduction <maximumf>, %769, %cst_229 [1] : vector<16x16xf32> to vector<16xf32>
    %771 = vector.shape_cast %770 : vector<16xf32> to vector<16x1xf32>
    %772 = vector.broadcast %771 : vector<16x1xf32> to vector<16x16xf32>
    %773 = arith.subf %769, %772 : vector<16x16xf32>
    %774 = math.exp %773 : vector<16x16xf32>
    %cst_230 = arith.constant dense<0.000000e+00> : vector<16xf32>
    %775 = vector.multi_reduction <add>, %774, %cst_230 [1] : vector<16x16xf32> to vector<16xf32>
    %776 = vector.shape_cast %775 : vector<16xf32> to vector<16x1xf32>
    %777 = tpu.reciprocal %776 {approx = true} : vector<16x1xf32> -> vector<16x1xf32>
    %778 = vector.broadcast %777 : vector<16x1xf32> to vector<16x16xf32>
    %779 = arith.mulf %774, %778 : vector<16x16xf32>
    %780 = vector.extract_strided_slice %707 {offsets = [0, 24], sizes = [16, 8], strides = [1, 1]} : vector<16x32xf32> to vector<16x8xf32>
    %cst_231 = arith.constant dense<0.000000e+00> : vector<16x8xf32>
    %781 = tpu.matmul %779, %780, %cst_231 {dimension_numbers = #tpu.dot_dimension_numbers<[1], [0], [0], [1], [0, 0, 1, 1], [], []>} : vector<16x16xf32>, vector<16x8xf32>, vector<16x8xf32> -> vector<16x8xf32>
    %782 = tpu.concatenate %727, %745, %763, %781 in 1 : vector<16x8xf32>, vector<16x8xf32>, vector<16x8xf32>, vector<16x8xf32> -> vector<16x32xf32>
    %cst_232 = arith.constant dense<0.000000e+00> : vector<16x32xf32>
    %783 = tpu.matmul %782, %708, %cst_232 {dimension_numbers = #tpu.dot_dimension_numbers<[1], [0], [0], [1], [0, 0, 1, 1], [], []>} : vector<16x32xf32>, vector<32x32xf32>, vector<16x32xf32> -> vector<16x32xf32>
    %784 = vector.broadcast %709 : vector<1x32xf32> to vector<16x32xf32>
    %785 = arith.addf %783, %784 : vector<16x32xf32>
    %786 = arith.addf %785, %699 : vector<16x32xf32>
    %c968 = arith.constant 968 : index
    %c0_233 = arith.constant 0 : index
    %787 = vector.load %arg1[%c968, %c0_233] : memref<1224x128xf32, #tpu.memory_space<vmem>>, vector<2x32xf32>
    %788 = vector.extract_strided_slice %787 {offsets = [0, 0], sizes = [1, 32], strides = [1, 1]} : vector<2x32xf32> to vector<1x32xf32>
    %789 = vector.extract_strided_slice %787 {offsets = [1, 0], sizes = [1, 32], strides = [1, 1]} : vector<2x32xf32> to vector<1x32xf32>
    %cst_234 = arith.constant dense<0.000000e+00> : vector<16xf32>
    %790 = vector.multi_reduction <add>, %786, %cst_234 [1] : vector<16x32xf32> to vector<16xf32>
    %791 = vector.shape_cast %790 : vector<16xf32> to vector<16x1xf32>
    %792 = arith.mulf %786, %786 : vector<16x32xf32>
    %cst_235 = arith.constant dense<0.000000e+00> : vector<16xf32>
    %793 = vector.multi_reduction <add>, %792, %cst_235 [1] : vector<16x32xf32> to vector<16xf32>
    %794 = vector.shape_cast %793 : vector<16xf32> to vector<16x1xf32>
    %cst_236 = arith.constant 3.125000e-02 : f32
    %795 = vector.broadcast %cst_236 : f32 to vector<16x1xf32>
    %796 = arith.mulf %791, %795 : vector<16x1xf32>
    %cst_237 = arith.constant 3.125000e-02 : f32
    %797 = vector.broadcast %cst_237 : f32 to vector<16x1xf32>
    %798 = arith.mulf %794, %797 : vector<16x1xf32>
    %799 = arith.mulf %796, %796 : vector<16x1xf32>
    %800 = arith.subf %798, %799 : vector<16x1xf32>
    %801 = vector.broadcast %796 : vector<16x1xf32> to vector<16x32xf32>
    %802 = arith.subf %786, %801 : vector<16x32xf32>
    %cst_238 = arith.constant 9.99999974E-6 : f32
    %803 = vector.broadcast %cst_238 : f32 to vector<16x1xf32>
    %804 = arith.addf %800, %803 : vector<16x1xf32>
    %805 = math.rsqrt %804 : vector<16x1xf32>
    %806 = vector.broadcast %805 : vector<16x1xf32> to vector<16x32xf32>
    %807 = arith.mulf %802, %806 : vector<16x32xf32>
    %808 = vector.broadcast %788 : vector<1x32xf32> to vector<16x32xf32>
    %809 = arith.mulf %807, %808 : vector<16x32xf32>
    %810 = vector.broadcast %789 : vector<1x32xf32> to vector<16x32xf32>
    %811 = arith.addf %809, %810 : vector<16x32xf32>
    %c976 = arith.constant 976 : index
    %c0_239 = arith.constant 0 : index
    %812 = vector.load %arg1[%c976, %c0_239] : memref<1224x128xf32, #tpu.memory_space<vmem>>, vector<32x32xf32>
    %cst_240 = arith.constant dense<0.000000e+00> : vector<16x32xf32>
    %813 = tpu.matmul %811, %812, %cst_240 {dimension_numbers = #tpu.dot_dimension_numbers<[1], [0], [0], [1], [0, 0, 1, 1], [], []>} : vector<16x32xf32>, vector<32x32xf32>, vector<16x32xf32> -> vector<16x32xf32>
    %c1008 = arith.constant 1008 : index
    %c0_241 = arith.constant 0 : index
    %814 = vector.load %arg1[%c1008, %c0_241] : memref<1224x128xf32, #tpu.memory_space<vmem>>, vector<1x32xf32>
    %815 = vector.broadcast %814 : vector<1x32xf32> to vector<16x32xf32>
    %816 = arith.addf %813, %815 : vector<16x32xf32>
    %c1016 = arith.constant 1016 : index
    %c0_242 = arith.constant 0 : index
    %817 = vector.load %arg1[%c1016, %c0_242] : memref<1224x128xf32, #tpu.memory_space<vmem>>, vector<32x64xf32>
    %cst_243 = arith.constant dense<0.000000e+00> : vector<16x64xf32>
    %818 = tpu.matmul %422, %817, %cst_243 {dimension_numbers = #tpu.dot_dimension_numbers<[1], [0], [0], [1], [0, 0, 1, 1], [], []>} : vector<16x32xf32>, vector<32x64xf32>, vector<16x64xf32> -> vector<16x64xf32>
    %c1048 = arith.constant 1048 : index
    %c0_244 = arith.constant 0 : index
    %819 = vector.load %arg1[%c1048, %c0_244] : memref<1224x128xf32, #tpu.memory_space<vmem>>, vector<1x64xf32>
    %820 = vector.broadcast %819 : vector<1x64xf32> to vector<16x64xf32>
    %821 = arith.addf %818, %820 : vector<16x64xf32>
    %822 = vector.extract_strided_slice %821 {offsets = [0, 0], sizes = [16, 32], strides = [1, 1]} : vector<16x64xf32> to vector<16x32xf32>
    %823 = vector.extract_strided_slice %821 {offsets = [0, 32], sizes = [16, 32], strides = [1, 1]} : vector<16x64xf32> to vector<16x32xf32>
    %c1056 = arith.constant 1056 : index
    %c0_245 = arith.constant 0 : index
    %824 = vector.load %arg1[%c1056, %c0_245] : memref<1224x128xf32, #tpu.memory_space<vmem>>, vector<32x32xf32>
    %c1088 = arith.constant 1088 : index
    %c0_246 = arith.constant 0 : index
    %825 = vector.load %arg1[%c1088, %c0_246] : memref<1224x128xf32, #tpu.memory_space<vmem>>, vector<1x32xf32>
    %826 = vector.extract_strided_slice %816 {offsets = [0, 0], sizes = [16, 8], strides = [1, 1]} : vector<16x32xf32> to vector<16x8xf32>
    %827 = vector.extract_strided_slice %822 {offsets = [0, 0], sizes = [16, 8], strides = [1, 1]} : vector<16x32xf32> to vector<16x8xf32>
    %cst_247 = arith.constant dense<0.000000e+00> : vector<16x16xf32>
    %828 = tpu.matmul %826, %827, %cst_247 {dimension_numbers = #tpu.dot_dimension_numbers<[1], [1], [0], [0], [0, 0, 1, 0], [], []>} : vector<16x8xf32>, vector<16x8xf32>, vector<16x16xf32> -> vector<16x16xf32>
    %cst_248 = arith.constant 0.353553385 : f32
    %829 = vector.broadcast %cst_248 : f32 to vector<16x16xf32>
    %830 = arith.mulf %828, %829 : vector<16x16xf32>
    %831 = arith.addf %830, %100 : vector<16x16xf32>
    %cst_249 = arith.constant dense<0xFF800000> : vector<16xf32>
    %832 = vector.multi_reduction <maximumf>, %831, %cst_249 [1] : vector<16x16xf32> to vector<16xf32>
    %833 = vector.shape_cast %832 : vector<16xf32> to vector<16x1xf32>
    %834 = vector.broadcast %833 : vector<16x1xf32> to vector<16x16xf32>
    %835 = arith.subf %831, %834 : vector<16x16xf32>
    %836 = math.exp %835 : vector<16x16xf32>
    %cst_250 = arith.constant dense<0.000000e+00> : vector<16xf32>
    %837 = vector.multi_reduction <add>, %836, %cst_250 [1] : vector<16x16xf32> to vector<16xf32>
    %838 = vector.shape_cast %837 : vector<16xf32> to vector<16x1xf32>
    %839 = tpu.reciprocal %838 {approx = true} : vector<16x1xf32> -> vector<16x1xf32>
    %840 = vector.broadcast %839 : vector<16x1xf32> to vector<16x16xf32>
    %841 = arith.mulf %836, %840 : vector<16x16xf32>
    %842 = vector.extract_strided_slice %823 {offsets = [0, 0], sizes = [16, 8], strides = [1, 1]} : vector<16x32xf32> to vector<16x8xf32>
    %cst_251 = arith.constant dense<0.000000e+00> : vector<16x8xf32>
    %843 = tpu.matmul %841, %842, %cst_251 {dimension_numbers = #tpu.dot_dimension_numbers<[1], [0], [0], [1], [0, 0, 1, 1], [], []>} : vector<16x16xf32>, vector<16x8xf32>, vector<16x8xf32> -> vector<16x8xf32>
    %844 = vector.extract_strided_slice %816 {offsets = [0, 8], sizes = [16, 8], strides = [1, 1]} : vector<16x32xf32> to vector<16x8xf32>
    %845 = vector.extract_strided_slice %822 {offsets = [0, 8], sizes = [16, 8], strides = [1, 1]} : vector<16x32xf32> to vector<16x8xf32>
    %cst_252 = arith.constant dense<0.000000e+00> : vector<16x16xf32>
    %846 = tpu.matmul %844, %845, %cst_252 {dimension_numbers = #tpu.dot_dimension_numbers<[1], [1], [0], [0], [0, 0, 1, 0], [], []>} : vector<16x8xf32>, vector<16x8xf32>, vector<16x16xf32> -> vector<16x16xf32>
    %cst_253 = arith.constant 0.353553385 : f32
    %847 = vector.broadcast %cst_253 : f32 to vector<16x16xf32>
    %848 = arith.mulf %846, %847 : vector<16x16xf32>
    %849 = arith.addf %848, %100 : vector<16x16xf32>
    %cst_254 = arith.constant dense<0xFF800000> : vector<16xf32>
    %850 = vector.multi_reduction <maximumf>, %849, %cst_254 [1] : vector<16x16xf32> to vector<16xf32>
    %851 = vector.shape_cast %850 : vector<16xf32> to vector<16x1xf32>
    %852 = vector.broadcast %851 : vector<16x1xf32> to vector<16x16xf32>
    %853 = arith.subf %849, %852 : vector<16x16xf32>
    %854 = math.exp %853 : vector<16x16xf32>
    %cst_255 = arith.constant dense<0.000000e+00> : vector<16xf32>
    %855 = vector.multi_reduction <add>, %854, %cst_255 [1] : vector<16x16xf32> to vector<16xf32>
    %856 = vector.shape_cast %855 : vector<16xf32> to vector<16x1xf32>
    %857 = tpu.reciprocal %856 {approx = true} : vector<16x1xf32> -> vector<16x1xf32>
    %858 = vector.broadcast %857 : vector<16x1xf32> to vector<16x16xf32>
    %859 = arith.mulf %854, %858 : vector<16x16xf32>
    %860 = vector.extract_strided_slice %823 {offsets = [0, 8], sizes = [16, 8], strides = [1, 1]} : vector<16x32xf32> to vector<16x8xf32>
    %cst_256 = arith.constant dense<0.000000e+00> : vector<16x8xf32>
    %861 = tpu.matmul %859, %860, %cst_256 {dimension_numbers = #tpu.dot_dimension_numbers<[1], [0], [0], [1], [0, 0, 1, 1], [], []>} : vector<16x16xf32>, vector<16x8xf32>, vector<16x8xf32> -> vector<16x8xf32>
    %862 = vector.extract_strided_slice %816 {offsets = [0, 16], sizes = [16, 8], strides = [1, 1]} : vector<16x32xf32> to vector<16x8xf32>
    %863 = vector.extract_strided_slice %822 {offsets = [0, 16], sizes = [16, 8], strides = [1, 1]} : vector<16x32xf32> to vector<16x8xf32>
    %cst_257 = arith.constant dense<0.000000e+00> : vector<16x16xf32>
    %864 = tpu.matmul %862, %863, %cst_257 {dimension_numbers = #tpu.dot_dimension_numbers<[1], [1], [0], [0], [0, 0, 1, 0], [], []>} : vector<16x8xf32>, vector<16x8xf32>, vector<16x16xf32> -> vector<16x16xf32>
    %cst_258 = arith.constant 0.353553385 : f32
    %865 = vector.broadcast %cst_258 : f32 to vector<16x16xf32>
    %866 = arith.mulf %864, %865 : vector<16x16xf32>
    %867 = arith.addf %866, %100 : vector<16x16xf32>
    %cst_259 = arith.constant dense<0xFF800000> : vector<16xf32>
    %868 = vector.multi_reduction <maximumf>, %867, %cst_259 [1] : vector<16x16xf32> to vector<16xf32>
    %869 = vector.shape_cast %868 : vector<16xf32> to vector<16x1xf32>
    %870 = vector.broadcast %869 : vector<16x1xf32> to vector<16x16xf32>
    %871 = arith.subf %867, %870 : vector<16x16xf32>
    %872 = math.exp %871 : vector<16x16xf32>
    %cst_260 = arith.constant dense<0.000000e+00> : vector<16xf32>
    %873 = vector.multi_reduction <add>, %872, %cst_260 [1] : vector<16x16xf32> to vector<16xf32>
    %874 = vector.shape_cast %873 : vector<16xf32> to vector<16x1xf32>
    %875 = tpu.reciprocal %874 {approx = true} : vector<16x1xf32> -> vector<16x1xf32>
    %876 = vector.broadcast %875 : vector<16x1xf32> to vector<16x16xf32>
    %877 = arith.mulf %872, %876 : vector<16x16xf32>
    %878 = vector.extract_strided_slice %823 {offsets = [0, 16], sizes = [16, 8], strides = [1, 1]} : vector<16x32xf32> to vector<16x8xf32>
    %cst_261 = arith.constant dense<0.000000e+00> : vector<16x8xf32>
    %879 = tpu.matmul %877, %878, %cst_261 {dimension_numbers = #tpu.dot_dimension_numbers<[1], [0], [0], [1], [0, 0, 1, 1], [], []>} : vector<16x16xf32>, vector<16x8xf32>, vector<16x8xf32> -> vector<16x8xf32>
    %880 = vector.extract_strided_slice %816 {offsets = [0, 24], sizes = [16, 8], strides = [1, 1]} : vector<16x32xf32> to vector<16x8xf32>
    %881 = vector.extract_strided_slice %822 {offsets = [0, 24], sizes = [16, 8], strides = [1, 1]} : vector<16x32xf32> to vector<16x8xf32>
    %cst_262 = arith.constant dense<0.000000e+00> : vector<16x16xf32>
    %882 = tpu.matmul %880, %881, %cst_262 {dimension_numbers = #tpu.dot_dimension_numbers<[1], [1], [0], [0], [0, 0, 1, 0], [], []>} : vector<16x8xf32>, vector<16x8xf32>, vector<16x16xf32> -> vector<16x16xf32>
    %cst_263 = arith.constant 0.353553385 : f32
    %883 = vector.broadcast %cst_263 : f32 to vector<16x16xf32>
    %884 = arith.mulf %882, %883 : vector<16x16xf32>
    %885 = arith.addf %884, %100 : vector<16x16xf32>
    %cst_264 = arith.constant dense<0xFF800000> : vector<16xf32>
    %886 = vector.multi_reduction <maximumf>, %885, %cst_264 [1] : vector<16x16xf32> to vector<16xf32>
    %887 = vector.shape_cast %886 : vector<16xf32> to vector<16x1xf32>
    %888 = vector.broadcast %887 : vector<16x1xf32> to vector<16x16xf32>
    %889 = arith.subf %885, %888 : vector<16x16xf32>
    %890 = math.exp %889 : vector<16x16xf32>
    %cst_265 = arith.constant dense<0.000000e+00> : vector<16xf32>
    %891 = vector.multi_reduction <add>, %890, %cst_265 [1] : vector<16x16xf32> to vector<16xf32>
    %892 = vector.shape_cast %891 : vector<16xf32> to vector<16x1xf32>
    %893 = tpu.reciprocal %892 {approx = true} : vector<16x1xf32> -> vector<16x1xf32>
    %894 = vector.broadcast %893 : vector<16x1xf32> to vector<16x16xf32>
    %895 = arith.mulf %890, %894 : vector<16x16xf32>
    %896 = vector.extract_strided_slice %823 {offsets = [0, 24], sizes = [16, 8], strides = [1, 1]} : vector<16x32xf32> to vector<16x8xf32>
    %cst_266 = arith.constant dense<0.000000e+00> : vector<16x8xf32>
    %897 = tpu.matmul %895, %896, %cst_266 {dimension_numbers = #tpu.dot_dimension_numbers<[1], [0], [0], [1], [0, 0, 1, 1], [], []>} : vector<16x16xf32>, vector<16x8xf32>, vector<16x8xf32> -> vector<16x8xf32>
    %898 = tpu.concatenate %843, %861, %879, %897 in 1 : vector<16x8xf32>, vector<16x8xf32>, vector<16x8xf32>, vector<16x8xf32> -> vector<16x32xf32>
    %cst_267 = arith.constant dense<0.000000e+00> : vector<16x32xf32>
    %899 = tpu.matmul %898, %824, %cst_267 {dimension_numbers = #tpu.dot_dimension_numbers<[1], [0], [0], [1], [0, 0, 1, 1], [], []>} : vector<16x32xf32>, vector<32x32xf32>, vector<16x32xf32> -> vector<16x32xf32>
    %900 = vector.broadcast %825 : vector<1x32xf32> to vector<16x32xf32>
    %901 = arith.addf %899, %900 : vector<16x32xf32>
    %902 = arith.addf %901, %811 : vector<16x32xf32>
    %c1096 = arith.constant 1096 : index
    %c0_268 = arith.constant 0 : index
    %903 = vector.load %arg1[%c1096, %c0_268] : memref<1224x128xf32, #tpu.memory_space<vmem>>, vector<2x32xf32>
    %904 = vector.extract_strided_slice %903 {offsets = [0, 0], sizes = [1, 32], strides = [1, 1]} : vector<2x32xf32> to vector<1x32xf32>
    %905 = vector.extract_strided_slice %903 {offsets = [1, 0], sizes = [1, 32], strides = [1, 1]} : vector<2x32xf32> to vector<1x32xf32>
    %cst_269 = arith.constant dense<0.000000e+00> : vector<16xf32>
    %906 = vector.multi_reduction <add>, %902, %cst_269 [1] : vector<16x32xf32> to vector<16xf32>
    %907 = vector.shape_cast %906 : vector<16xf32> to vector<16x1xf32>
    %908 = arith.mulf %902, %902 : vector<16x32xf32>
    %cst_270 = arith.constant dense<0.000000e+00> : vector<16xf32>
    %909 = vector.multi_reduction <add>, %908, %cst_270 [1] : vector<16x32xf32> to vector<16xf32>
    %910 = vector.shape_cast %909 : vector<16xf32> to vector<16x1xf32>
    %cst_271 = arith.constant 3.125000e-02 : f32
    %911 = vector.broadcast %cst_271 : f32 to vector<16x1xf32>
    %912 = arith.mulf %907, %911 : vector<16x1xf32>
    %cst_272 = arith.constant 3.125000e-02 : f32
    %913 = vector.broadcast %cst_272 : f32 to vector<16x1xf32>
    %914 = arith.mulf %910, %913 : vector<16x1xf32>
    %915 = arith.mulf %912, %912 : vector<16x1xf32>
    %916 = arith.subf %914, %915 : vector<16x1xf32>
    %917 = vector.broadcast %912 : vector<16x1xf32> to vector<16x32xf32>
    %918 = arith.subf %902, %917 : vector<16x32xf32>
    %cst_273 = arith.constant 9.99999974E-6 : f32
    %919 = vector.broadcast %cst_273 : f32 to vector<16x1xf32>
    %920 = arith.addf %916, %919 : vector<16x1xf32>
    %921 = math.rsqrt %920 : vector<16x1xf32>
    %922 = vector.broadcast %921 : vector<16x1xf32> to vector<16x32xf32>
    %923 = arith.mulf %918, %922 : vector<16x32xf32>
    %924 = vector.broadcast %904 : vector<1x32xf32> to vector<16x32xf32>
    %925 = arith.mulf %923, %924 : vector<16x32xf32>
    %926 = vector.broadcast %905 : vector<1x32xf32> to vector<16x32xf32>
    %927 = arith.addf %925, %926 : vector<16x32xf32>
    %c1104 = arith.constant 1104 : index
    %c0_274 = arith.constant 0 : index
    %928 = vector.load %arg1[%c1104, %c0_274] : memref<1224x128xf32, #tpu.memory_space<vmem>>, vector<32x64xf32>
    %cst_275 = arith.constant dense<0.000000e+00> : vector<16x64xf32>
    %929 = tpu.matmul %927, %928, %cst_275 {dimension_numbers = #tpu.dot_dimension_numbers<[1], [0], [0], [1], [0, 0, 1, 1], [], []>} : vector<16x32xf32>, vector<32x64xf32>, vector<16x64xf32> -> vector<16x64xf32>
    %c1136 = arith.constant 1136 : index
    %c0_276 = arith.constant 0 : index
    %930 = vector.load %arg1[%c1136, %c0_276] : memref<1224x128xf32, #tpu.memory_space<vmem>>, vector<1x64xf32>
    %931 = vector.broadcast %930 : vector<1x64xf32> to vector<16x64xf32>
    %932 = arith.addf %929, %931 : vector<16x64xf32>
    %933 = arith.mulf %932, %932 : vector<16x64xf32>
    %934 = arith.mulf %932, %933 : vector<16x64xf32>
    %cst_277 = arith.constant 4.471500e-02 : f32
    %935 = vector.broadcast %cst_277 : f32 to vector<16x64xf32>
    %936 = arith.mulf %935, %934 : vector<16x64xf32>
    %937 = arith.addf %932, %936 : vector<16x64xf32>
    %cst_278 = arith.constant 0.797884583 : f32
    %938 = vector.broadcast %cst_278 : f32 to vector<16x64xf32>
    %939 = arith.mulf %938, %937 : vector<16x64xf32>
    %940 = math.tanh %939 : vector<16x64xf32>
    %cst_279 = arith.constant 1.000000e+00 : f32
    %941 = vector.broadcast %cst_279 : f32 to vector<16x64xf32>
    %942 = arith.addf %941, %940 : vector<16x64xf32>
    %cst_280 = arith.constant 5.000000e-01 : f32
    %943 = vector.broadcast %cst_280 : f32 to vector<16x64xf32>
    %944 = arith.mulf %943, %942 : vector<16x64xf32>
    %945 = arith.mulf %932, %944 : vector<16x64xf32>
    %c1144 = arith.constant 1144 : index
    %c0_281 = arith.constant 0 : index
    %946 = vector.load %arg1[%c1144, %c0_281] : memref<1224x128xf32, #tpu.memory_space<vmem>>, vector<64x32xf32>
    %cst_282 = arith.constant dense<0.000000e+00> : vector<16x32xf32>
    %947 = tpu.matmul %945, %946, %cst_282 {dimension_numbers = #tpu.dot_dimension_numbers<[1], [0], [0], [1], [0, 0, 1, 1], [], []>} : vector<16x64xf32>, vector<64x32xf32>, vector<16x32xf32> -> vector<16x32xf32>
    %c1208 = arith.constant 1208 : index
    %c0_283 = arith.constant 0 : index
    %948 = vector.load %arg1[%c1208, %c0_283] : memref<1224x128xf32, #tpu.memory_space<vmem>>, vector<1x32xf32>
    %949 = vector.broadcast %948 : vector<1x32xf32> to vector<16x32xf32>
    %950 = arith.addf %947, %949 : vector<16x32xf32>
    %951 = arith.addf %950, %927 : vector<16x32xf32>
    %c1216 = arith.constant 1216 : index
    %c0_284 = arith.constant 0 : index
    %952 = vector.load %arg1[%c1216, %c0_284] : memref<1224x128xf32, #tpu.memory_space<vmem>>, vector<2x32xf32>
    %953 = vector.extract_strided_slice %952 {offsets = [0, 0], sizes = [1, 32], strides = [1, 1]} : vector<2x32xf32> to vector<1x32xf32>
    %954 = vector.extract_strided_slice %952 {offsets = [1, 0], sizes = [1, 32], strides = [1, 1]} : vector<2x32xf32> to vector<1x32xf32>
    %cst_285 = arith.constant dense<0.000000e+00> : vector<16xf32>
    %955 = vector.multi_reduction <add>, %951, %cst_285 [1] : vector<16x32xf32> to vector<16xf32>
    %956 = vector.shape_cast %955 : vector<16xf32> to vector<16x1xf32>
    %957 = arith.mulf %951, %951 : vector<16x32xf32>
    %cst_286 = arith.constant dense<0.000000e+00> : vector<16xf32>
    %958 = vector.multi_reduction <add>, %957, %cst_286 [1] : vector<16x32xf32> to vector<16xf32>
    %959 = vector.shape_cast %958 : vector<16xf32> to vector<16x1xf32>
    %cst_287 = arith.constant 3.125000e-02 : f32
    %960 = vector.broadcast %cst_287 : f32 to vector<16x1xf32>
    %961 = arith.mulf %956, %960 : vector<16x1xf32>
    %cst_288 = arith.constant 3.125000e-02 : f32
    %962 = vector.broadcast %cst_288 : f32 to vector<16x1xf32>
    %963 = arith.mulf %959, %962 : vector<16x1xf32>
    %964 = arith.mulf %961, %961 : vector<16x1xf32>
    %965 = arith.subf %963, %964 : vector<16x1xf32>
    %966 = vector.broadcast %961 : vector<16x1xf32> to vector<16x32xf32>
    %967 = arith.subf %951, %966 : vector<16x32xf32>
    %cst_289 = arith.constant 9.99999974E-6 : f32
    %968 = vector.broadcast %cst_289 : f32 to vector<16x1xf32>
    %969 = arith.addf %965, %968 : vector<16x1xf32>
    %970 = math.rsqrt %969 : vector<16x1xf32>
    %971 = vector.broadcast %970 : vector<16x1xf32> to vector<16x32xf32>
    %972 = arith.mulf %967, %971 : vector<16x32xf32>
    %973 = vector.broadcast %953 : vector<1x32xf32> to vector<16x32xf32>
    %974 = arith.mulf %972, %973 : vector<16x32xf32>
    %975 = vector.broadcast %954 : vector<1x32xf32> to vector<16x32xf32>
    %976 = arith.addf %974, %975 : vector<16x32xf32>
    %c64 = arith.constant 64 : index
    %c0_290 = arith.constant 0 : index
    %977 = vector.load %arg1[%c64, %c0_290] : memref<1224x128xf32, #tpu.memory_space<vmem>>, vector<32x64xf32>
    %cst_291 = arith.constant dense<0.000000e+00> : vector<16x64xf32>
    %978 = tpu.matmul %976, %977, %cst_291 {dimension_numbers = #tpu.dot_dimension_numbers<[1], [0], [0], [1], [0, 0, 1, 1], [], []>} : vector<16x32xf32>, vector<32x64xf32>, vector<16x64xf32> -> vector<16x64xf32>
    %c128 = arith.constant 128 : index
    %c0_292 = arith.constant 0 : index
    %979 = vector.load %arg1[%c128, %c0_292] : memref<1224x128xf32, #tpu.memory_space<vmem>>, vector<1x64xf32>
    %980 = vector.broadcast %979 : vector<1x64xf32> to vector<16x64xf32>
    %981 = arith.addf %978, %980 : vector<16x64xf32>
    %cst_293 = arith.constant dense<0xFF800000> : vector<16xf32>
    %982 = vector.multi_reduction <maximumf>, %981, %cst_293 [1] : vector<16x64xf32> to vector<16xf32>
    %983 = vector.shape_cast %982 : vector<16xf32> to vector<16x1xf32>
    %984 = vector.broadcast %983 : vector<16x1xf32> to vector<16x64xf32>
    %985 = arith.subf %981, %984 : vector<16x64xf32>
    %986 = math.exp %985 : vector<16x64xf32>
    %cst_294 = arith.constant dense<0.000000e+00> : vector<16xf32>
    %987 = vector.multi_reduction <add>, %986, %cst_294 [1] : vector<16x64xf32> to vector<16xf32>
    %988 = vector.shape_cast %987 : vector<16xf32> to vector<16x1xf32>
    %989 = math.log %988 : vector<16x1xf32>
    %990 = arith.addf %989, %983 : vector<16x1xf32>
    %991 = vector.extract_strided_slice %0 {offsets = [16, 0], sizes = [16, 1], strides = [1, 1]} : vector<32x1xi32> to vector<16x1xi32>
    %992 = tpu.iota {dimensions = array<i32: 1>} : vector<16x64xi32>
    %993 = vector.broadcast %991 : vector<16x1xi32> to vector<16x64xi32>
    %994 = arith.cmpi eq, %992, %993 : vector<16x64xi32>
    %995 = arith.extui %994 : vector<16x64xi1> to vector<16x64xi32>
    %996 = arith.sitofp %995 : vector<16x64xi32> to vector<16x64xf32>
    %997 = arith.mulf %981, %996 : vector<16x64xf32>
    %cst_295 = arith.constant dense<0.000000e+00> : vector<16xf32>
    %998 = vector.multi_reduction <add>, %997, %cst_295 [1] : vector<16x64xf32> to vector<16xf32>
    %999 = vector.shape_cast %998 : vector<16xf32> to vector<16x1xf32>
    %1000 = arith.subf %990, %999 : vector<16x1xf32>
    %cst_296 = arith.constant dense<0.000000e+00> : vector<1xf32>
    %1001 = vector.multi_reduction <add>, %1000, %cst_296 [0] : vector<16x1xf32> to vector<1xf32>
    %1002 = vector.shape_cast %1001 : vector<1xf32> to vector<1x1xf32>
    %cst_297 = arith.constant 6.250000e-02 : f32
    %1003 = vector.broadcast %cst_297 : f32 to vector<1x1xf32>
    %1004 = arith.mulf %1002, %1003 : vector<1x1xf32>
    %c0_298 = arith.constant 0 : index
    %c0_299 = arith.constant 0 : index
    %1005 = vector.load %arg2[%c0_298, %c0_299] : memref<1x1xf32, #tpu.memory_space<vmem>>, vector<1x1xf32>
    tpu.vector_store %arg2[%c0_298, %c0_299], %1004 {strides = array<i32>} : memref<1x1xf32, #tpu.memory_space<vmem>>, vector<1x1xf32>,
    return
  }
}

</mosaic_0001>

<llo_original>
// kernel: bart_loss.1
$region0: #{bart_loss.1}
  #allocation0 [shape = 'u32[]', space=smem, size = 0x4, offset = 0x4, fixed_abs, tag = 'smem constant byte address 0x4 - core index']
  #allocation1 [shape = 'u32[144,128]{1,0:T(1,128)}', space=vmem, size = 0x12000, scoped, tag = 'internal scratch']
  %s0 = inlined_call_operand.vmem [shape: s32[32,1], index: 0, kind: input, shape index: {}]
  %s1 = inlined_call_operand.hbm [shape: f32[1224,128], index: 1, kind: input, shape index: {}]
  %s2 = inlined_call_operand.hbm [shape: f32[1,1], index: 2, kind: output, shape index: {}]
  %s3 = sld [smem:[#allocation0]]
  $region22: #{bart_loss.1} parent=0
    _
  %s5 = ssub.s32 1, %s3
  %s6 = scalar_select 0, %s5, %s3
  $region1: #{bart_loss.1} parent=0
    #allocation2 [shape = 'u8[626688]{0}', space=vmem, size = 0x99000, scoped, tag = 'input window, operand 1, single buffered']
    #allocation3 [shape = 's32[1]{0}', space=sflag, size = 0x4, scoped, tag = 'scoped memory for bart_loss.1']
    #allocation4 [shape = 's32[1]{0}', space=sflag, size = 0x4, scoped, tag = 'scoped memory for bart_loss.1']
    #allocation5 [shape = 'u8[512]{0}', space=vmem, size = 0x400, scoped, tag = 'output window, operand 0, single buffered']
    %7 = vsyncpa [#allocation3], 0
    %8 = vsyncpa [#allocation4], 0
    // Predicated region
    $region2: #{bart_loss.1} parent=1 // pred_check
      _
    $region3: #{bart_loss.1} parent=1 // pred_check_branch
      %10 = sbr.rel (0) target = $region5
    $region4: #{bart_loss.1} parent=1 // pred_region
      _
    $region5: #{bart_loss.1} parent=1 // pred_fallthru
      _
    // Predicated region
    $region6: #{bart_loss.1} parent=1 // pred_check
      _
    $region7: #{bart_loss.1} parent=1 // pred_check_branch
      %12 = sbr.rel (0) target = $region9
    $region8: #{bart_loss.1} parent=1 // pred_region
      %s14 = ssub.s32 19584, 19584
      %15 = vsyncadd [#allocation3], %s14
      %s16 = sshll.u32 [#allocation2], 4
      %s17 = int_to_ptr.vmem [resolvable:$true] %s16
      %22 = dma.hbm_to_vmem [thread:$0]  %s1, 19584, %s17, [#allocation3], 128, 128, 8
    $region9: #{bart_loss.1} parent=1 // pred_fallthru
      _
    // Predicated region
    $region10: #{bart_loss.1} parent=1 // pred_check
      _
    $region11: #{bart_loss.1} parent=1 // pred_check_branch
      %24 = sbr.rel (0) target = $region13
    $region12: #{bart_loss.1} parent=1 // pred_region
      %25 = dma.done [#allocation3], 19584
    $region13: #{bart_loss.1} parent=1 // pred_fallthru
      _
    %v26 = vld [vmem:[%s0] sm:$0xff]
    %v27 = vld [vmem:[%s0 + $0x8] sm:$0xff]
    %v28 = vld [vmem:[%s0 + $0x10] sm:$0xff]
    %v29 = vld [vmem:[%s0 + $0x18] sm:$0xff]
    %v30 = vld [vmem:[#allocation2] sm:$0xff]
    %v31 = vld [vmem:[#allocation2 + $0x8] sm:$0xff]
    %v32 = vld [vmem:[#allocation2 + $0x10] sm:$0xff]
    %v33 = vld [vmem:[#allocation2 + $0x18] sm:$0xff]
    %v34 = vld [vmem:[#allocation2 + $0x20] sm:$0xff]
    %v35 = vld [vmem:[#allocation2 + $0x28] sm:$0xff]
    %v36 = vld [vmem:[#allocation2 + $0x30] sm:$0xff]
    %v37 = vld [vmem:[#allocation2 + $0x38] sm:$0xff]
    %v38 = vlaneseq
    %v39 = vand.u32 %v38, 127
    %40 = vset.pattern.permute.xlu0 0
    %41 = vperm.xlu0 %40, %v26
    %v42 = vpop.permute.xlu0 %41
    %43 = vset.pattern.permute.xlu0 0
    %44 = vperm.xlu0 %43, %v27
    %v45 = vpop.permute.xlu0 %44
    %46 = vset.pattern.permute.xlu0 0
    %47 = vperm.xlu0 %46, %v28
    %v48 = vpop.permute.xlu0 %47
    %49 = vset.pattern.permute.xlu0 0
    %50 = vperm.xlu0 %49, %v29
    %v51 = vpop.permute.xlu0 %50
    %vm52 = vcmp.eq.s32.totalorder %v39, %v42
    %vm53 = vcmp.eq.s32.totalorder %v39, %v45
    %vm54 = vcmp.eq.s32.totalorder %v39, %v48
    %vm55 = vcmp.eq.s32.totalorder %v39, %v51
    %v56 = vsel %vm52, 1, 0
    %v57 = vsel %vm53, 1, 0
    %v58 = vsel %vm54, 1, 0
    %v59 = vsel %vm55, 1, 0
    %v60 = vcvt.s32.f32 %v56
    %v61 = vcvt.s32.f32 %v57
    %v62 = vcvt.s32.f32 %v58
    %v63 = vcvt.s32.f32 %v59
    %vm64 = vcmask 523264
    %v66 = vsel %vm64, %v60, 0
    %v69 = vsel %vm64, %v61, 0
    %v72 = vsel %vm64, %v62, 0
    %v75 = vsel %vm64, %v63, 0
    %77 = vmatprep.subr.mxu0 0.0
    %78 = vmatpush1.msra.mxu0 %v30
    %79 = vmatprep.subr.mxu0 0.0
    %80 = vmatpush1.msra.mxu0 %v31
    %81 = vmatprep.subr.mxu0 0.0
    %82 = vmatpush1.msra.mxu0 %v32
    %83 = vmatprep.subr.mxu0 0.0
    %84 = vmatpush1.msra.mxu0 %v33
    %85 = vmatprep.subr.mxu0 0.0
    %86 = vmatpush1.msra.mxu0 %v34
    %87 = vmatprep.subr.mxu0 0.0
    %88 = vmatpush1.msra.mxu0 %v35
    %89 = vmatprep.subr.mxu0 0.0
    %90 = vmatpush1.msra.mxu0 %v36
    %91 = vmatprep.subr.mxu0 0.0
    %92 = vmatpush1.msra.mxu0 %v37
    %93 = vmatprep.subr.mxu0 0.0
    %94 = vmatpush1.msra.mxu0 0.0
    %95 = vmatprep.subr.mxu0 0.0
    %96 = vmatpush1.msra.mxu0 0.0
    %97 = vmatprep.subr.mxu0 0.0
    %98 = vmatpush1.msra.mxu0 0.0
    %99 = vmatprep.subr.mxu0 0.0
    %100 = vmatpush1.msra.mxu0 0.0
    %101 = vmatprep.subr.mxu0 0.0
    %102 = vmatpush1.msra.mxu0 0.0
    %103 = vmatprep.subr.mxu0 0.0
    %104 = vmatpush1.msra.mxu0 0.0
    %105 = vmatprep.subr.mxu0 0.0
    %106 = vmatpush1.msra.mxu0 0.0
    %107 = vmatprep.subr.mxu0 0.0
    %108 = vmatpush1.msra.mxu0 0.0
    %109 = vmatprep.subr.mxu0 0.0
    %110 = vmatpush1.msra.mxu0 0.0
    %111 = vmatprep.subr.mxu0 0.0
    %112 = vmatpush1.msra.mxu0 0.0
    %113 = vmatprep.subr.mxu0 0.0
    %114 = vmatpush1.msra.mxu0 0.0
    %115 = vmatprep.subr.mxu0 0.0
    %116 = vmatpush1.msra.mxu0 0.0
    %117 = vmatprep.subr.mxu0 0.0
    %118 = vmatpush1.msra.mxu0 0.0
    %119 = vmatprep.subr.mxu0 0.0
    %120 = vmatpush1.msra.mxu0 0.0
    %121 = vmatprep.subr.mxu0 0.0
    %122 = vmatpush1.msra.mxu0 0.0
    %123 = vmatprep.subr.mxu0 0.0
    %124 = vmatpush1.msra.mxu0 0.0
    %125 = vmatprep.subr.mxu0 0.0
    %126 = vmatpush1.msra.mxu0 0.0
    %127 = vmatprep.subr.mxu0 0.0
    %128 = vmatpush1.msra.mxu0 0.0
    %129 = vmatprep.subr.mxu0 0.0
    %130 = vmatpush1.msra.mxu0 0.0
    %131 = vmatprep.subr.mxu0 0.0
    %132 = vmatpush1.msra.mxu0 0.0
    %133 = vmatprep.subr.mxu0 0.0
    %134 = vmatpush1.msra.mxu0 0.0
    %135 = vmatprep.subr.mxu0 0.0
    %136 = vmatpush1.msra.mxu0 0.0
    %137 = vmatprep.subr.mxu0 0.0
    %138 = vmatpush1.msra.mxu0 0.0
    %139 = vmatprep.subr.mxu0 0.0
    %140 = vmatpush1.msra.mxu0 0.0
    %141 = vmatprep.mubr.f32.mxu0 0.0
    %142 = vmatmul.mubr.f32.gmra.mrb[0].mxu0 %v66
    %v143 = vpop.f32.mrb[0].mxu0
    %v144 = vadd.f32 0.0, %v143
    %v145 = vpop.f32.mrb[0].mxu0
    %146 = vmatprep.mubr.f32.mxu0 0.0
    %147 = vmatmul.mubr.f32.gmra.mrb[0].mxu0 %v69
    %v148 = vpop.f32.mrb[0].mxu0
    %v149 = vadd.f32 0.0, %v148
    %v150 = vpop.f32.mrb[0].mxu0
    %151 = vmatprep.mubr.f32.mxu0 0.0
    %152 = vmatmul.mubr.f32.gmra.mrb[0].mxu0 %v72
    %v153 = vpop.f32.mrb[0].mxu0
    %v154 = vadd.f32 0.0, %v153
    %v155 = vpop.f32.mrb[0].mxu0
    %156 = vmatprep.mubr.f32.mxu0 0.0
    %157 = vmatmul.mubr.f32.gmra.mrb[0].mxu0 %v75
    %v158 = vpop.f32.mrb[0].mxu0
    %v159 = vadd.f32 0.0, %v158
    %v160 = vpop.f32.mrb[0].mxu0
    %161 = vdwg.mxu0
    %v162 = vld [vmem:[#allocation2 + $0x60] sm:$0xff]
    %v163 = vadd.f32 %v144, %v162
    %v164 = vadd.f32 %v149, %v162
    %v165 = vld [vmem:[#allocation2 + $0x70] sm:$0x3]
    %vm166 = vcmask 261120
    %v167 = vsel %vm166, %v163, 0.0
    %168 = vadd.xlane.f32.xlu0 %v167
    %v169 = vpop.xlane.xlu0 %168
    %v170 = vsel %vm166, %v164, 0.0
    %171 = vadd.xlane.f32.xlu0 %v170
    %v172 = vpop.xlane.xlu0 %171
    %v173 = vmul.f32 %v163, %v163
    %v174 = vmul.f32 %v164, %v164
    %v175 = vsel %vm166, %v173, 0.0
    %176 = vadd.xlane.f32.xlu0 %v175
    %v177 = vpop.xlane.xlu0 %176
    %v178 = vsel %vm166, %v174, 0.0
    %179 = vadd.xlane.f32.xlu0 %v178
    %v180 = vpop.xlane.xlu0 %179
    %v181 = vmul.f32 %v169, 0.03125
    %v182 = vmul.f32 %v172, 0.03125
    %v183 = vmul.f32 %v177, 0.03125
    %v184 = vmul.f32 %v180, 0.03125
    %v185 = vmul.f32 %v181, %v181
    %v186 = vmul.f32 %v182, %v182
    %v187 = vsub.f32 %v183, %v185
    %v188 = vsub.f32 %v184, %v186
    %v189 = vsub.f32 %v163, %v181
    %v190 = vsub.f32 %v164, %v182
    %v191 = vadd.f32 %v187, 1e-05
    %v192 = vadd.f32 %v188, 1e-05
    %v193 = vrsqrt.pop %v191
    %v194 = vrsqrt.pop %v192
    %v195 = vmul.f32 %v189, %v193
    %v196 = vmul.f32 %v190, %v194
    %v197 = vlaneseq
    %v198 = vshrl.u32 %v197, 7
    %v199 = vsub.s32 0, %v198
    %v200 = vrot.slane %v165, %v199
    %v201 = vmul.f32 %v195, %v200
    %v202 = vmul.f32 %v196, %v200
    %v203 = vlaneseq
    %v204 = vshrl.u32 %v203, 7
    %v205 = vsub.s32 1, %v204
    %v206 = vrot.slane %v165, %v205
    %v207 = vadd.f32 %v201, %v206
    %v208 = vadd.f32 %v202, %v206
    %v209 = vadd.f32 %v154, %v162
    %v210 = vadd.f32 %v159, %v162
    %v211 = vld [vmem:[#allocation2 + $0x78] sm:$0x3]
    %v212 = vsel %vm166, %v209, 0.0
    %213 = vadd.xlane.f32.xlu0 %v212
    %v214 = vpop.xlane.xlu0 %213
    %v215 = vsel %vm166, %v210, 0.0
    %216 = vadd.xlane.f32.xlu0 %v215
    %v217 = vpop.xlane.xlu0 %216
    %v218 = vmul.f32 %v209, %v209
    %v219 = vmul.f32 %v210, %v210
    %v220 = vsel %vm166, %v218, 0.0
    %221 = vadd.xlane.f32.xlu0 %v220
    %v222 = vpop.xlane.xlu0 %221
    %v223 = vsel %vm166, %v219, 0.0
    %224 = vadd.xlane.f32.xlu0 %v223
    %v225 = vpop.xlane.xlu0 %224
    %v226 = vmul.f32 %v214, 0.03125
    %v227 = vmul.f32 %v217, 0.03125
    %v228 = vmul.f32 %v222, 0.03125
    %v229 = vmul.f32 %v225, 0.03125
    %v230 = vmul.f32 %v226, %v226
    %v231 = vmul.f32 %v227, %v227
    %v232 = vsub.f32 %v228, %v230
    %v233 = vsub.f32 %v229, %v231
    %v234 = vsub.f32 %v209, %v226
    %v235 = vsub.f32 %v210, %v227
    %v236 = vadd.f32 %v232, 1e-05
    %v237 = vadd.f32 %v233, 1e-05
    %v238 = vrsqrt.pop %v236
    %v239 = vrsqrt.pop %v237
    %v240 = vmul.f32 %v234, %v238
    %v241 = vmul.f32 %v235, %v239
    %v242 = vlaneseq
    %v243 = vshrl.u32 %v242, 7
    %v244 = vsub.s32 0, %v243
    %v245 = vrot.slane %v211, %v244
    %v246 = vmul.f32 %v240, %v245
    %v247 = vmul.f32 %v241, %v245
    %v248 = vlaneseq
    %v249 = vshrl.u32 %v248, 7
    %v250 = vsub.s32 1, %v249
    %v251 = vrot.slane %v211, %v250
    %v252 = vadd.f32 %v246, %v251
    %v253 = vadd.f32 %v247, %v251
    %v254 = vlaneseq
    %v255 = vshrl.u32 %v254, 7
    %v256 = vadd.s32 %v255, 8
    %v257 = vshra.s32 %v255, 3
    %v258 = vshra.s32 %v256, 3
    %v259 = vshra.s32 %v39, 3
    %vm260 = vcmp.eq.s32.totalorder %v257, %v259
    %vm261 = vcmp.eq.s32.totalorder %v258, %v259
    %v262 = vsel %vm260, 0.0, -1e+09
    %v263 = vsel %vm261, 0.0, -1e+09
    %v264 = vand.u32 %v255, 7
    %v265 = vand.u32 %v256, 7
    %v266 = vand.u32 %v39, 7
    %vm267 = vcmp.ge.s32.totalorder %v264, %v266
    %vm268 = vcmp.ge.s32.totalorder %v265, %v266
    %vm269 = vmand %vm260, %vm267
    %vm270 = vmand %vm261, %vm268
    %v271 = vsel %vm269, 0.0, -1e+09
    %v272 = vsel %vm270, 0.0, -1e+09
    %v273 = vld [vmem:[#allocation2 + $0x88] sm:$0xff]
    %v274 = vld [vmem:[#allocation2 + $0x90] sm:$0xff]
    %v275 = vld [vmem:[#allocation2 + $0x98] sm:$0xff]
    %v276 = vld [vmem:[#allocation2 + $0xa0] sm:$0xff]
    %v277 = vld [vmem:[#allocation2 + $0xa8] sm:$0x1]
    %v278 = vlaneseq
    %v279 = vshrl.u32 %v278, 7
    %v280 = vsub.s32 0, %v279
    %v281 = vrot.slane %v277, %v280
    %v283 = vsel %vm166, %v207, 0
    %v286 = vsel %vm166, %v208, 0
    %288 = vmatprep.subr.mxu0 0.0
    %289 = vmatpush1.msra.mxu0 %v273
    %290 = vmatprep.subr.mxu0 0.0
    %291 = vmatpush1.msra.mxu0 %v274
    %292 = vmatprep.subr.mxu0 0.0
    %293 = vmatpush1.msra.mxu0 %v275
    %294 = vmatprep.subr.mxu0 0.0
    %295 = vmatpush1.msra.mxu0 %v276
    %296 = vmatprep.subr.mxu0 0.0
    %297 = vmatpush1.msra.mxu0 0.0
    %298 = vmatprep.subr.mxu0 0.0
    %299 = vmatpush1.msra.mxu0 0.0
    %300 = vmatprep.subr.mxu0 0.0
    %301 = vmatpush1.msra.mxu0 0.0
    %302 = vmatprep.subr.mxu0 0.0
    %303 = vmatpush1.msra.mxu0 0.0
    %304 = vmatprep.subr.mxu0 0.0
    %305 = vmatpush1.msra.mxu0 0.0
    %306 = vmatprep.subr.mxu0 0.0
    %307 = vmatpush1.msra.mxu0 0.0
    %308 = vmatprep.subr.mxu0 0.0
    %309 = vmatpush1.msra.mxu0 0.0
    %310 = vmatprep.subr.mxu0 0.0
    %311 = vmatpush1.msra.mxu0 0.0
    %312 = vmatprep.subr.mxu0 0.0
    %313 = vmatpush1.msra.mxu0 0.0
    %314 = vmatprep.subr.mxu0 0.0
    %315 = vmatpush1.msra.mxu0 0.0
    %316 = vmatprep.subr.mxu0 0.0
    %317 = vmatpush1.msra.mxu0 0.0
    %318 = vmatprep.subr.mxu0 0.0
    %319 = vmatpush1.msra.mxu0 0.0
    %320 = vmatprep.subr.mxu0 0.0
    %321 = vmatpush1.msra.mxu0 0.0
    %322 = vmatprep.subr.mxu0 0.0
    %323 = vmatpush1.msra.mxu0 0.0
    %324 = vmatprep.subr.mxu0 0.0
    %325 = vmatpush1.msra.mxu0 0.0
    %326 = vmatprep.subr.mxu0 0.0
    %327 = vmatpush1.msra.mxu0 0.0
    %328 = vmatprep.subr.mxu0 0.0
    %329 = vmatpush1.msra.mxu0 0.0
    %330 = vmatprep.subr.mxu0 0.0
    %331 = vmatpush1.msra.mxu0 0.0
    %332 = vmatprep.subr.mxu0 0.0
    %333 = vmatpush1.msra.mxu0 0.0
    %334 = vmatprep.subr.mxu0 0.0
    %335 = vmatpush1.msra.mxu0 0.0
    %336 = vmatprep.subr.mxu0 0.0
    %337 = vmatpush1.msra.mxu0 0.0
    %338 = vmatprep.subr.mxu0 0.0
    %339 = vmatpush1.msra.mxu0 0.0
    %340 = vmatprep.subr.mxu0 0.0
    %341 = vmatpush1.msra.mxu0 0.0
    %342 = vmatprep.subr.mxu0 0.0
    %343 = vmatpush1.msra.mxu0 0.0
    %344 = vmatprep.subr.mxu0 0.0
    %345 = vmatpush1.msra.mxu0 0.0
    %346 = vmatprep.subr.mxu0 0.0
    %347 = vmatpush1.msra.mxu0 0.0
    %348 = vmatprep.subr.mxu0 0.0
    %349 = vmatpush1.msra.mxu0 0.0
    %350 = vmatprep.subr.mxu0 0.0
    %351 = vmatpush1.msra.mxu0 0.0
    %352 = vmatprep.mubr.f32.mxu0 0.0
    %353 = vmatmul.mubr.f32.gmra.mrb[0].mxu0 %v283
    %v354 = vpop.f32.mrb[0].mxu0
    %v355 = vadd.f32 %v281, %v354
    %v356 = vpop.f32.mrb[0].mxu0
    %357 = vmatprep.mubr.f32.mxu0 0.0
    %358 = vmatmul.mubr.f32.gmra.mrb[0].mxu0 %v286
    %v359 = vpop.f32.mrb[0].mxu0
    %v360 = vadd.f32 %v281, %v359
    %v361 = vpop.f32.mrb[0].mxu0
    %362 = vdwg.mxu0
    %v363 = vld [vmem:[#allocation2 + $0xb0] sm:$0xff]
    %v364 = vld [vmem:[#allocation2 + $0xb8] sm:$0xff]
    %v365 = vld [vmem:[#allocation2 + $0xc0] sm:$0xff]
    %v366 = vld [vmem:[#allocation2 + $0xc8] sm:$0xff]
    %v367 = vld [vmem:[#allocation2 + $0xd0] sm:$0x1]
    %370 = vrot.lane.b32.xlu0 %v355, 96
    %v371 = vpop.permute.xlu0 %370
    %372 = vrot.lane.b32.xlu0 %v360, 96
    %v373 = vpop.permute.xlu0 %372
    %vm374 = vcmask 64512
    %v375 = vsel %vm374, %v355, 0
    %v377 = vsel %vm374, %v360, 0
    %v379 = vsel %vm374, %v371, 0
    %v381 = vsel %vm374, %v373, 0
    %383 = vmatprep.subr.mxu0 0.0
    %384 = vmatpush1.xpose.msra.mxu0 %v379
    %385 = vmatprep.subr.mxu0 0.0
    %386 = vmatpush1.xpose.msra.mxu0 %v381
    %387 = vmatprep.subr.mxu0 0.0
    %388 = vmatpush1.xpose.msra.mxu0 0.0
    %389 = vmatprep.subr.mxu0 0.0
    %390 = vmatpush1.xpose.msra.mxu0 0.0
    %391 = vmatprep.subr.mxu0 0.0
    %392 = vmatpush1.xpose.msra.mxu0 0.0
    %393 = vmatprep.subr.mxu0 0.0
    %394 = vmatpush1.xpose.msra.mxu0 0.0
    %395 = vmatprep.subr.mxu0 0.0
    %396 = vmatpush1.xpose.msra.mxu0 0.0
    %397 = vmatprep.subr.mxu0 0.0
    %398 = vmatpush1.xpose.msra.mxu0 0.0
    %399 = vmatprep.subr.mxu0 0.0
    %400 = vmatpush1.xpose.msra.mxu0 0.0
    %401 = vmatprep.subr.mxu0 0.0
    %402 = vmatpush1.xpose.msra.mxu0 0.0
    %403 = vmatprep.subr.mxu0 0.0
    %404 = vmatpush1.xpose.msra.mxu0 0.0
    %405 = vmatprep.subr.mxu0 0.0
    %406 = vmatpush1.xpose.msra.mxu0 0.0
    %407 = vmatprep.subr.mxu0 0.0
    %408 = vmatpush1.xpose.msra.mxu0 0.0
    %409 = vmatprep.subr.mxu0 0.0
    %410 = vmatpush1.xpose.msra.mxu0 0.0
    %411 = vmatprep.subr.mxu0 0.0
    %412 = vmatpush1.xpose.msra.mxu0 0.0
    %413 = vmatprep.subr.mxu0 0.0
    %414 = vmatpush1.xpose.msra.mxu0 0.0
    %415 = vmatprep.subr.mxu0 0.0
    %416 = vmatpush1.xpose.msra.mxu0 0.0
    %417 = vmatprep.subr.mxu0 0.0
    %418 = vmatpush1.xpose.msra.mxu0 0.0
    %419 = vmatprep.subr.mxu0 0.0
    %420 = vmatpush1.xpose.msra.mxu0 0.0
    %421 = vmatprep.subr.mxu0 0.0
    %422 = vmatpush1.xpose.msra.mxu0 0.0
    %423 = vmatprep.subr.mxu0 0.0
    %424 = vmatpush1.xpose.msra.mxu0 0.0
    %425 = vmatprep.subr.mxu0 0.0
    %426 = vmatpush1.xpose.msra.mxu0 0.0
    %427 = vmatprep.subr.mxu0 0.0
    %428 = vmatpush1.xpose.msra.mxu0 0.0
    %429 = vmatprep.subr.mxu0 0.0
    %430 = vmatpush1.xpose.msra.mxu0 0.0
    %431 = vmatprep.subr.mxu0 0.0
    %432 = vmatpush1.xpose.msra.mxu0 0.0
    %433 = vmatprep.subr.mxu0 0.0
    %434 = vmatpush1.xpose.msra.mxu0 0.0
    %435 = vmatprep.subr.mxu0 0.0
    %436 = vmatpush1.xpose.msra.mxu0 0.0
    %437 = vmatprep.subr.mxu0 0.0
    %438 = vmatpush1.xpose.msra.mxu0 0.0
    %439 = vmatprep.subr.mxu0 0.0
    %440 = vmatpush1.xpose.msra.mxu0 0.0
    %441 = vmatprep.subr.mxu0 0.0
    %442 = vmatpush1.xpose.msra.mxu0 0.0
    %443 = vmatprep.subr.mxu0 0.0
    %444 = vmatpush1.xpose.msra.mxu0 0.0
    %445 = vmatprep.subr.mxu0 0.0
    %446 = vmatpush1.xpose.msra.mxu0 0.0
    %447 = vmatprep.mubr.f32.mxu0 0.0
    %448 = vmatmul.mubr.f32.gmra.mrb[0].mxu0 %v375
    %v449 = vpop.f32.mrb[0].mxu0
    %v450 = vadd.f32 0.0, %v449
    %v451 = vpop.f32.mrb[0].mxu0
    %452 = vmatprep.mubr.f32.mxu0 0.0
    %453 = vmatmul.mubr.f32.gmra.mrb[0].mxu0 %v377
    %v454 = vpop.f32.mrb[0].mxu0
    %v455 = vadd.f32 0.0, %v454
    %v456 = vpop.f32.mrb[0].mxu0
    %457 = vdwg.mxu0
    %v458 = vmul.f32 %v450, 0.35355338
    %v459 = vmul.f32 %v455, 0.35355338
    %v460 = vadd.f32 %v458, %v262
    %v461 = vadd.f32 %v459, %v263
    %vm462 = vcmask 130048
    %v463 = vsel %vm462, %v460, -inf
    %464 = vmax.xlane.f32.xlu0 %v463
    %v465 = vpop.xlane.xlu0 %464
    %v466 = vsel %vm462, %v461, -inf
    %467 = vmax.xlane.f32.xlu0 %v466
    %v468 = vpop.xlane.xlu0 %467
    %v469 = vsub.f32 %v460, %v465
    %v470 = vsub.f32 %v461, %v468
    %v471 = vmul.f32 %v469, 1.442695
    %v472 = vpow.pop %v471
    %v473 = vmul.f32 %v470, 1.442695
    %v474 = vpow.pop %v473
    %v475 = vsel %vm462, %v472, 0.0
    %476 = vadd.xlane.f32.xlu0 %v475
    %v477 = vpop.xlane.xlu0 %476
    %v478 = vsel %vm462, %v474, 0.0
    %479 = vadd.xlane.f32.xlu0 %v478
    %v480 = vpop.xlane.xlu0 %479
    %v481 = vrcp.pop %v477
    %v482 = vrcp.pop %v480
    %v483 = vmul.f32 %v472, %v481
    %v484 = vmul.f32 %v474, %v482
    %485 = vrot.lane.b32.xlu0 %v355, 64
    %v486 = vpop.permute.xlu0 %485
    %487 = vrot.lane.b32.xlu0 %v360, 64
    %v488 = vpop.permute.xlu0 %487
    %v492 = vsel %vm462, %v483, 0
    %v495 = vsel %vm462, %v484, 0
    %497 = vmatprep.subr.mxu0 0.0
    %498 = vmatpush1.msra.mxu0 %v486
    %499 = vmatprep.subr.mxu0 0.0
    %500 = vmatpush1.msra.mxu0 %v488
    %501 = vmatprep.subr.mxu0 0.0
    %502 = vmatpush1.msra.mxu0 0.0
    %503 = vmatprep.subr.mxu0 0.0
    %504 = vmatpush1.msra.mxu0 0.0
    %505 = vmatprep.subr.mxu0 0.0
    %506 = vmatpush1.msra.mxu0 0.0
    %507 = vmatprep.subr.mxu0 0.0
    %508 = vmatpush1.msra.mxu0 0.0
    %509 = vmatprep.subr.mxu0 0.0
    %510 = vmatpush1.msra.mxu0 0.0
    %511 = vmatprep.subr.mxu0 0.0
    %512 = vmatpush1.msra.mxu0 0.0
    %513 = vmatprep.subr.mxu0 0.0
    %514 = vmatpush1.msra.mxu0 0.0
    %515 = vmatprep.subr.mxu0 0.0
    %516 = vmatpush1.msra.mxu0 0.0
    %517 = vmatprep.subr.mxu0 0.0
    %518 = vmatpush1.msra.mxu0 0.0
    %519 = vmatprep.subr.mxu0 0.0
    %520 = vmatpush1.msra.mxu0 0.0
    %521 = vmatprep.subr.mxu0 0.0
    %522 = vmatpush1.msra.mxu0 0.0
    %523 = vmatprep.subr.mxu0 0.0
    %524 = vmatpush1.msra.mxu0 0.0
    %525 = vmatprep.subr.mxu0 0.0
    %526 = vmatpush1.msra.mxu0 0.0
    %527 = vmatprep.subr.mxu0 0.0
    %528 = vmatpush1.msra.mxu0 0.0
    %529 = vmatprep.subr.mxu0 0.0
    %530 = vmatpush1.msra.mxu0 0.0
    %531 = vmatprep.subr.mxu0 0.0
    %532 = vmatpush1.msra.mxu0 0.0
    %533 = vmatprep.subr.mxu0 0.0
    %534 = vmatpush1.msra.mxu0 0.0
    %535 = vmatprep.subr.mxu0 0.0
    %536 = vmatpush1.msra.mxu0 0.0
    %537 = vmatprep.subr.mxu0 0.0
    %538 = vmatpush1.msra.mxu0 0.0
    %539 = vmatprep.subr.mxu0 0.0
    %540 = vmatpush1.msra.mxu0 0.0
    %541 = vmatprep.subr.mxu0 0.0
    %542 = vmatpush1.msra.mxu0 0.0
    %543 = vmatprep.subr.mxu0 0.0
    %544 = vmatpush1.msra.mxu0 0.0
    %545 = vmatprep.subr.mxu0 0.0
    %546 = vmatpush1.msra.mxu0 0.0
    %547 = vmatprep.subr.mxu0 0.0
    %548 = vmatpush1.msra.mxu0 0.0
    %549 = vmatprep.subr.mxu0 0.0
    %550 = vmatpush1.msra.mxu0 0.0
    %551 = vmatprep.subr.mxu0 0.0
    %552 = vmatpush1.msra.mxu0 0.0
    %553 = vmatprep.subr.mxu0 0.0
    %554 = vmatpush1.msra.mxu0 0.0
    %555 = vmatprep.subr.mxu0 0.0
    %556 = vmatpush1.msra.mxu0 0.0
    %557 = vmatprep.subr.mxu0 0.0
    %558 = vmatpush1.msra.mxu0 0.0
    %559 = vmatprep.subr.mxu0 0.0
    %560 = vmatpush1.msra.mxu0 0.0
    %561 = vmatprep.mubr.f32.mxu0 0.0
    %562 = vmatmul.mubr.f32.gmra.mrb[0].mxu0 %v492
    %v563 = vpop.f32.mrb[0].mxu0
    %v564 = vadd.f32 0.0, %v563
    %v565 = vpop.f32.mrb[0].mxu0
    %566 = vmatprep.mubr.f32.mxu0 0.0
    %567 = vmatmul.mubr.f32.gmra.mrb[0].mxu0 %v495
    %v568 = vpop.f32.mrb[0].mxu0
    %v569 = vadd.f32 0.0, %v568
    %v570 = vpop.f32.mrb[0].mxu0
    %571 = vdwg.mxu0
    %572 = vrot.lane.b32.xlu0 %v355, 120
    %v573 = vpop.permute.xlu0 %572
    %574 = vrot.lane.b32.xlu0 %v360, 120
    %v575 = vpop.permute.xlu0 %574
    %576 = vrot.lane.b32.xlu0 %v355, 88
    %v577 = vpop.permute.xlu0 %576
    %578 = vrot.lane.b32.xlu0 %v360, 88
    %v579 = vpop.permute.xlu0 %578
    %v580 = vsel %vm374, %v573, 0
    %v582 = vsel %vm374, %v575, 0
    %v584 = vsel %vm374, %v577, 0
    %v586 = vsel %vm374, %v579, 0
    %588 = vmatprep.subr.mxu0 0.0
    %589 = vmatpush1.xpose.msra.mxu0 %v584
    %590 = vmatprep.subr.mxu0 0.0
    %591 = vmatpush1.xpose.msra.mxu0 %v586
    %592 = vmatprep.subr.mxu0 0.0
    %593 = vmatpush1.xpose.msra.mxu0 0.0
    %594 = vmatprep.subr.mxu0 0.0
    %595 = vmatpush1.xpose.msra.mxu0 0.0
    %596 = vmatprep.subr.mxu0 0.0
    %597 = vmatpush1.xpose.msra.mxu0 0.0
    %598 = vmatprep.subr.mxu0 0.0
    %599 = vmatpush1.xpose.msra.mxu0 0.0
    %600 = vmatprep.subr.mxu0 0.0
    %601 = vmatpush1.xpose.msra.mxu0 0.0
    %602 = vmatprep.subr.mxu0 0.0
    %603 = vmatpush1.xpose.msra.mxu0 0.0
    %604 = vmatprep.subr.mxu0 0.0
    %605 = vmatpush1.xpose.msra.mxu0 0.0
    %606 = vmatprep.subr.mxu0 0.0
    %607 = vmatpush1.xpose.msra.mxu0 0.0
    %608 = vmatprep.subr.mxu0 0.0
    %609 = vmatpush1.xpose.msra.mxu0 0.0
    %610 = vmatprep.subr.mxu0 0.0
    %611 = vmatpush1.xpose.msra.mxu0 0.0
    %612 = vmatprep.subr.mxu0 0.0
    %613 = vmatpush1.xpose.msra.mxu0 0.0
    %614 = vmatprep.subr.mxu0 0.0
    %615 = vmatpush1.xpose.msra.mxu0 0.0
    %616 = vmatprep.subr.mxu0 0.0
    %617 = vmatpush1.xpose.msra.mxu0 0.0
    %618 = vmatprep.subr.mxu0 0.0
    %619 = vmatpush1.xpose.msra.mxu0 0.0
    %620 = vmatprep.subr.mxu0 0.0
    %621 = vmatpush1.xpose.msra.mxu0 0.0
    %622 = vmatprep.subr.mxu0 0.0
    %623 = vmatpush1.xpose.msra.mxu0 0.0
    %624 = vmatprep.subr.mxu0 0.0
    %625 = vmatpush1.xpose.msra.mxu0 0.0
    %626 = vmatprep.subr.mxu0 0.0
    %627 = vmatpush1.xpose.msra.mxu0 0.0
    %628 = vmatprep.subr.mxu0 0.0
    %629 = vmatpush1.xpose.msra.mxu0 0.0
    %630 = vmatprep.subr.mxu0 0.0
    %631 = vmatpush1.xpose.msra.mxu0 0.0
    %632 = vmatprep.subr.mxu0 0.0
    %633 = vmatpush1.xpose.msra.mxu0 0.0
    %634 = vmatprep.subr.mxu0 0.0
    %635 = vmatpush1.xpose.msra.mxu0 0.0
    %636 = vmatprep.subr.mxu0 0.0
    %637 = vmatpush1.xpose.msra.mxu0 0.0
    %638 = vmatprep.subr.mxu0 0.0
    %639 = vmatpush1.xpose.msra.mxu0 0.0
    %640 = vmatprep.subr.mxu0 0.0
    %641 = vmatpush1.xpose.msra.mxu0 0.0
    %642 = vmatprep.subr.mxu0 0.0
    %643 = vmatpush1.xpose.msra.mxu0 0.0
    %644 = vmatprep.subr.mxu0 0.0
    %645 = vmatpush1.xpose.msra.mxu0 0.0
    %646 = vmatprep.subr.mxu0 0.0
    %647 = vmatpush1.xpose.msra.mxu0 0.0
    %648 = vmatprep.subr.mxu0 0.0
    %649 = vmatpush1.xpose.msra.mxu0 0.0
    %650 = vmatprep.subr.mxu0 0.0
    %651 = vmatpush1.xpose.msra.mxu0 0.0
    %652 = vmatprep.mubr.f32.mxu0 0.0
    %653 = vmatmul.mubr.f32.gmra.mrb[0].mxu0 %v580
    %v654 = vpop.f32.mrb[0].mxu0
    %v655 = vadd.f32 0.0, %v654
    %v656 = vpop.f32.mrb[0].mxu0
    %657 = vmatprep.mubr.f32.mxu0 0.0
    %658 = vmatmul.mubr.f32.gmra.mrb[0].mxu0 %v582
    %v659 = vpop.f32.mrb[0].mxu0
    %v660 = vadd.f32 0.0, %v659
    %v661 = vpop.f32.mrb[0].mxu0
    %662 = vdwg.mxu0
    %v663 = vmul.f32 %v655, 0.35355338
    %v664 = vmul.f32 %v660, 0.35355338
    %v665 = vadd.f32 %v663, %v262
    %v666 = vadd.f32 %v664, %v263
    %v667 = vsel %vm462, %v665, -inf
    %668 = vmax.xlane.f32.xlu0 %v667
    %v669 = vpop.xlane.xlu0 %668
    %v670 = vsel %vm462, %v666, -inf
    %671 = vmax.xlane.f32.xlu0 %v670
    %v672 = vpop.xlane.xlu0 %671
    %v673 = vsub.f32 %v665, %v669
    %v674 = vsub.f32 %v666, %v672
    %v675 = vmul.f32 %v673, 1.442695
    %v676 = vpow.pop %v675
    %v677 = vmul.f32 %v674, 1.442695
    %v678 = vpow.pop %v677
    %v679 = vsel %vm462, %v676, 0.0
    %680 = vadd.xlane.f32.xlu0 %v679
    %v681 = vpop.xlane.xlu0 %680
    %v682 = vsel %vm462, %v678, 0.0
    %683 = vadd.xlane.f32.xlu0 %v682
    %v684 = vpop.xlane.xlu0 %683
    %v685 = vrcp.pop %v681
    %v686 = vrcp.pop %v684
    %v687 = vmul.f32 %v676, %v685
    %v688 = vmul.f32 %v678, %v686
    %689 = vrot.lane.b32.xlu0 %v355, 56
    %v690 = vpop.permute.xlu0 %689
    %691 = vrot.lane.b32.xlu0 %v360, 56
    %v692 = vpop.permute.xlu0 %691
    %v696 = vsel %vm462, %v687, 0
    %v699 = vsel %vm462, %v688, 0
    %701 = vmatprep.subr.mxu0 0.0
    %702 = vmatpush1.msra.mxu0 %v690
    %703 = vmatprep.subr.mxu0 0.0
    %704 = vmatpush1.msra.mxu0 %v692
    %705 = vmatprep.subr.mxu0 0.0
    %706 = vmatpush1.msra.mxu0 0.0
    %707 = vmatprep.subr.mxu0 0.0
    %708 = vmatpush1.msra.mxu0 0.0
    %709 = vmatprep.subr.mxu0 0.0
    %710 = vmatpush1.msra.mxu0 0.0
    %711 = vmatprep.subr.mxu0 0.0
    %712 = vmatpush1.msra.mxu0 0.0
    %713 = vmatprep.subr.mxu0 0.0
    %714 = vmatpush1.msra.mxu0 0.0
    %715 = vmatprep.subr.mxu0 0.0
    %716 = vmatpush1.msra.mxu0 0.0
    %717 = vmatprep.subr.mxu0 0.0
    %718 = vmatpush1.msra.mxu0 0.0
    %719 = vmatprep.subr.mxu0 0.0
    %720 = vmatpush1.msra.mxu0 0.0
    %721 = vmatprep.subr.mxu0 0.0
    %722 = vmatpush1.msra.mxu0 0.0
    %723 = vmatprep.subr.mxu0 0.0
    %724 = vmatpush1.msra.mxu0 0.0
    %725 = vmatprep.subr.mxu0 0.0
    %726 = vmatpush1.msra.mxu0 0.0
    %727 = vmatprep.subr.mxu0 0.0
    %728 = vmatpush1.msra.mxu0 0.0
    %729 = vmatprep.subr.mxu0 0.0
    %730 = vmatpush1.msra.mxu0 0.0
    %731 = vmatprep.subr.mxu0 0.0
    %732 = vmatpush1.msra.mxu0 0.0
    %733 = vmatprep.subr.mxu0 0.0
    %734 = vmatpush1.msra.mxu0 0.0
    %735 = vmatprep.subr.mxu0 0.0
    %736 = vmatpush1.msra.mxu0 0.0
    %737 = vmatprep.subr.mxu0 0.0
    %738 = vmatpush1.msra.mxu0 0.0
    %739 = vmatprep.subr.mxu0 0.0
    %740 = vmatpush1.msra.mxu0 0.0
    %741 = vmatprep.subr.mxu0 0.0
    %742 = vmatpush1.msra.mxu0 0.0
    %743 = vmatprep.subr.mxu0 0.0
    %744 = vmatpush1.msra.mxu0 0.0
    %745 = vmatprep.subr.mxu0 0.0
    %746 = vmatpush1.msra.mxu0 0.0
    %747 = vmatprep.subr.mxu0 0.0
    %748 = vmatpush1.msra.mxu0 0.0
    %749 = vmatprep.subr.mxu0 0.0
    %750 = vmatpush1.msra.mxu0 0.0
    %751 = vmatprep.subr.mxu0 0.0
    %752 = vmatpush1.msra.mxu0 0.0
    %753 = vmatprep.subr.mxu0 0.0
    %754 = vmatpush1.msra.mxu0 0.0
    %755 = vmatprep.subr.mxu0 0.0
    %756 = vmatpush1.msra.mxu0 0.0
    %757 = vmatprep.subr.mxu0 0.0
    %758 = vmatpush1.msra.mxu0 0.0
    %759 = vmatprep.subr.mxu0 0.0
    %760 = vmatpush1.msra.mxu0 0.0
    %761 = vmatprep.subr.mxu0 0.0
    %762 = vmatpush1.msra.mxu0 0.0
    %763 = vmatprep.subr.mxu0 0.0
    %764 = vmatpush1.msra.mxu0 0.0
    %765 = vmatprep.mubr.f32.mxu0 0.0
    %766 = vmatmul.mubr.f32.gmra.mrb[0].mxu0 %v696
    %v767 = vpop.f32.mrb[0].mxu0
    %v768 = vadd.f32 0.0, %v767
    %v769 = vpop.f32.mrb[0].mxu0
    %770 = vmatprep.mubr.f32.mxu0 0.0
    %771 = vmatmul.mubr.f32.gmra.mrb[0].mxu0 %v699
    %v772 = vpop.f32.mrb[0].mxu0
    %v773 = vadd.f32 0.0, %v772
    %v774 = vpop.f32.mrb[0].mxu0
    %775 = vdwg.mxu0
    %776 = vrot.lane.b32.xlu0 %v355, 112
    %v777 = vpop.permute.xlu0 %776
    %778 = vrot.lane.b32.xlu0 %v360, 112
    %v779 = vpop.permute.xlu0 %778
    %780 = vrot.lane.b32.xlu0 %v355, 80
    %v781 = vpop.permute.xlu0 %780
    %782 = vrot.lane.b32.xlu0 %v360, 80
    %v783 = vpop.permute.xlu0 %782
    %v784 = vsel %vm374, %v777, 0
    %v786 = vsel %vm374, %v779, 0
    %v788 = vsel %vm374, %v781, 0
    %v790 = vsel %vm374, %v783, 0
    %792 = vmatprep.subr.mxu0 0.0
    %793 = vmatpush1.xpose.msra.mxu0 %v788
    %794 = vmatprep.subr.mxu0 0.0
    %795 = vmatpush1.xpose.msra.mxu0 %v790
    %796 = vmatprep.subr.mxu0 0.0
    %797 = vmatpush1.xpose.msra.mxu0 0.0
    %798 = vmatprep.subr.mxu0 0.0
    %799 = vmatpush1.xpose.msra.mxu0 0.0
    %800 = vmatprep.subr.mxu0 0.0
    %801 = vmatpush1.xpose.msra.mxu0 0.0
    %802 = vmatprep.subr.mxu0 0.0
    %803 = vmatpush1.xpose.msra.mxu0 0.0
    %804 = vmatprep.subr.mxu0 0.0
    %805 = vmatpush1.xpose.msra.mxu0 0.0
    %806 = vmatprep.subr.mxu0 0.0
    %807 = vmatpush1.xpose.msra.mxu0 0.0
    %808 = vmatprep.subr.mxu0 0.0
    %809 = vmatpush1.xpose.msra.mxu0 0.0
    %810 = vmatprep.subr.mxu0 0.0
    %811 = vmatpush1.xpose.msra.mxu0 0.0
    %812 = vmatprep.subr.mxu0 0.0
    %813 = vmatpush1.xpose.msra.mxu0 0.0
    %814 = vmatprep.subr.mxu0 0.0
    %815 = vmatpush1.xpose.msra.mxu0 0.0
    %816 = vmatprep.subr.mxu0 0.0
    %817 = vmatpush1.xpose.msra.mxu0 0.0
    %818 = vmatprep.subr.mxu0 0.0
    %819 = vmatpush1.xpose.msra.mxu0 0.0
    %820 = vmatprep.subr.mxu0 0.0
    %821 = vmatpush1.xpose.msra.mxu0 0.0
    %822 = vmatprep.subr.mxu0 0.0
    %823 = vmatpush1.xpose.msra.mxu0 0.0
    %824 = vmatprep.subr.mxu0 0.0
    %825 = vmatpush1.xpose.msra.mxu0 0.0
    %826 = vmatprep.subr.mxu0 0.0
    %827 = vmatpush1.xpose.msra.mxu0 0.0
    %828 = vmatprep.subr.mxu0 0.0
    %829 = vmatpush1.xpose.msra.mxu0 0.0
    %830 = vmatprep.subr.mxu0 0.0
    %831 = vmatpush1.xpose.msra.mxu0 0.0
    %832 = vmatprep.subr.mxu0 0.0
    %833 = vmatpush1.xpose.msra.mxu0 0.0
    %834 = vmatprep.subr.mxu0 0.0
    %835 = vmatpush1.xpose.msra.mxu0 0.0
    %836 = vmatprep.subr.mxu0 0.0
    %837 = vmatpush1.xpose.msra.mxu0 0.0
    %838 = vmatprep.subr.mxu0 0.0
    %839 = vmatpush1.xpose.msra.mxu0 0.0
    %840 = vmatprep.subr.mxu0 0.0
    %841 = vmatpush1.xpose.msra.mxu0 0.0
    %842 = vmatprep.subr.mxu0 0.0
    %843 = vmatpush1.xpose.msra.mxu0 0.0
    %844 = vmatprep.subr.mxu0 0.0
    %845 = vmatpush1.xpose.msra.mxu0 0.0
    %846 = vmatprep.subr.mxu0 0.0
    %847 = vmatpush1.xpose.msra.mxu0 0.0
    %848 = vmatprep.subr.mxu0 0.0
    %849 = vmatpush1.xpose.msra.mxu0 0.0
    %850 = vmatprep.subr.mxu0 0.0
    %851 = vmatpush1.xpose.msra.mxu0 0.0
    %852 = vmatprep.subr.mxu0 0.0
    %853 = vmatpush1.xpose.msra.mxu0 0.0
    %854 = vmatprep.subr.mxu0 0.0
    %855 = vmatpush1.xpose.msra.mxu0 0.0
    %856 = vmatprep.mubr.f32.mxu0 0.0
    %857 = vmatmul.mubr.f32.gmra.mrb[0].mxu0 %v784
    %v858 = vpop.f32.mrb[0].mxu0
    %v859 = vadd.f32 0.0, %v858
    %v860 = vpop.f32.mrb[0].mxu0
    %861 = vmatprep.mubr.f32.mxu0 0.0
    %862 = vmatmul.mubr.f32.gmra.mrb[0].mxu0 %v786
    %v863 = vpop.f32.mrb[0].mxu0
    %v864 = vadd.f32 0.0, %v863
    %v865 = vpop.f32.mrb[0].mxu0
    %866 = vdwg.mxu0
    %v867 = vmul.f32 %v859, 0.35355338
    %v868 = vmul.f32 %v864, 0.35355338
    %v869 = vadd.f32 %v867, %v262
    %v870 = vadd.f32 %v868, %v263
    %v871 = vsel %vm462, %v869, -inf
    %872 = vmax.xlane.f32.xlu0 %v871
    %v873 = vpop.xlane.xlu0 %872
    %v874 = vsel %vm462, %v870, -inf
    %875 = vmax.xlane.f32.xlu0 %v874
    %v876 = vpop.xlane.xlu0 %875
    %v877 = vsub.f32 %v869, %v873
    %v878 = vsub.f32 %v870, %v876
    %v879 = vmul.f32 %v877, 1.442695
    %v880 = vpow.pop %v879
    %v881 = vmul.f32 %v878, 1.442695
    %v882 = vpow.pop %v881
    %v883 = vsel %vm462, %v880, 0.0
    %884 = vadd.xlane.f32.xlu0 %v883
    %v885 = vpop.xlane.xlu0 %884
    %v886 = vsel %vm462, %v882, 0.0
    %887 = vadd.xlane.f32.xlu0 %v886
    %v888 = vpop.xlane.xlu0 %887
    %v889 = vrcp.pop %v885
    %v890 = vrcp.pop %v888
    %v891 = vmul.f32 %v880, %v889
    %v892 = vmul.f32 %v882, %v890
    %893 = vrot.lane.b32.xlu0 %v355, 48
    %v894 = vpop.permute.xlu0 %893
    %895 = vrot.lane.b32.xlu0 %v360, 48
    %v896 = vpop.permute.xlu0 %895
    %v900 = vsel %vm462, %v891, 0
    %v903 = vsel %vm462, %v892, 0
    %905 = vmatprep.subr.mxu0 0.0
    %906 = vmatpush1.msra.mxu0 %v894
    %907 = vmatprep.subr.mxu0 0.0
    %908 = vmatpush1.msra.mxu0 %v896
    %909 = vmatprep.subr.mxu0 0.0
    %910 = vmatpush1.msra.mxu0 0.0
    %911 = vmatprep.subr.mxu0 0.0
    %912 = vmatpush1.msra.mxu0 0.0
    %913 = vmatprep.subr.mxu0 0.0
    %914 = vmatpush1.msra.mxu0 0.0
    %915 = vmatprep.subr.mxu0 0.0
    %916 = vmatpush1.msra.mxu0 0.0
    %917 = vmatprep.subr.mxu0 0.0
    %918 = vmatpush1.msra.mxu0 0.0
    %919 = vmatprep.subr.mxu0 0.0
    %920 = vmatpush1.msra.mxu0 0.0
    %921 = vmatprep.subr.mxu0 0.0
    %922 = vmatpush1.msra.mxu0 0.0
    %923 = vmatprep.subr.mxu0 0.0
    %924 = vmatpush1.msra.mxu0 0.0
    %925 = vmatprep.subr.mxu0 0.0
    %926 = vmatpush1.msra.mxu0 0.0
    %927 = vmatprep.subr.mxu0 0.0
    %928 = vmatpush1.msra.mxu0 0.0
    %929 = vmatprep.subr.mxu0 0.0
    %930 = vmatpush1.msra.mxu0 0.0
    %931 = vmatprep.subr.mxu0 0.0
    %932 = vmatpush1.msra.mxu0 0.0
    %933 = vmatprep.subr.mxu0 0.0
    %934 = vmatpush1.msra.mxu0 0.0
    %935 = vmatprep.subr.mxu0 0.0
    %936 = vmatpush1.msra.mxu0 0.0
    %937 = vmatprep.subr.mxu0 0.0
    %938 = vmatpush1.msra.mxu0 0.0
    %939 = vmatprep.subr.mxu0 0.0
    %940 = vmatpush1.msra.mxu0 0.0
    %941 = vmatprep.subr.mxu0 0.0
    %942 = vmatpush1.msra.mxu0 0.0
    %943 = vmatprep.subr.mxu0 0.0
    %944 = vmatpush1.msra.mxu0 0.0
    %945 = vmatprep.subr.mxu0 0.0
    %946 = vmatpush1.msra.mxu0 0.0
    %947 = vmatprep.subr.mxu0 0.0
    %948 = vmatpush1.msra.mxu0 0.0
    %949 = vmatprep.subr.mxu0 0.0
    %950 = vmatpush1.msra.mxu0 0.0
    %951 = vmatprep.subr.mxu0 0.0
    %952 = vmatpush1.msra.mxu0 0.0
    %953 = vmatprep.subr.mxu0 0.0
    %954 = vmatpush1.msra.mxu0 0.0
    %955 = vmatprep.subr.mxu0 0.0
    %956 = vmatpush1.msra.mxu0 0.0
    %957 = vmatprep.subr.mxu0 0.0
    %958 = vmatpush1.msra.mxu0 0.0
    %959 = vmatprep.subr.mxu0 0.0
    %960 = vmatpush1.msra.mxu0 0.0
    %961 = vmatprep.subr.mxu0 0.0
    %962 = vmatpush1.msra.mxu0 0.0
    %963 = vmatprep.subr.mxu0 0.0
    %964 = vmatpush1.msra.mxu0 0.0
    %965 = vmatprep.subr.mxu0 0.0
    %966 = vmatpush1.msra.mxu0 0.0
    %967 = vmatprep.subr.mxu0 0.0
    %968 = vmatpush1.msra.mxu0 0.0
    %969 = vmatprep.mubr.f32.mxu0 0.0
    %970 = vmatmul.mubr.f32.gmra.mrb[0].mxu0 %v900
    %v971 = vpop.f32.mrb[0].mxu0
    %v972 = vadd.f32 0.0, %v971
    %v973 = vpop.f32.mrb[0].mxu0
    %974 = vmatprep.mubr.f32.mxu0 0.0
    %975 = vmatmul.mubr.f32.gmra.mrb[0].mxu0 %v903
    %v976 = vpop.f32.mrb[0].mxu0
    %v977 = vadd.f32 0.0, %v976
    %v978 = vpop.f32.mrb[0].mxu0
    %979 = vdwg.mxu0
    %980 = vrot.lane.b32.xlu0 %v355, 104
    %v981 = vpop.permute.xlu0 %980
    %982 = vrot.lane.b32.xlu0 %v360, 104
    %v983 = vpop.permute.xlu0 %982
    %984 = vrot.lane.b32.xlu0 %v355, 72
    %v985 = vpop.permute.xlu0 %984
    %986 = vrot.lane.b32.xlu0 %v360, 72
    %v987 = vpop.permute.xlu0 %986
    %v988 = vsel %vm374, %v981, 0
    %v990 = vsel %vm374, %v983, 0
    %v992 = vsel %vm374, %v985, 0
    %v994 = vsel %vm374, %v987, 0
    %996 = vmatprep.subr.mxu0 0.0
    %997 = vmatpush1.xpose.msra.mxu0 %v992
    %998 = vmatprep.subr.mxu0 0.0
    %999 = vmatpush1.xpose.msra.mxu0 %v994
    %1000 = vmatprep.subr.mxu0 0.0
    %1001 = vmatpush1.xpose.msra.mxu0 0.0
    %1002 = vmatprep.subr.mxu0 0.0
    %1003 = vmatpush1.xpose.msra.mxu0 0.0
    %1004 = vmatprep.subr.mxu0 0.0
    %1005 = vmatpush1.xpose.msra.mxu0 0.0
    %1006 = vmatprep.subr.mxu0 0.0
    %1007 = vmatpush1.xpose.msra.mxu0 0.0
    %1008 = vmatprep.subr.mxu0 0.0
    %1009 = vmatpush1.xpose.msra.mxu0 0.0
    %1010 = vmatprep.subr.mxu0 0.0
    %1011 = vmatpush1.xpose.msra.mxu0 0.0
    %1012 = vmatprep.subr.mxu0 0.0
    %1013 = vmatpush1.xpose.msra.mxu0 0.0
    %1014 = vmatprep.subr.mxu0 0.0
    %1015 = vmatpush1.xpose.msra.mxu0 0.0
    %1016 = vmatprep.subr.mxu0 0.0
    %1017 = vmatpush1.xpose.msra.mxu0 0.0
    %1018 = vmatprep.subr.mxu0 0.0
    %1019 = vmatpush1.xpose.msra.mxu0 0.0
    %1020 = vmatprep.subr.mxu0 0.0
    %1021 = vmatpush1.xpose.msra.mxu0 0.0
    %1022 = vmatprep.subr.mxu0 0.0
    %1023 = vmatpush1.xpose.msra.mxu0 0.0
    %1024 = vmatprep.subr.mxu0 0.0
    %1025 = vmatpush1.xpose.msra.mxu0 0.0
    %1026 = vmatprep.subr.mxu0 0.0
    %1027 = vmatpush1.xpose.msra.mxu0 0.0
    %1028 = vmatprep.subr.mxu0 0.0
    %1029 = vmatpush1.xpose.msra.mxu0 0.0
    %1030 = vmatprep.subr.mxu0 0.0
    %1031 = vmatpush1.xpose.msra.mxu0 0.0
    %1032 = vmatprep.subr.mxu0 0.0
    %1033 = vmatpush1.xpose.msra.mxu0 0.0
    %1034 = vmatprep.subr.mxu0 0.0
    %1035 = vmatpush1.xpose.msra.mxu0 0.0
    %1036 = vmatprep.subr.mxu0 0.0
    %1037 = vmatpush1.xpose.msra.mxu0 0.0
    %1038 = vmatprep.subr.mxu0 0.0
    %1039 = vmatpush1.xpose.msra.mxu0 0.0
    %1040 = vmatprep.subr.mxu0 0.0
    %1041 = vmatpush1.xpose.msra.mxu0 0.0
    %1042 = vmatprep.subr.mxu0 0.0
    %1043 = vmatpush1.xpose.msra.mxu0 0.0
    %1044 = vmatprep.subr.mxu0 0.0
    %1045 = vmatpush1.xpose.msra.mxu0 0.0
    %1046 = vmatprep.subr.mxu0 0.0
    %1047 = vmatpush1.xpose.msra.mxu0 0.0
    %1048 = vmatprep.subr.mxu0 0.0
    %1049 = vmatpush1.xpose.msra.mxu0 0.0
    %1050 = vmatprep.subr.mxu0 0.0
    %1051 = vmatpush1.xpose.msra.mxu0 0.0
    %1052 = vmatprep.subr.mxu0 0.0
    %1053 = vmatpush1.xpose.msra.mxu0 0.0
    %1054 = vmatprep.subr.mxu0 0.0
    %1055 = vmatpush1.xpose.msra.mxu0 0.0
    %1056 = vmatprep.subr.mxu0 0.0
    %1057 = vmatpush1.xpose.msra.mxu0 0.0
    %1058 = vmatprep.subr.mxu0 0.0
    %1059 = vmatpush1.xpose.msra.mxu0 0.0
    %1060 = vmatprep.mubr.f32.mxu0 0.0
    %1061 = vmatmul.mubr.f32.gmra.mrb[0].mxu0 %v988
    %v1062 = vpop.f32.mrb[0].mxu0
    %v1063 = vadd.f32 0.0, %v1062
    %v1064 = vpop.f32.mrb[0].mxu0
    %1065 = vmatprep.mubr.f32.mxu0 0.0
    %1066 = vmatmul.mubr.f32.gmra.mrb[0].mxu0 %v990
    %v1067 = vpop.f32.mrb[0].mxu0
    %v1068 = vadd.f32 0.0, %v1067
    %v1069 = vpop.f32.mrb[0].mxu0
    %1070 = vdwg.mxu0
    %v1071 = vmul.f32 %v1063, 0.35355338
    %v1072 = vmul.f32 %v1068, 0.35355338
    %v1073 = vadd.f32 %v1071, %v262
    %v1074 = vadd.f32 %v1072, %v263
    %v1075 = vsel %vm462, %v1073, -inf
    %1076 = vmax.xlane.f32.xlu0 %v1075
    %v1077 = vpop.xlane.xlu0 %1076
    %v1078 = vsel %vm462, %v1074, -inf
    %1079 = vmax.xlane.f32.xlu0 %v1078
    %v1080 = vpop.xlane.xlu0 %1079
    %v1081 = vsub.f32 %v1073, %v1077
    %v1082 = vsub.f32 %v1074, %v1080
    %v1083 = vmul.f32 %v1081, 1.442695
    %v1084 = vpow.pop %v1083
    %v1085 = vmul.f32 %v1082, 1.442695
    %v1086 = vpow.pop %v1085
    %v1087 = vsel %vm462, %v1084, 0.0
    %1088 = vadd.xlane.f32.xlu0 %v1087
    %v1089 = vpop.xlane.xlu0 %1088
    %v1090 = vsel %vm462, %v1086, 0.0
    %1091 = vadd.xlane.f32.xlu0 %v1090
    %v1092 = vpop.xlane.xlu0 %1091
    %v1093 = vrcp.pop %v1089
    %v1094 = vrcp.pop %v1092
    %v1095 = vmul.f32 %v1084, %v1093
    %v1096 = vmul.f32 %v1086, %v1094
    %1097 = vrot.lane.b32.xlu0 %v355, 40
    %v1098 = vpop.permute.xlu0 %1097
    %1099 = vrot.lane.b32.xlu0 %v360, 40
    %v1100 = vpop.permute.xlu0 %1099
    %v1104 = vsel %vm462, %v1095, 0
    %v1107 = vsel %vm462, %v1096, 0
    %1109 = vmatprep.subr.mxu0 0.0
    %1110 = vmatpush1.msra.mxu0 %v1098
    %1111 = vmatprep.subr.mxu0 0.0
    %1112 = vmatpush1.msra.mxu0 %v1100
    %1113 = vmatprep.subr.mxu0 0.0
    %1114 = vmatpush1.msra.mxu0 0.0
    %1115 = vmatprep.subr.mxu0 0.0
    %1116 = vmatpush1.msra.mxu0 0.0
    %1117 = vmatprep.subr.mxu0 0.0
    %1118 = vmatpush1.msra.mxu0 0.0
    %1119 = vmatprep.subr.mxu0 0.0
    %1120 = vmatpush1.msra.mxu0 0.0
    %1121 = vmatprep.subr.mxu0 0.0
    %1122 = vmatpush1.msra.mxu0 0.0
    %1123 = vmatprep.subr.mxu0 0.0
    %1124 = vmatpush1.msra.mxu0 0.0
    %1125 = vmatprep.subr.mxu0 0.0
    %1126 = vmatpush1.msra.mxu0 0.0
    %1127 = vmatprep.subr.mxu0 0.0
    %1128 = vmatpush1.msra.mxu0 0.0
    %1129 = vmatprep.subr.mxu0 0.0
    %1130 = vmatpush1.msra.mxu0 0.0
    %1131 = vmatprep.subr.mxu0 0.0
    %1132 = vmatpush1.msra.mxu0 0.0
    %1133 = vmatprep.subr.mxu0 0.0
    %1134 = vmatpush1.msra.mxu0 0.0
    %1135 = vmatprep.subr.mxu0 0.0
    %1136 = vmatpush1.msra.mxu0 0.0
    %1137 = vmatprep.subr.mxu0 0.0
    %1138 = vmatpush1.msra.mxu0 0.0
    %1139 = vmatprep.subr.mxu0 0.0
    %1140 = vmatpush1.msra.mxu0 0.0
    %1141 = vmatprep.subr.mxu0 0.0
    %1142 = vmatpush1.msra.mxu0 0.0
    %1143 = vmatprep.subr.mxu0 0.0
    %1144 = vmatpush1.msra.mxu0 0.0
    %1145 = vmatprep.subr.mxu0 0.0
    %1146 = vmatpush1.msra.mxu0 0.0
    %1147 = vmatprep.subr.mxu0 0.0
    %1148 = vmatpush1.msra.mxu0 0.0
    %1149 = vmatprep.subr.mxu0 0.0
    %1150 = vmatpush1.msra.mxu0 0.0
    %1151 = vmatprep.subr.mxu0 0.0
    %1152 = vmatpush1.msra.mxu0 0.0
    %1153 = vmatprep.subr.mxu0 0.0
    %1154 = vmatpush1.msra.mxu0 0.0
    %1155 = vmatprep.subr.mxu0 0.0
    %1156 = vmatpush1.msra.mxu0 0.0
    %1157 = vmatprep.subr.mxu0 0.0
    %1158 = vmatpush1.msra.mxu0 0.0
    %1159 = vmatprep.subr.mxu0 0.0
    %1160 = vmatpush1.msra.mxu0 0.0
    %1161 = vmatprep.subr.mxu0 0.0
    %1162 = vmatpush1.msra.mxu0 0.0
    %1163 = vmatprep.subr.mxu0 0.0
    %1164 = vmatpush1.msra.mxu0 0.0
    %1165 = vmatprep.subr.mxu0 0.0
    %1166 = vmatpush1.msra.mxu0 0.0
    %1167 = vmatprep.subr.mxu0 0.0
    %1168 = vmatpush1.msra.mxu0 0.0
    %1169 = vmatprep.subr.mxu0 0.0
    %1170 = vmatpush1.msra.mxu0 0.0
    %1171 = vmatprep.subr.mxu0 0.0
    %1172 = vmatpush1.msra.mxu0 0.0
    %1173 = vmatprep.mubr.f32.mxu0 0.0
    %1174 = vmatmul.mubr.f32.gmra.mrb[0].mxu0 %v1104
    %v1175 = vpop.f32.mrb[0].mxu0
    %v1176 = vadd.f32 0.0, %v1175
    %v1177 = vpop.f32.mrb[0].mxu0
    %1178 = vmatprep.mubr.f32.mxu0 0.0
    %1179 = vmatmul.mubr.f32.gmra.mrb[0].mxu0 %v1107
    %v1180 = vpop.f32.mrb[0].mxu0
    %v1181 = vadd.f32 0.0, %v1180
    %v1182 = vpop.f32.mrb[0].mxu0
    %1183 = vdwg.mxu0
    %1186 = vrot.lane.b32.xlu0 %v768, 8
    %v1187 = vpop.permute.xlu0 %1186
    %1188 = vrot.lane.b32.xlu0 %v773, 8
    %v1189 = vpop.permute.xlu0 %1188
    %1194 = vrot.lane.b32.xlu0 %v972, 16
    %v1195 = vpop.permute.xlu0 %1194
    %1196 = vrot.lane.b32.xlu0 %v977, 16
    %v1197 = vpop.permute.xlu0 %1196
    %1202 = vrot.lane.b32.xlu0 %v1176, 24
    %v1203 = vpop.permute.xlu0 %1202
    %1204 = vrot.lane.b32.xlu0 %v1181, 24
    %v1205 = vpop.permute.xlu0 %1204
    %v1208 = vsel %vm374, %v564, %v1187
    %v1209 = vsel %vm374, %v569, %v1189
    %v1210 = vsel %vm462, %v1208, %v1195
    %v1211 = vsel %vm462, %v1209, %v1197
    %vm1212 = vcmask 195584
    %v1213 = vsel %vm1212, %v1210, %v1203
    %v1214 = vsel %vm1212, %v1211, %v1205
    %v1215 = vlaneseq
    %v1216 = vshrl.u32 %v1215, 7
    %v1217 = vsub.s32 0, %v1216
    %v1218 = vrot.slane %v367, %v1217
    %v1220 = vsel %vm166, %v1213, 0
    %v1223 = vsel %vm166, %v1214, 0
    %1225 = vmatprep.subr.mxu0 0.0
    %1226 = vmatpush1.msra.mxu0 %v363
    %1227 = vmatprep.subr.mxu0 0.0
    %1228 = vmatpush1.msra.mxu0 %v364
    %1229 = vmatprep.subr.mxu0 0.0
    %1230 = vmatpush1.msra.mxu0 %v365
    %1231 = vmatprep.subr.mxu0 0.0
    %1232 = vmatpush1.msra.mxu0 %v366
    %1233 = vmatprep.subr.mxu0 0.0
    %1234 = vmatpush1.msra.mxu0 0.0
    %1235 = vmatprep.subr.mxu0 0.0
    %1236 = vmatpush1.msra.mxu0 0.0
    %1237 = vmatprep.subr.mxu0 0.0
    %1238 = vmatpush1.msra.mxu0 0.0
    %1239 = vmatprep.subr.mxu0 0.0
    %1240 = vmatpush1.msra.mxu0 0.0
    %1241 = vmatprep.subr.mxu0 0.0
    %1242 = vmatpush1.msra.mxu0 0.0
    %1243 = vmatprep.subr.mxu0 0.0
    %1244 = vmatpush1.msra.mxu0 0.0
    %1245 = vmatprep.subr.mxu0 0.0
    %1246 = vmatpush1.msra.mxu0 0.0
    %1247 = vmatprep.subr.mxu0 0.0
    %1248 = vmatpush1.msra.mxu0 0.0
    %1249 = vmatprep.subr.mxu0 0.0
    %1250 = vmatpush1.msra.mxu0 0.0
    %1251 = vmatprep.subr.mxu0 0.0
    %1252 = vmatpush1.msra.mxu0 0.0
    %1253 = vmatprep.subr.mxu0 0.0
    %1254 = vmatpush1.msra.mxu0 0.0
    %1255 = vmatprep.subr.mxu0 0.0
    %1256 = vmatpush1.msra.mxu0 0.0
    %1257 = vmatprep.subr.mxu0 0.0
    %1258 = vmatpush1.msra.mxu0 0.0
    %1259 = vmatprep.subr.mxu0 0.0
    %1260 = vmatpush1.msra.mxu0 0.0
    %1261 = vmatprep.subr.mxu0 0.0
    %1262 = vmatpush1.msra.mxu0 0.0
    %1263 = vmatprep.subr.mxu0 0.0
    %1264 = vmatpush1.msra.mxu0 0.0
    %1265 = vmatprep.subr.mxu0 0.0
    %1266 = vmatpush1.msra.mxu0 0.0
    %1267 = vmatprep.subr.mxu0 0.0
    %1268 = vmatpush1.msra.mxu0 0.0
    %1269 = vmatprep.subr.mxu0 0.0
    %1270 = vmatpush1.msra.mxu0 0.0
    %1271 = vmatprep.subr.mxu0 0.0
    %1272 = vmatpush1.msra.mxu0 0.0
    %1273 = vmatprep.subr.mxu0 0.0
    %1274 = vmatpush1.msra.mxu0 0.0
    %1275 = vmatprep.subr.mxu0 0.0
    %1276 = vmatpush1.msra.mxu0 0.0
    %1277 = vmatprep.subr.mxu0 0.0
    %1278 = vmatpush1.msra.mxu0 0.0
    %1279 = vmatprep.subr.mxu0 0.0
    %1280 = vmatpush1.msra.mxu0 0.0
    %1281 = vmatprep.subr.mxu0 0.0
    %1282 = vmatpush1.msra.mxu0 0.0
    %1283 = vmatprep.subr.mxu0 0.0
    %1284 = vmatpush1.msra.mxu0 0.0
    %1285 = vmatprep.subr.mxu0 0.0
    %1286 = vmatpush1.msra.mxu0 0.0
    %1287 = vmatprep.subr.mxu0 0.0
    %1288 = vmatpush1.msra.mxu0 0.0
    %1289 = vmatprep.mubr.f32.mxu0 0.0
    %1290 = vmatmul.mubr.f32.gmra.mrb[0].mxu0 %v1220
    %v1291 = vpop.f32.mrb[0].mxu0
    %v1292 = vadd.f32 %v1218, %v1291
    %v1293 = vpop.f32.mrb[0].mxu0
    %1294 = vmatprep.mubr.f32.mxu0 0.0
    %1295 = vmatmul.mubr.f32.gmra.mrb[0].mxu0 %v1223
    %v1296 = vpop.f32.mrb[0].mxu0
    %v1297 = vadd.f32 %v1218, %v1296
    %v1298 = vpop.f32.mrb[0].mxu0
    %1299 = vdwg.mxu0
    %v1300 = vadd.f32 %v1292, %v207
    %v1301 = vadd.f32 %v1297, %v208
    %v1302 = vld [vmem:[#allocation2 + $0xd8] sm:$0x3]
    %v1303 = vsel %vm166, %v1300, 0.0
    %1304 = vadd.xlane.f32.xlu0 %v1303
    %v1305 = vpop.xlane.xlu0 %1304
    %v1306 = vsel %vm166, %v1301, 0.0
    %1307 = vadd.xlane.f32.xlu0 %v1306
    %v1308 = vpop.xlane.xlu0 %1307
    %v1309 = vmul.f32 %v1300, %v1300
    %v1310 = vmul.f32 %v1301, %v1301
    %v1311 = vsel %vm166, %v1309, 0.0
    %1312 = vadd.xlane.f32.xlu0 %v1311
    %v1313 = vpop.xlane.xlu0 %1312
    %v1314 = vsel %vm166, %v1310, 0.0
    %1315 = vadd.xlane.f32.xlu0 %v1314
    %v1316 = vpop.xlane.xlu0 %1315
    %v1317 = vmul.f32 %v1305, 0.03125
    %v1318 = vmul.f32 %v1308, 0.03125
    %v1319 = vmul.f32 %v1313, 0.03125
    %v1320 = vmul.f32 %v1316, 0.03125
    %v1321 = vmul.f32 %v1317, %v1317
    %v1322 = vmul.f32 %v1318, %v1318
    %v1323 = vsub.f32 %v1319, %v1321
    %v1324 = vsub.f32 %v1320, %v1322
    %v1325 = vsub.f32 %v1300, %v1317
    %v1326 = vsub.f32 %v1301, %v1318
    %v1327 = vadd.f32 %v1323, 1e-05
    %v1328 = vadd.f32 %v1324, 1e-05
    %v1329 = vrsqrt.pop %v1327
    %v1330 = vrsqrt.pop %v1328
    %v1331 = vmul.f32 %v1325, %v1329
    %v1332 = vmul.f32 %v1326, %v1330
    %v1333 = vlaneseq
    %v1334 = vshrl.u32 %v1333, 7
    %v1335 = vsub.s32 0, %v1334
    %v1336 = vrot.slane %v1302, %v1335
    %v1337 = vmul.f32 %v1331, %v1336
    %v1338 = vmul.f32 %v1332, %v1336
    %v1339 = vlaneseq
    %v1340 = vshrl.u32 %v1339, 7
    %v1341 = vsub.s32 1, %v1340
    %v1342 = vrot.slane %v1302, %v1341
    %v1343 = vadd.f32 %v1337, %v1342
    %v1344 = vadd.f32 %v1338, %v1342
    %v1345 = vld [vmem:[#allocation2 + $0xe0] sm:$0xff]
    %v1346 = vld [vmem:[#allocation2 + $0xe8] sm:$0xff]
    %v1347 = vld [vmem:[#allocation2 + $0xf0] sm:$0xff]
    %v1348 = vld [vmem:[#allocation2 + $0xf8] sm:$0xff]
    %v1349 = vld [vmem:[#allocation2 + $0x100] sm:$0x1]
    %v1350 = vlaneseq
    %v1351 = vshrl.u32 %v1350, 7
    %v1352 = vsub.s32 0, %v1351
    %v1353 = vrot.slane %v1349, %v1352
    %v1355 = vsel %vm166, %v1343, 0
    %v1358 = vsel %vm166, %v1344, 0
    %1360 = vmatprep.subr.mxu0 0.0
    %1361 = vmatpush1.msra.mxu0 %v1345
    %1362 = vmatprep.subr.mxu0 0.0
    %1363 = vmatpush1.msra.mxu0 %v1346
    %1364 = vmatprep.subr.mxu0 0.0
    %1365 = vmatpush1.msra.mxu0 %v1347
    %1366 = vmatprep.subr.mxu0 0.0
    %1367 = vmatpush1.msra.mxu0 %v1348
    %1368 = vmatprep.subr.mxu0 0.0
    %1369 = vmatpush1.msra.mxu0 0.0
    %1370 = vmatprep.subr.mxu0 0.0
    %1371 = vmatpush1.msra.mxu0 0.0
    %1372 = vmatprep.subr.mxu0 0.0
    %1373 = vmatpush1.msra.mxu0 0.0
    %1374 = vmatprep.subr.mxu0 0.0
    %1375 = vmatpush1.msra.mxu0 0.0
    %1376 = vmatprep.subr.mxu0 0.0
    %1377 = vmatpush1.msra.mxu0 0.0
    %1378 = vmatprep.subr.mxu0 0.0
    %1379 = vmatpush1.msra.mxu0 0.0
    %1380 = vmatprep.subr.mxu0 0.0
    %1381 = vmatpush1.msra.mxu0 0.0
    %1382 = vmatprep.subr.mxu0 0.0
    %1383 = vmatpush1.msra.mxu0 0.0
    %1384 = vmatprep.subr.mxu0 0.0
    %1385 = vmatpush1.msra.mxu0 0.0
    %1386 = vmatprep.subr.mxu0 0.0
    %1387 = vmatpush1.msra.mxu0 0.0
    %1388 = vmatprep.subr.mxu0 0.0
    %1389 = vmatpush1.msra.mxu0 0.0
    %1390 = vmatprep.subr.mxu0 0.0
    %1391 = vmatpush1.msra.mxu0 0.0
    %1392 = vmatprep.subr.mxu0 0.0
    %1393 = vmatpush1.msra.mxu0 0.0
    %1394 = vmatprep.subr.mxu0 0.0
    %1395 = vmatpush1.msra.mxu0 0.0
    %1396 = vmatprep.subr.mxu0 0.0
    %1397 = vmatpush1.msra.mxu0 0.0
    %1398 = vmatprep.subr.mxu0 0.0
    %1399 = vmatpush1.msra.mxu0 0.0
    %1400 = vmatprep.subr.mxu0 0.0
    %1401 = vmatpush1.msra.mxu0 0.0
    %1402 = vmatprep.subr.mxu0 0.0
    %1403 = vmatpush1.msra.mxu0 0.0
    %1404 = vmatprep.subr.mxu0 0.0
    %1405 = vmatpush1.msra.mxu0 0.0
    %1406 = vmatprep.subr.mxu0 0.0
    %1407 = vmatpush1.msra.mxu0 0.0
    %1408 = vmatprep.subr.mxu0 0.0
    %1409 = vmatpush1.msra.mxu0 0.0
    %1410 = vmatprep.subr.mxu0 0.0
    %1411 = vmatpush1.msra.mxu0 0.0
    %1412 = vmatprep.subr.mxu0 0.0
    %1413 = vmatpush1.msra.mxu0 0.0
    %1414 = vmatprep.subr.mxu0 0.0
    %1415 = vmatpush1.msra.mxu0 0.0
    %1416 = vmatprep.subr.mxu0 0.0
    %1417 = vmatpush1.msra.mxu0 0.0
    %1418 = vmatprep.subr.mxu0 0.0
    %1419 = vmatpush1.msra.mxu0 0.0
    %1420 = vmatprep.subr.mxu0 0.0
    %1421 = vmatpush1.msra.mxu0 0.0
    %1422 = vmatprep.subr.mxu0 0.0
    %1423 = vmatpush1.msra.mxu0 0.0
    %1424 = vmatprep.mubr.f32.mxu0 0.0
    %1425 = vmatmul.mubr.f32.gmra.mrb[0].mxu0 %v1355
    %v1426 = vpop.f32.mrb[0].mxu0
    %v1427 = vadd.f32 %v1353, %v1426
    %v1428 = vpop.f32.mrb[0].mxu0
    %1429 = vmatprep.mubr.f32.mxu0 0.0
    %1430 = vmatmul.mubr.f32.gmra.mrb[0].mxu0 %v1358
    %v1431 = vpop.f32.mrb[0].mxu0
    %v1432 = vadd.f32 %v1353, %v1431
    %v1433 = vpop.f32.mrb[0].mxu0
    %1434 = vdwg.mxu0
    %v1435 = vmul.f32 %v1427, %v1427
    %v1436 = vmul.f32 %v1432, %v1432
    %v1437 = vmul.f32 %v1427, %v1435
    %v1438 = vmul.f32 %v1432, %v1436
    %v1439 = vmul.f32 %v1437, 0.044715
    %v1440 = vmul.f32 %v1438, 0.044715
    %v1441 = vadd.f32 %v1427, %v1439
    %v1442 = vadd.f32 %v1432, %v1440
    %v1443 = vmul.f32 %v1441, 0.7978846
    %v1444 = vmul.f32 %v1442, 0.7978846
    %v1445 = vtanh.pop %v1443
    %v1446 = vtanh.pop %v1444
    %v1447 = vadd.f32 %v1445, 1.0
    %v1448 = vadd.f32 %v1446, 1.0
    %v1449 = vmul.f32 %v1447, 0.5
    %v1450 = vmul.f32 %v1448, 0.5
    %v1451 = vmul.f32 %v1427, %v1449
    %v1452 = vmul.f32 %v1432, %v1450
    %v1453 = vld [vmem:[#allocation2 + $0x108] sm:$0xff]
    %v1454 = vld [vmem:[#allocation2 + $0x110] sm:$0xff]
    %v1455 = vld [vmem:[#allocation2 + $0x118] sm:$0xff]
    %v1456 = vld [vmem:[#allocation2 + $0x120] sm:$0xff]
    %v1457 = vld [vmem:[#allocation2 + $0x128] sm:$0xff]
    %v1458 = vld [vmem:[#allocation2 + $0x130] sm:$0xff]
    %v1459 = vld [vmem:[#allocation2 + $0x138] sm:$0xff]
    %v1460 = vld [vmem:[#allocation2 + $0x140] sm:$0xff]
    %v1461 = vld [vmem:[#allocation2 + $0x148] sm:$0x1]
    %v1462 = vlaneseq
    %v1463 = vshrl.u32 %v1462, 7
    %v1464 = vsub.s32 0, %v1463
    %v1465 = vrot.slane %v1461, %v1464
    %v1467 = vsel %vm64, %v1451, 0
    %v1470 = vsel %vm64, %v1452, 0
    %1472 = vmatprep.subr.mxu0 0.0
    %1473 = vmatpush1.msra.mxu0 %v1453
    %1474 = vmatprep.subr.mxu0 0.0
    %1475 = vmatpush1.msra.mxu0 %v1454
    %1476 = vmatprep.subr.mxu0 0.0
    %1477 = vmatpush1.msra.mxu0 %v1455
    %1478 = vmatprep.subr.mxu0 0.0
    %1479 = vmatpush1.msra.mxu0 %v1456
    %1480 = vmatprep.subr.mxu0 0.0
    %1481 = vmatpush1.msra.mxu0 %v1457
    %1482 = vmatprep.subr.mxu0 0.0
    %1483 = vmatpush1.msra.mxu0 %v1458
    %1484 = vmatprep.subr.mxu0 0.0
    %1485 = vmatpush1.msra.mxu0 %v1459
    %1486 = vmatprep.subr.mxu0 0.0
    %1487 = vmatpush1.msra.mxu0 %v1460
    %1488 = vmatprep.subr.mxu0 0.0
    %1489 = vmatpush1.msra.mxu0 0.0
    %1490 = vmatprep.subr.mxu0 0.0
    %1491 = vmatpush1.msra.mxu0 0.0
    %1492 = vmatprep.subr.mxu0 0.0
    %1493 = vmatpush1.msra.mxu0 0.0
    %1494 = vmatprep.subr.mxu0 0.0
    %1495 = vmatpush1.msra.mxu0 0.0
    %1496 = vmatprep.subr.mxu0 0.0
    %1497 = vmatpush1.msra.mxu0 0.0
    %1498 = vmatprep.subr.mxu0 0.0
    %1499 = vmatpush1.msra.mxu0 0.0
    %1500 = vmatprep.subr.mxu0 0.0
    %1501 = vmatpush1.msra.mxu0 0.0
    %1502 = vmatprep.subr.mxu0 0.0
    %1503 = vmatpush1.msra.mxu0 0.0
    %1504 = vmatprep.subr.mxu0 0.0
    %1505 = vmatpush1.msra.mxu0 0.0
    %1506 = vmatprep.subr.mxu0 0.0
    %1507 = vmatpush1.msra.mxu0 0.0
    %1508 = vmatprep.subr.mxu0 0.0
    %1509 = vmatpush1.msra.mxu0 0.0
    %1510 = vmatprep.subr.mxu0 0.0
    %1511 = vmatpush1.msra.mxu0 0.0
    %1512 = vmatprep.subr.mxu0 0.0
    %1513 = vmatpush1.msra.mxu0 0.0
    %1514 = vmatprep.subr.mxu0 0.0
    %1515 = vmatpush1.msra.mxu0 0.0
    %1516 = vmatprep.subr.mxu0 0.0
    %1517 = vmatpush1.msra.mxu0 0.0
    %1518 = vmatprep.subr.mxu0 0.0
    %1519 = vmatpush1.msra.mxu0 0.0
    %1520 = vmatprep.subr.mxu0 0.0
    %1521 = vmatpush1.msra.mxu0 0.0
    %1522 = vmatprep.subr.mxu0 0.0
    %1523 = vmatpush1.msra.mxu0 0.0
    %1524 = vmatprep.subr.mxu0 0.0
    %1525 = vmatpush1.msra.mxu0 0.0
    %1526 = vmatprep.subr.mxu0 0.0
    %1527 = vmatpush1.msra.mxu0 0.0
    %1528 = vmatprep.subr.mxu0 0.0
    %1529 = vmatpush1.msra.mxu0 0.0
    %1530 = vmatprep.subr.mxu0 0.0
    %1531 = vmatpush1.msra.mxu0 0.0
    %1532 = vmatprep.subr.mxu0 0.0
    %1533 = vmatpush1.msra.mxu0 0.0
    %1534 = vmatprep.subr.mxu0 0.0
    %1535 = vmatpush1.msra.mxu0 0.0
    %1536 = vmatprep.mubr.f32.mxu0 0.0
    %1537 = vmatmul.mubr.f32.gmra.mrb[0].mxu0 %v1467
    %v1538 = vpop.f32.mrb[0].mxu0
    %v1539 = vadd.f32 %v1465, %v1538
    %v1540 = vpop.f32.mrb[0].mxu0
    %1541 = vmatprep.mubr.f32.mxu0 0.0
    %1542 = vmatmul.mubr.f32.gmra.mrb[0].mxu0 %v1470
    %v1543 = vpop.f32.mrb[0].mxu0
    %v1544 = vadd.f32 %v1465, %v1543
    %v1545 = vpop.f32.mrb[0].mxu0
    %1546 = vdwg.mxu0
    %v1547 = vadd.f32 %v1539, %v1343
    %v1548 = vadd.f32 %v1544, %v1344
    %v1549 = vld [vmem:[#allocation2 + $0x150] sm:$0x3]
    %v1550 = vsel %vm166, %v1547, 0.0
    %1551 = vadd.xlane.f32.xlu0 %v1550
    %v1552 = vpop.xlane.xlu0 %1551
    %v1553 = vsel %vm166, %v1548, 0.0
    %1554 = vadd.xlane.f32.xlu0 %v1553
    %v1555 = vpop.xlane.xlu0 %1554
    %v1556 = vmul.f32 %v1547, %v1547
    %v1557 = vmul.f32 %v1548, %v1548
    %v1558 = vsel %vm166, %v1556, 0.0
    %1559 = vadd.xlane.f32.xlu0 %v1558
    %v1560 = vpop.xlane.xlu0 %1559
    %v1561 = vsel %vm166, %v1557, 0.0
    %1562 = vadd.xlane.f32.xlu0 %v1561
    %v1563 = vpop.xlane.xlu0 %1562
    %v1564 = vmul.f32 %v1552, 0.03125
    %v1565 = vmul.f32 %v1555, 0.03125
    %v1566 = vmul.f32 %v1560, 0.03125
    %v1567 = vmul.f32 %v1563, 0.03125
    %v1568 = vmul.f32 %v1564, %v1564
    %v1569 = vmul.f32 %v1565, %v1565
    %v1570 = vsub.f32 %v1566, %v1568
    %v1571 = vsub.f32 %v1567, %v1569
    %v1572 = vsub.f32 %v1547, %v1564
    %v1573 = vsub.f32 %v1548, %v1565
    %v1574 = vadd.f32 %v1570, 1e-05
    %v1575 = vadd.f32 %v1571, 1e-05
    %v1576 = vrsqrt.pop %v1574
    %v1577 = vrsqrt.pop %v1575
    %v1578 = vmul.f32 %v1572, %v1576
    %v1579 = vmul.f32 %v1573, %v1577
    %v1580 = vlaneseq
    %v1581 = vshrl.u32 %v1580, 7
    %v1582 = vsub.s32 0, %v1581
    %v1583 = vrot.slane %v1549, %v1582
    %v1584 = vmul.f32 %v1578, %v1583
    %v1585 = vmul.f32 %v1579, %v1583
    %v1586 = vlaneseq
    %v1587 = vshrl.u32 %v1586, 7
    %v1588 = vsub.s32 1, %v1587
    %v1589 = vrot.slane %v1549, %v1588
    %v1590 = vadd.f32 %v1584, %v1589
    %v1591 = vadd.f32 %v1585, %v1589
    %v1592 = vld [vmem:[#allocation2 + $0x158] sm:$0xff]
    %v1593 = vld [vmem:[#allocation2 + $0x160] sm:$0xff]
    %v1594 = vld [vmem:[#allocation2 + $0x168] sm:$0xff]
    %v1595 = vld [vmem:[#allocation2 + $0x170] sm:$0xff]
    %v1596 = vld [vmem:[#allocation2 + $0x178] sm:$0x1]
    %v1597 = vlaneseq
    %v1598 = vshrl.u32 %v1597, 7
    %v1599 = vsub.s32 0, %v1598
    %v1600 = vrot.slane %v1596, %v1599
    %v1602 = vsel %vm166, %v1590, 0
    %v1605 = vsel %vm166, %v1591, 0
    %1607 = vmatprep.subr.mxu0 0.0
    %1608 = vmatpush1.msra.mxu0 %v1592
    %1609 = vmatprep.subr.mxu0 0.0
    %1610 = vmatpush1.msra.mxu0 %v1593
    %1611 = vmatprep.subr.mxu0 0.0
    %1612 = vmatpush1.msra.mxu0 %v1594
    %1613 = vmatprep.subr.mxu0 0.0
    %1614 = vmatpush1.msra.mxu0 %v1595
    %1615 = vmatprep.subr.mxu0 0.0
    %1616 = vmatpush1.msra.mxu0 0.0
    %1617 = vmatprep.subr.mxu0 0.0
    %1618 = vmatpush1.msra.mxu0 0.0
    %1619 = vmatprep.subr.mxu0 0.0
    %1620 = vmatpush1.msra.mxu0 0.0
    %1621 = vmatprep.subr.mxu0 0.0
    %1622 = vmatpush1.msra.mxu0 0.0
    %1623 = vmatprep.subr.mxu0 0.0
    %1624 = vmatpush1.msra.mxu0 0.0
    %1625 = vmatprep.subr.mxu0 0.0
    %1626 = vmatpush1.msra.mxu0 0.0
    %1627 = vmatprep.subr.mxu0 0.0
    %1628 = vmatpush1.msra.mxu0 0.0
    %1629 = vmatprep.subr.mxu0 0.0
    %1630 = vmatpush1.msra.mxu0 0.0
    %1631 = vmatprep.subr.mxu0 0.0
    %1632 = vmatpush1.msra.mxu0 0.0
    %1633 = vmatprep.subr.mxu0 0.0
    %1634 = vmatpush1.msra.mxu0 0.0
    %1635 = vmatprep.subr.mxu0 0.0
    %1636 = vmatpush1.msra.mxu0 0.0
    %1637 = vmatprep.subr.mxu0 0.0
    %1638 = vmatpush1.msra.mxu0 0.0
    %1639 = vmatprep.subr.mxu0 0.0
    %1640 = vmatpush1.msra.mxu0 0.0
    %1641 = vmatprep.subr.mxu0 0.0
    %1642 = vmatpush1.msra.mxu0 0.0
    %1643 = vmatprep.subr.mxu0 0.0
    %1644 = vmatpush1.msra.mxu0 0.0
    %1645 = vmatprep.subr.mxu0 0.0
    %1646 = vmatpush1.msra.mxu0 0.0
    %1647 = vmatprep.subr.mxu0 0.0
    %1648 = vmatpush1.msra.mxu0 0.0
    %1649 = vmatprep.subr.mxu0 0.0
    %1650 = vmatpush1.msra.mxu0 0.0
    %1651 = vmatprep.subr.mxu0 0.0
    %1652 = vmatpush1.msra.mxu0 0.0
    %1653 = vmatprep.subr.mxu0 0.0
    %1654 = vmatpush1.msra.mxu0 0.0
    %1655 = vmatprep.subr.mxu0 0.0
    %1656 = vmatpush1.msra.mxu0 0.0
    %1657 = vmatprep.subr.mxu0 0.0
    %1658 = vmatpush1.msra.mxu0 0.0
    %1659 = vmatprep.subr.mxu0 0.0
    %1660 = vmatpush1.msra.mxu0 0.0
    %1661 = vmatprep.subr.mxu0 0.0
    %1662 = vmatpush1.msra.mxu0 0.0
    %1663 = vmatprep.subr.mxu0 0.0
    %1664 = vmatpush1.msra.mxu0 0.0
    %1665 = vmatprep.subr.mxu0 0.0
    %1666 = vmatpush1.msra.mxu0 0.0
    %1667 = vmatprep.subr.mxu0 0.0
    %1668 = vmatpush1.msra.mxu0 0.0
    %1669 = vmatprep.subr.mxu0 0.0
    %1670 = vmatpush1.msra.mxu0 0.0
    %1671 = vmatprep.mubr.f32.mxu0 0.0
    %1672 = vmatmul.mubr.f32.gmra.mrb[0].mxu0 %v1602
    %v1673 = vpop.f32.mrb[0].mxu0
    %v1674 = vadd.f32 %v1600, %v1673
    %v1675 = vpop.f32.mrb[0].mxu0
    %1676 = vmatprep.mubr.f32.mxu0 0.0
    %1677 = vmatmul.mubr.f32.gmra.mrb[0].mxu0 %v1605
    %v1678 = vpop.f32.mrb[0].mxu0
    %v1679 = vadd.f32 %v1600, %v1678
    %v1680 = vpop.f32.mrb[0].mxu0
    %1681 = vdwg.mxu0
    %v1682 = vld [vmem:[#allocation2 + $0x180] sm:$0xff]
    %v1683 = vld [vmem:[#allocation2 + $0x188] sm:$0xff]
    %v1684 = vld [vmem:[#allocation2 + $0x190] sm:$0xff]
    %v1685 = vld [vmem:[#allocation2 + $0x198] sm:$0xff]
    %v1686 = vld [vmem:[#allocation2 + $0x1a0] sm:$0x1]
    %1689 = vrot.lane.b32.xlu0 %v1674, 96
    %v1690 = vpop.permute.xlu0 %1689
    %1691 = vrot.lane.b32.xlu0 %v1679, 96
    %v1692 = vpop.permute.xlu0 %1691
    %v1693 = vsel %vm374, %v1674, 0
    %v1695 = vsel %vm374, %v1679, 0
    %v1697 = vsel %vm374, %v1690, 0
    %v1699 = vsel %vm374, %v1692, 0
    %1701 = vmatprep.subr.mxu0 0.0
    %1702 = vmatpush1.xpose.msra.mxu0 %v1697
    %1703 = vmatprep.subr.mxu0 0.0
    %1704 = vmatpush1.xpose.msra.mxu0 %v1699
    %1705 = vmatprep.subr.mxu0 0.0
    %1706 = vmatpush1.xpose.msra.mxu0 0.0
    %1707 = vmatprep.subr.mxu0 0.0
    %1708 = vmatpush1.xpose.msra.mxu0 0.0
    %1709 = vmatprep.subr.mxu0 0.0
    %1710 = vmatpush1.xpose.msra.mxu0 0.0
    %1711 = vmatprep.subr.mxu0 0.0
    %1712 = vmatpush1.xpose.msra.mxu0 0.0
    %1713 = vmatprep.subr.mxu0 0.0
    %1714 = vmatpush1.xpose.msra.mxu0 0.0
    %1715 = vmatprep.subr.mxu0 0.0
    %1716 = vmatpush1.xpose.msra.mxu0 0.0
    %1717 = vmatprep.subr.mxu0 0.0
    %1718 = vmatpush1.xpose.msra.mxu0 0.0
    %1719 = vmatprep.subr.mxu0 0.0
    %1720 = vmatpush1.xpose.msra.mxu0 0.0
    %1721 = vmatprep.subr.mxu0 0.0
    %1722 = vmatpush1.xpose.msra.mxu0 0.0
    %1723 = vmatprep.subr.mxu0 0.0
    %1724 = vmatpush1.xpose.msra.mxu0 0.0
    %1725 = vmatprep.subr.mxu0 0.0
    %1726 = vmatpush1.xpose.msra.mxu0 0.0
    %1727 = vmatprep.subr.mxu0 0.0
    %1728 = vmatpush1.xpose.msra.mxu0 0.0
    %1729 = vmatprep.subr.mxu0 0.0
    %1730 = vmatpush1.xpose.msra.mxu0 0.0
    %1731 = vmatprep.subr.mxu0 0.0
    %1732 = vmatpush1.xpose.msra.mxu0 0.0
    %1733 = vmatprep.subr.mxu0 0.0
    %1734 = vmatpush1.xpose.msra.mxu0 0.0
    %1735 = vmatprep.subr.mxu0 0.0
    %1736 = vmatpush1.xpose.msra.mxu0 0.0
    %1737 = vmatprep.subr.mxu0 0.0
    %1738 = vmatpush1.xpose.msra.mxu0 0.0
    %1739 = vmatprep.subr.mxu0 0.0
    %1740 = vmatpush1.xpose.msra.mxu0 0.0
    %1741 = vmatprep.subr.mxu0 0.0
    %1742 = vmatpush1.xpose.msra.mxu0 0.0
    %1743 = vmatprep.subr.mxu0 0.0
    %1744 = vmatpush1.xpose.msra.mxu0 0.0
    %1745 = vmatprep.subr.mxu0 0.0
    %1746 = vmatpush1.xpose.msra.mxu0 0.0
    %1747 = vmatprep.subr.mxu0 0.0
    %1748 = vmatpush1.xpose.msra.mxu0 0.0
    %1749 = vmatprep.subr.mxu0 0.0
    %1750 = vmatpush1.xpose.msra.mxu0 0.0
    %1751 = vmatprep.subr.mxu0 0.0
    %1752 = vmatpush1.xpose.msra.mxu0 0.0
    %1753 = vmatprep.subr.mxu0 0.0
    %1754 = vmatpush1.xpose.msra.mxu0 0.0
    %1755 = vmatprep.subr.mxu0 0.0
    %1756 = vmatpush1.xpose.msra.mxu0 0.0
    %1757 = vmatprep.subr.mxu0 0.0
    %1758 = vmatpush1.xpose.msra.mxu0 0.0
    %1759 = vmatprep.subr.mxu0 0.0
    %1760 = vmatpush1.xpose.msra.mxu0 0.0
    %1761 = vmatprep.subr.mxu0 0.0
    %1762 = vmatpush1.xpose.msra.mxu0 0.0
    %1763 = vmatprep.subr.mxu0 0.0
    %1764 = vmatpush1.xpose.msra.mxu0 0.0
    %1765 = vmatprep.mubr.f32.mxu0 0.0
    %1766 = vmatmul.mubr.f32.gmra.mrb[0].mxu0 %v1693
    %v1767 = vpop.f32.mrb[0].mxu0
    %v1768 = vadd.f32 0.0, %v1767
    %v1769 = vpop.f32.mrb[0].mxu0
    %1770 = vmatprep.mubr.f32.mxu0 0.0
    %1771 = vmatmul.mubr.f32.gmra.mrb[0].mxu0 %v1695
    %v1772 = vpop.f32.mrb[0].mxu0
    %v1773 = vadd.f32 0.0, %v1772
    %v1774 = vpop.f32.mrb[0].mxu0
    %1775 = vdwg.mxu0
    %v1776 = vmul.f32 %v1768, 0.35355338
    %v1777 = vmul.f32 %v1773, 0.35355338
    %v1778 = vadd.f32 %v1776, %v262
    %v1779 = vadd.f32 %v1777, %v263
    %v1780 = vsel %vm462, %v1778, -inf
    %1781 = vmax.xlane.f32.xlu0 %v1780
    %v1782 = vpop.xlane.xlu0 %1781
    %v1783 = vsel %vm462, %v1779, -inf
    %1784 = vmax.xlane.f32.xlu0 %v1783
    %v1785 = vpop.xlane.xlu0 %1784
    %v1786 = vsub.f32 %v1778, %v1782
    %v1787 = vsub.f32 %v1779, %v1785
    %v1788 = vmul.f32 %v1786, 1.442695
    %v1789 = vpow.pop %v1788
    %v1790 = vmul.f32 %v1787, 1.442695
    %v1791 = vpow.pop %v1790
    %v1792 = vsel %vm462, %v1789, 0.0
    %1793 = vadd.xlane.f32.xlu0 %v1792
    %v1794 = vpop.xlane.xlu0 %1793
    %v1795 = vsel %vm462, %v1791, 0.0
    %1796 = vadd.xlane.f32.xlu0 %v1795
    %v1797 = vpop.xlane.xlu0 %1796
    %v1798 = vrcp.pop %v1794
    %v1799 = vrcp.pop %v1797
    %v1800 = vmul.f32 %v1789, %v1798
    %v1801 = vmul.f32 %v1791, %v1799
    %1802 = vrot.lane.b32.xlu0 %v1674, 64
    %v1803 = vpop.permute.xlu0 %1802
    %1804 = vrot.lane.b32.xlu0 %v1679, 64
    %v1805 = vpop.permute.xlu0 %1804
    %v1809 = vsel %vm462, %v1800, 0
    %v1812 = vsel %vm462, %v1801, 0
    %1814 = vmatprep.subr.mxu0 0.0
    %1815 = vmatpush1.msra.mxu0 %v1803
    %1816 = vmatprep.subr.mxu0 0.0
    %1817 = vmatpush1.msra.mxu0 %v1805
    %1818 = vmatprep.subr.mxu0 0.0
    %1819 = vmatpush1.msra.mxu0 0.0
    %1820 = vmatprep.subr.mxu0 0.0
    %1821 = vmatpush1.msra.mxu0 0.0
    %1822 = vmatprep.subr.mxu0 0.0
    %1823 = vmatpush1.msra.mxu0 0.0
    %1824 = vmatprep.subr.mxu0 0.0
    %1825 = vmatpush1.msra.mxu0 0.0
    %1826 = vmatprep.subr.mxu0 0.0
    %1827 = vmatpush1.msra.mxu0 0.0
    %1828 = vmatprep.subr.mxu0 0.0
    %1829 = vmatpush1.msra.mxu0 0.0
    %1830 = vmatprep.subr.mxu0 0.0
    %1831 = vmatpush1.msra.mxu0 0.0
    %1832 = vmatprep.subr.mxu0 0.0
    %1833 = vmatpush1.msra.mxu0 0.0
    %1834 = vmatprep.subr.mxu0 0.0
    %1835 = vmatpush1.msra.mxu0 0.0
    %1836 = vmatprep.subr.mxu0 0.0
    %1837 = vmatpush1.msra.mxu0 0.0
    %1838 = vmatprep.subr.mxu0 0.0
    %1839 = vmatpush1.msra.mxu0 0.0
    %1840 = vmatprep.subr.mxu0 0.0
    %1841 = vmatpush1.msra.mxu0 0.0
    %1842 = vmatprep.subr.mxu0 0.0
    %1843 = vmatpush1.msra.mxu0 0.0
    %1844 = vmatprep.subr.mxu0 0.0
    %1845 = vmatpush1.msra.mxu0 0.0
    %1846 = vmatprep.subr.mxu0 0.0
    %1847 = vmatpush1.msra.mxu0 0.0
    %1848 = vmatprep.subr.mxu0 0.0
    %1849 = vmatpush1.msra.mxu0 0.0
    %1850 = vmatprep.subr.mxu0 0.0
    %1851 = vmatpush1.msra.mxu0 0.0
    %1852 = vmatprep.subr.mxu0 0.0
    %1853 = vmatpush1.msra.mxu0 0.0
    %1854 = vmatprep.subr.mxu0 0.0
    %1855 = vmatpush1.msra.mxu0 0.0
    %1856 = vmatprep.subr.mxu0 0.0
    %1857 = vmatpush1.msra.mxu0 0.0
    %1858 = vmatprep.subr.mxu0 0.0
    %1859 = vmatpush1.msra.mxu0 0.0
    %1860 = vmatprep.subr.mxu0 0.0
    %1861 = vmatpush1.msra.mxu0 0.0
    %1862 = vmatprep.subr.mxu0 0.0
    %1863 = vmatpush1.msra.mxu0 0.0
    %1864 = vmatprep.subr.mxu0 0.0
    %1865 = vmatpush1.msra.mxu0 0.0
    %1866 = vmatprep.subr.mxu0 0.0
    %1867 = vmatpush1.msra.mxu0 0.0
    %1868 = vmatprep.subr.mxu0 0.0
    %1869 = vmatpush1.msra.mxu0 0.0
    %1870 = vmatprep.subr.mxu0 0.0
    %1871 = vmatpush1.msra.mxu0 0.0
    %1872 = vmatprep.subr.mxu0 0.0
    %1873 = vmatpush1.msra.mxu0 0.0
    %1874 = vmatprep.subr.mxu0 0.0
    %1875 = vmatpush1.msra.mxu0 0.0
    %1876 = vmatprep.subr.mxu0 0.0
    %1877 = vmatpush1.msra.mxu0 0.0
    %1878 = vmatprep.mubr.f32.mxu0 0.0
    %1879 = vmatmul.mubr.f32.gmra.mrb[0].mxu0 %v1809
    %v1880 = vpop.f32.mrb[0].mxu0
    %v1881 = vadd.f32 0.0, %v1880
    %v1882 = vpop.f32.mrb[0].mxu0
    %1883 = vmatprep.mubr.f32.mxu0 0.0
    %1884 = vmatmul.mubr.f32.gmra.mrb[0].mxu0 %v1812
    %v1885 = vpop.f32.mrb[0].mxu0
    %v1886 = vadd.f32 0.0, %v1885
    %v1887 = vpop.f32.mrb[0].mxu0
    %1888 = vdwg.mxu0
    %1889 = vrot.lane.b32.xlu0 %v1674, 120
    %v1890 = vpop.permute.xlu0 %1889
    %1891 = vrot.lane.b32.xlu0 %v1679, 120
    %v1892 = vpop.permute.xlu0 %1891
    %1893 = vrot.lane.b32.xlu0 %v1674, 88
    %v1894 = vpop.permute.xlu0 %1893
    %1895 = vrot.lane.b32.xlu0 %v1679, 88
    %v1896 = vpop.permute.xlu0 %1895
    %v1897 = vsel %vm374, %v1890, 0
    %v1899 = vsel %vm374, %v1892, 0
    %v1901 = vsel %vm374, %v1894, 0
    %v1903 = vsel %vm374, %v1896, 0
    %1905 = vmatprep.subr.mxu0 0.0
    %1906 = vmatpush1.xpose.msra.mxu0 %v1901
    %1907 = vmatprep.subr.mxu0 0.0
    %1908 = vmatpush1.xpose.msra.mxu0 %v1903
    %1909 = vmatprep.subr.mxu0 0.0
    %1910 = vmatpush1.xpose.msra.mxu0 0.0
    %1911 = vmatprep.subr.mxu0 0.0
    %1912 = vmatpush1.xpose.msra.mxu0 0.0
    %1913 = vmatprep.subr.mxu0 0.0
    %1914 = vmatpush1.xpose.msra.mxu0 0.0
    %1915 = vmatprep.subr.mxu0 0.0
    %1916 = vmatpush1.xpose.msra.mxu0 0.0
    %1917 = vmatprep.subr.mxu0 0.0
    %1918 = vmatpush1.xpose.msra.mxu0 0.0
    %1919 = vmatprep.subr.mxu0 0.0
    %1920 = vmatpush1.xpose.msra.mxu0 0.0
    %1921 = vmatprep.subr.mxu0 0.0
    %1922 = vmatpush1.xpose.msra.mxu0 0.0
    %1923 = vmatprep.subr.mxu0 0.0
    %1924 = vmatpush1.xpose.msra.mxu0 0.0
    %1925 = vmatprep.subr.mxu0 0.0
    %1926 = vmatpush1.xpose.msra.mxu0 0.0
    %1927 = vmatprep.subr.mxu0 0.0
    %1928 = vmatpush1.xpose.msra.mxu0 0.0
    %1929 = vmatprep.subr.mxu0 0.0
    %1930 = vmatpush1.xpose.msra.mxu0 0.0
    %1931 = vmatprep.subr.mxu0 0.0
    %1932 = vmatpush1.xpose.msra.mxu0 0.0
    %1933 = vmatprep.subr.mxu0 0.0
    %1934 = vmatpush1.xpose.msra.mxu0 0.0
    %1935 = vmatprep.subr.mxu0 0.0
    %1936 = vmatpush1.xpose.msra.mxu0 0.0
    %1937 = vmatprep.subr.mxu0 0.0
    %1938 = vmatpush1.xpose.msra.mxu0 0.0
    %1939 = vmatprep.subr.mxu0 0.0
    %1940 = vmatpush1.xpose.msra.mxu0 0.0
    %1941 = vmatprep.subr.mxu0 0.0
    %1942 = vmatpush1.xpose.msra.mxu0 0.0
    %1943 = vmatprep.subr.mxu0 0.0
    %1944 = vmatpush1.xpose.msra.mxu0 0.0
    %1945 = vmatprep.subr.mxu0 0.0
    %1946 = vmatpush1.xpose.msra.mxu0 0.0
    %1947 = vmatprep.subr.mxu0 0.0
    %1948 = vmatpush1.xpose.msra.mxu0 0.0
    %1949 = vmatprep.subr.mxu0 0.0
    %1950 = vmatpush1.xpose.msra.mxu0 0.0
    %1951 = vmatprep.subr.mxu0 0.0
    %1952 = vmatpush1.xpose.msra.mxu0 0.0
    %1953 = vmatprep.subr.mxu0 0.0
    %1954 = vmatpush1.xpose.msra.mxu0 0.0
    %1955 = vmatprep.subr.mxu0 0.0
    %1956 = vmatpush1.xpose.msra.mxu0 0.0
    %1957 = vmatprep.subr.mxu0 0.0
    %1958 = vmatpush1.xpose.msra.mxu0 0.0
    %1959 = vmatprep.subr.mxu0 0.0
    %1960 = vmatpush1.xpose.msra.mxu0 0.0
    %1961 = vmatprep.subr.mxu0 0.0
    %1962 = vmatpush1.xpose.msra.mxu0 0.0
    %1963 = vmatprep.subr.mxu0 0.0
    %1964 = vmatpush1.xpose.msra.mxu0 0.0
    %1965 = vmatprep.subr.mxu0 0.0
    %1966 = vmatpush1.xpose.msra.mxu0 0.0
    %1967 = vmatprep.subr.mxu0 0.0
    %1968 = vmatpush1.xpose.msra.mxu0 0.0
    %1969 = vmatprep.mubr.f32.mxu0 0.0
    %1970 = vmatmul.mubr.f32.gmra.mrb[0].mxu0 %v1897
    %v1971 = vpop.f32.mrb[0].mxu0
    %v1972 = vadd.f32 0.0, %v1971
    %v1973 = vpop.f32.mrb[0].mxu0
    %1974 = vmatprep.mubr.f32.mxu0 0.0
    %1975 = vmatmul.mubr.f32.gmra.mrb[0].mxu0 %v1899
    %v1976 = vpop.f32.mrb[0].mxu0
    %v1977 = vadd.f32 0.0, %v1976
    %v1978 = vpop.f32.mrb[0].mxu0
    %1979 = vdwg.mxu0
    %v1980 = vmul.f32 %v1972, 0.35355338
    %v1981 = vmul.f32 %v1977, 0.35355338
    %v1982 = vadd.f32 %v1980, %v262
    %v1983 = vadd.f32 %v1981, %v263
    %v1984 = vsel %vm462, %v1982, -inf
    %1985 = vmax.xlane.f32.xlu0 %v1984
    %v1986 = vpop.xlane.xlu0 %1985
    %v1987 = vsel %vm462, %v1983, -inf
    %1988 = vmax.xlane.f32.xlu0 %v1987
    %v1989 = vpop.xlane.xlu0 %1988
    %v1990 = vsub.f32 %v1982, %v1986
    %v1991 = vsub.f32 %v1983, %v1989
    %v1992 = vmul.f32 %v1990, 1.442695
    %v1993 = vpow.pop %v1992
    %v1994 = vmul.f32 %v1991, 1.442695
    %v1995 = vpow.pop %v1994
    %v1996 = vsel %vm462, %v1993, 0.0
    %1997 = vadd.xlane.f32.xlu0 %v1996
    %v1998 = vpop.xlane.xlu0 %1997
    %v1999 = vsel %vm462, %v1995, 0.0
    %2000 = vadd.xlane.f32.xlu0 %v1999
    %v2001 = vpop.xlane.xlu0 %2000
    %v2002 = vrcp.pop %v1998
    %v2003 = vrcp.pop %v2001
    %v2004 = vmul.f32 %v1993, %v2002
    %v2005 = vmul.f32 %v1995, %v2003
    %2006 = vrot.lane.b32.xlu0 %v1674, 56
    %v2007 = vpop.permute.xlu0 %2006
    %2008 = vrot.lane.b32.xlu0 %v1679, 56
    %v2009 = vpop.permute.xlu0 %2008
    %v2013 = vsel %vm462, %v2004, 0
    %v2016 = vsel %vm462, %v2005, 0
    %2018 = vmatprep.subr.mxu0 0.0
    %2019 = vmatpush1.msra.mxu0 %v2007
    %2020 = vmatprep.subr.mxu0 0.0
    %2021 = vmatpush1.msra.mxu0 %v2009
    %2022 = vmatprep.subr.mxu0 0.0
    %2023 = vmatpush1.msra.mxu0 0.0
    %2024 = vmatprep.subr.mxu0 0.0
    %2025 = vmatpush1.msra.mxu0 0.0
    %2026 = vmatprep.subr.mxu0 0.0
    %2027 = vmatpush1.msra.mxu0 0.0
    %2028 = vmatprep.subr.mxu0 0.0
    %2029 = vmatpush1.msra.mxu0 0.0
    %2030 = vmatprep.subr.mxu0 0.0
    %2031 = vmatpush1.msra.mxu0 0.0
    %2032 = vmatprep.subr.mxu0 0.0
    %2033 = vmatpush1.msra.mxu0 0.0
    %2034 = vmatprep.subr.mxu0 0.0
    %2035 = vmatpush1.msra.mxu0 0.0
    %2036 = vmatprep.subr.mxu0 0.0
    %2037 = vmatpush1.msra.mxu0 0.0
    %2038 = vmatprep.subr.mxu0 0.0
    %2039 = vmatpush1.msra.mxu0 0.0
    %2040 = vmatprep.subr.mxu0 0.0
    %2041 = vmatpush1.msra.mxu0 0.0
    %2042 = vmatprep.subr.mxu0 0.0
    %2043 = vmatpush1.msra.mxu0 0.0
    %2044 = vmatprep.subr.mxu0 0.0
    %2045 = vmatpush1.msra.mxu0 0.0
    %2046 = vmatprep.subr.mxu0 0.0
    %2047 = vmatpush1.msra.mxu0 0.0
    %2048 = vmatprep.subr.mxu0 0.0
    %2049 = vmatpush1.msra.mxu0 0.0
    %2050 = vmatprep.subr.mxu0 0.0
    %2051 = vmatpush1.msra.mxu0 0.0
    %2052 = vmatprep.subr.mxu0 0.0
    %2053 = vmatpush1.msra.mxu0 0.0
    %2054 = vmatprep.subr.mxu0 0.0
    %2055 = vmatpush1.msra.mxu0 0.0
    %2056 = vmatprep.subr.mxu0 0.0
    %2057 = vmatpush1.msra.mxu0 0.0
    %2058 = vmatprep.subr.mxu0 0.0
    %2059 = vmatpush1.msra.mxu0 0.0
    %2060 = vmatprep.subr.mxu0 0.0
    %2061 = vmatpush1.msra.mxu0 0.0
    %2062 = vmatprep.subr.mxu0 0.0
    %2063 = vmatpush1.msra.mxu0 0.0
    %2064 = vmatprep.subr.mxu0 0.0
    %2065 = vmatpush1.msra.mxu0 0.0
    %2066 = vmatprep.subr.mxu0 0.0
    %2067 = vmatpush1.msra.mxu0 0.0
    %2068 = vmatprep.subr.mxu0 0.0
    %2069 = vmatpush1.msra.mxu0 0.0
    %2070 = vmatprep.subr.mxu0 0.0
    %2071 = vmatpush1.msra.mxu0 0.0
    %2072 = vmatprep.subr.mxu0 0.0
    %2073 = vmatpush1.msra.mxu0 0.0
    %2074 = vmatprep.subr.mxu0 0.0
    %2075 = vmatpush1.msra.mxu0 0.0
    %2076 = vmatprep.subr.mxu0 0.0
    %2077 = vmatpush1.msra.mxu0 0.0
    %2078 = vmatprep.subr.mxu0 0.0
    %2079 = vmatpush1.msra.mxu0 0.0
    %2080 = vmatprep.subr.mxu0 0.0
    %2081 = vmatpush1.msra.mxu0 0.0
    %2082 = vmatprep.mubr.f32.mxu0 0.0
    %2083 = vmatmul.mubr.f32.gmra.mrb[0].mxu0 %v2013
    %v2084 = vpop.f32.mrb[0].mxu0
    %v2085 = vadd.f32 0.0, %v2084
    %v2086 = vpop.f32.mrb[0].mxu0
    %2087 = vmatprep.mubr.f32.mxu0 0.0
    %2088 = vmatmul.mubr.f32.gmra.mrb[0].mxu0 %v2016
    %v2089 = vpop.f32.mrb[0].mxu0
    %v2090 = vadd.f32 0.0, %v2089
    %v2091 = vpop.f32.mrb[0].mxu0
    %2092 = vdwg.mxu0
    %2093 = vrot.lane.b32.xlu0 %v1674, 112
    %v2094 = vpop.permute.xlu0 %2093
    %2095 = vrot.lane.b32.xlu0 %v1679, 112
    %v2096 = vpop.permute.xlu0 %2095
    %2097 = vrot.lane.b32.xlu0 %v1674, 80
    %v2098 = vpop.permute.xlu0 %2097
    %2099 = vrot.lane.b32.xlu0 %v1679, 80
    %v2100 = vpop.permute.xlu0 %2099
    %v2101 = vsel %vm374, %v2094, 0
    %v2103 = vsel %vm374, %v2096, 0
    %v2105 = vsel %vm374, %v2098, 0
    %v2107 = vsel %vm374, %v2100, 0
    %2109 = vmatprep.subr.mxu0 0.0
    %2110 = vmatpush1.xpose.msra.mxu0 %v2105
    %2111 = vmatprep.subr.mxu0 0.0
    %2112 = vmatpush1.xpose.msra.mxu0 %v2107
    %2113 = vmatprep.subr.mxu0 0.0
    %2114 = vmatpush1.xpose.msra.mxu0 0.0
    %2115 = vmatprep.subr.mxu0 0.0
    %2116 = vmatpush1.xpose.msra.mxu0 0.0
    %2117 = vmatprep.subr.mxu0 0.0
    %2118 = vmatpush1.xpose.msra.mxu0 0.0
    %2119 = vmatprep.subr.mxu0 0.0
    %2120 = vmatpush1.xpose.msra.mxu0 0.0
    %2121 = vmatprep.subr.mxu0 0.0
    %2122 = vmatpush1.xpose.msra.mxu0 0.0
    %2123 = vmatprep.subr.mxu0 0.0
    %2124 = vmatpush1.xpose.msra.mxu0 0.0
    %2125 = vmatprep.subr.mxu0 0.0
    %2126 = vmatpush1.xpose.msra.mxu0 0.0
    %2127 = vmatprep.subr.mxu0 0.0
    %2128 = vmatpush1.xpose.msra.mxu0 0.0
    %2129 = vmatprep.subr.mxu0 0.0
    %2130 = vmatpush1.xpose.msra.mxu0 0.0
    %2131 = vmatprep.subr.mxu0 0.0
    %2132 = vmatpush1.xpose.msra.mxu0 0.0
    %2133 = vmatprep.subr.mxu0 0.0
    %2134 = vmatpush1.xpose.msra.mxu0 0.0
    %2135 = vmatprep.subr.mxu0 0.0
    %2136 = vmatpush1.xpose.msra.mxu0 0.0
    %2137 = vmatprep.subr.mxu0 0.0
    %2138 = vmatpush1.xpose.msra.mxu0 0.0
    %2139 = vmatprep.subr.mxu0 0.0
    %2140 = vmatpush1.xpose.msra.mxu0 0.0
    %2141 = vmatprep.subr.mxu0 0.0
    %2142 = vmatpush1.xpose.msra.mxu0 0.0
    %2143 = vmatprep.subr.mxu0 0.0
    %2144 = vmatpush1.xpose.msra.mxu0 0.0
    %2145 = vmatprep.subr.mxu0 0.0
    %2146 = vmatpush1.xpose.msra.mxu0 0.0
    %2147 = vmatprep.subr.mxu0 0.0
    %2148 = vmatpush1.xpose.msra.mxu0 0.0
    %2149 = vmatprep.subr.mxu0 0.0
    %2150 = vmatpush1.xpose.msra.mxu0 0.0
    %2151 = vmatprep.subr.mxu0 0.0
    %2152 = vmatpush1.xpose.msra.mxu0 0.0
    %2153 = vmatprep.subr.mxu0 0.0
    %2154 = vmatpush1.xpose.msra.mxu0 0.0
    %2155 = vmatprep.subr.mxu0 0.0
    %2156 = vmatpush1.xpose.msra.mxu0 0.0
    %2157 = vmatprep.subr.mxu0 0.0
    %2158 = vmatpush1.xpose.msra.mxu0 0.0
    %2159 = vmatprep.subr.mxu0 0.0
    %2160 = vmatpush1.xpose.msra.mxu0 0.0
    %2161 = vmatprep.subr.mxu0 0.0
    %2162 = vmatpush1.xpose.msra.mxu0 0.0
    %2163 = vmatprep.subr.mxu0 0.0
    %2164 = vmatpush1.xpose.msra.mxu0 0.0
    %2165 = vmatprep.subr.mxu0 0.0
    %2166 = vmatpush1.xpose.msra.mxu0 0.0
    %2167 = vmatprep.subr.mxu0 0.0
    %2168 = vmatpush1.xpose.msra.mxu0 0.0
    %2169 = vmatprep.subr.mxu0 0.0
    %2170 = vmatpush1.xpose.msra.mxu0 0.0
    %2171 = vmatprep.subr.mxu0 0.0
    %2172 = vmatpush1.xpose.msra.mxu0 0.0
    %2173 = vmatprep.mubr.f32.mxu0 0.0
    %2174 = vmatmul.mubr.f32.gmra.mrb[0].mxu0 %v2101
    %v2175 = vpop.f32.mrb[0].mxu0
    %v2176 = vadd.f32 0.0, %v2175
    %v2177 = vpop.f32.mrb[0].mxu0
    %2178 = vmatprep.mubr.f32.mxu0 0.0
    %2179 = vmatmul.mubr.f32.gmra.mrb[0].mxu0 %v2103
    %v2180 = vpop.f32.mrb[0].mxu0
    %v2181 = vadd.f32 0.0, %v2180
    %v2182 = vpop.f32.mrb[0].mxu0
    %2183 = vdwg.mxu0
    %v2184 = vmul.f32 %v2176, 0.35355338
    %v2185 = vmul.f32 %v2181, 0.35355338
    %v2186 = vadd.f32 %v2184, %v262
    %v2187 = vadd.f32 %v2185, %v263
    %v2188 = vsel %vm462, %v2186, -inf
    %2189 = vmax.xlane.f32.xlu0 %v2188
    %v2190 = vpop.xlane.xlu0 %2189
    %v2191 = vsel %vm462, %v2187, -inf
    %2192 = vmax.xlane.f32.xlu0 %v2191
    %v2193 = vpop.xlane.xlu0 %2192
    %v2194 = vsub.f32 %v2186, %v2190
    %v2195 = vsub.f32 %v2187, %v2193
    %v2196 = vmul.f32 %v2194, 1.442695
    %v2197 = vpow.pop %v2196
    %v2198 = vmul.f32 %v2195, 1.442695
    %v2199 = vpow.pop %v2198
    %v2200 = vsel %vm462, %v2197, 0.0
    %2201 = vadd.xlane.f32.xlu0 %v2200
    %v2202 = vpop.xlane.xlu0 %2201
    %v2203 = vsel %vm462, %v2199, 0.0
    %2204 = vadd.xlane.f32.xlu0 %v2203
    %v2205 = vpop.xlane.xlu0 %2204
    %v2206 = vrcp.pop %v2202
    %v2207 = vrcp.pop %v2205
    %v2208 = vmul.f32 %v2197, %v2206
    %v2209 = vmul.f32 %v2199, %v2207
    %2210 = vrot.lane.b32.xlu0 %v1674, 48
    %v2211 = vpop.permute.xlu0 %2210
    %2212 = vrot.lane.b32.xlu0 %v1679, 48
    %v2213 = vpop.permute.xlu0 %2212
    %v2217 = vsel %vm462, %v2208, 0
    %v2220 = vsel %vm462, %v2209, 0
    %2222 = vmatprep.subr.mxu0 0.0
    %2223 = vmatpush1.msra.mxu0 %v2211
    %2224 = vmatprep.subr.mxu0 0.0
    %2225 = vmatpush1.msra.mxu0 %v2213
    %2226 = vmatprep.subr.mxu0 0.0
    %2227 = vmatpush1.msra.mxu0 0.0
    %2228 = vmatprep.subr.mxu0 0.0
    %2229 = vmatpush1.msra.mxu0 0.0
    %2230 = vmatprep.subr.mxu0 0.0
    %2231 = vmatpush1.msra.mxu0 0.0
    %2232 = vmatprep.subr.mxu0 0.0
    %2233 = vmatpush1.msra.mxu0 0.0
    %2234 = vmatprep.subr.mxu0 0.0
    %2235 = vmatpush1.msra.mxu0 0.0
    %2236 = vmatprep.subr.mxu0 0.0
    %2237 = vmatpush1.msra.mxu0 0.0
    %2238 = vmatprep.subr.mxu0 0.0
    %2239 = vmatpush1.msra.mxu0 0.0
    %2240 = vmatprep.subr.mxu0 0.0
    %2241 = vmatpush1.msra.mxu0 0.0
    %2242 = vmatprep.subr.mxu0 0.0
    %2243 = vmatpush1.msra.mxu0 0.0
    %2244 = vmatprep.subr.mxu0 0.0
    %2245 = vmatpush1.msra.mxu0 0.0
    %2246 = vmatprep.subr.mxu0 0.0
    %2247 = vmatpush1.msra.mxu0 0.0
    %2248 = vmatprep.subr.mxu0 0.0
    %2249 = vmatpush1.msra.mxu0 0.0
    %2250 = vmatprep.subr.mxu0 0.0
    %2251 = vmatpush1.msra.mxu0 0.0
    %2252 = vmatprep.subr.mxu0 0.0
    %2253 = vmatpush1.msra.mxu0 0.0
    %2254 = vmatprep.subr.mxu0 0.0
    %2255 = vmatpush1.msra.mxu0 0.0
    %2256 = vmatprep.subr.mxu0 0.0
    %2257 = vmatpush1.msra.mxu0 0.0
    %2258 = vmatprep.subr.mxu0 0.0
    %2259 = vmatpush1.msra.mxu0 0.0
    %2260 = vmatprep.subr.mxu0 0.0
    %2261 = vmatpush1.msra.mxu0 0.0
    %2262 = vmatprep.subr.mxu0 0.0
    %2263 = vmatpush1.msra.mxu0 0.0
    %2264 = vmatprep.subr.mxu0 0.0
    %2265 = vmatpush1.msra.mxu0 0.0
    %2266 = vmatprep.subr.mxu0 0.0
    %2267 = vmatpush1.msra.mxu0 0.0
    %2268 = vmatprep.subr.mxu0 0.0
    %2269 = vmatpush1.msra.mxu0 0.0
    %2270 = vmatprep.subr.mxu0 0.0
    %2271 = vmatpush1.msra.mxu0 0.0
    %2272 = vmatprep.subr.mxu0 0.0
    %2273 = vmatpush1.msra.mxu0 0.0
    %2274 = vmatprep.subr.mxu0 0.0
    %2275 = vmatpush1.msra.mxu0 0.0
    %2276 = vmatprep.subr.mxu0 0.0
    %2277 = vmatpush1.msra.mxu0 0.0
    %2278 = vmatprep.subr.mxu0 0.0
    %2279 = vmatpush1.msra.mxu0 0.0
    %2280 = vmatprep.subr.mxu0 0.0
    %2281 = vmatpush1.msra.mxu0 0.0
    %2282 = vmatprep.subr.mxu0 0.0
    %2283 = vmatpush1.msra.mxu0 0.0
    %2284 = vmatprep.subr.mxu0 0.0
    %2285 = vmatpush1.msra.mxu0 0.0
    %2286 = vmatprep.mubr.f32.mxu0 0.0
    %2287 = vmatmul.mubr.f32.gmra.mrb[0].mxu0 %v2217
    %v2288 = vpop.f32.mrb[0].mxu0
    %v2289 = vadd.f32 0.0, %v2288
    %v2290 = vpop.f32.mrb[0].mxu0
    %2291 = vmatprep.mubr.f32.mxu0 0.0
    %2292 = vmatmul.mubr.f32.gmra.mrb[0].mxu0 %v2220
    %v2293 = vpop.f32.mrb[0].mxu0
    %v2294 = vadd.f32 0.0, %v2293
    %v2295 = vpop.f32.mrb[0].mxu0
    %2296 = vdwg.mxu0
    %2297 = vrot.lane.b32.xlu0 %v1674, 104
    %v2298 = vpop.permute.xlu0 %2297
    %2299 = vrot.lane.b32.xlu0 %v1679, 104
    %v2300 = vpop.permute.xlu0 %2299
    %2301 = vrot.lane.b32.xlu0 %v1674, 72
    %v2302 = vpop.permute.xlu0 %2301
    %2303 = vrot.lane.b32.xlu0 %v1679, 72
    %v2304 = vpop.permute.xlu0 %2303
    %v2305 = vsel %vm374, %v2298, 0
    %v2307 = vsel %vm374, %v2300, 0
    %v2309 = vsel %vm374, %v2302, 0
    %v2311 = vsel %vm374, %v2304, 0
    %2313 = vmatprep.subr.mxu0 0.0
    %2314 = vmatpush1.xpose.msra.mxu0 %v2309
    %2315 = vmatprep.subr.mxu0 0.0
    %2316 = vmatpush1.xpose.msra.mxu0 %v2311
    %2317 = vmatprep.subr.mxu0 0.0
    %2318 = vmatpush1.xpose.msra.mxu0 0.0
    %2319 = vmatprep.subr.mxu0 0.0
    %2320 = vmatpush1.xpose.msra.mxu0 0.0
    %2321 = vmatprep.subr.mxu0 0.0
    %2322 = vmatpush1.xpose.msra.mxu0 0.0
    %2323 = vmatprep.subr.mxu0 0.0
    %2324 = vmatpush1.xpose.msra.mxu0 0.0
    %2325 = vmatprep.subr.mxu0 0.0
    %2326 = vmatpush1.xpose.msra.mxu0 0.0
    %2327 = vmatprep.subr.mxu0 0.0
    %2328 = vmatpush1.xpose.msra.mxu0 0.0
    %2329 = vmatprep.subr.mxu0 0.0
    %2330 = vmatpush1.xpose.msra.mxu0 0.0
    %2331 = vmatprep.subr.mxu0 0.0
    %2332 = vmatpush1.xpose.msra.mxu0 0.0
    %2333 = vmatprep.subr.mxu0 0.0
    %2334 = vmatpush1.xpose.msra.mxu0 0.0
    %2335 = vmatprep.subr.mxu0 0.0
    %2336 = vmatpush1.xpose.msra.mxu0 0.0
    %2337 = vmatprep.subr.mxu0 0.0
    %2338 = vmatpush1.xpose.msra.mxu0 0.0
    %2339 = vmatprep.subr.mxu0 0.0
    %2340 = vmatpush1.xpose.msra.mxu0 0.0
    %2341 = vmatprep.subr.mxu0 0.0
    %2342 = vmatpush1.xpose.msra.mxu0 0.0
    %2343 = vmatprep.subr.mxu0 0.0
    %2344 = vmatpush1.xpose.msra.mxu0 0.0
    %2345 = vmatprep.subr.mxu0 0.0
    %2346 = vmatpush1.xpose.msra.mxu0 0.0
    %2347 = vmatprep.subr.mxu0 0.0
    %2348 = vmatpush1.xpose.msra.mxu0 0.0
    %2349 = vmatprep.subr.mxu0 0.0
    %2350 = vmatpush1.xpose.msra.mxu0 0.0
    %2351 = vmatprep.subr.mxu0 0.0
    %2352 = vmatpush1.xpose.msra.mxu0 0.0
    %2353 = vmatprep.subr.mxu0 0.0
    %2354 = vmatpush1.xpose.msra.mxu0 0.0
    %2355 = vmatprep.subr.mxu0 0.0
    %2356 = vmatpush1.xpose.msra.mxu0 0.0
    %2357 = vmatprep.subr.mxu0 0.0
    %2358 = vmatpush1.xpose.msra.mxu0 0.0
    %2359 = vmatprep.subr.mxu0 0.0
    %2360 = vmatpush1.xpose.msra.mxu0 0.0
    %2361 = vmatprep.subr.mxu0 0.0
    %2362 = vmatpush1.xpose.msra.mxu0 0.0
    %2363 = vmatprep.subr.mxu0 0.0
    %2364 = vmatpush1.xpose.msra.mxu0 0.0
    %2365 = vmatprep.subr.mxu0 0.0
    %2366 = vmatpush1.xpose.msra.mxu0 0.0
    %2367 = vmatprep.subr.mxu0 0.0
    %2368 = vmatpush1.xpose.msra.mxu0 0.0
    %2369 = vmatprep.subr.mxu0 0.0
    %2370 = vmatpush1.xpose.msra.mxu0 0.0
    %2371 = vmatprep.subr.mxu0 0.0
    %2372 = vmatpush1.xpose.msra.mxu0 0.0
    %2373 = vmatprep.subr.mxu0 0.0
    %2374 = vmatpush1.xpose.msra.mxu0 0.0
    %2375 = vmatprep.subr.mxu0 0.0
    %2376 = vmatpush1.xpose.msra.mxu0 0.0
    %2377 = vmatprep.mubr.f32.mxu0 0.0
    %2378 = vmatmul.mubr.f32.gmra.mrb[0].mxu0 %v2305
    %v2379 = vpop.f32.mrb[0].mxu0
    %v2380 = vadd.f32 0.0, %v2379
    %v2381 = vpop.f32.mrb[0].mxu0
    %2382 = vmatprep.mubr.f32.mxu0 0.0
    %2383 = vmatmul.mubr.f32.gmra.mrb[0].mxu0 %v2307
    %v2384 = vpop.f32.mrb[0].mxu0
    %v2385 = vadd.f32 0.0, %v2384
    %v2386 = vpop.f32.mrb[0].mxu0
    %2387 = vdwg.mxu0
    %v2388 = vmul.f32 %v2380, 0.35355338
    %v2389 = vmul.f32 %v2385, 0.35355338
    %v2390 = vadd.f32 %v2388, %v262
    %v2391 = vadd.f32 %v2389, %v263
    %v2392 = vsel %vm462, %v2390, -inf
    %2393 = vmax.xlane.f32.xlu0 %v2392
    %v2394 = vpop.xlane.xlu0 %2393
    %v2395 = vsel %vm462, %v2391, -inf
    %2396 = vmax.xlane.f32.xlu0 %v2395
    %v2397 = vpop.xlane.xlu0 %2396
    %v2398 = vsub.f32 %v2390, %v2394
    %v2399 = vsub.f32 %v2391, %v2397
    %v2400 = vmul.f32 %v2398, 1.442695
    %v2401 = vpow.pop %v2400
    %v2402 = vmul.f32 %v2399, 1.442695
    %v2403 = vpow.pop %v2402
    %v2404 = vsel %vm462, %v2401, 0.0
    %2405 = vadd.xlane.f32.xlu0 %v2404
    %v2406 = vpop.xlane.xlu0 %2405
    %v2407 = vsel %vm462, %v2403, 0.0
    %2408 = vadd.xlane.f32.xlu0 %v2407
    %v2409 = vpop.xlane.xlu0 %2408
    %v2410 = vrcp.pop %v2406
    %v2411 = vrcp.pop %v2409
    %v2412 = vmul.f32 %v2401, %v2410
    %v2413 = vmul.f32 %v2403, %v2411
    %2414 = vrot.lane.b32.xlu0 %v1674, 40
    %v2415 = vpop.permute.xlu0 %2414
    %2416 = vrot.lane.b32.xlu0 %v1679, 40
    %v2417 = vpop.permute.xlu0 %2416
    %v2421 = vsel %vm462, %v2412, 0
    %v2424 = vsel %vm462, %v2413, 0
    %2426 = vmatprep.subr.mxu0 0.0
    %2427 = vmatpush1.msra.mxu0 %v2415
    %2428 = vmatprep.subr.mxu0 0.0
    %2429 = vmatpush1.msra.mxu0 %v2417
    %2430 = vmatprep.subr.mxu0 0.0
    %2431 = vmatpush1.msra.mxu0 0.0
    %2432 = vmatprep.subr.mxu0 0.0
    %2433 = vmatpush1.msra.mxu0 0.0
    %2434 = vmatprep.subr.mxu0 0.0
    %2435 = vmatpush1.msra.mxu0 0.0
    %2436 = vmatprep.subr.mxu0 0.0
    %2437 = vmatpush1.msra.mxu0 0.0
    %2438 = vmatprep.subr.mxu0 0.0
    %2439 = vmatpush1.msra.mxu0 0.0
    %2440 = vmatprep.subr.mxu0 0.0
    %2441 = vmatpush1.msra.mxu0 0.0
    %2442 = vmatprep.subr.mxu0 0.0
    %2443 = vmatpush1.msra.mxu0 0.0
    %2444 = vmatprep.subr.mxu0 0.0
    %2445 = vmatpush1.msra.mxu0 0.0
    %2446 = vmatprep.subr.mxu0 0.0
    %2447 = vmatpush1.msra.mxu0 0.0
    %2448 = vmatprep.subr.mxu0 0.0
    %2449 = vmatpush1.msra.mxu0 0.0
    %2450 = vmatprep.subr.mxu0 0.0
    %2451 = vmatpush1.msra.mxu0 0.0
    %2452 = vmatprep.subr.mxu0 0.0
    %2453 = vmatpush1.msra.mxu0 0.0
    %2454 = vmatprep.subr.mxu0 0.0
    %2455 = vmatpush1.msra.mxu0 0.0
    %2456 = vmatprep.subr.mxu0 0.0
    %2457 = vmatpush1.msra.mxu0 0.0
    %2458 = vmatprep.subr.mxu0 0.0
    %2459 = vmatpush1.msra.mxu0 0.0
    %2460 = vmatprep.subr.mxu0 0.0
    %2461 = vmatpush1.msra.mxu0 0.0
    %2462 = vmatprep.subr.mxu0 0.0
    %2463 = vmatpush1.msra.mxu0 0.0
    %2464 = vmatprep.subr.mxu0 0.0
    %2465 = vmatpush1.msra.mxu0 0.0
    %2466 = vmatprep.subr.mxu0 0.0
    %2467 = vmatpush1.msra.mxu0 0.0
    %2468 = vmatprep.subr.mxu0 0.0
    %2469 = vmatpush1.msra.mxu0 0.0
    %2470 = vmatprep.subr.mxu0 0.0
    %2471 = vmatpush1.msra.mxu0 0.0
    %2472 = vmatprep.subr.mxu0 0.0
    %2473 = vmatpush1.msra.mxu0 0.0
    %2474 = vmatprep.subr.mxu0 0.0
    %2475 = vmatpush1.msra.mxu0 0.0
    %2476 = vmatprep.subr.mxu0 0.0
    %2477 = vmatpush1.msra.mxu0 0.0
    %2478 = vmatprep.subr.mxu0 0.0
    %2479 = vmatpush1.msra.mxu0 0.0
    %2480 = vmatprep.subr.mxu0 0.0
    %2481 = vmatpush1.msra.mxu0 0.0
    %2482 = vmatprep.subr.mxu0 0.0
    %2483 = vmatpush1.msra.mxu0 0.0
    %2484 = vmatprep.subr.mxu0 0.0
    %2485 = vmatpush1.msra.mxu0 0.0
    %2486 = vmatprep.subr.mxu0 0.0
    %2487 = vmatpush1.msra.mxu0 0.0
    %2488 = vmatprep.subr.mxu0 0.0
    %2489 = vmatpush1.msra.mxu0 0.0
    %2490 = vmatprep.mubr.f32.mxu0 0.0
    %2491 = vmatmul.mubr.f32.gmra.mrb[0].mxu0 %v2421
    %v2492 = vpop.f32.mrb[0].mxu0
    %v2493 = vadd.f32 0.0, %v2492
    %v2494 = vpop.f32.mrb[0].mxu0
    %2495 = vmatprep.mubr.f32.mxu0 0.0
    %2496 = vmatmul.mubr.f32.gmra.mrb[0].mxu0 %v2424
    %v2497 = vpop.f32.mrb[0].mxu0
    %v2498 = vadd.f32 0.0, %v2497
    %v2499 = vpop.f32.mrb[0].mxu0
    %2500 = vdwg.mxu0
    %2503 = vrot.lane.b32.xlu0 %v2085, 8
    %v2504 = vpop.permute.xlu0 %2503
    %2505 = vrot.lane.b32.xlu0 %v2090, 8
    %v2506 = vpop.permute.xlu0 %2505
    %2511 = vrot.lane.b32.xlu0 %v2289, 16
    %v2512 = vpop.permute.xlu0 %2511
    %2513 = vrot.lane.b32.xlu0 %v2294, 16
    %v2514 = vpop.permute.xlu0 %2513
    %2519 = vrot.lane.b32.xlu0 %v2493, 24
    %v2520 = vpop.permute.xlu0 %2519
    %2521 = vrot.lane.b32.xlu0 %v2498, 24
    %v2522 = vpop.permute.xlu0 %2521
    %v2525 = vsel %vm374, %v1881, %v2504
    %v2526 = vsel %vm374, %v1886, %v2506
    %v2527 = vsel %vm462, %v2525, %v2512
    %v2528 = vsel %vm462, %v2526, %v2514
    %v2529 = vsel %vm1212, %v2527, %v2520
    %v2530 = vsel %vm1212, %v2528, %v2522
    %v2531 = vlaneseq
    %v2532 = vshrl.u32 %v2531, 7
    %v2533 = vsub.s32 0, %v2532
    %v2534 = vrot.slane %v1686, %v2533
    %v2536 = vsel %vm166, %v2529, 0
    %v2539 = vsel %vm166, %v2530, 0
    %2541 = vmatprep.subr.mxu0 0.0
    %2542 = vmatpush1.msra.mxu0 %v1682
    %2543 = vmatprep.subr.mxu0 0.0
    %2544 = vmatpush1.msra.mxu0 %v1683
    %2545 = vmatprep.subr.mxu0 0.0
    %2546 = vmatpush1.msra.mxu0 %v1684
    %2547 = vmatprep.subr.mxu0 0.0
    %2548 = vmatpush1.msra.mxu0 %v1685
    %2549 = vmatprep.subr.mxu0 0.0
    %2550 = vmatpush1.msra.mxu0 0.0
    %2551 = vmatprep.subr.mxu0 0.0
    %2552 = vmatpush1.msra.mxu0 0.0
    %2553 = vmatprep.subr.mxu0 0.0
    %2554 = vmatpush1.msra.mxu0 0.0
    %2555 = vmatprep.subr.mxu0 0.0
    %2556 = vmatpush1.msra.mxu0 0.0
    %2557 = vmatprep.subr.mxu0 0.0
    %2558 = vmatpush1.msra.mxu0 0.0
    %2559 = vmatprep.subr.mxu0 0.0
    %2560 = vmatpush1.msra.mxu0 0.0
    %2561 = vmatprep.subr.mxu0 0.0
    %2562 = vmatpush1.msra.mxu0 0.0
    %2563 = vmatprep.subr.mxu0 0.0
    %2564 = vmatpush1.msra.mxu0 0.0
    %2565 = vmatprep.subr.mxu0 0.0
    %2566 = vmatpush1.msra.mxu0 0.0
    %2567 = vmatprep.subr.mxu0 0.0
    %2568 = vmatpush1.msra.mxu0 0.0
    %2569 = vmatprep.subr.mxu0 0.0
    %2570 = vmatpush1.msra.mxu0 0.0
    %2571 = vmatprep.subr.mxu0 0.0
    %2572 = vmatpush1.msra.mxu0 0.0
    %2573 = vmatprep.subr.mxu0 0.0
    %2574 = vmatpush1.msra.mxu0 0.0
    %2575 = vmatprep.subr.mxu0 0.0
    %2576 = vmatpush1.msra.mxu0 0.0
    %2577 = vmatprep.subr.mxu0 0.0
    %2578 = vmatpush1.msra.mxu0 0.0
    %2579 = vmatprep.subr.mxu0 0.0
    %2580 = vmatpush1.msra.mxu0 0.0
    %2581 = vmatprep.subr.mxu0 0.0
    %2582 = vmatpush1.msra.mxu0 0.0
    %2583 = vmatprep.subr.mxu0 0.0
    %2584 = vmatpush1.msra.mxu0 0.0
    %2585 = vmatprep.subr.mxu0 0.0
    %2586 = vmatpush1.msra.mxu0 0.0
    %2587 = vmatprep.subr.mxu0 0.0
    %2588 = vmatpush1.msra.mxu0 0.0
    %2589 = vmatprep.subr.mxu0 0.0
    %2590 = vmatpush1.msra.mxu0 0.0
    %2591 = vmatprep.subr.mxu0 0.0
    %2592 = vmatpush1.msra.mxu0 0.0
    %2593 = vmatprep.subr.mxu0 0.0
    %2594 = vmatpush1.msra.mxu0 0.0
    %2595 = vmatprep.subr.mxu0 0.0
    %2596 = vmatpush1.msra.mxu0 0.0
    %2597 = vmatprep.subr.mxu0 0.0
    %2598 = vmatpush1.msra.mxu0 0.0
    %2599 = vmatprep.subr.mxu0 0.0
    %2600 = vmatpush1.msra.mxu0 0.0
    %2601 = vmatprep.subr.mxu0 0.0
    %2602 = vmatpush1.msra.mxu0 0.0
    %2603 = vmatprep.subr.mxu0 0.0
    %2604 = vmatpush1.msra.mxu0 0.0
    %2605 = vmatprep.mubr.f32.mxu0 0.0
    %2606 = vmatmul.mubr.f32.gmra.mrb[0].mxu0 %v2536
    %v2607 = vpop.f32.mrb[0].mxu0
    %v2608 = vadd.f32 %v2534, %v2607
    %v2609 = vpop.f32.mrb[0].mxu0
    %2610 = vmatprep.mubr.f32.mxu0 0.0
    %2611 = vmatmul.mubr.f32.gmra.mrb[0].mxu0 %v2539
    %v2612 = vpop.f32.mrb[0].mxu0
    %v2613 = vadd.f32 %v2534, %v2612
    %v2614 = vpop.f32.mrb[0].mxu0
    %2615 = vdwg.mxu0
    %v2616 = vadd.f32 %v2608, %v1590
    %v2617 = vadd.f32 %v2613, %v1591
    %v2618 = vld [vmem:[#allocation2 + $0x1a8] sm:$0x3]
    %v2619 = vsel %vm166, %v2616, 0.0
    %2620 = vadd.xlane.f32.xlu0 %v2619
    %v2621 = vpop.xlane.xlu0 %2620
    %v2622 = vsel %vm166, %v2617, 0.0
    %2623 = vadd.xlane.f32.xlu0 %v2622
    %v2624 = vpop.xlane.xlu0 %2623
    %v2625 = vmul.f32 %v2616, %v2616
    %v2626 = vmul.f32 %v2617, %v2617
    %v2627 = vsel %vm166, %v2625, 0.0
    %2628 = vadd.xlane.f32.xlu0 %v2627
    %v2629 = vpop.xlane.xlu0 %2628
    %v2630 = vsel %vm166, %v2626, 0.0
    %2631 = vadd.xlane.f32.xlu0 %v2630
    %v2632 = vpop.xlane.xlu0 %2631
    %v2633 = vmul.f32 %v2621, 0.03125
    %v2634 = vmul.f32 %v2624, 0.03125
    %v2635 = vmul.f32 %v2629, 0.03125
    %v2636 = vmul.f32 %v2632, 0.03125
    %v2637 = vmul.f32 %v2633, %v2633
    %v2638 = vmul.f32 %v2634, %v2634
    %v2639 = vsub.f32 %v2635, %v2637
    %v2640 = vsub.f32 %v2636, %v2638
    %v2641 = vsub.f32 %v2616, %v2633
    %v2642 = vsub.f32 %v2617, %v2634
    %v2643 = vadd.f32 %v2639, 1e-05
    %v2644 = vadd.f32 %v2640, 1e-05
    %v2645 = vrsqrt.pop %v2643
    %v2646 = vrsqrt.pop %v2644
    %v2647 = vmul.f32 %v2641, %v2645
    %v2648 = vmul.f32 %v2642, %v2646
    %v2649 = vlaneseq
    %v2650 = vshrl.u32 %v2649, 7
    %v2651 = vsub.s32 0, %v2650
    %v2652 = vrot.slane %v2618, %v2651
    %v2653 = vmul.f32 %v2647, %v2652
    %v2654 = vmul.f32 %v2648, %v2652
    %v2655 = vlaneseq
    %v2656 = vshrl.u32 %v2655, 7
    %v2657 = vsub.s32 1, %v2656
    %v2658 = vrot.slane %v2618, %v2657
    %v2659 = vadd.f32 %v2653, %v2658
    %v2660 = vadd.f32 %v2654, %v2658
    %v2661 = vld [vmem:[#allocation2 + $0x1b0] sm:$0xff]
    %v2662 = vld [vmem:[#allocation2 + $0x1b8] sm:$0xff]
    %v2663 = vld [vmem:[#allocation2 + $0x1c0] sm:$0xff]
    %v2664 = vld [vmem:[#allocation2 + $0x1c8] sm:$0xff]
    %v2665 = vld [vmem:[#allocation2 + $0x1d0] sm:$0x1]
    %v2666 = vlaneseq
    %v2667 = vshrl.u32 %v2666, 7
    %v2668 = vsub.s32 0, %v2667
    %v2669 = vrot.slane %v2665, %v2668
    %v2671 = vsel %vm166, %v2659, 0
    %v2674 = vsel %vm166, %v2660, 0
    %2676 = vmatprep.subr.mxu0 0.0
    %2677 = vmatpush1.msra.mxu0 %v2661
    %2678 = vmatprep.subr.mxu0 0.0
    %2679 = vmatpush1.msra.mxu0 %v2662
    %2680 = vmatprep.subr.mxu0 0.0
    %2681 = vmatpush1.msra.mxu0 %v2663
    %2682 = vmatprep.subr.mxu0 0.0
    %2683 = vmatpush1.msra.mxu0 %v2664
    %2684 = vmatprep.subr.mxu0 0.0
    %2685 = vmatpush1.msra.mxu0 0.0
    %2686 = vmatprep.subr.mxu0 0.0
    %2687 = vmatpush1.msra.mxu0 0.0
    %2688 = vmatprep.subr.mxu0 0.0
    %2689 = vmatpush1.msra.mxu0 0.0
    %2690 = vmatprep.subr.mxu0 0.0
    %2691 = vmatpush1.msra.mxu0 0.0
    %2692 = vmatprep.subr.mxu0 0.0
    %2693 = vmatpush1.msra.mxu0 0.0
    %2694 = vmatprep.subr.mxu0 0.0
    %2695 = vmatpush1.msra.mxu0 0.0
    %2696 = vmatprep.subr.mxu0 0.0
    %2697 = vmatpush1.msra.mxu0 0.0
    %2698 = vmatprep.subr.mxu0 0.0
    %2699 = vmatpush1.msra.mxu0 0.0
    %2700 = vmatprep.subr.mxu0 0.0
    %2701 = vmatpush1.msra.mxu0 0.0
    %2702 = vmatprep.subr.mxu0 0.0
    %2703 = vmatpush1.msra.mxu0 0.0
    %2704 = vmatprep.subr.mxu0 0.0
    %2705 = vmatpush1.msra.mxu0 0.0
    %2706 = vmatprep.subr.mxu0 0.0
    %2707 = vmatpush1.msra.mxu0 0.0
    %2708 = vmatprep.subr.mxu0 0.0
    %2709 = vmatpush1.msra.mxu0 0.0
    %2710 = vmatprep.subr.mxu0 0.0
    %2711 = vmatpush1.msra.mxu0 0.0
    %2712 = vmatprep.subr.mxu0 0.0
    %2713 = vmatpush1.msra.mxu0 0.0
    %2714 = vmatprep.subr.mxu0 0.0
    %2715 = vmatpush1.msra.mxu0 0.0
    %2716 = vmatprep.subr.mxu0 0.0
    %2717 = vmatpush1.msra.mxu0 0.0
    %2718 = vmatprep.subr.mxu0 0.0
    %2719 = vmatpush1.msra.mxu0 0.0
    %2720 = vmatprep.subr.mxu0 0.0
    %2721 = vmatpush1.msra.mxu0 0.0
    %2722 = vmatprep.subr.mxu0 0.0
    %2723 = vmatpush1.msra.mxu0 0.0
    %2724 = vmatprep.subr.mxu0 0.0
    %2725 = vmatpush1.msra.mxu0 0.0
    %2726 = vmatprep.subr.mxu0 0.0
    %2727 = vmatpush1.msra.mxu0 0.0
    %2728 = vmatprep.subr.mxu0 0.0
    %2729 = vmatpush1.msra.mxu0 0.0
    %2730 = vmatprep.subr.mxu0 0.0
    %2731 = vmatpush1.msra.mxu0 0.0
    %2732 = vmatprep.subr.mxu0 0.0
    %2733 = vmatpush1.msra.mxu0 0.0
    %2734 = vmatprep.subr.mxu0 0.0
    %2735 = vmatpush1.msra.mxu0 0.0
    %2736 = vmatprep.subr.mxu0 0.0
    %2737 = vmatpush1.msra.mxu0 0.0
    %2738 = vmatprep.subr.mxu0 0.0
    %2739 = vmatpush1.msra.mxu0 0.0
    %2740 = vmatprep.mubr.f32.mxu0 0.0
    %2741 = vmatmul.mubr.f32.gmra.mrb[0].mxu0 %v2671
    %v2742 = vpop.f32.mrb[0].mxu0
    %v2743 = vadd.f32 %v2669, %v2742
    %v2744 = vpop.f32.mrb[0].mxu0
    %2745 = vmatprep.mubr.f32.mxu0 0.0
    %2746 = vmatmul.mubr.f32.gmra.mrb[0].mxu0 %v2674
    %v2747 = vpop.f32.mrb[0].mxu0
    %v2748 = vadd.f32 %v2669, %v2747
    %v2749 = vpop.f32.mrb[0].mxu0
    %2750 = vdwg.mxu0
    %v2751 = vmul.f32 %v2743, %v2743
    %v2752 = vmul.f32 %v2748, %v2748
    %v2753 = vmul.f32 %v2743, %v2751
    %v2754 = vmul.f32 %v2748, %v2752
    %v2755 = vmul.f32 %v2753, 0.044715
    %v2756 = vmul.f32 %v2754, 0.044715
    %v2757 = vadd.f32 %v2743, %v2755
    %v2758 = vadd.f32 %v2748, %v2756
    %v2759 = vmul.f32 %v2757, 0.7978846
    %v2760 = vmul.f32 %v2758, 0.7978846
    %v2761 = vtanh.pop %v2759
    %v2762 = vtanh.pop %v2760
    %v2763 = vadd.f32 %v2761, 1.0
    %v2764 = vadd.f32 %v2762, 1.0
    %v2765 = vmul.f32 %v2763, 0.5
    %v2766 = vmul.f32 %v2764, 0.5
    %v2767 = vmul.f32 %v2743, %v2765
    %v2768 = vmul.f32 %v2748, %v2766
    %v2769 = vld [vmem:[#allocation2 + $0x1d8] sm:$0xff]
    %v2770 = vld [vmem:[#allocation2 + $0x1e0] sm:$0xff]
    %v2771 = vld [vmem:[#allocation2 + $0x1e8] sm:$0xff]
    %v2772 = vld [vmem:[#allocation2 + $0x1f0] sm:$0xff]
    %v2773 = vld [vmem:[#allocation2 + $0x1f8] sm:$0xff]
    %v2774 = vld [vmem:[#allocation2 + $0x200] sm:$0xff]
    %v2775 = vld [vmem:[#allocation2 + $0x208] sm:$0xff]
    %v2776 = vld [vmem:[#allocation2 + $0x210] sm:$0xff]
    %v2777 = vld [vmem:[#allocation2 + $0x218] sm:$0x1]
    %v2778 = vlaneseq
    %v2779 = vshrl.u32 %v2778, 7
    %v2780 = vsub.s32 0, %v2779
    %v2781 = vrot.slane %v2777, %v2780
    %v2783 = vsel %vm64, %v2767, 0
    %v2786 = vsel %vm64, %v2768, 0
    %2788 = vmatprep.subr.mxu0 0.0
    %2789 = vmatpush1.msra.mxu0 %v2769
    %2790 = vmatprep.subr.mxu0 0.0
    %2791 = vmatpush1.msra.mxu0 %v2770
    %2792 = vmatprep.subr.mxu0 0.0
    %2793 = vmatpush1.msra.mxu0 %v2771
    %2794 = vmatprep.subr.mxu0 0.0
    %2795 = vmatpush1.msra.mxu0 %v2772
    %2796 = vmatprep.subr.mxu0 0.0
    %2797 = vmatpush1.msra.mxu0 %v2773
    %2798 = vmatprep.subr.mxu0 0.0
    %2799 = vmatpush1.msra.mxu0 %v2774
    %2800 = vmatprep.subr.mxu0 0.0
    %2801 = vmatpush1.msra.mxu0 %v2775
    %2802 = vmatprep.subr.mxu0 0.0
    %2803 = vmatpush1.msra.mxu0 %v2776
    %2804 = vmatprep.subr.mxu0 0.0
    %2805 = vmatpush1.msra.mxu0 0.0
    %2806 = vmatprep.subr.mxu0 0.0
    %2807 = vmatpush1.msra.mxu0 0.0
    %2808 = vmatprep.subr.mxu0 0.0
    %2809 = vmatpush1.msra.mxu0 0.0
    %2810 = vmatprep.subr.mxu0 0.0
    %2811 = vmatpush1.msra.mxu0 0.0
    %2812 = vmatprep.subr.mxu0 0.0
    %2813 = vmatpush1.msra.mxu0 0.0
    %2814 = vmatprep.subr.mxu0 0.0
    %2815 = vmatpush1.msra.mxu0 0.0
    %2816 = vmatprep.subr.mxu0 0.0
    %2817 = vmatpush1.msra.mxu0 0.0
    %2818 = vmatprep.subr.mxu0 0.0
    %2819 = vmatpush1.msra.mxu0 0.0
    %2820 = vmatprep.subr.mxu0 0.0
    %2821 = vmatpush1.msra.mxu0 0.0
    %2822 = vmatprep.subr.mxu0 0.0
    %2823 = vmatpush1.msra.mxu0 0.0
    %2824 = vmatprep.subr.mxu0 0.0
    %2825 = vmatpush1.msra.mxu0 0.0
    %2826 = vmatprep.subr.mxu0 0.0
    %2827 = vmatpush1.msra.mxu0 0.0
    %2828 = vmatprep.subr.mxu0 0.0
    %2829 = vmatpush1.msra.mxu0 0.0
    %2830 = vmatprep.subr.mxu0 0.0
    %2831 = vmatpush1.msra.mxu0 0.0
    %2832 = vmatprep.subr.mxu0 0.0
    %2833 = vmatpush1.msra.mxu0 0.0
    %2834 = vmatprep.subr.mxu0 0.0
    %2835 = vmatpush1.msra.mxu0 0.0
    %2836 = vmatprep.subr.mxu0 0.0
    %2837 = vmatpush1.msra.mxu0 0.0
    %2838 = vmatprep.subr.mxu0 0.0
    %2839 = vmatpush1.msra.mxu0 0.0
    %2840 = vmatprep.subr.mxu0 0.0
    %2841 = vmatpush1.msra.mxu0 0.0
    %2842 = vmatprep.subr.mxu0 0.0
    %2843 = vmatpush1.msra.mxu0 0.0
    %2844 = vmatprep.subr.mxu0 0.0
    %2845 = vmatpush1.msra.mxu0 0.0
    %2846 = vmatprep.subr.mxu0 0.0
    %2847 = vmatpush1.msra.mxu0 0.0
    %2848 = vmatprep.subr.mxu0 0.0
    %2849 = vmatpush1.msra.mxu0 0.0
    %2850 = vmatprep.subr.mxu0 0.0
    %2851 = vmatpush1.msra.mxu0 0.0
    %2852 = vmatprep.mubr.f32.mxu0 0.0
    %2853 = vmatmul.mubr.f32.gmra.mrb[0].mxu0 %v2783
    %v2854 = vpop.f32.mrb[0].mxu0
    %v2855 = vadd.f32 %v2781, %v2854
    %v2856 = vpop.f32.mrb[0].mxu0
    %2857 = vmatprep.mubr.f32.mxu0 0.0
    %2858 = vmatmul.mubr.f32.gmra.mrb[0].mxu0 %v2786
    %v2859 = vpop.f32.mrb[0].mxu0
    %v2860 = vadd.f32 %v2781, %v2859
    %v2861 = vpop.f32.mrb[0].mxu0
    %2862 = vdwg.mxu0
    %v2863 = vadd.f32 %v2855, %v2659
    %v2864 = vadd.f32 %v2860, %v2660
    %v2865 = vld [vmem:[#allocation2 + $0x220] sm:$0x3]
    %v2866 = vsel %vm166, %v2863, 0.0
    %2867 = vadd.xlane.f32.xlu0 %v2866
    %v2868 = vpop.xlane.xlu0 %2867
    %v2869 = vsel %vm166, %v2864, 0.0
    %2870 = vadd.xlane.f32.xlu0 %v2869
    %v2871 = vpop.xlane.xlu0 %2870
    %v2872 = vmul.f32 %v2863, %v2863
    %v2873 = vmul.f32 %v2864, %v2864
    %v2874 = vsel %vm166, %v2872, 0.0
    %2875 = vadd.xlane.f32.xlu0 %v2874
    %v2876 = vpop.xlane.xlu0 %2875
    %v2877 = vsel %vm166, %v2873, 0.0
    %2878 = vadd.xlane.f32.xlu0 %v2877
    %v2879 = vpop.xlane.xlu0 %2878
    %v2880 = vmul.f32 %v2868, 0.03125
    %v2881 = vmul.f32 %v2871, 0.03125
    %v2882 = vmul.f32 %v2876, 0.03125
    %v2883 = vmul.f32 %v2879, 0.03125
    %v2884 = vmul.f32 %v2880, %v2880
    %v2885 = vmul.f32 %v2881, %v2881
    %v2886 = vsub.f32 %v2882, %v2884
    %v2887 = vsub.f32 %v2883, %v2885
    %v2888 = vsub.f32 %v2863, %v2880
    %v2889 = vsub.f32 %v2864, %v2881
    %v2890 = vadd.f32 %v2886, 1e-05
    %v2891 = vadd.f32 %v2887, 1e-05
    %v2892 = vrsqrt.pop %v2890
    %v2893 = vrsqrt.pop %v2891
    %v2894 = vmul.f32 %v2888, %v2892
    %v2895 = vmul.f32 %v2889, %v2893
    %v2896 = vlaneseq
    %v2897 = vshrl.u32 %v2896, 7
    %v2898 = vsub.s32 0, %v2897
    %v2899 = vrot.slane %v2865, %v2898
    %v2900 = vmul.f32 %v2894, %v2899
    %v2901 = vmul.f32 %v2895, %v2899
    %v2902 = vlaneseq
    %v2903 = vshrl.u32 %v2902, 7
    %v2904 = vsub.s32 1, %v2903
    %v2905 = vrot.slane %v2865, %v2904
    %v2906 = vadd.f32 %v2900, %v2905
    %v2907 = vadd.f32 %v2901, %v2905
    %v2908 = vld [vmem:[#allocation2 + $0x228] sm:$0xff]
    %v2909 = vld [vmem:[#allocation2 + $0x230] sm:$0xff]
    %v2910 = vld [vmem:[#allocation2 + $0x238] sm:$0xff]
    %v2911 = vld [vmem:[#allocation2 + $0x240] sm:$0xff]
    %v2912 = vld [vmem:[#allocation2 + $0x248] sm:$0x1]
    %v2913 = vlaneseq
    %v2914 = vshrl.u32 %v2913, 7
    %v2915 = vsub.s32 0, %v2914
    %v2916 = vrot.slane %v2912, %v2915
    %v2918 = vsel %vm166, %v252, 0
    %v2921 = vsel %vm166, %v253, 0
    %2923 = vmatprep.subr.mxu0 0.0
    %2924 = vmatpush1.msra.mxu0 %v2908
    %2925 = vmatprep.subr.mxu0 0.0
    %2926 = vmatpush1.msra.mxu0 %v2909
    %2927 = vmatprep.subr.mxu0 0.0
    %2928 = vmatpush1.msra.mxu0 %v2910
    %2929 = vmatprep.subr.mxu0 0.0
    %2930 = vmatpush1.msra.mxu0 %v2911
    %2931 = vmatprep.subr.mxu0 0.0
    %2932 = vmatpush1.msra.mxu0 0.0
    %2933 = vmatprep.subr.mxu0 0.0
    %2934 = vmatpush1.msra.mxu0 0.0
    %2935 = vmatprep.subr.mxu0 0.0
    %2936 = vmatpush1.msra.mxu0 0.0
    %2937 = vmatprep.subr.mxu0 0.0
    %2938 = vmatpush1.msra.mxu0 0.0
    %2939 = vmatprep.subr.mxu0 0.0
    %2940 = vmatpush1.msra.mxu0 0.0
    %2941 = vmatprep.subr.mxu0 0.0
    %2942 = vmatpush1.msra.mxu0 0.0
    %2943 = vmatprep.subr.mxu0 0.0
    %2944 = vmatpush1.msra.mxu0 0.0
    %2945 = vmatprep.subr.mxu0 0.0
    %2946 = vmatpush1.msra.mxu0 0.0
    %2947 = vmatprep.subr.mxu0 0.0
    %2948 = vmatpush1.msra.mxu0 0.0
    %2949 = vmatprep.subr.mxu0 0.0
    %2950 = vmatpush1.msra.mxu0 0.0
    %2951 = vmatprep.subr.mxu0 0.0
    %2952 = vmatpush1.msra.mxu0 0.0
    %2953 = vmatprep.subr.mxu0 0.0
    %2954 = vmatpush1.msra.mxu0 0.0
    %2955 = vmatprep.subr.mxu0 0.0
    %2956 = vmatpush1.msra.mxu0 0.0
    %2957 = vmatprep.subr.mxu0 0.0
    %2958 = vmatpush1.msra.mxu0 0.0
    %2959 = vmatprep.subr.mxu0 0.0
    %2960 = vmatpush1.msra.mxu0 0.0
    %2961 = vmatprep.subr.mxu0 0.0
    %2962 = vmatpush1.msra.mxu0 0.0
    %2963 = vmatprep.subr.mxu0 0.0
    %2964 = vmatpush1.msra.mxu0 0.0
    %2965 = vmatprep.subr.mxu0 0.0
    %2966 = vmatpush1.msra.mxu0 0.0
    %2967 = vmatprep.subr.mxu0 0.0
    %2968 = vmatpush1.msra.mxu0 0.0
    %2969 = vmatprep.subr.mxu0 0.0
    %2970 = vmatpush1.msra.mxu0 0.0
    %2971 = vmatprep.subr.mxu0 0.0
    %2972 = vmatpush1.msra.mxu0 0.0
    %2973 = vmatprep.subr.mxu0 0.0
    %2974 = vmatpush1.msra.mxu0 0.0
    %2975 = vmatprep.subr.mxu0 0.0
    %2976 = vmatpush1.msra.mxu0 0.0
    %2977 = vmatprep.subr.mxu0 0.0
    %2978 = vmatpush1.msra.mxu0 0.0
    %2979 = vmatprep.subr.mxu0 0.0
    %2980 = vmatpush1.msra.mxu0 0.0
    %2981 = vmatprep.subr.mxu0 0.0
    %2982 = vmatpush1.msra.mxu0 0.0
    %2983 = vmatprep.subr.mxu0 0.0
    %2984 = vmatpush1.msra.mxu0 0.0
    %2985 = vmatprep.subr.mxu0 0.0
    %2986 = vmatpush1.msra.mxu0 0.0
    %2987 = vmatprep.mubr.f32.mxu0 0.0
    %2988 = vmatmul.mubr.f32.gmra.mrb[0].mxu0 %v2918
    %v2989 = vpop.f32.mrb[0].mxu0
    %v2990 = vadd.f32 %v2916, %v2989
    %v2991 = vpop.f32.mrb[0].mxu0
    %2992 = vmatprep.mubr.f32.mxu0 0.0
    %2993 = vmatmul.mubr.f32.gmra.mrb[0].mxu0 %v2921
    %v2994 = vpop.f32.mrb[0].mxu0
    %v2995 = vadd.f32 %v2916, %v2994
    %v2996 = vpop.f32.mrb[0].mxu0
    %2997 = vdwg.mxu0
    %v2998 = vld [vmem:[#allocation2 + $0x250] sm:$0xff]
    %v2999 = vld [vmem:[#allocation2 + $0x258] sm:$0xff]
    %v3000 = vld [vmem:[#allocation2 + $0x260] sm:$0xff]
    %v3001 = vld [vmem:[#allocation2 + $0x268] sm:$0xff]
    %v3002 = vld [vmem:[#allocation2 + $0x270] sm:$0x1]
    %3005 = vrot.lane.b32.xlu0 %v2990, 96
    %v3006 = vpop.permute.xlu0 %3005
    %3007 = vrot.lane.b32.xlu0 %v2995, 96
    %v3008 = vpop.permute.xlu0 %3007
    %v3009 = vsel %vm374, %v2990, 0
    %v3011 = vsel %vm374, %v2995, 0
    %v3013 = vsel %vm374, %v3006, 0
    %v3015 = vsel %vm374, %v3008, 0
    %3017 = vmatprep.subr.mxu0 0.0
    %3018 = vmatpush1.xpose.msra.mxu0 %v3013
    %3019 = vmatprep.subr.mxu0 0.0
    %3020 = vmatpush1.xpose.msra.mxu0 %v3015
    %3021 = vmatprep.subr.mxu0 0.0
    %3022 = vmatpush1.xpose.msra.mxu0 0.0
    %3023 = vmatprep.subr.mxu0 0.0
    %3024 = vmatpush1.xpose.msra.mxu0 0.0
    %3025 = vmatprep.subr.mxu0 0.0
    %3026 = vmatpush1.xpose.msra.mxu0 0.0
    %3027 = vmatprep.subr.mxu0 0.0
    %3028 = vmatpush1.xpose.msra.mxu0 0.0
    %3029 = vmatprep.subr.mxu0 0.0
    %3030 = vmatpush1.xpose.msra.mxu0 0.0
    %3031 = vmatprep.subr.mxu0 0.0
    %3032 = vmatpush1.xpose.msra.mxu0 0.0
    %3033 = vmatprep.subr.mxu0 0.0
    %3034 = vmatpush1.xpose.msra.mxu0 0.0
    %3035 = vmatprep.subr.mxu0 0.0
    %3036 = vmatpush1.xpose.msra.mxu0 0.0
    %3037 = vmatprep.subr.mxu0 0.0
    %3038 = vmatpush1.xpose.msra.mxu0 0.0
    %3039 = vmatprep.subr.mxu0 0.0
    %3040 = vmatpush1.xpose.msra.mxu0 0.0
    %3041 = vmatprep.subr.mxu0 0.0
    %3042 = vmatpush1.xpose.msra.mxu0 0.0
    %3043 = vmatprep.subr.mxu0 0.0
    %3044 = vmatpush1.xpose.msra.mxu0 0.0
    %3045 = vmatprep.subr.mxu0 0.0
    %3046 = vmatpush1.xpose.msra.mxu0 0.0
    %3047 = vmatprep.subr.mxu0 0.0
    %3048 = vmatpush1.xpose.msra.mxu0 0.0
    %3049 = vmatprep.subr.mxu0 0.0
    %3050 = vmatpush1.xpose.msra.mxu0 0.0
    %3051 = vmatprep.subr.mxu0 0.0
    %3052 = vmatpush1.xpose.msra.mxu0 0.0
    %3053 = vmatprep.subr.mxu0 0.0
    %3054 = vmatpush1.xpose.msra.mxu0 0.0
    %3055 = vmatprep.subr.mxu0 0.0
    %3056 = vmatpush1.xpose.msra.mxu0 0.0
    %3057 = vmatprep.subr.mxu0 0.0
    %3058 = vmatpush1.xpose.msra.mxu0 0.0
    %3059 = vmatprep.subr.mxu0 0.0
    %3060 = vmatpush1.xpose.msra.mxu0 0.0
    %3061 = vmatprep.subr.mxu0 0.0
    %3062 = vmatpush1.xpose.msra.mxu0 0.0
    %3063 = vmatprep.subr.mxu0 0.0
    %3064 = vmatpush1.xpose.msra.mxu0 0.0
    %3065 = vmatprep.subr.mxu0 0.0
    %3066 = vmatpush1.xpose.msra.mxu0 0.0
    %3067 = vmatprep.subr.mxu0 0.0
    %3068 = vmatpush1.xpose.msra.mxu0 0.0
    %3069 = vmatprep.subr.mxu0 0.0
    %3070 = vmatpush1.xpose.msra.mxu0 0.0
    %3071 = vmatprep.subr.mxu0 0.0
    %3072 = vmatpush1.xpose.msra.mxu0 0.0
    %3073 = vmatprep.subr.mxu0 0.0
    %3074 = vmatpush1.xpose.msra.mxu0 0.0
    %3075 = vmatprep.subr.mxu0 0.0
    %3076 = vmatpush1.xpose.msra.mxu0 0.0
    %3077 = vmatprep.subr.mxu0 0.0
    %3078 = vmatpush1.xpose.msra.mxu0 0.0
    %3079 = vmatprep.subr.mxu0 0.0
    %3080 = vmatpush1.xpose.msra.mxu0 0.0
    %3081 = vmatprep.mubr.f32.mxu0 0.0
    %3082 = vmatmul.mubr.f32.gmra.mrb[0].mxu0 %v3009
    %v3083 = vpop.f32.mrb[0].mxu0
    %v3084 = vadd.f32 0.0, %v3083
    %v3085 = vpop.f32.mrb[0].mxu0
    %3086 = vmatprep.mubr.f32.mxu0 0.0
    %3087 = vmatmul.mubr.f32.gmra.mrb[0].mxu0 %v3011
    %v3088 = vpop.f32.mrb[0].mxu0
    %v3089 = vadd.f32 0.0, %v3088
    %v3090 = vpop.f32.mrb[0].mxu0
    %3091 = vdwg.mxu0
    %v3092 = vmul.f32 %v3084, 0.35355338
    %v3093 = vmul.f32 %v3089, 0.35355338
    %v3094 = vadd.f32 %v3092, %v271
    %v3095 = vadd.f32 %v3093, %v272
    %v3096 = vsel %vm462, %v3094, -inf
    %3097 = vmax.xlane.f32.xlu0 %v3096
    %v3098 = vpop.xlane.xlu0 %3097
    %v3099 = vsel %vm462, %v3095, -inf
    %3100 = vmax.xlane.f32.xlu0 %v3099
    %v3101 = vpop.xlane.xlu0 %3100
    %v3102 = vsub.f32 %v3094, %v3098
    %v3103 = vsub.f32 %v3095, %v3101
    %v3104 = vmul.f32 %v3102, 1.442695
    %v3105 = vpow.pop %v3104
    %v3106 = vmul.f32 %v3103, 1.442695
    %v3107 = vpow.pop %v3106
    %v3108 = vsel %vm462, %v3105, 0.0
    %3109 = vadd.xlane.f32.xlu0 %v3108
    %v3110 = vpop.xlane.xlu0 %3109
    %v3111 = vsel %vm462, %v3107, 0.0
    %3112 = vadd.xlane.f32.xlu0 %v3111
    %v3113 = vpop.xlane.xlu0 %3112
    %v3114 = vrcp.pop %v3110
    %v3115 = vrcp.pop %v3113
    %v3116 = vmul.f32 %v3105, %v3114
    %v3117 = vmul.f32 %v3107, %v3115
    %3118 = vrot.lane.b32.xlu0 %v2990, 64
    %v3119 = vpop.permute.xlu0 %3118
    %3120 = vrot.lane.b32.xlu0 %v2995, 64
    %v3121 = vpop.permute.xlu0 %3120
    %v3125 = vsel %vm462, %v3116, 0
    %v3128 = vsel %vm462, %v3117, 0
    %3130 = vmatprep.subr.mxu0 0.0
    %3131 = vmatpush1.msra.mxu0 %v3119
    %3132 = vmatprep.subr.mxu0 0.0
    %3133 = vmatpush1.msra.mxu0 %v3121
    %3134 = vmatprep.subr.mxu0 0.0
    %3135 = vmatpush1.msra.mxu0 0.0
    %3136 = vmatprep.subr.mxu0 0.0
    %3137 = vmatpush1.msra.mxu0 0.0
    %3138 = vmatprep.subr.mxu0 0.0
    %3139 = vmatpush1.msra.mxu0 0.0
    %3140 = vmatprep.subr.mxu0 0.0
    %3141 = vmatpush1.msra.mxu0 0.0
    %3142 = vmatprep.subr.mxu0 0.0
    %3143 = vmatpush1.msra.mxu0 0.0
    %3144 = vmatprep.subr.mxu0 0.0
    %3145 = vmatpush1.msra.mxu0 0.0
    %3146 = vmatprep.subr.mxu0 0.0
    %3147 = vmatpush1.msra.mxu0 0.0
    %3148 = vmatprep.subr.mxu0 0.0
    %3149 = vmatpush1.msra.mxu0 0.0
    %3150 = vmatprep.subr.mxu0 0.0
    %3151 = vmatpush1.msra.mxu0 0.0
    %3152 = vmatprep.subr.mxu0 0.0
    %3153 = vmatpush1.msra.mxu0 0.0
    %3154 = vmatprep.subr.mxu0 0.0
    %3155 = vmatpush1.msra.mxu0 0.0
    %3156 = vmatprep.subr.mxu0 0.0
    %3157 = vmatpush1.msra.mxu0 0.0
    %3158 = vmatprep.subr.mxu0 0.0
    %3159 = vmatpush1.msra.mxu0 0.0
    %3160 = vmatprep.subr.mxu0 0.0
    %3161 = vmatpush1.msra.mxu0 0.0
    %3162 = vmatprep.subr.mxu0 0.0
    %3163 = vmatpush1.msra.mxu0 0.0
    %3164 = vmatprep.subr.mxu0 0.0
    %3165 = vmatpush1.msra.mxu0 0.0
    %3166 = vmatprep.subr.mxu0 0.0
    %3167 = vmatpush1.msra.mxu0 0.0
    %3168 = vmatprep.subr.mxu0 0.0
    %3169 = vmatpush1.msra.mxu0 0.0
    %3170 = vmatprep.subr.mxu0 0.0
    %3171 = vmatpush1.msra.mxu0 0.0
    %3172 = vmatprep.subr.mxu0 0.0
    %3173 = vmatpush1.msra.mxu0 0.0
    %3174 = vmatprep.subr.mxu0 0.0
    %3175 = vmatpush1.msra.mxu0 0.0
    %3176 = vmatprep.subr.mxu0 0.0
    %3177 = vmatpush1.msra.mxu0 0.0
    %3178 = vmatprep.subr.mxu0 0.0
    %3179 = vmatpush1.msra.mxu0 0.0
    %3180 = vmatprep.subr.mxu0 0.0
    %3181 = vmatpush1.msra.mxu0 0.0
    %3182 = vmatprep.subr.mxu0 0.0
    %3183 = vmatpush1.msra.mxu0 0.0
    %3184 = vmatprep.subr.mxu0 0.0
    %3185 = vmatpush1.msra.mxu0 0.0
    %3186 = vmatprep.subr.mxu0 0.0
    %3187 = vmatpush1.msra.mxu0 0.0
    %3188 = vmatprep.subr.mxu0 0.0
    %3189 = vmatpush1.msra.mxu0 0.0
    %3190 = vmatprep.subr.mxu0 0.0
    %3191 = vmatpush1.msra.mxu0 0.0
    %3192 = vmatprep.subr.mxu0 0.0
    %3193 = vmatpush1.msra.mxu0 0.0
    %3194 = vmatprep.mubr.f32.mxu0 0.0
    %3195 = vmatmul.mubr.f32.gmra.mrb[0].mxu0 %v3125
    %v3196 = vpop.f32.mrb[0].mxu0
    %v3197 = vadd.f32 0.0, %v3196
    %v3198 = vpop.f32.mrb[0].mxu0
    %3199 = vmatprep.mubr.f32.mxu0 0.0
    %3200 = vmatmul.mubr.f32.gmra.mrb[0].mxu0 %v3128
    %v3201 = vpop.f32.mrb[0].mxu0
    %v3202 = vadd.f32 0.0, %v3201
    %v3203 = vpop.f32.mrb[0].mxu0
    %3204 = vdwg.mxu0
    %3205 = vrot.lane.b32.xlu0 %v2990, 120
    %v3206 = vpop.permute.xlu0 %3205
    %3207 = vrot.lane.b32.xlu0 %v2995, 120
    %v3208 = vpop.permute.xlu0 %3207
    %3209 = vrot.lane.b32.xlu0 %v2990, 88
    %v3210 = vpop.permute.xlu0 %3209
    %3211 = vrot.lane.b32.xlu0 %v2995, 88
    %v3212 = vpop.permute.xlu0 %3211
    %v3213 = vsel %vm374, %v3206, 0
    %v3215 = vsel %vm374, %v3208, 0
    %v3217 = vsel %vm374, %v3210, 0
    %v3219 = vsel %vm374, %v3212, 0
    %3221 = vmatprep.subr.mxu0 0.0
    %3222 = vmatpush1.xpose.msra.mxu0 %v3217
    %3223 = vmatprep.subr.mxu0 0.0
    %3224 = vmatpush1.xpose.msra.mxu0 %v3219
    %3225 = vmatprep.subr.mxu0 0.0
    %3226 = vmatpush1.xpose.msra.mxu0 0.0
    %3227 = vmatprep.subr.mxu0 0.0
    %3228 = vmatpush1.xpose.msra.mxu0 0.0
    %3229 = vmatprep.subr.mxu0 0.0
    %3230 = vmatpush1.xpose.msra.mxu0 0.0
    %3231 = vmatprep.subr.mxu0 0.0
    %3232 = vmatpush1.xpose.msra.mxu0 0.0
    %3233 = vmatprep.subr.mxu0 0.0
    %3234 = vmatpush1.xpose.msra.mxu0 0.0
    %3235 = vmatprep.subr.mxu0 0.0
    %3236 = vmatpush1.xpose.msra.mxu0 0.0
    %3237 = vmatprep.subr.mxu0 0.0
    %3238 = vmatpush1.xpose.msra.mxu0 0.0
    %3239 = vmatprep.subr.mxu0 0.0
    %3240 = vmatpush1.xpose.msra.mxu0 0.0
    %3241 = vmatprep.subr.mxu0 0.0
    %3242 = vmatpush1.xpose.msra.mxu0 0.0
    %3243 = vmatprep.subr.mxu0 0.0
    %3244 = vmatpush1.xpose.msra.mxu0 0.0
    %3245 = vmatprep.subr.mxu0 0.0
    %3246 = vmatpush1.xpose.msra.mxu0 0.0
    %3247 = vmatprep.subr.mxu0 0.0
    %3248 = vmatpush1.xpose.msra.mxu0 0.0
    %3249 = vmatprep.subr.mxu0 0.0
    %3250 = vmatpush1.xpose.msra.mxu0 0.0
    %3251 = vmatprep.subr.mxu0 0.0
    %3252 = vmatpush1.xpose.msra.mxu0 0.0
    %3253 = vmatprep.subr.mxu0 0.0
    %3254 = vmatpush1.xpose.msra.mxu0 0.0
    %3255 = vmatprep.subr.mxu0 0.0
    %3256 = vmatpush1.xpose.msra.mxu0 0.0
    %3257 = vmatprep.subr.mxu0 0.0
    %3258 = vmatpush1.xpose.msra.mxu0 0.0
    %3259 = vmatprep.subr.mxu0 0.0
    %3260 = vmatpush1.xpose.msra.mxu0 0.0
    %3261 = vmatprep.subr.mxu0 0.0
    %3262 = vmatpush1.xpose.msra.mxu0 0.0
    %3263 = vmatprep.subr.mxu0 0.0
    %3264 = vmatpush1.xpose.msra.mxu0 0.0
    %3265 = vmatprep.subr.mxu0 0.0
    %3266 = vmatpush1.xpose.msra.mxu0 0.0
    %3267 = vmatprep.subr.mxu0 0.0
    %3268 = vmatpush1.xpose.msra.mxu0 0.0
    %3269 = vmatprep.subr.mxu0 0.0
    %3270 = vmatpush1.xpose.msra.mxu0 0.0
    %3271 = vmatprep.subr.mxu0 0.0
    %3272 = vmatpush1.xpose.msra.mxu0 0.0
    %3273 = vmatprep.subr.mxu0 0.0
    %3274 = vmatpush1.xpose.msra.mxu0 0.0
    %3275 = vmatprep.subr.mxu0 0.0
    %3276 = vmatpush1.xpose.msra.mxu0 0.0
    %3277 = vmatprep.subr.mxu0 0.0
    %3278 = vmatpush1.xpose.msra.mxu0 0.0
    %3279 = vmatprep.subr.mxu0 0.0
    %3280 = vmatpush1.xpose.msra.mxu0 0.0
    %3281 = vmatprep.subr.mxu0 0.0
    %3282 = vmatpush1.xpose.msra.mxu0 0.0
    %3283 = vmatprep.subr.mxu0 0.0
    %3284 = vmatpush1.xpose.msra.mxu0 0.0
    %3285 = vmatprep.mubr.f32.mxu0 0.0
    %3286 = vmatmul.mubr.f32.gmra.mrb[0].mxu0 %v3213
    %v3287 = vpop.f32.mrb[0].mxu0
    %v3288 = vadd.f32 0.0, %v3287
    %v3289 = vpop.f32.mrb[0].mxu0
    %3290 = vmatprep.mubr.f32.mxu0 0.0
    %3291 = vmatmul.mubr.f32.gmra.mrb[0].mxu0 %v3215
    %v3292 = vpop.f32.mrb[0].mxu0
    %v3293 = vadd.f32 0.0, %v3292
    %v3294 = vpop.f32.mrb[0].mxu0
    %3295 = vdwg.mxu0
    %v3296 = vmul.f32 %v3288, 0.35355338
    %v3297 = vmul.f32 %v3293, 0.35355338
    %v3298 = vadd.f32 %v3296, %v271
    %v3299 = vadd.f32 %v3297, %v272
    %v3300 = vsel %vm462, %v3298, -inf
    %3301 = vmax.xlane.f32.xlu0 %v3300
    %v3302 = vpop.xlane.xlu0 %3301
    %v3303 = vsel %vm462, %v3299, -inf
    %3304 = vmax.xlane.f32.xlu0 %v3303
    %v3305 = vpop.xlane.xlu0 %3304
    %v3306 = vsub.f32 %v3298, %v3302
    %v3307 = vsub.f32 %v3299, %v3305
    %v3308 = vmul.f32 %v3306, 1.442695
    %v3309 = vpow.pop %v3308
    %v3310 = vmul.f32 %v3307, 1.442695
    %v3311 = vpow.pop %v3310
    %v3312 = vsel %vm462, %v3309, 0.0
    %3313 = vadd.xlane.f32.xlu0 %v3312
    %v3314 = vpop.xlane.xlu0 %3313
    %v3315 = vsel %vm462, %v3311, 0.0
    %3316 = vadd.xlane.f32.xlu0 %v3315
    %v3317 = vpop.xlane.xlu0 %3316
    %v3318 = vrcp.pop %v3314
    %v3319 = vrcp.pop %v3317
    %v3320 = vmul.f32 %v3309, %v3318
    %v3321 = vmul.f32 %v3311, %v3319
    %3322 = vrot.lane.b32.xlu0 %v2990, 56
    %v3323 = vpop.permute.xlu0 %3322
    %3324 = vrot.lane.b32.xlu0 %v2995, 56
    %v3325 = vpop.permute.xlu0 %3324
    %v3329 = vsel %vm462, %v3320, 0
    %v3332 = vsel %vm462, %v3321, 0
    %3334 = vmatprep.subr.mxu0 0.0
    %3335 = vmatpush1.msra.mxu0 %v3323
    %3336 = vmatprep.subr.mxu0 0.0
    %3337 = vmatpush1.msra.mxu0 %v3325
    %3338 = vmatprep.subr.mxu0 0.0
    %3339 = vmatpush1.msra.mxu0 0.0
    %3340 = vmatprep.subr.mxu0 0.0
    %3341 = vmatpush1.msra.mxu0 0.0
    %3342 = vmatprep.subr.mxu0 0.0
    %3343 = vmatpush1.msra.mxu0 0.0
    %3344 = vmatprep.subr.mxu0 0.0
    %3345 = vmatpush1.msra.mxu0 0.0
    %3346 = vmatprep.subr.mxu0 0.0
    %3347 = vmatpush1.msra.mxu0 0.0
    %3348 = vmatprep.subr.mxu0 0.0
    %3349 = vmatpush1.msra.mxu0 0.0
    %3350 = vmatprep.subr.mxu0 0.0
    %3351 = vmatpush1.msra.mxu0 0.0
    %3352 = vmatprep.subr.mxu0 0.0
    %3353 = vmatpush1.msra.mxu0 0.0
    %3354 = vmatprep.subr.mxu0 0.0
    %3355 = vmatpush1.msra.mxu0 0.0
    %3356 = vmatprep.subr.mxu0 0.0
    %3357 = vmatpush1.msra.mxu0 0.0
    %3358 = vmatprep.subr.mxu0 0.0
    %3359 = vmatpush1.msra.mxu0 0.0
    %3360 = vmatprep.subr.mxu0 0.0
    %3361 = vmatpush1.msra.mxu0 0.0
    %3362 = vmatprep.subr.mxu0 0.0
    %3363 = vmatpush1.msra.mxu0 0.0
    %3364 = vmatprep.subr.mxu0 0.0
    %3365 = vmatpush1.msra.mxu0 0.0
    %3366 = vmatprep.subr.mxu0 0.0
    %3367 = vmatpush1.msra.mxu0 0.0
    %3368 = vmatprep.subr.mxu0 0.0
    %3369 = vmatpush1.msra.mxu0 0.0
    %3370 = vmatprep.subr.mxu0 0.0
    %3371 = vmatpush1.msra.mxu0 0.0
    %3372 = vmatprep.subr.mxu0 0.0
    %3373 = vmatpush1.msra.mxu0 0.0
    %3374 = vmatprep.subr.mxu0 0.0
    %3375 = vmatpush1.msra.mxu0 0.0
    %3376 = vmatprep.subr.mxu0 0.0
    %3377 = vmatpush1.msra.mxu0 0.0
    %3378 = vmatprep.subr.mxu0 0.0
    %3379 = vmatpush1.msra.mxu0 0.0
    %3380 = vmatprep.subr.mxu0 0.0
    %3381 = vmatpush1.msra.mxu0 0.0
    %3382 = vmatprep.subr.mxu0 0.0
    %3383 = vmatpush1.msra.mxu0 0.0
    %3384 = vmatprep.subr.mxu0 0.0
    %3385 = vmatpush1.msra.mxu0 0.0
    %3386 = vmatprep.subr.mxu0 0.0
    %3387 = vmatpush1.msra.mxu0 0.0
    %3388 = vmatprep.subr.mxu0 0.0
    %3389 = vmatpush1.msra.mxu0 0.0
    %3390 = vmatprep.subr.mxu0 0.0
    %3391 = vmatpush1.msra.mxu0 0.0
    %3392 = vmatprep.subr.mxu0 0.0
    %3393 = vmatpush1.msra.mxu0 0.0
    %3394 = vmatprep.subr.mxu0 0.0
    %3395 = vmatpush1.msra.mxu0 0.0
    %3396 = vmatprep.subr.mxu0 0.0
    %3397 = vmatpush1.msra.mxu0 0.0
    %3398 = vmatprep.mubr.f32.mxu0 0.0
    %3399 = vmatmul.mubr.f32.gmra.mrb[0].mxu0 %v3329
    %v3400 = vpop.f32.mrb[0].mxu0
    %v3401 = vadd.f32 0.0, %v3400
    %v3402 = vpop.f32.mrb[0].mxu0
    %3403 = vmatprep.mubr.f32.mxu0 0.0
    %3404 = vmatmul.mubr.f32.gmra.mrb[0].mxu0 %v3332
    %v3405 = vpop.f32.mrb[0].mxu0
    %v3406 = vadd.f32 0.0, %v3405
    %v3407 = vpop.f32.mrb[0].mxu0
    %3408 = vdwg.mxu0
    %3409 = vrot.lane.b32.xlu0 %v2990, 112
    %v3410 = vpop.permute.xlu0 %3409
    %3411 = vrot.lane.b32.xlu0 %v2995, 112
    %v3412 = vpop.permute.xlu0 %3411
    %3413 = vrot.lane.b32.xlu0 %v2990, 80
    %v3414 = vpop.permute.xlu0 %3413
    %3415 = vrot.lane.b32.xlu0 %v2995, 80
    %v3416 = vpop.permute.xlu0 %3415
    %v3417 = vsel %vm374, %v3410, 0
    %v3419 = vsel %vm374, %v3412, 0
    %v3421 = vsel %vm374, %v3414, 0
    %v3423 = vsel %vm374, %v3416, 0
    %3425 = vmatprep.subr.mxu0 0.0
    %3426 = vmatpush1.xpose.msra.mxu0 %v3421
    %3427 = vmatprep.subr.mxu0 0.0
    %3428 = vmatpush1.xpose.msra.mxu0 %v3423
    %3429 = vmatprep.subr.mxu0 0.0
    %3430 = vmatpush1.xpose.msra.mxu0 0.0
    %3431 = vmatprep.subr.mxu0 0.0
    %3432 = vmatpush1.xpose.msra.mxu0 0.0
    %3433 = vmatprep.subr.mxu0 0.0
    %3434 = vmatpush1.xpose.msra.mxu0 0.0
    %3435 = vmatprep.subr.mxu0 0.0
    %3436 = vmatpush1.xpose.msra.mxu0 0.0
    %3437 = vmatprep.subr.mxu0 0.0
    %3438 = vmatpush1.xpose.msra.mxu0 0.0
    %3439 = vmatprep.subr.mxu0 0.0
    %3440 = vmatpush1.xpose.msra.mxu0 0.0
    %3441 = vmatprep.subr.mxu0 0.0
    %3442 = vmatpush1.xpose.msra.mxu0 0.0
    %3443 = vmatprep.subr.mxu0 0.0
    %3444 = vmatpush1.xpose.msra.mxu0 0.0
    %3445 = vmatprep.subr.mxu0 0.0
    %3446 = vmatpush1.xpose.msra.mxu0 0.0
    %3447 = vmatprep.subr.mxu0 0.0
    %3448 = vmatpush1.xpose.msra.mxu0 0.0
    %3449 = vmatprep.subr.mxu0 0.0
    %3450 = vmatpush1.xpose.msra.mxu0 0.0
    %3451 = vmatprep.subr.mxu0 0.0
    %3452 = vmatpush1.xpose.msra.mxu0 0.0
    %3453 = vmatprep.subr.mxu0 0.0
    %3454 = vmatpush1.xpose.msra.mxu0 0.0
    %3455 = vmatprep.subr.mxu0 0.0
    %3456 = vmatpush1.xpose.msra.mxu0 0.0
    %3457 = vmatprep.subr.mxu0 0.0
    %3458 = vmatpush1.xpose.msra.mxu0 0.0
    %3459 = vmatprep.subr.mxu0 0.0
    %3460 = vmatpush1.xpose.msra.mxu0 0.0
    %3461 = vmatprep.subr.mxu0 0.0
    %3462 = vmatpush1.xpose.msra.mxu0 0.0
    %3463 = vmatprep.subr.mxu0 0.0
    %3464 = vmatpush1.xpose.msra.mxu0 0.0
    %3465 = vmatprep.subr.mxu0 0.0
    %3466 = vmatpush1.xpose.msra.mxu0 0.0
    %3467 = vmatprep.subr.mxu0 0.0
    %3468 = vmatpush1.xpose.msra.mxu0 0.0
    %3469 = vmatprep.subr.mxu0 0.0
    %3470 = vmatpush1.xpose.msra.mxu0 0.0
    %3471 = vmatprep.subr.mxu0 0.0
    %3472 = vmatpush1.xpose.msra.mxu0 0.0
    %3473 = vmatprep.subr.mxu0 0.0
    %3474 = vmatpush1.xpose.msra.mxu0 0.0
    %3475 = vmatprep.subr.mxu0 0.0
    %3476 = vmatpush1.xpose.msra.mxu0 0.0
    %3477 = vmatprep.subr.mxu0 0.0
    %3478 = vmatpush1.xpose.msra.mxu0 0.0
    %3479 = vmatprep.subr.mxu0 0.0
    %3480 = vmatpush1.xpose.msra.mxu0 0.0
    %3481 = vmatprep.subr.mxu0 0.0
    %3482 = vmatpush1.xpose.msra.mxu0 0.0
    %3483 = vmatprep.subr.mxu0 0.0
    %3484 = vmatpush1.xpose.msra.mxu0 0.0
    %3485 = vmatprep.subr.mxu0 0.0
    %3486 = vmatpush1.xpose.msra.mxu0 0.0
    %3487 = vmatprep.subr.mxu0 0.0
    %3488 = vmatpush1.xpose.msra.mxu0 0.0
    %3489 = vmatprep.mubr.f32.mxu0 0.0
    %3490 = vmatmul.mubr.f32.gmra.mrb[0].mxu0 %v3417
    %v3491 = vpop.f32.mrb[0].mxu0
    %v3492 = vadd.f32 0.0, %v3491
    %v3493 = vpop.f32.mrb[0].mxu0
    %3494 = vmatprep.mubr.f32.mxu0 0.0
    %3495 = vmatmul.mubr.f32.gmra.mrb[0].mxu0 %v3419
    %v3496 = vpop.f32.mrb[0].mxu0
    %v3497 = vadd.f32 0.0, %v3496
    %v3498 = vpop.f32.mrb[0].mxu0
    %3499 = vdwg.mxu0
    %v3500 = vmul.f32 %v3492, 0.35355338
    %v3501 = vmul.f32 %v3497, 0.35355338
    %v3502 = vadd.f32 %v3500, %v271
    %v3503 = vadd.f32 %v3501, %v272
    %v3504 = vsel %vm462, %v3502, -inf
    %3505 = vmax.xlane.f32.xlu0 %v3504
    %v3506 = vpop.xlane.xlu0 %3505
    %v3507 = vsel %vm462, %v3503, -inf
    %3508 = vmax.xlane.f32.xlu0 %v3507
    %v3509 = vpop.xlane.xlu0 %3508
    %v3510 = vsub.f32 %v3502, %v3506
    %v3511 = vsub.f32 %v3503, %v3509
    %v3512 = vmul.f32 %v3510, 1.442695
    %v3513 = vpow.pop %v3512
    %v3514 = vmul.f32 %v3511, 1.442695
    %v3515 = vpow.pop %v3514
    %v3516 = vsel %vm462, %v3513, 0.0
    %3517 = vadd.xlane.f32.xlu0 %v3516
    %v3518 = vpop.xlane.xlu0 %3517
    %v3519 = vsel %vm462, %v3515, 0.0
    %3520 = vadd.xlane.f32.xlu0 %v3519
    %v3521 = vpop.xlane.xlu0 %3520
    %v3522 = vrcp.pop %v3518
    %v3523 = vrcp.pop %v3521
    %v3524 = vmul.f32 %v3513, %v3522
    %v3525 = vmul.f32 %v3515, %v3523
    %3526 = vrot.lane.b32.xlu0 %v2990, 48
    %v3527 = vpop.permute.xlu0 %3526
    %3528 = vrot.lane.b32.xlu0 %v2995, 48
    %v3529 = vpop.permute.xlu0 %3528
    %v3533 = vsel %vm462, %v3524, 0
    %v3536 = vsel %vm462, %v3525, 0
    %3538 = vmatprep.subr.mxu0 0.0
    %3539 = vmatpush1.msra.mxu0 %v3527
    %3540 = vmatprep.subr.mxu0 0.0
    %3541 = vmatpush1.msra.mxu0 %v3529
    %3542 = vmatprep.subr.mxu0 0.0
    %3543 = vmatpush1.msra.mxu0 0.0
    %3544 = vmatprep.subr.mxu0 0.0
    %3545 = vmatpush1.msra.mxu0 0.0
    %3546 = vmatprep.subr.mxu0 0.0
    %3547 = vmatpush1.msra.mxu0 0.0
    %3548 = vmatprep.subr.mxu0 0.0
    %3549 = vmatpush1.msra.mxu0 0.0
    %3550 = vmatprep.subr.mxu0 0.0
    %3551 = vmatpush1.msra.mxu0 0.0
    %3552 = vmatprep.subr.mxu0 0.0
    %3553 = vmatpush1.msra.mxu0 0.0
    %3554 = vmatprep.subr.mxu0 0.0
    %3555 = vmatpush1.msra.mxu0 0.0
    %3556 = vmatprep.subr.mxu0 0.0
    %3557 = vmatpush1.msra.mxu0 0.0
    %3558 = vmatprep.subr.mxu0 0.0
    %3559 = vmatpush1.msra.mxu0 0.0
    %3560 = vmatprep.subr.mxu0 0.0
    %3561 = vmatpush1.msra.mxu0 0.0
    %3562 = vmatprep.subr.mxu0 0.0
    %3563 = vmatpush1.msra.mxu0 0.0
    %3564 = vmatprep.subr.mxu0 0.0
    %3565 = vmatpush1.msra.mxu0 0.0
    %3566 = vmatprep.subr.mxu0 0.0
    %3567 = vmatpush1.msra.mxu0 0.0
    %3568 = vmatprep.subr.mxu0 0.0
    %3569 = vmatpush1.msra.mxu0 0.0
    %3570 = vmatprep.subr.mxu0 0.0
    %3571 = vmatpush1.msra.mxu0 0.0
    %3572 = vmatprep.subr.mxu0 0.0
    %3573 = vmatpush1.msra.mxu0 0.0
    %3574 = vmatprep.subr.mxu0 0.0
    %3575 = vmatpush1.msra.mxu0 0.0
    %3576 = vmatprep.subr.mxu0 0.0
    %3577 = vmatpush1.msra.mxu0 0.0
    %3578 = vmatprep.subr.mxu0 0.0
    %3579 = vmatpush1.msra.mxu0 0.0
    %3580 = vmatprep.subr.mxu0 0.0
    %3581 = vmatpush1.msra.mxu0 0.0
    %3582 = vmatprep.subr.mxu0 0.0
    %3583 = vmatpush1.msra.mxu0 0.0
    %3584 = vmatprep.subr.mxu0 0.0
    %3585 = vmatpush1.msra.mxu0 0.0
    %3586 = vmatprep.subr.mxu0 0.0
    %3587 = vmatpush1.msra.mxu0 0.0
    %3588 = vmatprep.subr.mxu0 0.0
    %3589 = vmatpush1.msra.mxu0 0.0
    %3590 = vmatprep.subr.mxu0 0.0
    %3591 = vmatpush1.msra.mxu0 0.0
    %3592 = vmatprep.subr.mxu0 0.0
    %3593 = vmatpush1.msra.mxu0 0.0
    %3594 = vmatprep.subr.mxu0 0.0
    %3595 = vmatpush1.msra.mxu0 0.0
    %3596 = vmatprep.subr.mxu0 0.0
    %3597 = vmatpush1.msra.mxu0 0.0
    %3598 = vmatprep.subr.mxu0 0.0
    %3599 = vmatpush1.msra.mxu0 0.0
    %3600 = vmatprep.subr.mxu0 0.0
    %3601 = vmatpush1.msra.mxu0 0.0
    %3602 = vmatprep.mubr.f32.mxu0 0.0
    %3603 = vmatmul.mubr.f32.gmra.mrb[0].mxu0 %v3533
    %v3604 = vpop.f32.mrb[0].mxu0
    %v3605 = vadd.f32 0.0, %v3604
    %v3606 = vpop.f32.mrb[0].mxu0
    %3607 = vmatprep.mubr.f32.mxu0 0.0
    %3608 = vmatmul.mubr.f32.gmra.mrb[0].mxu0 %v3536
    %v3609 = vpop.f32.mrb[0].mxu0
    %v3610 = vadd.f32 0.0, %v3609
    %v3611 = vpop.f32.mrb[0].mxu0
    %3612 = vdwg.mxu0
    %3613 = vrot.lane.b32.xlu0 %v2990, 104
    %v3614 = vpop.permute.xlu0 %3613
    %3615 = vrot.lane.b32.xlu0 %v2995, 104
    %v3616 = vpop.permute.xlu0 %3615
    %3617 = vrot.lane.b32.xlu0 %v2990, 72
    %v3618 = vpop.permute.xlu0 %3617
    %3619 = vrot.lane.b32.xlu0 %v2995, 72
    %v3620 = vpop.permute.xlu0 %3619
    %v3621 = vsel %vm374, %v3614, 0
    %v3623 = vsel %vm374, %v3616, 0
    %v3625 = vsel %vm374, %v3618, 0
    %v3627 = vsel %vm374, %v3620, 0
    %3629 = vmatprep.subr.mxu0 0.0
    %3630 = vmatpush1.xpose.msra.mxu0 %v3625
    %3631 = vmatprep.subr.mxu0 0.0
    %3632 = vmatpush1.xpose.msra.mxu0 %v3627
    %3633 = vmatprep.subr.mxu0 0.0
    %3634 = vmatpush1.xpose.msra.mxu0 0.0
    %3635 = vmatprep.subr.mxu0 0.0
    %3636 = vmatpush1.xpose.msra.mxu0 0.0
    %3637 = vmatprep.subr.mxu0 0.0
    %3638 = vmatpush1.xpose.msra.mxu0 0.0
    %3639 = vmatprep.subr.mxu0 0.0
    %3640 = vmatpush1.xpose.msra.mxu0 0.0
    %3641 = vmatprep.subr.mxu0 0.0
    %3642 = vmatpush1.xpose.msra.mxu0 0.0
    %3643 = vmatprep.subr.mxu0 0.0
    %3644 = vmatpush1.xpose.msra.mxu0 0.0
    %3645 = vmatprep.subr.mxu0 0.0
    %3646 = vmatpush1.xpose.msra.mxu0 0.0
    %3647 = vmatprep.subr.mxu0 0.0
    %3648 = vmatpush1.xpose.msra.mxu0 0.0
    %3649 = vmatprep.subr.mxu0 0.0
    %3650 = vmatpush1.xpose.msra.mxu0 0.0
    %3651 = vmatprep.subr.mxu0 0.0
    %3652 = vmatpush1.xpose.msra.mxu0 0.0
    %3653 = vmatprep.subr.mxu0 0.0
    %3654 = vmatpush1.xpose.msra.mxu0 0.0
    %3655 = vmatprep.subr.mxu0 0.0
    %3656 = vmatpush1.xpose.msra.mxu0 0.0
    %3657 = vmatprep.subr.mxu0 0.0
    %3658 = vmatpush1.xpose.msra.mxu0 0.0
    %3659 = vmatprep.subr.mxu0 0.0
    %3660 = vmatpush1.xpose.msra.mxu0 0.0
    %3661 = vmatprep.subr.mxu0 0.0
    %3662 = vmatpush1.xpose.msra.mxu0 0.0
    %3663 = vmatprep.subr.mxu0 0.0
    %3664 = vmatpush1.xpose.msra.mxu0 0.0
    %3665 = vmatprep.subr.mxu0 0.0
    %3666 = vmatpush1.xpose.msra.mxu0 0.0
    %3667 = vmatprep.subr.mxu0 0.0
    %3668 = vmatpush1.xpose.msra.mxu0 0.0
    %3669 = vmatprep.subr.mxu0 0.0
    %3670 = vmatpush1.xpose.msra.mxu0 0.0
    %3671 = vmatprep.subr.mxu0 0.0
    %3672 = vmatpush1.xpose.msra.mxu0 0.0
    %3673 = vmatprep.subr.mxu0 0.0
    %3674 = vmatpush1.xpose.msra.mxu0 0.0
    %3675 = vmatprep.subr.mxu0 0.0
    %3676 = vmatpush1.xpose.msra.mxu0 0.0
    %3677 = vmatprep.subr.mxu0 0.0
    %3678 = vmatpush1.xpose.msra.mxu0 0.0
    %3679 = vmatprep.subr.mxu0 0.0
    %3680 = vmatpush1.xpose.msra.mxu0 0.0
    %3681 = vmatprep.subr.mxu0 0.0
    %3682 = vmatpush1.xpose.msra.mxu0 0.0
    %3683 = vmatprep.subr.mxu0 0.0
    %3684 = vmatpush1.xpose.msra.mxu0 0.0
    %3685 = vmatprep.subr.mxu0 0.0
    %3686 = vmatpush1.xpose.msra.mxu0 0.0
    %3687 = vmatprep.subr.mxu0 0.0
    %3688 = vmatpush1.xpose.msra.mxu0 0.0
    %3689 = vmatprep.subr.mxu0 0.0
    %3690 = vmatpush1.xpose.msra.mxu0 0.0
    %3691 = vmatprep.subr.mxu0 0.0
    %3692 = vmatpush1.xpose.msra.mxu0 0.0
    %3693 = vmatprep.mubr.f32.mxu0 0.0
    %3694 = vmatmul.mubr.f32.gmra.mrb[0].mxu0 %v3621
    %v3695 = vpop.f32.mrb[0].mxu0
    %v3696 = vadd.f32 0.0, %v3695
    %v3697 = vpop.f32.mrb[0].mxu0
    %3698 = vmatprep.mubr.f32.mxu0 0.0
    %3699 = vmatmul.mubr.f32.gmra.mrb[0].mxu0 %v3623
    %v3700 = vpop.f32.mrb[0].mxu0
    %v3701 = vadd.f32 0.0, %v3700
    %v3702 = vpop.f32.mrb[0].mxu0
    %3703 = vdwg.mxu0
    %v3704 = vmul.f32 %v3696, 0.35355338
    %v3705 = vmul.f32 %v3701, 0.35355338
    %v3706 = vadd.f32 %v3704, %v271
    %v3707 = vadd.f32 %v3705, %v272
    %v3708 = vsel %vm462, %v3706, -inf
    %3709 = vmax.xlane.f32.xlu0 %v3708
    %v3710 = vpop.xlane.xlu0 %3709
    %v3711 = vsel %vm462, %v3707, -inf
    %3712 = vmax.xlane.f32.xlu0 %v3711
    %v3713 = vpop.xlane.xlu0 %3712
    %v3714 = vsub.f32 %v3706, %v3710
    %v3715 = vsub.f32 %v3707, %v3713
    %v3716 = vmul.f32 %v3714, 1.442695
    %v3717 = vpow.pop %v3716
    %v3718 = vmul.f32 %v3715, 1.442695
    %v3719 = vpow.pop %v3718
    %v3720 = vsel %vm462, %v3717, 0.0
    %3721 = vadd.xlane.f32.xlu0 %v3720
    %v3722 = vpop.xlane.xlu0 %3721
    %v3723 = vsel %vm462, %v3719, 0.0
    %3724 = vadd.xlane.f32.xlu0 %v3723
    %v3725 = vpop.xlane.xlu0 %3724
    %v3726 = vrcp.pop %v3722
    %v3727 = vrcp.pop %v3725
    %v3728 = vmul.f32 %v3717, %v3726
    %v3729 = vmul.f32 %v3719, %v3727
    %3730 = vrot.lane.b32.xlu0 %v2990, 40
    %v3731 = vpop.permute.xlu0 %3730
    %3732 = vrot.lane.b32.xlu0 %v2995, 40
    %v3733 = vpop.permute.xlu0 %3732
    %v3737 = vsel %vm462, %v3728, 0
    %v3740 = vsel %vm462, %v3729, 0
    %3742 = vmatprep.subr.mxu0 0.0
    %3743 = vmatpush1.msra.mxu0 %v3731
    %3744 = vmatprep.subr.mxu0 0.0
    %3745 = vmatpush1.msra.mxu0 %v3733
    %3746 = vmatprep.subr.mxu0 0.0
    %3747 = vmatpush1.msra.mxu0 0.0
    %3748 = vmatprep.subr.mxu0 0.0
    %3749 = vmatpush1.msra.mxu0 0.0
    %3750 = vmatprep.subr.mxu0 0.0
    %3751 = vmatpush1.msra.mxu0 0.0
    %3752 = vmatprep.subr.mxu0 0.0
    %3753 = vmatpush1.msra.mxu0 0.0
    %3754 = vmatprep.subr.mxu0 0.0
    %3755 = vmatpush1.msra.mxu0 0.0
    %3756 = vmatprep.subr.mxu0 0.0
    %3757 = vmatpush1.msra.mxu0 0.0
    %3758 = vmatprep.subr.mxu0 0.0
    %3759 = vmatpush1.msra.mxu0 0.0
    %3760 = vmatprep.subr.mxu0 0.0
    %3761 = vmatpush1.msra.mxu0 0.0
    %3762 = vmatprep.subr.mxu0 0.0
    %3763 = vmatpush1.msra.mxu0 0.0
    %3764 = vmatprep.subr.mxu0 0.0
    %3765 = vmatpush1.msra.mxu0 0.0
    %3766 = vmatprep.subr.mxu0 0.0
    %3767 = vmatpush1.msra.mxu0 0.0
    %3768 = vmatprep.subr.mxu0 0.0
    %3769 = vmatpush1.msra.mxu0 0.0
    %3770 = vmatprep.subr.mxu0 0.0
    %3771 = vmatpush1.msra.mxu0 0.0
    %3772 = vmatprep.subr.mxu0 0.0
    %3773 = vmatpush1.msra.mxu0 0.0
    %3774 = vmatprep.subr.mxu0 0.0
    %3775 = vmatpush1.msra.mxu0 0.0
    %3776 = vmatprep.subr.mxu0 0.0
    %3777 = vmatpush1.msra.mxu0 0.0
    %3778 = vmatprep.subr.mxu0 0.0
    %3779 = vmatpush1.msra.mxu0 0.0
    %3780 = vmatprep.subr.mxu0 0.0
    %3781 = vmatpush1.msra.mxu0 0.0
    %3782 = vmatprep.subr.mxu0 0.0
    %3783 = vmatpush1.msra.mxu0 0.0
    %3784 = vmatprep.subr.mxu0 0.0
    %3785 = vmatpush1.msra.mxu0 0.0
    %3786 = vmatprep.subr.mxu0 0.0
    %3787 = vmatpush1.msra.mxu0 0.0
    %3788 = vmatprep.subr.mxu0 0.0
    %3789 = vmatpush1.msra.mxu0 0.0
    %3790 = vmatprep.subr.mxu0 0.0
    %3791 = vmatpush1.msra.mxu0 0.0
    %3792 = vmatprep.subr.mxu0 0.0
    %3793 = vmatpush1.msra.mxu0 0.0
    %3794 = vmatprep.subr.mxu0 0.0
    %3795 = vmatpush1.msra.mxu0 0.0
    %3796 = vmatprep.subr.mxu0 0.0
    %3797 = vmatpush1.msra.mxu0 0.0
    %3798 = vmatprep.subr.mxu0 0.0
    %3799 = vmatpush1.msra.mxu0 0.0
    %3800 = vmatprep.subr.mxu0 0.0
    %3801 = vmatpush1.msra.mxu0 0.0
    %3802 = vmatprep.subr.mxu0 0.0
    %3803 = vmatpush1.msra.mxu0 0.0
    %3804 = vmatprep.subr.mxu0 0.0
    %3805 = vmatpush1.msra.mxu0 0.0
    %3806 = vmatprep.mubr.f32.mxu0 0.0
    %3807 = vmatmul.mubr.f32.gmra.mrb[0].mxu0 %v3737
    %v3808 = vpop.f32.mrb[0].mxu0
    %v3809 = vadd.f32 0.0, %v3808
    %v3810 = vpop.f32.mrb[0].mxu0
    %3811 = vmatprep.mubr.f32.mxu0 0.0
    %3812 = vmatmul.mubr.f32.gmra.mrb[0].mxu0 %v3740
    %v3813 = vpop.f32.mrb[0].mxu0
    %v3814 = vadd.f32 0.0, %v3813
    %v3815 = vpop.f32.mrb[0].mxu0
    %3816 = vdwg.mxu0
    %3819 = vrot.lane.b32.xlu0 %v3401, 8
    %v3820 = vpop.permute.xlu0 %3819
    %3821 = vrot.lane.b32.xlu0 %v3406, 8
    %v3822 = vpop.permute.xlu0 %3821
    %3827 = vrot.lane.b32.xlu0 %v3605, 16
    %v3828 = vpop.permute.xlu0 %3827
    %3829 = vrot.lane.b32.xlu0 %v3610, 16
    %v3830 = vpop.permute.xlu0 %3829
    %3835 = vrot.lane.b32.xlu0 %v3809, 24
    %v3836 = vpop.permute.xlu0 %3835
    %3837 = vrot.lane.b32.xlu0 %v3814, 24
    %v3838 = vpop.permute.xlu0 %3837
    %v3841 = vsel %vm374, %v3197, %v3820
    %v3842 = vsel %vm374, %v3202, %v3822
    %v3843 = vsel %vm462, %v3841, %v3828
    %v3844 = vsel %vm462, %v3842, %v3830
    %v3845 = vsel %vm1212, %v3843, %v3836
    %v3846 = vsel %vm1212, %v3844, %v3838
    %v3847 = vlaneseq
    %v3848 = vshrl.u32 %v3847, 7
    %v3849 = vsub.s32 0, %v3848
    %v3850 = vrot.slane %v3002, %v3849
    %v3852 = vsel %vm166, %v3845, 0
    %v3855 = vsel %vm166, %v3846, 0
    %3857 = vmatprep.subr.mxu0 0.0
    %3858 = vmatpush1.msra.mxu0 %v2998
    %3859 = vmatprep.subr.mxu0 0.0
    %3860 = vmatpush1.msra.mxu0 %v2999
    %3861 = vmatprep.subr.mxu0 0.0
    %3862 = vmatpush1.msra.mxu0 %v3000
    %3863 = vmatprep.subr.mxu0 0.0
    %3864 = vmatpush1.msra.mxu0 %v3001
    %3865 = vmatprep.subr.mxu0 0.0
    %3866 = vmatpush1.msra.mxu0 0.0
    %3867 = vmatprep.subr.mxu0 0.0
    %3868 = vmatpush1.msra.mxu0 0.0
    %3869 = vmatprep.subr.mxu0 0.0
    %3870 = vmatpush1.msra.mxu0 0.0
    %3871 = vmatprep.subr.mxu0 0.0
    %3872 = vmatpush1.msra.mxu0 0.0
    %3873 = vmatprep.subr.mxu0 0.0
    %3874 = vmatpush1.msra.mxu0 0.0
    %3875 = vmatprep.subr.mxu0 0.0
    %3876 = vmatpush1.msra.mxu0 0.0
    %3877 = vmatprep.subr.mxu0 0.0
    %3878 = vmatpush1.msra.mxu0 0.0
    %3879 = vmatprep.subr.mxu0 0.0
    %3880 = vmatpush1.msra.mxu0 0.0
    %3881 = vmatprep.subr.mxu0 0.0
    %3882 = vmatpush1.msra.mxu0 0.0
    %3883 = vmatprep.subr.mxu0 0.0
    %3884 = vmatpush1.msra.mxu0 0.0
    %3885 = vmatprep.subr.mxu0 0.0
    %3886 = vmatpush1.msra.mxu0 0.0
    %3887 = vmatprep.subr.mxu0 0.0
    %3888 = vmatpush1.msra.mxu0 0.0
    %3889 = vmatprep.subr.mxu0 0.0
    %3890 = vmatpush1.msra.mxu0 0.0
    %3891 = vmatprep.subr.mxu0 0.0
    %3892 = vmatpush1.msra.mxu0 0.0
    %3893 = vmatprep.subr.mxu0 0.0
    %3894 = vmatpush1.msra.mxu0 0.0
    %3895 = vmatprep.subr.mxu0 0.0
    %3896 = vmatpush1.msra.mxu0 0.0
    %3897 = vmatprep.subr.mxu0 0.0
    %3898 = vmatpush1.msra.mxu0 0.0
    %3899 = vmatprep.subr.mxu0 0.0
    %3900 = vmatpush1.msra.mxu0 0.0
    %3901 = vmatprep.subr.mxu0 0.0
    %3902 = vmatpush1.msra.mxu0 0.0
    %3903 = vmatprep.subr.mxu0 0.0
    %3904 = vmatpush1.msra.mxu0 0.0
    %3905 = vmatprep.subr.mxu0 0.0
    %3906 = vmatpush1.msra.mxu0 0.0
    %3907 = vmatprep.subr.mxu0 0.0
    %3908 = vmatpush1.msra.mxu0 0.0
    %3909 = vmatprep.subr.mxu0 0.0
    %3910 = vmatpush1.msra.mxu0 0.0
    %3911 = vmatprep.subr.mxu0 0.0
    %3912 = vmatpush1.msra.mxu0 0.0
    %3913 = vmatprep.subr.mxu0 0.0
    %3914 = vmatpush1.msra.mxu0 0.0
    %3915 = vmatprep.subr.mxu0 0.0
    %3916 = vmatpush1.msra.mxu0 0.0
    %3917 = vmatprep.subr.mxu0 0.0
    %3918 = vmatpush1.msra.mxu0 0.0
    %3919 = vmatprep.subr.mxu0 0.0
    %3920 = vmatpush1.msra.mxu0 0.0
    %3921 = vmatprep.mubr.f32.mxu0 0.0
    %3922 = vmatmul.mubr.f32.gmra.mrb[0].mxu0 %v3852
    %v3923 = vpop.f32.mrb[0].mxu0
    %v3924 = vadd.f32 %v3850, %v3923
    %v3925 = vpop.f32.mrb[0].mxu0
    %3926 = vmatprep.mubr.f32.mxu0 0.0
    %3927 = vmatmul.mubr.f32.gmra.mrb[0].mxu0 %v3855
    %v3928 = vpop.f32.mrb[0].mxu0
    %v3929 = vadd.f32 %v3850, %v3928
    %v3930 = vpop.f32.mrb[0].mxu0
    %3931 = vdwg.mxu0
    %v3932 = vadd.f32 %v3924, %v252
    %v3933 = vadd.f32 %v3929, %v253
    %v3934 = vld [vmem:[#allocation2 + $0x278] sm:$0x3]
    %v3935 = vsel %vm166, %v3932, 0.0
    %3936 = vadd.xlane.f32.xlu0 %v3935
    %v3937 = vpop.xlane.xlu0 %3936
    %v3938 = vsel %vm166, %v3933, 0.0
    %3939 = vadd.xlane.f32.xlu0 %v3938
    %v3940 = vpop.xlane.xlu0 %3939
    %v3941 = vmul.f32 %v3932, %v3932
    %v3942 = vmul.f32 %v3933, %v3933
    %v3943 = vsel %vm166, %v3941, 0.0
    %3944 = vadd.xlane.f32.xlu0 %v3943
    %v3945 = vpop.xlane.xlu0 %3944
    %v3946 = vsel %vm166, %v3942, 0.0
    %3947 = vadd.xlane.f32.xlu0 %v3946
    %v3948 = vpop.xlane.xlu0 %3947
    %v3949 = vmul.f32 %v3937, 0.03125
    %v3950 = vmul.f32 %v3940, 0.03125
    %v3951 = vmul.f32 %v3945, 0.03125
    %v3952 = vmul.f32 %v3948, 0.03125
    %v3953 = vmul.f32 %v3949, %v3949
    %v3954 = vmul.f32 %v3950, %v3950
    %v3955 = vsub.f32 %v3951, %v3953
    %v3956 = vsub.f32 %v3952, %v3954
    %v3957 = vsub.f32 %v3932, %v3949
    %v3958 = vsub.f32 %v3933, %v3950
    %v3959 = vadd.f32 %v3955, 1e-05
    %v3960 = vadd.f32 %v3956, 1e-05
    %v3961 = vrsqrt.pop %v3959
    %v3962 = vrsqrt.pop %v3960
    %v3963 = vmul.f32 %v3957, %v3961
    %v3964 = vmul.f32 %v3958, %v3962
    %v3965 = vlaneseq
    %v3966 = vshrl.u32 %v3965, 7
    %v3967 = vsub.s32 0, %v3966
    %v3968 = vrot.slane %v3934, %v3967
    %v3969 = vmul.f32 %v3963, %v3968
    %v3970 = vmul.f32 %v3964, %v3968
    %v3971 = vlaneseq
    %v3972 = vshrl.u32 %v3971, 7
    %v3973 = vsub.s32 1, %v3972
    %v3974 = vrot.slane %v3934, %v3973
    %v3975 = vadd.f32 %v3969, %v3974
    %v3976 = vadd.f32 %v3970, %v3974
    %v3977 = vld [vmem:[#allocation2 + $0x280] sm:$0xff]
    %v3978 = vld [vmem:[#allocation2 + $0x288] sm:$0xff]
    %v3979 = vld [vmem:[#allocation2 + $0x290] sm:$0xff]
    %v3980 = vld [vmem:[#allocation2 + $0x298] sm:$0xff]
    %v3981 = vld [vmem:[#allocation2 + $0x2a0] sm:$0x1]
    %v3982 = vlaneseq
    %v3983 = vshrl.u32 %v3982, 7
    %v3984 = vsub.s32 0, %v3983
    %v3985 = vrot.slane %v3981, %v3984
    %v3987 = vsel %vm166, %v3975, 0
    %v3990 = vsel %vm166, %v3976, 0
    %3992 = vmatprep.subr.mxu0 0.0
    %3993 = vmatpush1.msra.mxu0 %v3977
    %3994 = vmatprep.subr.mxu0 0.0
    %3995 = vmatpush1.msra.mxu0 %v3978
    %3996 = vmatprep.subr.mxu0 0.0
    %3997 = vmatpush1.msra.mxu0 %v3979
    %3998 = vmatprep.subr.mxu0 0.0
    %3999 = vmatpush1.msra.mxu0 %v3980
    %4000 = vmatprep.subr.mxu0 0.0
    %4001 = vmatpush1.msra.mxu0 0.0
    %4002 = vmatprep.subr.mxu0 0.0
    %4003 = vmatpush1.msra.mxu0 0.0
    %4004 = vmatprep.subr.mxu0 0.0
    %4005 = vmatpush1.msra.mxu0 0.0
    %4006 = vmatprep.subr.mxu0 0.0
    %4007 = vmatpush1.msra.mxu0 0.0
    %4008 = vmatprep.subr.mxu0 0.0
    %4009 = vmatpush1.msra.mxu0 0.0
    %4010 = vmatprep.subr.mxu0 0.0
    %4011 = vmatpush1.msra.mxu0 0.0
    %4012 = vmatprep.subr.mxu0 0.0
    %4013 = vmatpush1.msra.mxu0 0.0
    %4014 = vmatprep.subr.mxu0 0.0
    %4015 = vmatpush1.msra.mxu0 0.0
    %4016 = vmatprep.subr.mxu0 0.0
    %4017 = vmatpush1.msra.mxu0 0.0
    %4018 = vmatprep.subr.mxu0 0.0
    %4019 = vmatpush1.msra.mxu0 0.0
    %4020 = vmatprep.subr.mxu0 0.0
    %4021 = vmatpush1.msra.mxu0 0.0
    %4022 = vmatprep.subr.mxu0 0.0
    %4023 = vmatpush1.msra.mxu0 0.0
    %4024 = vmatprep.subr.mxu0 0.0
    %4025 = vmatpush1.msra.mxu0 0.0
    %4026 = vmatprep.subr.mxu0 0.0
    %4027 = vmatpush1.msra.mxu0 0.0
    %4028 = vmatprep.subr.mxu0 0.0
    %4029 = vmatpush1.msra.mxu0 0.0
    %4030 = vmatprep.subr.mxu0 0.0
    %4031 = vmatpush1.msra.mxu0 0.0
    %4032 = vmatprep.subr.mxu0 0.0
    %4033 = vmatpush1.msra.mxu0 0.0
    %4034 = vmatprep.subr.mxu0 0.0
    %4035 = vmatpush1.msra.mxu0 0.0
    %4036 = vmatprep.subr.mxu0 0.0
    %4037 = vmatpush1.msra.mxu0 0.0
    %4038 = vmatprep.subr.mxu0 0.0
    %4039 = vmatpush1.msra.mxu0 0.0
    %4040 = vmatprep.subr.mxu0 0.0
    %4041 = vmatpush1.msra.mxu0 0.0
    %4042 = vmatprep.subr.mxu0 0.0
    %4043 = vmatpush1.msra.mxu0 0.0
    %4044 = vmatprep.subr.mxu0 0.0
    %4045 = vmatpush1.msra.mxu0 0.0
    %4046 = vmatprep.subr.mxu0 0.0
    %4047 = vmatpush1.msra.mxu0 0.0
    %4048 = vmatprep.subr.mxu0 0.0
    %4049 = vmatpush1.msra.mxu0 0.0
    %4050 = vmatprep.subr.mxu0 0.0
    %4051 = vmatpush1.msra.mxu0 0.0
    %4052 = vmatprep.subr.mxu0 0.0
    %4053 = vmatpush1.msra.mxu0 0.0
    %4054 = vmatprep.subr.mxu0 0.0
    %4055 = vmatpush1.msra.mxu0 0.0
    %4056 = vmatprep.mubr.f32.mxu0 0.0
    %4057 = vmatmul.mubr.f32.gmra.mrb[0].mxu0 %v3987
    %v4058 = vpop.f32.mrb[0].mxu0
    %v4059 = vadd.f32 %v3985, %v4058
    %v4060 = vpop.f32.mrb[0].mxu0
    %4061 = vmatprep.mubr.f32.mxu0 0.0
    %4062 = vmatmul.mubr.f32.gmra.mrb[0].mxu0 %v3990
    %v4063 = vpop.f32.mrb[0].mxu0
    %v4064 = vadd.f32 %v3985, %v4063
    %v4065 = vpop.f32.mrb[0].mxu0
    %4066 = vdwg.mxu0
    %v4067 = vld [vmem:[#allocation2 + $0x2a8] sm:$0xff]
    %v4068 = vld [vmem:[#allocation2 + $0x2b0] sm:$0xff]
    %v4069 = vld [vmem:[#allocation2 + $0x2b8] sm:$0xff]
    %v4070 = vld [vmem:[#allocation2 + $0x2c0] sm:$0xff]
    %v4071 = vld [vmem:[#allocation2 + $0x2c8] sm:$0x1]
    %v4072 = vlaneseq
    %v4073 = vshrl.u32 %v4072, 7
    %v4074 = vsub.s32 0, %v4073
    %v4075 = vrot.slane %v4071, %v4074
    %v4077 = vsel %vm166, %v2906, 0
    %v4080 = vsel %vm166, %v2907, 0
    %4082 = vmatprep.subr.mxu0 0.0
    %4083 = vmatpush1.msra.mxu0 %v4067
    %4084 = vmatprep.subr.mxu0 0.0
    %4085 = vmatpush1.msra.mxu0 %v4068
    %4086 = vmatprep.subr.mxu0 0.0
    %4087 = vmatpush1.msra.mxu0 %v4069
    %4088 = vmatprep.subr.mxu0 0.0
    %4089 = vmatpush1.msra.mxu0 %v4070
    %4090 = vmatprep.subr.mxu0 0.0
    %4091 = vmatpush1.msra.mxu0 0.0
    %4092 = vmatprep.subr.mxu0 0.0
    %4093 = vmatpush1.msra.mxu0 0.0
    %4094 = vmatprep.subr.mxu0 0.0
    %4095 = vmatpush1.msra.mxu0 0.0
    %4096 = vmatprep.subr.mxu0 0.0
    %4097 = vmatpush1.msra.mxu0 0.0
    %4098 = vmatprep.subr.mxu0 0.0
    %4099 = vmatpush1.msra.mxu0 0.0
    %4100 = vmatprep.subr.mxu0 0.0
    %4101 = vmatpush1.msra.mxu0 0.0
    %4102 = vmatprep.subr.mxu0 0.0
    %4103 = vmatpush1.msra.mxu0 0.0
    %4104 = vmatprep.subr.mxu0 0.0
    %4105 = vmatpush1.msra.mxu0 0.0
    %4106 = vmatprep.subr.mxu0 0.0
    %4107 = vmatpush1.msra.mxu0 0.0
    %4108 = vmatprep.subr.mxu0 0.0
    %4109 = vmatpush1.msra.mxu0 0.0
    %4110 = vmatprep.subr.mxu0 0.0
    %4111 = vmatpush1.msra.mxu0 0.0
    %4112 = vmatprep.subr.mxu0 0.0
    %4113 = vmatpush1.msra.mxu0 0.0
    %4114 = vmatprep.subr.mxu0 0.0
    %4115 = vmatpush1.msra.mxu0 0.0
    %4116 = vmatprep.subr.mxu0 0.0
    %4117 = vmatpush1.msra.mxu0 0.0
    %4118 = vmatprep.subr.mxu0 0.0
    %4119 = vmatpush1.msra.mxu0 0.0
    %4120 = vmatprep.subr.mxu0 0.0
    %4121 = vmatpush1.msra.mxu0 0.0
    %4122 = vmatprep.subr.mxu0 0.0
    %4123 = vmatpush1.msra.mxu0 0.0
    %4124 = vmatprep.subr.mxu0 0.0
    %4125 = vmatpush1.msra.mxu0 0.0
    %4126 = vmatprep.subr.mxu0 0.0
    %4127 = vmatpush1.msra.mxu0 0.0
    %4128 = vmatprep.subr.mxu0 0.0
    %4129 = vmatpush1.msra.mxu0 0.0
    %4130 = vmatprep.subr.mxu0 0.0
    %4131 = vmatpush1.msra.mxu0 0.0
    %4132 = vmatprep.subr.mxu0 0.0
    %4133 = vmatpush1.msra.mxu0 0.0
    %4134 = vmatprep.subr.mxu0 0.0
    %4135 = vmatpush1.msra.mxu0 0.0
    %4136 = vmatprep.subr.mxu0 0.0
    %4137 = vmatpush1.msra.mxu0 0.0
    %4138 = vmatprep.subr.mxu0 0.0
    %4139 = vmatpush1.msra.mxu0 0.0
    %4140 = vmatprep.subr.mxu0 0.0
    %4141 = vmatpush1.msra.mxu0 0.0
    %4142 = vmatprep.subr.mxu0 0.0
    %4143 = vmatpush1.msra.mxu0 0.0
    %4144 = vmatprep.subr.mxu0 0.0
    %4145 = vmatpush1.msra.mxu0 0.0
    %4146 = vmatprep.mubr.f32.mxu0 0.0
    %4147 = vmatmul.mubr.f32.gmra.mrb[0].mxu0 %v4077
    %v4148 = vpop.f32.mrb[0].mxu0
    %v4149 = vadd.f32 %v4075, %v4148
    %v4150 = vpop.f32.mrb[0].mxu0
    %4151 = vmatprep.mubr.f32.mxu0 0.0
    %4152 = vmatmul.mubr.f32.gmra.mrb[0].mxu0 %v4080
    %v4153 = vpop.f32.mrb[0].mxu0
    %v4154 = vadd.f32 %v4075, %v4153
    %v4155 = vpop.f32.mrb[0].mxu0
    %4156 = vdwg.mxu0
    %v4157 = vld [vmem:[#allocation2 + $0x2d0] sm:$0xff]
    %v4158 = vld [vmem:[#allocation2 + $0x2d8] sm:$0xff]
    %v4159 = vld [vmem:[#allocation2 + $0x2e0] sm:$0xff]
    %v4160 = vld [vmem:[#allocation2 + $0x2e8] sm:$0xff]
    %v4161 = vld [vmem:[#allocation2 + $0x2f0] sm:$0x1]
    %v4163 = vsel %vm374, %v4059, 0
    %v4166 = vsel %vm374, %v4064, 0
    %v4169 = vsel %vm374, %v4149, 0
    %v4172 = vsel %vm374, %v4154, 0
    %4174 = vmatprep.subr.mxu0 0.0
    %4175 = vmatpush1.xpose.msra.mxu0 %v4169
    %4176 = vmatprep.subr.mxu0 0.0
    %4177 = vmatpush1.xpose.msra.mxu0 %v4172
    %4178 = vmatprep.subr.mxu0 0.0
    %4179 = vmatpush1.xpose.msra.mxu0 0.0
    %4180 = vmatprep.subr.mxu0 0.0
    %4181 = vmatpush1.xpose.msra.mxu0 0.0
    %4182 = vmatprep.subr.mxu0 0.0
    %4183 = vmatpush1.xpose.msra.mxu0 0.0
    %4184 = vmatprep.subr.mxu0 0.0
    %4185 = vmatpush1.xpose.msra.mxu0 0.0
    %4186 = vmatprep.subr.mxu0 0.0
    %4187 = vmatpush1.xpose.msra.mxu0 0.0
    %4188 = vmatprep.subr.mxu0 0.0
    %4189 = vmatpush1.xpose.msra.mxu0 0.0
    %4190 = vmatprep.subr.mxu0 0.0
    %4191 = vmatpush1.xpose.msra.mxu0 0.0
    %4192 = vmatprep.subr.mxu0 0.0
    %4193 = vmatpush1.xpose.msra.mxu0 0.0
    %4194 = vmatprep.subr.mxu0 0.0
    %4195 = vmatpush1.xpose.msra.mxu0 0.0
    %4196 = vmatprep.subr.mxu0 0.0
    %4197 = vmatpush1.xpose.msra.mxu0 0.0
    %4198 = vmatprep.subr.mxu0 0.0
    %4199 = vmatpush1.xpose.msra.mxu0 0.0
    %4200 = vmatprep.subr.mxu0 0.0
    %4201 = vmatpush1.xpose.msra.mxu0 0.0
    %4202 = vmatprep.subr.mxu0 0.0
    %4203 = vmatpush1.xpose.msra.mxu0 0.0
    %4204 = vmatprep.subr.mxu0 0.0
    %4205 = vmatpush1.xpose.msra.mxu0 0.0
    %4206 = vmatprep.subr.mxu0 0.0
    %4207 = vmatpush1.xpose.msra.mxu0 0.0
    %4208 = vmatprep.subr.mxu0 0.0
    %4209 = vmatpush1.xpose.msra.mxu0 0.0
    %4210 = vmatprep.subr.mxu0 0.0
    %4211 = vmatpush1.xpose.msra.mxu0 0.0
    %4212 = vmatprep.subr.mxu0 0.0
    %4213 = vmatpush1.xpose.msra.mxu0 0.0
    %4214 = vmatprep.subr.mxu0 0.0
    %4215 = vmatpush1.xpose.msra.mxu0 0.0
    %4216 = vmatprep.subr.mxu0 0.0
    %4217 = vmatpush1.xpose.msra.mxu0 0.0
    %4218 = vmatprep.subr.mxu0 0.0
    %4219 = vmatpush1.xpose.msra.mxu0 0.0
    %4220 = vmatprep.subr.mxu0 0.0
    %4221 = vmatpush1.xpose.msra.mxu0 0.0
    %4222 = vmatprep.subr.mxu0 0.0
    %4223 = vmatpush1.xpose.msra.mxu0 0.0
    %4224 = vmatprep.subr.mxu0 0.0
    %4225 = vmatpush1.xpose.msra.mxu0 0.0
    %4226 = vmatprep.subr.mxu0 0.0
    %4227 = vmatpush1.xpose.msra.mxu0 0.0
    %4228 = vmatprep.subr.mxu0 0.0
    %4229 = vmatpush1.xpose.msra.mxu0 0.0
    %4230 = vmatprep.subr.mxu0 0.0
    %4231 = vmatpush1.xpose.msra.mxu0 0.0
    %4232 = vmatprep.subr.mxu0 0.0
    %4233 = vmatpush1.xpose.msra.mxu0 0.0
    %4234 = vmatprep.subr.mxu0 0.0
    %4235 = vmatpush1.xpose.msra.mxu0 0.0
    %4236 = vmatprep.subr.mxu0 0.0
    %4237 = vmatpush1.xpose.msra.mxu0 0.0
    %4238 = vmatprep.mubr.f32.mxu0 0.0
    %4239 = vmatmul.mubr.f32.gmra.mrb[0].mxu0 %v4163
    %v4240 = vpop.f32.mrb[0].mxu0
    %v4241 = vadd.f32 0.0, %v4240
    %v4242 = vpop.f32.mrb[0].mxu0
    %4243 = vmatprep.mubr.f32.mxu0 0.0
    %4244 = vmatmul.mubr.f32.gmra.mrb[0].mxu0 %v4166
    %v4245 = vpop.f32.mrb[0].mxu0
    %v4246 = vadd.f32 0.0, %v4245
    %v4247 = vpop.f32.mrb[0].mxu0
    %4248 = vdwg.mxu0
    %v4249 = vmul.f32 %v4241, 0.35355338
    %v4250 = vmul.f32 %v4246, 0.35355338
    %v4251 = vadd.f32 %v4249, %v262
    %v4252 = vadd.f32 %v4250, %v263
    %v4253 = vsel %vm462, %v4251, -inf
    %4254 = vmax.xlane.f32.xlu0 %v4253
    %v4255 = vpop.xlane.xlu0 %4254
    %v4256 = vsel %vm462, %v4252, -inf
    %4257 = vmax.xlane.f32.xlu0 %v4256
    %v4258 = vpop.xlane.xlu0 %4257
    %v4259 = vsub.f32 %v4251, %v4255
    %v4260 = vsub.f32 %v4252, %v4258
    %v4261 = vmul.f32 %v4259, 1.442695
    %v4262 = vpow.pop %v4261
    %v4263 = vmul.f32 %v4260, 1.442695
    %v4264 = vpow.pop %v4263
    %v4265 = vsel %vm462, %v4262, 0.0
    %4266 = vadd.xlane.f32.xlu0 %v4265
    %v4267 = vpop.xlane.xlu0 %4266
    %v4268 = vsel %vm462, %v4264, 0.0
    %4269 = vadd.xlane.f32.xlu0 %v4268
    %v4270 = vpop.xlane.xlu0 %4269
    %v4271 = vrcp.pop %v4267
    %v4272 = vrcp.pop %v4270
    %v4273 = vmul.f32 %v4262, %v4271
    %v4274 = vmul.f32 %v4264, %v4272
    %4275 = vrot.lane.b32.xlu0 %v4149, 96
    %v4276 = vpop.permute.xlu0 %4275
    %4277 = vrot.lane.b32.xlu0 %v4154, 96
    %v4278 = vpop.permute.xlu0 %4277
    %v4282 = vsel %vm462, %v4273, 0
    %v4285 = vsel %vm462, %v4274, 0
    %4287 = vmatprep.subr.mxu0 0.0
    %4288 = vmatpush1.msra.mxu0 %v4276
    %4289 = vmatprep.subr.mxu0 0.0
    %4290 = vmatpush1.msra.mxu0 %v4278
    %4291 = vmatprep.subr.mxu0 0.0
    %4292 = vmatpush1.msra.mxu0 0.0
    %4293 = vmatprep.subr.mxu0 0.0
    %4294 = vmatpush1.msra.mxu0 0.0
    %4295 = vmatprep.subr.mxu0 0.0
    %4296 = vmatpush1.msra.mxu0 0.0
    %4297 = vmatprep.subr.mxu0 0.0
    %4298 = vmatpush1.msra.mxu0 0.0
    %4299 = vmatprep.subr.mxu0 0.0
    %4300 = vmatpush1.msra.mxu0 0.0
    %4301 = vmatprep.subr.mxu0 0.0
    %4302 = vmatpush1.msra.mxu0 0.0
    %4303 = vmatprep.subr.mxu0 0.0
    %4304 = vmatpush1.msra.mxu0 0.0
    %4305 = vmatprep.subr.mxu0 0.0
    %4306 = vmatpush1.msra.mxu0 0.0
    %4307 = vmatprep.subr.mxu0 0.0
    %4308 = vmatpush1.msra.mxu0 0.0
    %4309 = vmatprep.subr.mxu0 0.0
    %4310 = vmatpush1.msra.mxu0 0.0
    %4311 = vmatprep.subr.mxu0 0.0
    %4312 = vmatpush1.msra.mxu0 0.0
    %4313 = vmatprep.subr.mxu0 0.0
    %4314 = vmatpush1.msra.mxu0 0.0
    %4315 = vmatprep.subr.mxu0 0.0
    %4316 = vmatpush1.msra.mxu0 0.0
    %4317 = vmatprep.subr.mxu0 0.0
    %4318 = vmatpush1.msra.mxu0 0.0
    %4319 = vmatprep.subr.mxu0 0.0
    %4320 = vmatpush1.msra.mxu0 0.0
    %4321 = vmatprep.subr.mxu0 0.0
    %4322 = vmatpush1.msra.mxu0 0.0
    %4323 = vmatprep.subr.mxu0 0.0
    %4324 = vmatpush1.msra.mxu0 0.0
    %4325 = vmatprep.subr.mxu0 0.0
    %4326 = vmatpush1.msra.mxu0 0.0
    %4327 = vmatprep.subr.mxu0 0.0
    %4328 = vmatpush1.msra.mxu0 0.0
    %4329 = vmatprep.subr.mxu0 0.0
    %4330 = vmatpush1.msra.mxu0 0.0
    %4331 = vmatprep.subr.mxu0 0.0
    %4332 = vmatpush1.msra.mxu0 0.0
    %4333 = vmatprep.subr.mxu0 0.0
    %4334 = vmatpush1.msra.mxu0 0.0
    %4335 = vmatprep.subr.mxu0 0.0
    %4336 = vmatpush1.msra.mxu0 0.0
    %4337 = vmatprep.subr.mxu0 0.0
    %4338 = vmatpush1.msra.mxu0 0.0
    %4339 = vmatprep.subr.mxu0 0.0
    %4340 = vmatpush1.msra.mxu0 0.0
    %4341 = vmatprep.subr.mxu0 0.0
    %4342 = vmatpush1.msra.mxu0 0.0
    %4343 = vmatprep.subr.mxu0 0.0
    %4344 = vmatpush1.msra.mxu0 0.0
    %4345 = vmatprep.subr.mxu0 0.0
    %4346 = vmatpush1.msra.mxu0 0.0
    %4347 = vmatprep.subr.mxu0 0.0
    %4348 = vmatpush1.msra.mxu0 0.0
    %4349 = vmatprep.subr.mxu0 0.0
    %4350 = vmatpush1.msra.mxu0 0.0
    %4351 = vmatprep.mubr.f32.mxu0 0.0
    %4352 = vmatmul.mubr.f32.gmra.mrb[0].mxu0 %v4282
    %v4353 = vpop.f32.mrb[0].mxu0
    %v4354 = vadd.f32 0.0, %v4353
    %v4355 = vpop.f32.mrb[0].mxu0
    %4356 = vmatprep.mubr.f32.mxu0 0.0
    %4357 = vmatmul.mubr.f32.gmra.mrb[0].mxu0 %v4285
    %v4358 = vpop.f32.mrb[0].mxu0
    %v4359 = vadd.f32 0.0, %v4358
    %v4360 = vpop.f32.mrb[0].mxu0
    %4361 = vdwg.mxu0
    %4362 = vrot.lane.b32.xlu0 %v4059, 120
    %v4363 = vpop.permute.xlu0 %4362
    %4364 = vrot.lane.b32.xlu0 %v4064, 120
    %v4365 = vpop.permute.xlu0 %4364
    %4366 = vrot.lane.b32.xlu0 %v4149, 120
    %v4367 = vpop.permute.xlu0 %4366
    %4368 = vrot.lane.b32.xlu0 %v4154, 120
    %v4369 = vpop.permute.xlu0 %4368
    %v4370 = vsel %vm374, %v4363, 0
    %v4372 = vsel %vm374, %v4365, 0
    %v4374 = vsel %vm374, %v4367, 0
    %v4376 = vsel %vm374, %v4369, 0
    %4378 = vmatprep.subr.mxu0 0.0
    %4379 = vmatpush1.xpose.msra.mxu0 %v4374
    %4380 = vmatprep.subr.mxu0 0.0
    %4381 = vmatpush1.xpose.msra.mxu0 %v4376
    %4382 = vmatprep.subr.mxu0 0.0
    %4383 = vmatpush1.xpose.msra.mxu0 0.0
    %4384 = vmatprep.subr.mxu0 0.0
    %4385 = vmatpush1.xpose.msra.mxu0 0.0
    %4386 = vmatprep.subr.mxu0 0.0
    %4387 = vmatpush1.xpose.msra.mxu0 0.0
    %4388 = vmatprep.subr.mxu0 0.0
    %4389 = vmatpush1.xpose.msra.mxu0 0.0
    %4390 = vmatprep.subr.mxu0 0.0
    %4391 = vmatpush1.xpose.msra.mxu0 0.0
    %4392 = vmatprep.subr.mxu0 0.0
    %4393 = vmatpush1.xpose.msra.mxu0 0.0
    %4394 = vmatprep.subr.mxu0 0.0
    %4395 = vmatpush1.xpose.msra.mxu0 0.0
    %4396 = vmatprep.subr.mxu0 0.0
    %4397 = vmatpush1.xpose.msra.mxu0 0.0
    %4398 = vmatprep.subr.mxu0 0.0
    %4399 = vmatpush1.xpose.msra.mxu0 0.0
    %4400 = vmatprep.subr.mxu0 0.0
    %4401 = vmatpush1.xpose.msra.mxu0 0.0
    %4402 = vmatprep.subr.mxu0 0.0
    %4403 = vmatpush1.xpose.msra.mxu0 0.0
    %4404 = vmatprep.subr.mxu0 0.0
    %4405 = vmatpush1.xpose.msra.mxu0 0.0
    %4406 = vmatprep.subr.mxu0 0.0
    %4407 = vmatpush1.xpose.msra.mxu0 0.0
    %4408 = vmatprep.subr.mxu0 0.0
    %4409 = vmatpush1.xpose.msra.mxu0 0.0
    %4410 = vmatprep.subr.mxu0 0.0
    %4411 = vmatpush1.xpose.msra.mxu0 0.0
    %4412 = vmatprep.subr.mxu0 0.0
    %4413 = vmatpush1.xpose.msra.mxu0 0.0
    %4414 = vmatprep.subr.mxu0 0.0
    %4415 = vmatpush1.xpose.msra.mxu0 0.0
    %4416 = vmatprep.subr.mxu0 0.0
    %4417 = vmatpush1.xpose.msra.mxu0 0.0
    %4418 = vmatprep.subr.mxu0 0.0
    %4419 = vmatpush1.xpose.msra.mxu0 0.0
    %4420 = vmatprep.subr.mxu0 0.0
    %4421 = vmatpush1.xpose.msra.mxu0 0.0
    %4422 = vmatprep.subr.mxu0 0.0
    %4423 = vmatpush1.xpose.msra.mxu0 0.0
    %4424 = vmatprep.subr.mxu0 0.0
    %4425 = vmatpush1.xpose.msra.mxu0 0.0
    %4426 = vmatprep.subr.mxu0 0.0
    %4427 = vmatpush1.xpose.msra.mxu0 0.0
    %4428 = vmatprep.subr.mxu0 0.0
    %4429 = vmatpush1.xpose.msra.mxu0 0.0
    %4430 = vmatprep.subr.mxu0 0.0
    %4431 = vmatpush1.xpose.msra.mxu0 0.0
    %4432 = vmatprep.subr.mxu0 0.0
    %4433 = vmatpush1.xpose.msra.mxu0 0.0
    %4434 = vmatprep.subr.mxu0 0.0
    %4435 = vmatpush1.xpose.msra.mxu0 0.0
    %4436 = vmatprep.subr.mxu0 0.0
    %4437 = vmatpush1.xpose.msra.mxu0 0.0
    %4438 = vmatprep.subr.mxu0 0.0
    %4439 = vmatpush1.xpose.msra.mxu0 0.0
    %4440 = vmatprep.subr.mxu0 0.0
    %4441 = vmatpush1.xpose.msra.mxu0 0.0
    %4442 = vmatprep.mubr.f32.mxu0 0.0
    %4443 = vmatmul.mubr.f32.gmra.mrb[0].mxu0 %v4370
    %v4444 = vpop.f32.mrb[0].mxu0
    %v4445 = vadd.f32 0.0, %v4444
    %v4446 = vpop.f32.mrb[0].mxu0
    %4447 = vmatprep.mubr.f32.mxu0 0.0
    %4448 = vmatmul.mubr.f32.gmra.mrb[0].mxu0 %v4372
    %v4449 = vpop.f32.mrb[0].mxu0
    %v4450 = vadd.f32 0.0, %v4449
    %v4451 = vpop.f32.mrb[0].mxu0
    %4452 = vdwg.mxu0
    %v4453 = vmul.f32 %v4445, 0.35355338
    %v4454 = vmul.f32 %v4450, 0.35355338
    %v4455 = vadd.f32 %v4453, %v262
    %v4456 = vadd.f32 %v4454, %v263
    %v4457 = vsel %vm462, %v4455, -inf
    %4458 = vmax.xlane.f32.xlu0 %v4457
    %v4459 = vpop.xlane.xlu0 %4458
    %v4460 = vsel %vm462, %v4456, -inf
    %4461 = vmax.xlane.f32.xlu0 %v4460
    %v4462 = vpop.xlane.xlu0 %4461
    %v4463 = vsub.f32 %v4455, %v4459
    %v4464 = vsub.f32 %v4456, %v4462
    %v4465 = vmul.f32 %v4463, 1.442695
    %v4466 = vpow.pop %v4465
    %v4467 = vmul.f32 %v4464, 1.442695
    %v4468 = vpow.pop %v4467
    %v4469 = vsel %vm462, %v4466, 0.0
    %4470 = vadd.xlane.f32.xlu0 %v4469
    %v4471 = vpop.xlane.xlu0 %4470
    %v4472 = vsel %vm462, %v4468, 0.0
    %4473 = vadd.xlane.f32.xlu0 %v4472
    %v4474 = vpop.xlane.xlu0 %4473
    %v4475 = vrcp.pop %v4471
    %v4476 = vrcp.pop %v4474
    %v4477 = vmul.f32 %v4466, %v4475
    %v4478 = vmul.f32 %v4468, %v4476
    %4479 = vrot.lane.b32.xlu0 %v4149, 88
    %v4480 = vpop.permute.xlu0 %4479
    %4481 = vrot.lane.b32.xlu0 %v4154, 88
    %v4482 = vpop.permute.xlu0 %4481
    %v4486 = vsel %vm462, %v4477, 0
    %v4489 = vsel %vm462, %v4478, 0
    %4491 = vmatprep.subr.mxu0 0.0
    %4492 = vmatpush1.msra.mxu0 %v4480
    %4493 = vmatprep.subr.mxu0 0.0
    %4494 = vmatpush1.msra.mxu0 %v4482
    %4495 = vmatprep.subr.mxu0 0.0
    %4496 = vmatpush1.msra.mxu0 0.0
    %4497 = vmatprep.subr.mxu0 0.0
    %4498 = vmatpush1.msra.mxu0 0.0
    %4499 = vmatprep.subr.mxu0 0.0
    %4500 = vmatpush1.msra.mxu0 0.0
    %4501 = vmatprep.subr.mxu0 0.0
    %4502 = vmatpush1.msra.mxu0 0.0
    %4503 = vmatprep.subr.mxu0 0.0
    %4504 = vmatpush1.msra.mxu0 0.0
    %4505 = vmatprep.subr.mxu0 0.0
    %4506 = vmatpush1.msra.mxu0 0.0
    %4507 = vmatprep.subr.mxu0 0.0
    %4508 = vmatpush1.msra.mxu0 0.0
    %4509 = vmatprep.subr.mxu0 0.0
    %4510 = vmatpush1.msra.mxu0 0.0
    %4511 = vmatprep.subr.mxu0 0.0
    %4512 = vmatpush1.msra.mxu0 0.0
    %4513 = vmatprep.subr.mxu0 0.0
    %4514 = vmatpush1.msra.mxu0 0.0
    %4515 = vmatprep.subr.mxu0 0.0
    %4516 = vmatpush1.msra.mxu0 0.0
    %4517 = vmatprep.subr.mxu0 0.0
    %4518 = vmatpush1.msra.mxu0 0.0
    %4519 = vmatprep.subr.mxu0 0.0
    %4520 = vmatpush1.msra.mxu0 0.0
    %4521 = vmatprep.subr.mxu0 0.0
    %4522 = vmatpush1.msra.mxu0 0.0
    %4523 = vmatprep.subr.mxu0 0.0
    %4524 = vmatpush1.msra.mxu0 0.0
    %4525 = vmatprep.subr.mxu0 0.0
    %4526 = vmatpush1.msra.mxu0 0.0
    %4527 = vmatprep.subr.mxu0 0.0
    %4528 = vmatpush1.msra.mxu0 0.0
    %4529 = vmatprep.subr.mxu0 0.0
    %4530 = vmatpush1.msra.mxu0 0.0
    %4531 = vmatprep.subr.mxu0 0.0
    %4532 = vmatpush1.msra.mxu0 0.0
    %4533 = vmatprep.subr.mxu0 0.0
    %4534 = vmatpush1.msra.mxu0 0.0
    %4535 = vmatprep.subr.mxu0 0.0
    %4536 = vmatpush1.msra.mxu0 0.0
    %4537 = vmatprep.subr.mxu0 0.0
    %4538 = vmatpush1.msra.mxu0 0.0
    %4539 = vmatprep.subr.mxu0 0.0
    %4540 = vmatpush1.msra.mxu0 0.0
    %4541 = vmatprep.subr.mxu0 0.0
    %4542 = vmatpush1.msra.mxu0 0.0
    %4543 = vmatprep.subr.mxu0 0.0
    %4544 = vmatpush1.msra.mxu0 0.0
    %4545 = vmatprep.subr.mxu0 0.0
    %4546 = vmatpush1.msra.mxu0 0.0
    %4547 = vmatprep.subr.mxu0 0.0
    %4548 = vmatpush1.msra.mxu0 0.0
    %4549 = vmatprep.subr.mxu0 0.0
    %4550 = vmatpush1.msra.mxu0 0.0
    %4551 = vmatprep.subr.mxu0 0.0
    %4552 = vmatpush1.msra.mxu0 0.0
    %4553 = vmatprep.subr.mxu0 0.0
    %4554 = vmatpush1.msra.mxu0 0.0
    %4555 = vmatprep.mubr.f32.mxu0 0.0
    %4556 = vmatmul.mubr.f32.gmra.mrb[0].mxu0 %v4486
    %v4557 = vpop.f32.mrb[0].mxu0
    %v4558 = vadd.f32 0.0, %v4557
    %v4559 = vpop.f32.mrb[0].mxu0
    %4560 = vmatprep.mubr.f32.mxu0 0.0
    %4561 = vmatmul.mubr.f32.gmra.mrb[0].mxu0 %v4489
    %v4562 = vpop.f32.mrb[0].mxu0
    %v4563 = vadd.f32 0.0, %v4562
    %v4564 = vpop.f32.mrb[0].mxu0
    %4565 = vdwg.mxu0
    %4566 = vrot.lane.b32.xlu0 %v4059, 112
    %v4567 = vpop.permute.xlu0 %4566
    %4568 = vrot.lane.b32.xlu0 %v4064, 112
    %v4569 = vpop.permute.xlu0 %4568
    %4570 = vrot.lane.b32.xlu0 %v4149, 112
    %v4571 = vpop.permute.xlu0 %4570
    %4572 = vrot.lane.b32.xlu0 %v4154, 112
    %v4573 = vpop.permute.xlu0 %4572
    %v4574 = vsel %vm374, %v4567, 0
    %v4576 = vsel %vm374, %v4569, 0
    %v4578 = vsel %vm374, %v4571, 0
    %v4580 = vsel %vm374, %v4573, 0
    %4582 = vmatprep.subr.mxu0 0.0
    %4583 = vmatpush1.xpose.msra.mxu0 %v4578
    %4584 = vmatprep.subr.mxu0 0.0
    %4585 = vmatpush1.xpose.msra.mxu0 %v4580
    %4586 = vmatprep.subr.mxu0 0.0
    %4587 = vmatpush1.xpose.msra.mxu0 0.0
    %4588 = vmatprep.subr.mxu0 0.0
    %4589 = vmatpush1.xpose.msra.mxu0 0.0
    %4590 = vmatprep.subr.mxu0 0.0
    %4591 = vmatpush1.xpose.msra.mxu0 0.0
    %4592 = vmatprep.subr.mxu0 0.0
    %4593 = vmatpush1.xpose.msra.mxu0 0.0
    %4594 = vmatprep.subr.mxu0 0.0
    %4595 = vmatpush1.xpose.msra.mxu0 0.0
    %4596 = vmatprep.subr.mxu0 0.0
    %4597 = vmatpush1.xpose.msra.mxu0 0.0
    %4598 = vmatprep.subr.mxu0 0.0
    %4599 = vmatpush1.xpose.msra.mxu0 0.0
    %4600 = vmatprep.subr.mxu0 0.0
    %4601 = vmatpush1.xpose.msra.mxu0 0.0
    %4602 = vmatprep.subr.mxu0 0.0
    %4603 = vmatpush1.xpose.msra.mxu0 0.0
    %4604 = vmatprep.subr.mxu0 0.0
    %4605 = vmatpush1.xpose.msra.mxu0 0.0
    %4606 = vmatprep.subr.mxu0 0.0
    %4607 = vmatpush1.xpose.msra.mxu0 0.0
    %4608 = vmatprep.subr.mxu0 0.0
    %4609 = vmatpush1.xpose.msra.mxu0 0.0
    %4610 = vmatprep.subr.mxu0 0.0
    %4611 = vmatpush1.xpose.msra.mxu0 0.0
    %4612 = vmatprep.subr.mxu0 0.0
    %4613 = vmatpush1.xpose.msra.mxu0 0.0
    %4614 = vmatprep.subr.mxu0 0.0
    %4615 = vmatpush1.xpose.msra.mxu0 0.0
    %4616 = vmatprep.subr.mxu0 0.0
    %4617 = vmatpush1.xpose.msra.mxu0 0.0
    %4618 = vmatprep.subr.mxu0 0.0
    %4619 = vmatpush1.xpose.msra.mxu0 0.0
    %4620 = vmatprep.subr.mxu0 0.0
    %4621 = vmatpush1.xpose.msra.mxu0 0.0
    %4622 = vmatprep.subr.mxu0 0.0
    %4623 = vmatpush1.xpose.msra.mxu0 0.0
    %4624 = vmatprep.subr.mxu0 0.0
    %4625 = vmatpush1.xpose.msra.mxu0 0.0
    %4626 = vmatprep.subr.mxu0 0.0
    %4627 = vmatpush1.xpose.msra.mxu0 0.0
    %4628 = vmatprep.subr.mxu0 0.0
    %4629 = vmatpush1.xpose.msra.mxu0 0.0
    %4630 = vmatprep.subr.mxu0 0.0
    %4631 = vmatpush1.xpose.msra.mxu0 0.0
    %4632 = vmatprep.subr.mxu0 0.0
    %4633 = vmatpush1.xpose.msra.mxu0 0.0
    %4634 = vmatprep.subr.mxu0 0.0
    %4635 = vmatpush1.xpose.msra.mxu0 0.0
    %4636 = vmatprep.subr.mxu0 0.0
    %4637 = vmatpush1.xpose.msra.mxu0 0.0
    %4638 = vmatprep.subr.mxu0 0.0
    %4639 = vmatpush1.xpose.msra.mxu0 0.0
    %4640 = vmatprep.subr.mxu0 0.0
    %4641 = vmatpush1.xpose.msra.mxu0 0.0
    %4642 = vmatprep.subr.mxu0 0.0
    %4643 = vmatpush1.xpose.msra.mxu0 0.0
    %4644 = vmatprep.subr.mxu0 0.0
    %4645 = vmatpush1.xpose.msra.mxu0 0.0
    %4646 = vmatprep.mubr.f32.mxu0 0.0
    %4647 = vmatmul.mubr.f32.gmra.mrb[0].mxu0 %v4574
    %v4648 = vpop.f32.mrb[0].mxu0
    %v4649 = vadd.f32 0.0, %v4648
    %v4650 = vpop.f32.mrb[0].mxu0
    %4651 = vmatprep.mubr.f32.mxu0 0.0
    %4652 = vmatmul.mubr.f32.gmra.mrb[0].mxu0 %v4576
    %v4653 = vpop.f32.mrb[0].mxu0
    %v4654 = vadd.f32 0.0, %v4653
    %v4655 = vpop.f32.mrb[0].mxu0
    %4656 = vdwg.mxu0
    %v4657 = vmul.f32 %v4649, 0.35355338
    %v4658 = vmul.f32 %v4654, 0.35355338
    %v4659 = vadd.f32 %v4657, %v262
    %v4660 = vadd.f32 %v4658, %v263
    %v4661 = vsel %vm462, %v4659, -inf
    %4662 = vmax.xlane.f32.xlu0 %v4661
    %v4663 = vpop.xlane.xlu0 %4662
    %v4664 = vsel %vm462, %v4660, -inf
    %4665 = vmax.xlane.f32.xlu0 %v4664
    %v4666 = vpop.xlane.xlu0 %4665
    %v4667 = vsub.f32 %v4659, %v4663
    %v4668 = vsub.f32 %v4660, %v4666
    %v4669 = vmul.f32 %v4667, 1.442695
    %v4670 = vpow.pop %v4669
    %v4671 = vmul.f32 %v4668, 1.442695
    %v4672 = vpow.pop %v4671
    %v4673 = vsel %vm462, %v4670, 0.0
    %4674 = vadd.xlane.f32.xlu0 %v4673
    %v4675 = vpop.xlane.xlu0 %4674
    %v4676 = vsel %vm462, %v4672, 0.0
    %4677 = vadd.xlane.f32.xlu0 %v4676
    %v4678 = vpop.xlane.xlu0 %4677
    %v4679 = vrcp.pop %v4675
    %v4680 = vrcp.pop %v4678
    %v4681 = vmul.f32 %v4670, %v4679
    %v4682 = vmul.f32 %v4672, %v4680
    %4683 = vrot.lane.b32.xlu0 %v4149, 80
    %v4684 = vpop.permute.xlu0 %4683
    %4685 = vrot.lane.b32.xlu0 %v4154, 80
    %v4686 = vpop.permute.xlu0 %4685
    %v4690 = vsel %vm462, %v4681, 0
    %v4693 = vsel %vm462, %v4682, 0
    %4695 = vmatprep.subr.mxu0 0.0
    %4696 = vmatpush1.msra.mxu0 %v4684
    %4697 = vmatprep.subr.mxu0 0.0
    %4698 = vmatpush1.msra.mxu0 %v4686
    %4699 = vmatprep.subr.mxu0 0.0
    %4700 = vmatpush1.msra.mxu0 0.0
    %4701 = vmatprep.subr.mxu0 0.0
    %4702 = vmatpush1.msra.mxu0 0.0
    %4703 = vmatprep.subr.mxu0 0.0
    %4704 = vmatpush1.msra.mxu0 0.0
    %4705 = vmatprep.subr.mxu0 0.0
    %4706 = vmatpush1.msra.mxu0 0.0
    %4707 = vmatprep.subr.mxu0 0.0
    %4708 = vmatpush1.msra.mxu0 0.0
    %4709 = vmatprep.subr.mxu0 0.0
    %4710 = vmatpush1.msra.mxu0 0.0
    %4711 = vmatprep.subr.mxu0 0.0
    %4712 = vmatpush1.msra.mxu0 0.0
    %4713 = vmatprep.subr.mxu0 0.0
    %4714 = vmatpush1.msra.mxu0 0.0
    %4715 = vmatprep.subr.mxu0 0.0
    %4716 = vmatpush1.msra.mxu0 0.0
    %4717 = vmatprep.subr.mxu0 0.0
    %4718 = vmatpush1.msra.mxu0 0.0
    %4719 = vmatprep.subr.mxu0 0.0
    %4720 = vmatpush1.msra.mxu0 0.0
    %4721 = vmatprep.subr.mxu0 0.0
    %4722 = vmatpush1.msra.mxu0 0.0
    %4723 = vmatprep.subr.mxu0 0.0
    %4724 = vmatpush1.msra.mxu0 0.0
    %4725 = vmatprep.subr.mxu0 0.0
    %4726 = vmatpush1.msra.mxu0 0.0
    %4727 = vmatprep.subr.mxu0 0.0
    %4728 = vmatpush1.msra.mxu0 0.0
    %4729 = vmatprep.subr.mxu0 0.0
    %4730 = vmatpush1.msra.mxu0 0.0
    %4731 = vmatprep.subr.mxu0 0.0
    %4732 = vmatpush1.msra.mxu0 0.0
    %4733 = vmatprep.subr.mxu0 0.0
    %4734 = vmatpush1.msra.mxu0 0.0
    %4735 = vmatprep.subr.mxu0 0.0
    %4736 = vmatpush1.msra.mxu0 0.0
    %4737 = vmatprep.subr.mxu0 0.0
    %4738 = vmatpush1.msra.mxu0 0.0
    %4739 = vmatprep.subr.mxu0 0.0
    %4740 = vmatpush1.msra.mxu0 0.0
    %4741 = vmatprep.subr.mxu0 0.0
    %4742 = vmatpush1.msra.mxu0 0.0
    %4743 = vmatprep.subr.mxu0 0.0
    %4744 = vmatpush1.msra.mxu0 0.0
    %4745 = vmatprep.subr.mxu0 0.0
    %4746 = vmatpush1.msra.mxu0 0.0
    %4747 = vmatprep.subr.mxu0 0.0
    %4748 = vmatpush1.msra.mxu0 0.0
    %4749 = vmatprep.subr.mxu0 0.0
    %4750 = vmatpush1.msra.mxu0 0.0
    %4751 = vmatprep.subr.mxu0 0.0
    %4752 = vmatpush1.msra.mxu0 0.0
    %4753 = vmatprep.subr.mxu0 0.0
    %4754 = vmatpush1.msra.mxu0 0.0
    %4755 = vmatprep.subr.mxu0 0.0
    %4756 = vmatpush1.msra.mxu0 0.0
    %4757 = vmatprep.subr.mxu0 0.0
    %4758 = vmatpush1.msra.mxu0 0.0
    %4759 = vmatprep.mubr.f32.mxu0 0.0
    %4760 = vmatmul.mubr.f32.gmra.mrb[0].mxu0 %v4690
    %v4761 = vpop.f32.mrb[0].mxu0
    %v4762 = vadd.f32 0.0, %v4761
    %v4763 = vpop.f32.mrb[0].mxu0
    %4764 = vmatprep.mubr.f32.mxu0 0.0
    %4765 = vmatmul.mubr.f32.gmra.mrb[0].mxu0 %v4693
    %v4766 = vpop.f32.mrb[0].mxu0
    %v4767 = vadd.f32 0.0, %v4766
    %v4768 = vpop.f32.mrb[0].mxu0
    %4769 = vdwg.mxu0
    %4770 = vrot.lane.b32.xlu0 %v4059, 104
    %v4771 = vpop.permute.xlu0 %4770
    %4772 = vrot.lane.b32.xlu0 %v4064, 104
    %v4773 = vpop.permute.xlu0 %4772
    %4774 = vrot.lane.b32.xlu0 %v4149, 104
    %v4775 = vpop.permute.xlu0 %4774
    %4776 = vrot.lane.b32.xlu0 %v4154, 104
    %v4777 = vpop.permute.xlu0 %4776
    %v4778 = vsel %vm374, %v4771, 0
    %v4780 = vsel %vm374, %v4773, 0
    %v4782 = vsel %vm374, %v4775, 0
    %v4784 = vsel %vm374, %v4777, 0
    %4786 = vmatprep.subr.mxu0 0.0
    %4787 = vmatpush1.xpose.msra.mxu0 %v4782
    %4788 = vmatprep.subr.mxu0 0.0
    %4789 = vmatpush1.xpose.msra.mxu0 %v4784
    %4790 = vmatprep.subr.mxu0 0.0
    %4791 = vmatpush1.xpose.msra.mxu0 0.0
    %4792 = vmatprep.subr.mxu0 0.0
    %4793 = vmatpush1.xpose.msra.mxu0 0.0
    %4794 = vmatprep.subr.mxu0 0.0
    %4795 = vmatpush1.xpose.msra.mxu0 0.0
    %4796 = vmatprep.subr.mxu0 0.0
    %4797 = vmatpush1.xpose.msra.mxu0 0.0
    %4798 = vmatprep.subr.mxu0 0.0
    %4799 = vmatpush1.xpose.msra.mxu0 0.0
    %4800 = vmatprep.subr.mxu0 0.0
    %4801 = vmatpush1.xpose.msra.mxu0 0.0
    %4802 = vmatprep.subr.mxu0 0.0
    %4803 = vmatpush1.xpose.msra.mxu0 0.0
    %4804 = vmatprep.subr.mxu0 0.0
    %4805 = vmatpush1.xpose.msra.mxu0 0.0
    %4806 = vmatprep.subr.mxu0 0.0
    %4807 = vmatpush1.xpose.msra.mxu0 0.0
    %4808 = vmatprep.subr.mxu0 0.0
    %4809 = vmatpush1.xpose.msra.mxu0 0.0
    %4810 = vmatprep.subr.mxu0 0.0
    %4811 = vmatpush1.xpose.msra.mxu0 0.0
    %4812 = vmatprep.subr.mxu0 0.0
    %4813 = vmatpush1.xpose.msra.mxu0 0.0
    %4814 = vmatprep.subr.mxu0 0.0
    %4815 = vmatpush1.xpose.msra.mxu0 0.0
    %4816 = vmatprep.subr.mxu0 0.0
    %4817 = vmatpush1.xpose.msra.mxu0 0.0
    %4818 = vmatprep.subr.mxu0 0.0
    %4819 = vmatpush1.xpose.msra.mxu0 0.0
    %4820 = vmatprep.subr.mxu0 0.0
    %4821 = vmatpush1.xpose.msra.mxu0 0.0
    %4822 = vmatprep.subr.mxu0 0.0
    %4823 = vmatpush1.xpose.msra.mxu0 0.0
    %4824 = vmatprep.subr.mxu0 0.0
    %4825 = vmatpush1.xpose.msra.mxu0 0.0
    %4826 = vmatprep.subr.mxu0 0.0
    %4827 = vmatpush1.xpose.msra.mxu0 0.0
    %4828 = vmatprep.subr.mxu0 0.0
    %4829 = vmatpush1.xpose.msra.mxu0 0.0
    %4830 = vmatprep.subr.mxu0 0.0
    %4831 = vmatpush1.xpose.msra.mxu0 0.0
    %4832 = vmatprep.subr.mxu0 0.0
    %4833 = vmatpush1.xpose.msra.mxu0 0.0
    %4834 = vmatprep.subr.mxu0 0.0
    %4835 = vmatpush1.xpose.msra.mxu0 0.0
    %4836 = vmatprep.subr.mxu0 0.0
    %4837 = vmatpush1.xpose.msra.mxu0 0.0
    %4838 = vmatprep.subr.mxu0 0.0
    %4839 = vmatpush1.xpose.msra.mxu0 0.0
    %4840 = vmatprep.subr.mxu0 0.0
    %4841 = vmatpush1.xpose.msra.mxu0 0.0
    %4842 = vmatprep.subr.mxu0 0.0
    %4843 = vmatpush1.xpose.msra.mxu0 0.0
    %4844 = vmatprep.subr.mxu0 0.0
    %4845 = vmatpush1.xpose.msra.mxu0 0.0
    %4846 = vmatprep.subr.mxu0 0.0
    %4847 = vmatpush1.xpose.msra.mxu0 0.0
    %4848 = vmatprep.subr.mxu0 0.0
    %4849 = vmatpush1.xpose.msra.mxu0 0.0
    %4850 = vmatprep.mubr.f32.mxu0 0.0
    %4851 = vmatmul.mubr.f32.gmra.mrb[0].mxu0 %v4778
    %v4852 = vpop.f32.mrb[0].mxu0
    %v4853 = vadd.f32 0.0, %v4852
    %v4854 = vpop.f32.mrb[0].mxu0
    %4855 = vmatprep.mubr.f32.mxu0 0.0
    %4856 = vmatmul.mubr.f32.gmra.mrb[0].mxu0 %v4780
    %v4857 = vpop.f32.mrb[0].mxu0
    %v4858 = vadd.f32 0.0, %v4857
    %v4859 = vpop.f32.mrb[0].mxu0
    %4860 = vdwg.mxu0
    %v4861 = vmul.f32 %v4853, 0.35355338
    %v4862 = vmul.f32 %v4858, 0.35355338
    %v4863 = vadd.f32 %v4861, %v262
    %v4864 = vadd.f32 %v4862, %v263
    %v4865 = vsel %vm462, %v4863, -inf
    %4866 = vmax.xlane.f32.xlu0 %v4865
    %v4867 = vpop.xlane.xlu0 %4866
    %v4868 = vsel %vm462, %v4864, -inf
    %4869 = vmax.xlane.f32.xlu0 %v4868
    %v4870 = vpop.xlane.xlu0 %4869
    %v4871 = vsub.f32 %v4863, %v4867
    %v4872 = vsub.f32 %v4864, %v4870
    %v4873 = vmul.f32 %v4871, 1.442695
    %v4874 = vpow.pop %v4873
    %v4875 = vmul.f32 %v4872, 1.442695
    %v4876 = vpow.pop %v4875
    %v4877 = vsel %vm462, %v4874, 0.0
    %4878 = vadd.xlane.f32.xlu0 %v4877
    %v4879 = vpop.xlane.xlu0 %4878
    %v4880 = vsel %vm462, %v4876, 0.0
    %4881 = vadd.xlane.f32.xlu0 %v4880
    %v4882 = vpop.xlane.xlu0 %4881
    %v4883 = vrcp.pop %v4879
    %v4884 = vrcp.pop %v4882
    %v4885 = vmul.f32 %v4874, %v4883
    %v4886 = vmul.f32 %v4876, %v4884
    %4887 = vrot.lane.b32.xlu0 %v4149, 72
    %v4888 = vpop.permute.xlu0 %4887
    %4889 = vrot.lane.b32.xlu0 %v4154, 72
    %v4890 = vpop.permute.xlu0 %4889
    %v4894 = vsel %vm462, %v4885, 0
    %v4897 = vsel %vm462, %v4886, 0
    %4899 = vmatprep.subr.mxu0 0.0
    %4900 = vmatpush1.msra.mxu0 %v4888
    %4901 = vmatprep.subr.mxu0 0.0
    %4902 = vmatpush1.msra.mxu0 %v4890
    %4903 = vmatprep.subr.mxu0 0.0
    %4904 = vmatpush1.msra.mxu0 0.0
    %4905 = vmatprep.subr.mxu0 0.0
    %4906 = vmatpush1.msra.mxu0 0.0
    %4907 = vmatprep.subr.mxu0 0.0
    %4908 = vmatpush1.msra.mxu0 0.0
    %4909 = vmatprep.subr.mxu0 0.0
    %4910 = vmatpush1.msra.mxu0 0.0
    %4911 = vmatprep.subr.mxu0 0.0
    %4912 = vmatpush1.msra.mxu0 0.0
    %4913 = vmatprep.subr.mxu0 0.0
    %4914 = vmatpush1.msra.mxu0 0.0
    %4915 = vmatprep.subr.mxu0 0.0
    %4916 = vmatpush1.msra.mxu0 0.0
    %4917 = vmatprep.subr.mxu0 0.0
    %4918 = vmatpush1.msra.mxu0 0.0
    %4919 = vmatprep.subr.mxu0 0.0
    %4920 = vmatpush1.msra.mxu0 0.0
    %4921 = vmatprep.subr.mxu0 0.0
    %4922 = vmatpush1.msra.mxu0 0.0
    %4923 = vmatprep.subr.mxu0 0.0
    %4924 = vmatpush1.msra.mxu0 0.0
    %4925 = vmatprep.subr.mxu0 0.0
    %4926 = vmatpush1.msra.mxu0 0.0
    %4927 = vmatprep.subr.mxu0 0.0
    %4928 = vmatpush1.msra.mxu0 0.0
    %4929 = vmatprep.subr.mxu0 0.0
    %4930 = vmatpush1.msra.mxu0 0.0
    %4931 = vmatprep.subr.mxu0 0.0
    %4932 = vmatpush1.msra.mxu0 0.0
    %4933 = vmatprep.subr.mxu0 0.0
    %4934 = vmatpush1.msra.mxu0 0.0
    %4935 = vmatprep.subr.mxu0 0.0
    %4936 = vmatpush1.msra.mxu0 0.0
    %4937 = vmatprep.subr.mxu0 0.0
    %4938 = vmatpush1.msra.mxu0 0.0
    %4939 = vmatprep.subr.mxu0 0.0
    %4940 = vmatpush1.msra.mxu0 0.0
    %4941 = vmatprep.subr.mxu0 0.0
    %4942 = vmatpush1.msra.mxu0 0.0
    %4943 = vmatprep.subr.mxu0 0.0
    %4944 = vmatpush1.msra.mxu0 0.0
    %4945 = vmatprep.subr.mxu0 0.0
    %4946 = vmatpush1.msra.mxu0 0.0
    %4947 = vmatprep.subr.mxu0 0.0
    %4948 = vmatpush1.msra.mxu0 0.0
    %4949 = vmatprep.subr.mxu0 0.0
    %4950 = vmatpush1.msra.mxu0 0.0
    %4951 = vmatprep.subr.mxu0 0.0
    %4952 = vmatpush1.msra.mxu0 0.0
    %4953 = vmatprep.subr.mxu0 0.0
    %4954 = vmatpush1.msra.mxu0 0.0
    %4955 = vmatprep.subr.mxu0 0.0
    %4956 = vmatpush1.msra.mxu0 0.0
    %4957 = vmatprep.subr.mxu0 0.0
    %4958 = vmatpush1.msra.mxu0 0.0
    %4959 = vmatprep.subr.mxu0 0.0
    %4960 = vmatpush1.msra.mxu0 0.0
    %4961 = vmatprep.subr.mxu0 0.0
    %4962 = vmatpush1.msra.mxu0 0.0
    %4963 = vmatprep.mubr.f32.mxu0 0.0
    %4964 = vmatmul.mubr.f32.gmra.mrb[0].mxu0 %v4894
    %v4965 = vpop.f32.mrb[0].mxu0
    %v4966 = vadd.f32 0.0, %v4965
    %v4967 = vpop.f32.mrb[0].mxu0
    %4968 = vmatprep.mubr.f32.mxu0 0.0
    %4969 = vmatmul.mubr.f32.gmra.mrb[0].mxu0 %v4897
    %v4970 = vpop.f32.mrb[0].mxu0
    %v4971 = vadd.f32 0.0, %v4970
    %v4972 = vpop.f32.mrb[0].mxu0
    %4973 = vdwg.mxu0
    %4976 = vrot.lane.b32.xlu0 %v4558, 8
    %v4977 = vpop.permute.xlu0 %4976
    %4978 = vrot.lane.b32.xlu0 %v4563, 8
    %v4979 = vpop.permute.xlu0 %4978
    %4984 = vrot.lane.b32.xlu0 %v4762, 16
    %v4985 = vpop.permute.xlu0 %4984
    %4986 = vrot.lane.b32.xlu0 %v4767, 16
    %v4987 = vpop.permute.xlu0 %4986
    %4992 = vrot.lane.b32.xlu0 %v4966, 24
    %v4993 = vpop.permute.xlu0 %4992
    %4994 = vrot.lane.b32.xlu0 %v4971, 24
    %v4995 = vpop.permute.xlu0 %4994
    %v4998 = vsel %vm374, %v4354, %v4977
    %v4999 = vsel %vm374, %v4359, %v4979
    %v5000 = vsel %vm462, %v4998, %v4985
    %v5001 = vsel %vm462, %v4999, %v4987
    %v5002 = vsel %vm1212, %v5000, %v4993
    %v5003 = vsel %vm1212, %v5001, %v4995
    %v5004 = vlaneseq
    %v5005 = vshrl.u32 %v5004, 7
    %v5006 = vsub.s32 0, %v5005
    %v5007 = vrot.slane %v4161, %v5006
    %v5009 = vsel %vm166, %v5002, 0
    %v5012 = vsel %vm166, %v5003, 0
    %5014 = vmatprep.subr.mxu0 0.0
    %5015 = vmatpush1.msra.mxu0 %v4157
    %5016 = vmatprep.subr.mxu0 0.0
    %5017 = vmatpush1.msra.mxu0 %v4158
    %5018 = vmatprep.subr.mxu0 0.0
    %5019 = vmatpush1.msra.mxu0 %v4159
    %5020 = vmatprep.subr.mxu0 0.0
    %5021 = vmatpush1.msra.mxu0 %v4160
    %5022 = vmatprep.subr.mxu0 0.0
    %5023 = vmatpush1.msra.mxu0 0.0
    %5024 = vmatprep.subr.mxu0 0.0
    %5025 = vmatpush1.msra.mxu0 0.0
    %5026 = vmatprep.subr.mxu0 0.0
    %5027 = vmatpush1.msra.mxu0 0.0
    %5028 = vmatprep.subr.mxu0 0.0
    %5029 = vmatpush1.msra.mxu0 0.0
    %5030 = vmatprep.subr.mxu0 0.0
    %5031 = vmatpush1.msra.mxu0 0.0
    %5032 = vmatprep.subr.mxu0 0.0
    %5033 = vmatpush1.msra.mxu0 0.0
    %5034 = vmatprep.subr.mxu0 0.0
    %5035 = vmatpush1.msra.mxu0 0.0
    %5036 = vmatprep.subr.mxu0 0.0
    %5037 = vmatpush1.msra.mxu0 0.0
    %5038 = vmatprep.subr.mxu0 0.0
    %5039 = vmatpush1.msra.mxu0 0.0
    %5040 = vmatprep.subr.mxu0 0.0
    %5041 = vmatpush1.msra.mxu0 0.0
    %5042 = vmatprep.subr.mxu0 0.0
    %5043 = vmatpush1.msra.mxu0 0.0
    %5044 = vmatprep.subr.mxu0 0.0
    %5045 = vmatpush1.msra.mxu0 0.0
    %5046 = vmatprep.subr.mxu0 0.0
    %5047 = vmatpush1.msra.mxu0 0.0
    %5048 = vmatprep.subr.mxu0 0.0
    %5049 = vmatpush1.msra.mxu0 0.0
    %5050 = vmatprep.subr.mxu0 0.0
    %5051 = vmatpush1.msra.mxu0 0.0
    %5052 = vmatprep.subr.mxu0 0.0
    %5053 = vmatpush1.msra.mxu0 0.0
    %5054 = vmatprep.subr.mxu0 0.0
    %5055 = vmatpush1.msra.mxu0 0.0
    %5056 = vmatprep.subr.mxu0 0.0
    %5057 = vmatpush1.msra.mxu0 0.0
    %5058 = vmatprep.subr.mxu0 0.0
    %5059 = vmatpush1.msra.mxu0 0.0
    %5060 = vmatprep.subr.mxu0 0.0
    %5061 = vmatpush1.msra.mxu0 0.0
    %5062 = vmatprep.subr.mxu0 0.0
    %5063 = vmatpush1.msra.mxu0 0.0
    %5064 = vmatprep.subr.mxu0 0.0
    %5065 = vmatpush1.msra.mxu0 0.0
    %5066 = vmatprep.subr.mxu0 0.0
    %5067 = vmatpush1.msra.mxu0 0.0
    %5068 = vmatprep.subr.mxu0 0.0
    %5069 = vmatpush1.msra.mxu0 0.0
    %5070 = vmatprep.subr.mxu0 0.0
    %5071 = vmatpush1.msra.mxu0 0.0
    %5072 = vmatprep.subr.mxu0 0.0
    %5073 = vmatpush1.msra.mxu0 0.0
    %5074 = vmatprep.subr.mxu0 0.0
    %5075 = vmatpush1.msra.mxu0 0.0
    %5076 = vmatprep.subr.mxu0 0.0
    %5077 = vmatpush1.msra.mxu0 0.0
    %5078 = vmatprep.mubr.f32.mxu0 0.0
    %5079 = vmatmul.mubr.f32.gmra.mrb[0].mxu0 %v5009
    %v5080 = vpop.f32.mrb[0].mxu0
    %v5081 = vadd.f32 %v5007, %v5080
    %v5082 = vpop.f32.mrb[0].mxu0
    %5083 = vmatprep.mubr.f32.mxu0 0.0
    %5084 = vmatmul.mubr.f32.gmra.mrb[0].mxu0 %v5012
    %v5085 = vpop.f32.mrb[0].mxu0
    %v5086 = vadd.f32 %v5007, %v5085
    %v5087 = vpop.f32.mrb[0].mxu0
    %5088 = vdwg.mxu0
    %v5089 = vadd.f32 %v5081, %v3975
    %v5090 = vadd.f32 %v5086, %v3976
    %v5091 = vld [vmem:[#allocation2 + $0x2f8] sm:$0x3]
    %v5092 = vsel %vm166, %v5089, 0.0
    %5093 = vadd.xlane.f32.xlu0 %v5092
    %v5094 = vpop.xlane.xlu0 %5093
    %v5095 = vsel %vm166, %v5090, 0.0
    %5096 = vadd.xlane.f32.xlu0 %v5095
    %v5097 = vpop.xlane.xlu0 %5096
    %v5098 = vmul.f32 %v5089, %v5089
    %v5099 = vmul.f32 %v5090, %v5090
    %v5100 = vsel %vm166, %v5098, 0.0
    %5101 = vadd.xlane.f32.xlu0 %v5100
    %v5102 = vpop.xlane.xlu0 %5101
    %v5103 = vsel %vm166, %v5099, 0.0
    %5104 = vadd.xlane.f32.xlu0 %v5103
    %v5105 = vpop.xlane.xlu0 %5104
    %v5106 = vmul.f32 %v5094, 0.03125
    %v5107 = vmul.f32 %v5097, 0.03125
    %v5108 = vmul.f32 %v5102, 0.03125
    %v5109 = vmul.f32 %v5105, 0.03125
    %v5110 = vmul.f32 %v5106, %v5106
    %v5111 = vmul.f32 %v5107, %v5107
    %v5112 = vsub.f32 %v5108, %v5110
    %v5113 = vsub.f32 %v5109, %v5111
    %v5114 = vsub.f32 %v5089, %v5106
    %v5115 = vsub.f32 %v5090, %v5107
    %v5116 = vadd.f32 %v5112, 1e-05
    %v5117 = vadd.f32 %v5113, 1e-05
    %v5118 = vrsqrt.pop %v5116
    %v5119 = vrsqrt.pop %v5117
    %v5120 = vmul.f32 %v5114, %v5118
    %v5121 = vmul.f32 %v5115, %v5119
    %v5122 = vlaneseq
    %v5123 = vshrl.u32 %v5122, 7
    %v5124 = vsub.s32 0, %v5123
    %v5125 = vrot.slane %v5091, %v5124
    %v5126 = vmul.f32 %v5120, %v5125
    %v5127 = vmul.f32 %v5121, %v5125
    %v5128 = vlaneseq
    %v5129 = vshrl.u32 %v5128, 7
    %v5130 = vsub.s32 1, %v5129
    %v5131 = vrot.slane %v5091, %v5130
    %v5132 = vadd.f32 %v5126, %v5131
    %v5133 = vadd.f32 %v5127, %v5131
    %v5134 = vld [vmem:[#allocation2 + $0x300] sm:$0xff]
    %v5135 = vld [vmem:[#allocation2 + $0x308] sm:$0xff]
    %v5136 = vld [vmem:[#allocation2 + $0x310] sm:$0xff]
    %v5137 = vld [vmem:[#allocation2 + $0x318] sm:$0xff]
    %v5138 = vld [vmem:[#allocation2 + $0x320] sm:$0x1]
    %v5139 = vlaneseq
    %v5140 = vshrl.u32 %v5139, 7
    %v5141 = vsub.s32 0, %v5140
    %v5142 = vrot.slane %v5138, %v5141
    %v5144 = vsel %vm166, %v5132, 0
    %v5147 = vsel %vm166, %v5133, 0
    %5149 = vmatprep.subr.mxu0 0.0
    %5150 = vmatpush1.msra.mxu0 %v5134
    %5151 = vmatprep.subr.mxu0 0.0
    %5152 = vmatpush1.msra.mxu0 %v5135
    %5153 = vmatprep.subr.mxu0 0.0
    %5154 = vmatpush1.msra.mxu0 %v5136
    %5155 = vmatprep.subr.mxu0 0.0
    %5156 = vmatpush1.msra.mxu0 %v5137
    %5157 = vmatprep.subr.mxu0 0.0
    %5158 = vmatpush1.msra.mxu0 0.0
    %5159 = vmatprep.subr.mxu0 0.0
    %5160 = vmatpush1.msra.mxu0 0.0
    %5161 = vmatprep.subr.mxu0 0.0
    %5162 = vmatpush1.msra.mxu0 0.0
    %5163 = vmatprep.subr.mxu0 0.0
    %5164 = vmatpush1.msra.mxu0 0.0
    %5165 = vmatprep.subr.mxu0 0.0
    %5166 = vmatpush1.msra.mxu0 0.0
    %5167 = vmatprep.subr.mxu0 0.0
    %5168 = vmatpush1.msra.mxu0 0.0
    %5169 = vmatprep.subr.mxu0 0.0
    %5170 = vmatpush1.msra.mxu0 0.0
    %5171 = vmatprep.subr.mxu0 0.0
    %5172 = vmatpush1.msra.mxu0 0.0
    %5173 = vmatprep.subr.mxu0 0.0
    %5174 = vmatpush1.msra.mxu0 0.0
    %5175 = vmatprep.subr.mxu0 0.0
    %5176 = vmatpush1.msra.mxu0 0.0
    %5177 = vmatprep.subr.mxu0 0.0
    %5178 = vmatpush1.msra.mxu0 0.0
    %5179 = vmatprep.subr.mxu0 0.0
    %5180 = vmatpush1.msra.mxu0 0.0
    %5181 = vmatprep.subr.mxu0 0.0
    %5182 = vmatpush1.msra.mxu0 0.0
    %5183 = vmatprep.subr.mxu0 0.0
    %5184 = vmatpush1.msra.mxu0 0.0
    %5185 = vmatprep.subr.mxu0 0.0
    %5186 = vmatpush1.msra.mxu0 0.0
    %5187 = vmatprep.subr.mxu0 0.0
    %5188 = vmatpush1.msra.mxu0 0.0
    %5189 = vmatprep.subr.mxu0 0.0
    %5190 = vmatpush1.msra.mxu0 0.0
    %5191 = vmatprep.subr.mxu0 0.0
    %5192 = vmatpush1.msra.mxu0 0.0
    %5193 = vmatprep.subr.mxu0 0.0
    %5194 = vmatpush1.msra.mxu0 0.0
    %5195 = vmatprep.subr.mxu0 0.0
    %5196 = vmatpush1.msra.mxu0 0.0
    %5197 = vmatprep.subr.mxu0 0.0
    %5198 = vmatpush1.msra.mxu0 0.0
    %5199 = vmatprep.subr.mxu0 0.0
    %5200 = vmatpush1.msra.mxu0 0.0
    %5201 = vmatprep.subr.mxu0 0.0
    %5202 = vmatpush1.msra.mxu0 0.0
    %5203 = vmatprep.subr.mxu0 0.0
    %5204 = vmatpush1.msra.mxu0 0.0
    %5205 = vmatprep.subr.mxu0 0.0
    %5206 = vmatpush1.msra.mxu0 0.0
    %5207 = vmatprep.subr.mxu0 0.0
    %5208 = vmatpush1.msra.mxu0 0.0
    %5209 = vmatprep.subr.mxu0 0.0
    %5210 = vmatpush1.msra.mxu0 0.0
    %5211 = vmatprep.subr.mxu0 0.0
    %5212 = vmatpush1.msra.mxu0 0.0
    %5213 = vmatprep.mubr.f32.mxu0 0.0
    %5214 = vmatmul.mubr.f32.gmra.mrb[0].mxu0 %v5144
    %v5215 = vpop.f32.mrb[0].mxu0
    %v5216 = vadd.f32 %v5142, %v5215
    %v5217 = vpop.f32.mrb[0].mxu0
    %5218 = vmatprep.mubr.f32.mxu0 0.0
    %5219 = vmatmul.mubr.f32.gmra.mrb[0].mxu0 %v5147
    %v5220 = vpop.f32.mrb[0].mxu0
    %v5221 = vadd.f32 %v5142, %v5220
    %v5222 = vpop.f32.mrb[0].mxu0
    %5223 = vdwg.mxu0
    %v5224 = vmul.f32 %v5216, %v5216
    %v5225 = vmul.f32 %v5221, %v5221
    %v5226 = vmul.f32 %v5216, %v5224
    %v5227 = vmul.f32 %v5221, %v5225
    %v5228 = vmul.f32 %v5226, 0.044715
    %v5229 = vmul.f32 %v5227, 0.044715
    %v5230 = vadd.f32 %v5216, %v5228
    %v5231 = vadd.f32 %v5221, %v5229
    %v5232 = vmul.f32 %v5230, 0.7978846
    %v5233 = vmul.f32 %v5231, 0.7978846
    %v5234 = vtanh.pop %v5232
    %v5235 = vtanh.pop %v5233
    %v5236 = vadd.f32 %v5234, 1.0
    %v5237 = vadd.f32 %v5235, 1.0
    %v5238 = vmul.f32 %v5236, 0.5
    %v5239 = vmul.f32 %v5237, 0.5
    %v5240 = vmul.f32 %v5216, %v5238
    %v5241 = vmul.f32 %v5221, %v5239
    %v5242 = vld [vmem:[#allocation2 + $0x328] sm:$0xff]
    %v5243 = vld [vmem:[#allocation2 + $0x330] sm:$0xff]
    %v5244 = vld [vmem:[#allocation2 + $0x338] sm:$0xff]
    %v5245 = vld [vmem:[#allocation2 + $0x340] sm:$0xff]
    %v5246 = vld [vmem:[#allocation2 + $0x348] sm:$0xff]
    %v5247 = vld [vmem:[#allocation2 + $0x350] sm:$0xff]
    %v5248 = vld [vmem:[#allocation2 + $0x358] sm:$0xff]
    %v5249 = vld [vmem:[#allocation2 + $0x360] sm:$0xff]
    %v5250 = vld [vmem:[#allocation2 + $0x368] sm:$0x1]
    %v5251 = vlaneseq
    %v5252 = vshrl.u32 %v5251, 7
    %v5253 = vsub.s32 0, %v5252
    %v5254 = vrot.slane %v5250, %v5253
    %v5256 = vsel %vm64, %v5240, 0
    %v5259 = vsel %vm64, %v5241, 0
    %5261 = vmatprep.subr.mxu0 0.0
    %5262 = vmatpush1.msra.mxu0 %v5242
    %5263 = vmatprep.subr.mxu0 0.0
    %5264 = vmatpush1.msra.mxu0 %v5243
    %5265 = vmatprep.subr.mxu0 0.0
    %5266 = vmatpush1.msra.mxu0 %v5244
    %5267 = vmatprep.subr.mxu0 0.0
    %5268 = vmatpush1.msra.mxu0 %v5245
    %5269 = vmatprep.subr.mxu0 0.0
    %5270 = vmatpush1.msra.mxu0 %v5246
    %5271 = vmatprep.subr.mxu0 0.0
    %5272 = vmatpush1.msra.mxu0 %v5247
    %5273 = vmatprep.subr.mxu0 0.0
    %5274 = vmatpush1.msra.mxu0 %v5248
    %5275 = vmatprep.subr.mxu0 0.0
    %5276 = vmatpush1.msra.mxu0 %v5249
    %5277 = vmatprep.subr.mxu0 0.0
    %5278 = vmatpush1.msra.mxu0 0.0
    %5279 = vmatprep.subr.mxu0 0.0
    %5280 = vmatpush1.msra.mxu0 0.0
    %5281 = vmatprep.subr.mxu0 0.0
    %5282 = vmatpush1.msra.mxu0 0.0
    %5283 = vmatprep.subr.mxu0 0.0
    %5284 = vmatpush1.msra.mxu0 0.0
    %5285 = vmatprep.subr.mxu0 0.0
    %5286 = vmatpush1.msra.mxu0 0.0
    %5287 = vmatprep.subr.mxu0 0.0
    %5288 = vmatpush1.msra.mxu0 0.0
    %5289 = vmatprep.subr.mxu0 0.0
    %5290 = vmatpush1.msra.mxu0 0.0
    %5291 = vmatprep.subr.mxu0 0.0
    %5292 = vmatpush1.msra.mxu0 0.0
    %5293 = vmatprep.subr.mxu0 0.0
    %5294 = vmatpush1.msra.mxu0 0.0
    %5295 = vmatprep.subr.mxu0 0.0
    %5296 = vmatpush1.msra.mxu0 0.0
    %5297 = vmatprep.subr.mxu0 0.0
    %5298 = vmatpush1.msra.mxu0 0.0
    %5299 = vmatprep.subr.mxu0 0.0
    %5300 = vmatpush1.msra.mxu0 0.0
    %5301 = vmatprep.subr.mxu0 0.0
    %5302 = vmatpush1.msra.mxu0 0.0
    %5303 = vmatprep.subr.mxu0 0.0
    %5304 = vmatpush1.msra.mxu0 0.0
    %5305 = vmatprep.subr.mxu0 0.0
    %5306 = vmatpush1.msra.mxu0 0.0
    %5307 = vmatprep.subr.mxu0 0.0
    %5308 = vmatpush1.msra.mxu0 0.0
    %5309 = vmatprep.subr.mxu0 0.0
    %5310 = vmatpush1.msra.mxu0 0.0
    %5311 = vmatprep.subr.mxu0 0.0
    %5312 = vmatpush1.msra.mxu0 0.0
    %5313 = vmatprep.subr.mxu0 0.0
    %5314 = vmatpush1.msra.mxu0 0.0
    %5315 = vmatprep.subr.mxu0 0.0
    %5316 = vmatpush1.msra.mxu0 0.0
    %5317 = vmatprep.subr.mxu0 0.0
    %5318 = vmatpush1.msra.mxu0 0.0
    %5319 = vmatprep.subr.mxu0 0.0
    %5320 = vmatpush1.msra.mxu0 0.0
    %5321 = vmatprep.subr.mxu0 0.0
    %5322 = vmatpush1.msra.mxu0 0.0
    %5323 = vmatprep.subr.mxu0 0.0
    %5324 = vmatpush1.msra.mxu0 0.0
    %5325 = vmatprep.mubr.f32.mxu0 0.0
    %5326 = vmatmul.mubr.f32.gmra.mrb[0].mxu0 %v5256
    %v5327 = vpop.f32.mrb[0].mxu0
    %v5328 = vadd.f32 %v5254, %v5327
    %v5329 = vpop.f32.mrb[0].mxu0
    %5330 = vmatprep.mubr.f32.mxu0 0.0
    %5331 = vmatmul.mubr.f32.gmra.mrb[0].mxu0 %v5259
    %v5332 = vpop.f32.mrb[0].mxu0
    %v5333 = vadd.f32 %v5254, %v5332
    %v5334 = vpop.f32.mrb[0].mxu0
    %5335 = vdwg.mxu0
    %v5336 = vadd.f32 %v5328, %v5132
    %v5337 = vadd.f32 %v5333, %v5133
    %v5338 = vld [vmem:[#allocation2 + $0x370] sm:$0x3]
    %v5339 = vsel %vm166, %v5336, 0.0
    %5340 = vadd.xlane.f32.xlu0 %v5339
    %v5341 = vpop.xlane.xlu0 %5340
    %v5342 = vsel %vm166, %v5337, 0.0
    %5343 = vadd.xlane.f32.xlu0 %v5342
    %v5344 = vpop.xlane.xlu0 %5343
    %v5345 = vmul.f32 %v5336, %v5336
    %v5346 = vmul.f32 %v5337, %v5337
    %v5347 = vsel %vm166, %v5345, 0.0
    %5348 = vadd.xlane.f32.xlu0 %v5347
    %v5349 = vpop.xlane.xlu0 %5348
    %v5350 = vsel %vm166, %v5346, 0.0
    %5351 = vadd.xlane.f32.xlu0 %v5350
    %v5352 = vpop.xlane.xlu0 %5351
    %v5353 = vmul.f32 %v5341, 0.03125
    %v5354 = vmul.f32 %v5344, 0.03125
    %v5355 = vmul.f32 %v5349, 0.03125
    %v5356 = vmul.f32 %v5352, 0.03125
    %v5357 = vmul.f32 %v5353, %v5353
    %v5358 = vmul.f32 %v5354, %v5354
    %v5359 = vsub.f32 %v5355, %v5357
    %v5360 = vsub.f32 %v5356, %v5358
    %v5361 = vsub.f32 %v5336, %v5353
    %v5362 = vsub.f32 %v5337, %v5354
    %v5363 = vadd.f32 %v5359, 1e-05
    %v5364 = vadd.f32 %v5360, 1e-05
    %v5365 = vrsqrt.pop %v5363
    %v5366 = vrsqrt.pop %v5364
    %v5367 = vmul.f32 %v5361, %v5365
    %v5368 = vmul.f32 %v5362, %v5366
    %v5369 = vlaneseq
    %v5370 = vshrl.u32 %v5369, 7
    %v5371 = vsub.s32 0, %v5370
    %v5372 = vrot.slane %v5338, %v5371
    %v5373 = vmul.f32 %v5367, %v5372
    %v5374 = vmul.f32 %v5368, %v5372
    %v5375 = vlaneseq
    %v5376 = vshrl.u32 %v5375, 7
    %v5377 = vsub.s32 1, %v5376
    %v5378 = vrot.slane %v5338, %v5377
    %v5379 = vadd.f32 %v5373, %v5378
    %v5380 = vadd.f32 %v5374, %v5378
    %v5381 = vld [vmem:[#allocation2 + $0x378] sm:$0xff]
    %v5382 = vld [vmem:[#allocation2 + $0x380] sm:$0xff]
    %v5383 = vld [vmem:[#allocation2 + $0x388] sm:$0xff]
    %v5384 = vld [vmem:[#allocation2 + $0x390] sm:$0xff]
    %v5385 = vld [vmem:[#allocation2 + $0x398] sm:$0x1]
    %v5386 = vlaneseq
    %v5387 = vshrl.u32 %v5386, 7
    %v5388 = vsub.s32 0, %v5387
    %v5389 = vrot.slane %v5385, %v5388
    %v5391 = vsel %vm166, %v5379, 0
    %v5394 = vsel %vm166, %v5380, 0
    %5396 = vmatprep.subr.mxu0 0.0
    %5397 = vmatpush1.msra.mxu0 %v5381
    %5398 = vmatprep.subr.mxu0 0.0
    %5399 = vmatpush1.msra.mxu0 %v5382
    %5400 = vmatprep.subr.mxu0 0.0
    %5401 = vmatpush1.msra.mxu0 %v5383
    %5402 = vmatprep.subr.mxu0 0.0
    %5403 = vmatpush1.msra.mxu0 %v5384
    %5404 = vmatprep.subr.mxu0 0.0
    %5405 = vmatpush1.msra.mxu0 0.0
    %5406 = vmatprep.subr.mxu0 0.0
    %5407 = vmatpush1.msra.mxu0 0.0
    %5408 = vmatprep.subr.mxu0 0.0
    %5409 = vmatpush1.msra.mxu0 0.0
    %5410 = vmatprep.subr.mxu0 0.0
    %5411 = vmatpush1.msra.mxu0 0.0
    %5412 = vmatprep.subr.mxu0 0.0
    %5413 = vmatpush1.msra.mxu0 0.0
    %5414 = vmatprep.subr.mxu0 0.0
    %5415 = vmatpush1.msra.mxu0 0.0
    %5416 = vmatprep.subr.mxu0 0.0
    %5417 = vmatpush1.msra.mxu0 0.0
    %5418 = vmatprep.subr.mxu0 0.0
    %5419 = vmatpush1.msra.mxu0 0.0
    %5420 = vmatprep.subr.mxu0 0.0
    %5421 = vmatpush1.msra.mxu0 0.0
    %5422 = vmatprep.subr.mxu0 0.0
    %5423 = vmatpush1.msra.mxu0 0.0
    %5424 = vmatprep.subr.mxu0 0.0
    %5425 = vmatpush1.msra.mxu0 0.0
    %5426 = vmatprep.subr.mxu0 0.0
    %5427 = vmatpush1.msra.mxu0 0.0
    %5428 = vmatprep.subr.mxu0 0.0
    %5429 = vmatpush1.msra.mxu0 0.0
    %5430 = vmatprep.subr.mxu0 0.0
    %5431 = vmatpush1.msra.mxu0 0.0
    %5432 = vmatprep.subr.mxu0 0.0
    %5433 = vmatpush1.msra.mxu0 0.0
    %5434 = vmatprep.subr.mxu0 0.0
    %5435 = vmatpush1.msra.mxu0 0.0
    %5436 = vmatprep.subr.mxu0 0.0
    %5437 = vmatpush1.msra.mxu0 0.0
    %5438 = vmatprep.subr.mxu0 0.0
    %5439 = vmatpush1.msra.mxu0 0.0
    %5440 = vmatprep.subr.mxu0 0.0
    %5441 = vmatpush1.msra.mxu0 0.0
    %5442 = vmatprep.subr.mxu0 0.0
    %5443 = vmatpush1.msra.mxu0 0.0
    %5444 = vmatprep.subr.mxu0 0.0
    %5445 = vmatpush1.msra.mxu0 0.0
    %5446 = vmatprep.subr.mxu0 0.0
    %5447 = vmatpush1.msra.mxu0 0.0
    %5448 = vmatprep.subr.mxu0 0.0
    %5449 = vmatpush1.msra.mxu0 0.0
    %5450 = vmatprep.subr.mxu0 0.0
    %5451 = vmatpush1.msra.mxu0 0.0
    %5452 = vmatprep.subr.mxu0 0.0
    %5453 = vmatpush1.msra.mxu0 0.0
    %5454 = vmatprep.subr.mxu0 0.0
    %5455 = vmatpush1.msra.mxu0 0.0
    %5456 = vmatprep.subr.mxu0 0.0
    %5457 = vmatpush1.msra.mxu0 0.0
    %5458 = vmatprep.subr.mxu0 0.0
    %5459 = vmatpush1.msra.mxu0 0.0
    %5460 = vmatprep.mubr.f32.mxu0 0.0
    %5461 = vmatmul.mubr.f32.gmra.mrb[0].mxu0 %v5391
    %v5462 = vpop.f32.mrb[0].mxu0
    %v5463 = vadd.f32 %v5389, %v5462
    %v5464 = vpop.f32.mrb[0].mxu0
    %5465 = vmatprep.mubr.f32.mxu0 0.0
    %5466 = vmatmul.mubr.f32.gmra.mrb[0].mxu0 %v5394
    %v5467 = vpop.f32.mrb[0].mxu0
    %v5468 = vadd.f32 %v5389, %v5467
    %v5469 = vpop.f32.mrb[0].mxu0
    %5470 = vdwg.mxu0
    %v5471 = vld [vmem:[#allocation2 + $0x3a0] sm:$0xff]
    %v5472 = vld [vmem:[#allocation2 + $0x3a8] sm:$0xff]
    %v5473 = vld [vmem:[#allocation2 + $0x3b0] sm:$0xff]
    %v5474 = vld [vmem:[#allocation2 + $0x3b8] sm:$0xff]
    %v5475 = vld [vmem:[#allocation2 + $0x3c0] sm:$0x1]
    %5478 = vrot.lane.b32.xlu0 %v5463, 96
    %v5479 = vpop.permute.xlu0 %5478
    %5480 = vrot.lane.b32.xlu0 %v5468, 96
    %v5481 = vpop.permute.xlu0 %5480
    %v5482 = vsel %vm374, %v5463, 0
    %v5484 = vsel %vm374, %v5468, 0
    %v5486 = vsel %vm374, %v5479, 0
    %v5488 = vsel %vm374, %v5481, 0
    %5490 = vmatprep.subr.mxu0 0.0
    %5491 = vmatpush1.xpose.msra.mxu0 %v5486
    %5492 = vmatprep.subr.mxu0 0.0
    %5493 = vmatpush1.xpose.msra.mxu0 %v5488
    %5494 = vmatprep.subr.mxu0 0.0
    %5495 = vmatpush1.xpose.msra.mxu0 0.0
    %5496 = vmatprep.subr.mxu0 0.0
    %5497 = vmatpush1.xpose.msra.mxu0 0.0
    %5498 = vmatprep.subr.mxu0 0.0
    %5499 = vmatpush1.xpose.msra.mxu0 0.0
    %5500 = vmatprep.subr.mxu0 0.0
    %5501 = vmatpush1.xpose.msra.mxu0 0.0
    %5502 = vmatprep.subr.mxu0 0.0
    %5503 = vmatpush1.xpose.msra.mxu0 0.0
    %5504 = vmatprep.subr.mxu0 0.0
    %5505 = vmatpush1.xpose.msra.mxu0 0.0
    %5506 = vmatprep.subr.mxu0 0.0
    %5507 = vmatpush1.xpose.msra.mxu0 0.0
    %5508 = vmatprep.subr.mxu0 0.0
    %5509 = vmatpush1.xpose.msra.mxu0 0.0
    %5510 = vmatprep.subr.mxu0 0.0
    %5511 = vmatpush1.xpose.msra.mxu0 0.0
    %5512 = vmatprep.subr.mxu0 0.0
    %5513 = vmatpush1.xpose.msra.mxu0 0.0
    %5514 = vmatprep.subr.mxu0 0.0
    %5515 = vmatpush1.xpose.msra.mxu0 0.0
    %5516 = vmatprep.subr.mxu0 0.0
    %5517 = vmatpush1.xpose.msra.mxu0 0.0
    %5518 = vmatprep.subr.mxu0 0.0
    %5519 = vmatpush1.xpose.msra.mxu0 0.0
    %5520 = vmatprep.subr.mxu0 0.0
    %5521 = vmatpush1.xpose.msra.mxu0 0.0
    %5522 = vmatprep.subr.mxu0 0.0
    %5523 = vmatpush1.xpose.msra.mxu0 0.0
    %5524 = vmatprep.subr.mxu0 0.0
    %5525 = vmatpush1.xpose.msra.mxu0 0.0
    %5526 = vmatprep.subr.mxu0 0.0
    %5527 = vmatpush1.xpose.msra.mxu0 0.0
    %5528 = vmatprep.subr.mxu0 0.0
    %5529 = vmatpush1.xpose.msra.mxu0 0.0
    %5530 = vmatprep.subr.mxu0 0.0
    %5531 = vmatpush1.xpose.msra.mxu0 0.0
    %5532 = vmatprep.subr.mxu0 0.0
    %5533 = vmatpush1.xpose.msra.mxu0 0.0
    %5534 = vmatprep.subr.mxu0 0.0
    %5535 = vmatpush1.xpose.msra.mxu0 0.0
    %5536 = vmatprep.subr.mxu0 0.0
    %5537 = vmatpush1.xpose.msra.mxu0 0.0
    %5538 = vmatprep.subr.mxu0 0.0
    %5539 = vmatpush1.xpose.msra.mxu0 0.0
    %5540 = vmatprep.subr.mxu0 0.0
    %5541 = vmatpush1.xpose.msra.mxu0 0.0
    %5542 = vmatprep.subr.mxu0 0.0
    %5543 = vmatpush1.xpose.msra.mxu0 0.0
    %5544 = vmatprep.subr.mxu0 0.0
    %5545 = vmatpush1.xpose.msra.mxu0 0.0
    %5546 = vmatprep.subr.mxu0 0.0
    %5547 = vmatpush1.xpose.msra.mxu0 0.0
    %5548 = vmatprep.subr.mxu0 0.0
    %5549 = vmatpush1.xpose.msra.mxu0 0.0
    %5550 = vmatprep.subr.mxu0 0.0
    %5551 = vmatpush1.xpose.msra.mxu0 0.0
    %5552 = vmatprep.subr.mxu0 0.0
    %5553 = vmatpush1.xpose.msra.mxu0 0.0
    %5554 = vmatprep.mubr.f32.mxu0 0.0
    %5555 = vmatmul.mubr.f32.gmra.mrb[0].mxu0 %v5482
    %v5556 = vpop.f32.mrb[0].mxu0
    %v5557 = vadd.f32 0.0, %v5556
    %v5558 = vpop.f32.mrb[0].mxu0
    %5559 = vmatprep.mubr.f32.mxu0 0.0
    %5560 = vmatmul.mubr.f32.gmra.mrb[0].mxu0 %v5484
    %v5561 = vpop.f32.mrb[0].mxu0
    %v5562 = vadd.f32 0.0, %v5561
    %v5563 = vpop.f32.mrb[0].mxu0
    %5564 = vdwg.mxu0
    %v5565 = vmul.f32 %v5557, 0.35355338
    %v5566 = vmul.f32 %v5562, 0.35355338
    %v5567 = vadd.f32 %v5565, %v271
    %v5568 = vadd.f32 %v5566, %v272
    %v5569 = vsel %vm462, %v5567, -inf
    %5570 = vmax.xlane.f32.xlu0 %v5569
    %v5571 = vpop.xlane.xlu0 %5570
    %v5572 = vsel %vm462, %v5568, -inf
    %5573 = vmax.xlane.f32.xlu0 %v5572
    %v5574 = vpop.xlane.xlu0 %5573
    %v5575 = vsub.f32 %v5567, %v5571
    %v5576 = vsub.f32 %v5568, %v5574
    %v5577 = vmul.f32 %v5575, 1.442695
    %v5578 = vpow.pop %v5577
    %v5579 = vmul.f32 %v5576, 1.442695
    %v5580 = vpow.pop %v5579
    %v5581 = vsel %vm462, %v5578, 0.0
    %5582 = vadd.xlane.f32.xlu0 %v5581
    %v5583 = vpop.xlane.xlu0 %5582
    %v5584 = vsel %vm462, %v5580, 0.0
    %5585 = vadd.xlane.f32.xlu0 %v5584
    %v5586 = vpop.xlane.xlu0 %5585
    %v5587 = vrcp.pop %v5583
    %v5588 = vrcp.pop %v5586
    %v5589 = vmul.f32 %v5578, %v5587
    %v5590 = vmul.f32 %v5580, %v5588
    %5591 = vrot.lane.b32.xlu0 %v5463, 64
    %v5592 = vpop.permute.xlu0 %5591
    %5593 = vrot.lane.b32.xlu0 %v5468, 64
    %v5594 = vpop.permute.xlu0 %5593
    %v5598 = vsel %vm462, %v5589, 0
    %v5601 = vsel %vm462, %v5590, 0
    %5603 = vmatprep.subr.mxu0 0.0
    %5604 = vmatpush1.msra.mxu0 %v5592
    %5605 = vmatprep.subr.mxu0 0.0
    %5606 = vmatpush1.msra.mxu0 %v5594
    %5607 = vmatprep.subr.mxu0 0.0
    %5608 = vmatpush1.msra.mxu0 0.0
    %5609 = vmatprep.subr.mxu0 0.0
    %5610 = vmatpush1.msra.mxu0 0.0
    %5611 = vmatprep.subr.mxu0 0.0
    %5612 = vmatpush1.msra.mxu0 0.0
    %5613 = vmatprep.subr.mxu0 0.0
    %5614 = vmatpush1.msra.mxu0 0.0
    %5615 = vmatprep.subr.mxu0 0.0
    %5616 = vmatpush1.msra.mxu0 0.0
    %5617 = vmatprep.subr.mxu0 0.0
    %5618 = vmatpush1.msra.mxu0 0.0
    %5619 = vmatprep.subr.mxu0 0.0
    %5620 = vmatpush1.msra.mxu0 0.0
    %5621 = vmatprep.subr.mxu0 0.0
    %5622 = vmatpush1.msra.mxu0 0.0
    %5623 = vmatprep.subr.mxu0 0.0
    %5624 = vmatpush1.msra.mxu0 0.0
    %5625 = vmatprep.subr.mxu0 0.0
    %5626 = vmatpush1.msra.mxu0 0.0
    %5627 = vmatprep.subr.mxu0 0.0
    %5628 = vmatpush1.msra.mxu0 0.0
    %5629 = vmatprep.subr.mxu0 0.0
    %5630 = vmatpush1.msra.mxu0 0.0
    %5631 = vmatprep.subr.mxu0 0.0
    %5632 = vmatpush1.msra.mxu0 0.0
    %5633 = vmatprep.subr.mxu0 0.0
    %5634 = vmatpush1.msra.mxu0 0.0
    %5635 = vmatprep.subr.mxu0 0.0
    %5636 = vmatpush1.msra.mxu0 0.0
    %5637 = vmatprep.subr.mxu0 0.0
    %5638 = vmatpush1.msra.mxu0 0.0
    %5639 = vmatprep.subr.mxu0 0.0
    %5640 = vmatpush1.msra.mxu0 0.0
    %5641 = vmatprep.subr.mxu0 0.0
    %5642 = vmatpush1.msra.mxu0 0.0
    %5643 = vmatprep.subr.mxu0 0.0
    %5644 = vmatpush1.msra.mxu0 0.0
    %5645 = vmatprep.subr.mxu0 0.0
    %5646 = vmatpush1.msra.mxu0 0.0
    %5647 = vmatprep.subr.mxu0 0.0
    %5648 = vmatpush1.msra.mxu0 0.0
    %5649 = vmatprep.subr.mxu0 0.0
    %5650 = vmatpush1.msra.mxu0 0.0
    %5651 = vmatprep.subr.mxu0 0.0
    %5652 = vmatpush1.msra.mxu0 0.0
    %5653 = vmatprep.subr.mxu0 0.0
    %5654 = vmatpush1.msra.mxu0 0.0
    %5655 = vmatprep.subr.mxu0 0.0
    %5656 = vmatpush1.msra.mxu0 0.0
    %5657 = vmatprep.subr.mxu0 0.0
    %5658 = vmatpush1.msra.mxu0 0.0
    %5659 = vmatprep.subr.mxu0 0.0
    %5660 = vmatpush1.msra.mxu0 0.0
    %5661 = vmatprep.subr.mxu0 0.0
    %5662 = vmatpush1.msra.mxu0 0.0
    %5663 = vmatprep.subr.mxu0 0.0
    %5664 = vmatpush1.msra.mxu0 0.0
    %5665 = vmatprep.subr.mxu0 0.0
    %5666 = vmatpush1.msra.mxu0 0.0
    %5667 = vmatprep.mubr.f32.mxu0 0.0
    %5668 = vmatmul.mubr.f32.gmra.mrb[0].mxu0 %v5598
    %v5669 = vpop.f32.mrb[0].mxu0
    %v5670 = vadd.f32 0.0, %v5669
    %v5671 = vpop.f32.mrb[0].mxu0
    %5672 = vmatprep.mubr.f32.mxu0 0.0
    %5673 = vmatmul.mubr.f32.gmra.mrb[0].mxu0 %v5601
    %v5674 = vpop.f32.mrb[0].mxu0
    %v5675 = vadd.f32 0.0, %v5674
    %v5676 = vpop.f32.mrb[0].mxu0
    %5677 = vdwg.mxu0
    %5678 = vrot.lane.b32.xlu0 %v5463, 120
    %v5679 = vpop.permute.xlu0 %5678
    %5680 = vrot.lane.b32.xlu0 %v5468, 120
    %v5681 = vpop.permute.xlu0 %5680
    %5682 = vrot.lane.b32.xlu0 %v5463, 88
    %v5683 = vpop.permute.xlu0 %5682
    %5684 = vrot.lane.b32.xlu0 %v5468, 88
    %v5685 = vpop.permute.xlu0 %5684
    %v5686 = vsel %vm374, %v5679, 0
    %v5688 = vsel %vm374, %v5681, 0
    %v5690 = vsel %vm374, %v5683, 0
    %v5692 = vsel %vm374, %v5685, 0
    %5694 = vmatprep.subr.mxu0 0.0
    %5695 = vmatpush1.xpose.msra.mxu0 %v5690
    %5696 = vmatprep.subr.mxu0 0.0
    %5697 = vmatpush1.xpose.msra.mxu0 %v5692
    %5698 = vmatprep.subr.mxu0 0.0
    %5699 = vmatpush1.xpose.msra.mxu0 0.0
    %5700 = vmatprep.subr.mxu0 0.0
    %5701 = vmatpush1.xpose.msra.mxu0 0.0
    %5702 = vmatprep.subr.mxu0 0.0
    %5703 = vmatpush1.xpose.msra.mxu0 0.0
    %5704 = vmatprep.subr.mxu0 0.0
    %5705 = vmatpush1.xpose.msra.mxu0 0.0
    %5706 = vmatprep.subr.mxu0 0.0
    %5707 = vmatpush1.xpose.msra.mxu0 0.0
    %5708 = vmatprep.subr.mxu0 0.0
    %5709 = vmatpush1.xpose.msra.mxu0 0.0
    %5710 = vmatprep.subr.mxu0 0.0
    %5711 = vmatpush1.xpose.msra.mxu0 0.0
    %5712 = vmatprep.subr.mxu0 0.0
    %5713 = vmatpush1.xpose.msra.mxu0 0.0
    %5714 = vmatprep.subr.mxu0 0.0
    %5715 = vmatpush1.xpose.msra.mxu0 0.0
    %5716 = vmatprep.subr.mxu0 0.0
    %5717 = vmatpush1.xpose.msra.mxu0 0.0
    %5718 = vmatprep.subr.mxu0 0.0
    %5719 = vmatpush1.xpose.msra.mxu0 0.0
    %5720 = vmatprep.subr.mxu0 0.0
    %5721 = vmatpush1.xpose.msra.mxu0 0.0
    %5722 = vmatprep.subr.mxu0 0.0
    %5723 = vmatpush1.xpose.msra.mxu0 0.0
    %5724 = vmatprep.subr.mxu0 0.0
    %5725 = vmatpush1.xpose.msra.mxu0 0.0
    %5726 = vmatprep.subr.mxu0 0.0
    %5727 = vmatpush1.xpose.msra.mxu0 0.0
    %5728 = vmatprep.subr.mxu0 0.0
    %5729 = vmatpush1.xpose.msra.mxu0 0.0
    %5730 = vmatprep.subr.mxu0 0.0
    %5731 = vmatpush1.xpose.msra.mxu0 0.0
    %5732 = vmatprep.subr.mxu0 0.0
    %5733 = vmatpush1.xpose.msra.mxu0 0.0
    %5734 = vmatprep.subr.mxu0 0.0
    %5735 = vmatpush1.xpose.msra.mxu0 0.0
    %5736 = vmatprep.subr.mxu0 0.0
    %5737 = vmatpush1.xpose.msra.mxu0 0.0
    %5738 = vmatprep.subr.mxu0 0.0
    %5739 = vmatpush1.xpose.msra.mxu0 0.0
    %5740 = vmatprep.subr.mxu0 0.0
    %5741 = vmatpush1.xpose.msra.mxu0 0.0
    %5742 = vmatprep.subr.mxu0 0.0
    %5743 = vmatpush1.xpose.msra.mxu0 0.0
    %5744 = vmatprep.subr.mxu0 0.0
    %5745 = vmatpush1.xpose.msra.mxu0 0.0
    %5746 = vmatprep.subr.mxu0 0.0
    %5747 = vmatpush1.xpose.msra.mxu0 0.0
    %5748 = vmatprep.subr.mxu0 0.0
    %5749 = vmatpush1.xpose.msra.mxu0 0.0
    %5750 = vmatprep.subr.mxu0 0.0
    %5751 = vmatpush1.xpose.msra.mxu0 0.0
    %5752 = vmatprep.subr.mxu0 0.0
    %5753 = vmatpush1.xpose.msra.mxu0 0.0
    %5754 = vmatprep.subr.mxu0 0.0
    %5755 = vmatpush1.xpose.msra.mxu0 0.0
    %5756 = vmatprep.subr.mxu0 0.0
    %5757 = vmatpush1.xpose.msra.mxu0 0.0
    %5758 = vmatprep.mubr.f32.mxu0 0.0
    %5759 = vmatmul.mubr.f32.gmra.mrb[0].mxu0 %v5686
    %v5760 = vpop.f32.mrb[0].mxu0
    %v5761 = vadd.f32 0.0, %v5760
    %v5762 = vpop.f32.mrb[0].mxu0
    %5763 = vmatprep.mubr.f32.mxu0 0.0
    %5764 = vmatmul.mubr.f32.gmra.mrb[0].mxu0 %v5688
    %v5765 = vpop.f32.mrb[0].mxu0
    %v5766 = vadd.f32 0.0, %v5765
    %v5767 = vpop.f32.mrb[0].mxu0
    %5768 = vdwg.mxu0
    %v5769 = vmul.f32 %v5761, 0.35355338
    %v5770 = vmul.f32 %v5766, 0.35355338
    %v5771 = vadd.f32 %v5769, %v271
    %v5772 = vadd.f32 %v5770, %v272
    %v5773 = vsel %vm462, %v5771, -inf
    %5774 = vmax.xlane.f32.xlu0 %v5773
    %v5775 = vpop.xlane.xlu0 %5774
    %v5776 = vsel %vm462, %v5772, -inf
    %5777 = vmax.xlane.f32.xlu0 %v5776
    %v5778 = vpop.xlane.xlu0 %5777
    %v5779 = vsub.f32 %v5771, %v5775
    %v5780 = vsub.f32 %v5772, %v5778
    %v5781 = vmul.f32 %v5779, 1.442695
    %v5782 = vpow.pop %v5781
    %v5783 = vmul.f32 %v5780, 1.442695
    %v5784 = vpow.pop %v5783
    %v5785 = vsel %vm462, %v5782, 0.0
    %5786 = vadd.xlane.f32.xlu0 %v5785
    %v5787 = vpop.xlane.xlu0 %5786
    %v5788 = vsel %vm462, %v5784, 0.0
    %5789 = vadd.xlane.f32.xlu0 %v5788
    %v5790 = vpop.xlane.xlu0 %5789
    %v5791 = vrcp.pop %v5787
    %v5792 = vrcp.pop %v5790
    %v5793 = vmul.f32 %v5782, %v5791
    %v5794 = vmul.f32 %v5784, %v5792
    %5795 = vrot.lane.b32.xlu0 %v5463, 56
    %v5796 = vpop.permute.xlu0 %5795
    %5797 = vrot.lane.b32.xlu0 %v5468, 56
    %v5798 = vpop.permute.xlu0 %5797
    %v5802 = vsel %vm462, %v5793, 0
    %v5805 = vsel %vm462, %v5794, 0
    %5807 = vmatprep.subr.mxu0 0.0
    %5808 = vmatpush1.msra.mxu0 %v5796
    %5809 = vmatprep.subr.mxu0 0.0
    %5810 = vmatpush1.msra.mxu0 %v5798
    %5811 = vmatprep.subr.mxu0 0.0
    %5812 = vmatpush1.msra.mxu0 0.0
    %5813 = vmatprep.subr.mxu0 0.0
    %5814 = vmatpush1.msra.mxu0 0.0
    %5815 = vmatprep.subr.mxu0 0.0
    %5816 = vmatpush1.msra.mxu0 0.0
    %5817 = vmatprep.subr.mxu0 0.0
    %5818 = vmatpush1.msra.mxu0 0.0
    %5819 = vmatprep.subr.mxu0 0.0
    %5820 = vmatpush1.msra.mxu0 0.0
    %5821 = vmatprep.subr.mxu0 0.0
    %5822 = vmatpush1.msra.mxu0 0.0
    %5823 = vmatprep.subr.mxu0 0.0
    %5824 = vmatpush1.msra.mxu0 0.0
    %5825 = vmatprep.subr.mxu0 0.0
    %5826 = vmatpush1.msra.mxu0 0.0
    %5827 = vmatprep.subr.mxu0 0.0
    %5828 = vmatpush1.msra.mxu0 0.0
    %5829 = vmatprep.subr.mxu0 0.0
    %5830 = vmatpush1.msra.mxu0 0.0
    %5831 = vmatprep.subr.mxu0 0.0
    %5832 = vmatpush1.msra.mxu0 0.0
    %5833 = vmatprep.subr.mxu0 0.0
    %5834 = vmatpush1.msra.mxu0 0.0
    %5835 = vmatprep.subr.mxu0 0.0
    %5836 = vmatpush1.msra.mxu0 0.0
    %5837 = vmatprep.subr.mxu0 0.0
    %5838 = vmatpush1.msra.mxu0 0.0
    %5839 = vmatprep.subr.mxu0 0.0
    %5840 = vmatpush1.msra.mxu0 0.0
    %5841 = vmatprep.subr.mxu0 0.0
    %5842 = vmatpush1.msra.mxu0 0.0
    %5843 = vmatprep.subr.mxu0 0.0
    %5844 = vmatpush1.msra.mxu0 0.0
    %5845 = vmatprep.subr.mxu0 0.0
    %5846 = vmatpush1.msra.mxu0 0.0
    %5847 = vmatprep.subr.mxu0 0.0
    %5848 = vmatpush1.msra.mxu0 0.0
    %5849 = vmatprep.subr.mxu0 0.0
    %5850 = vmatpush1.msra.mxu0 0.0
    %5851 = vmatprep.subr.mxu0 0.0
    %5852 = vmatpush1.msra.mxu0 0.0
    %5853 = vmatprep.subr.mxu0 0.0
    %5854 = vmatpush1.msra.mxu0 0.0
    %5855 = vmatprep.subr.mxu0 0.0
    %5856 = vmatpush1.msra.mxu0 0.0
    %5857 = vmatprep.subr.mxu0 0.0
    %5858 = vmatpush1.msra.mxu0 0.0
    %5859 = vmatprep.subr.mxu0 0.0
    %5860 = vmatpush1.msra.mxu0 0.0
    %5861 = vmatprep.subr.mxu0 0.0
    %5862 = vmatpush1.msra.mxu0 0.0
    %5863 = vmatprep.subr.mxu0 0.0
    %5864 = vmatpush1.msra.mxu0 0.0
    %5865 = vmatprep.subr.mxu0 0.0
    %5866 = vmatpush1.msra.mxu0 0.0
    %5867 = vmatprep.subr.mxu0 0.0
    %5868 = vmatpush1.msra.mxu0 0.0
    %5869 = vmatprep.subr.mxu0 0.0
    %5870 = vmatpush1.msra.mxu0 0.0
    %5871 = vmatprep.mubr.f32.mxu0 0.0
    %5872 = vmatmul.mubr.f32.gmra.mrb[0].mxu0 %v5802
    %v5873 = vpop.f32.mrb[0].mxu0
    %v5874 = vadd.f32 0.0, %v5873
    %v5875 = vpop.f32.mrb[0].mxu0
    %5876 = vmatprep.mubr.f32.mxu0 0.0
    %5877 = vmatmul.mubr.f32.gmra.mrb[0].mxu0 %v5805
    %v5878 = vpop.f32.mrb[0].mxu0
    %v5879 = vadd.f32 0.0, %v5878
    %v5880 = vpop.f32.mrb[0].mxu0
    %5881 = vdwg.mxu0
    %5882 = vrot.lane.b32.xlu0 %v5463, 112
    %v5883 = vpop.permute.xlu0 %5882
    %5884 = vrot.lane.b32.xlu0 %v5468, 112
    %v5885 = vpop.permute.xlu0 %5884
    %5886 = vrot.lane.b32.xlu0 %v5463, 80
    %v5887 = vpop.permute.xlu0 %5886
    %5888 = vrot.lane.b32.xlu0 %v5468, 80
    %v5889 = vpop.permute.xlu0 %5888
    %v5890 = vsel %vm374, %v5883, 0
    %v5892 = vsel %vm374, %v5885, 0
    %v5894 = vsel %vm374, %v5887, 0
    %v5896 = vsel %vm374, %v5889, 0
    %5898 = vmatprep.subr.mxu0 0.0
    %5899 = vmatpush1.xpose.msra.mxu0 %v5894
    %5900 = vmatprep.subr.mxu0 0.0
    %5901 = vmatpush1.xpose.msra.mxu0 %v5896
    %5902 = vmatprep.subr.mxu0 0.0
    %5903 = vmatpush1.xpose.msra.mxu0 0.0
    %5904 = vmatprep.subr.mxu0 0.0
    %5905 = vmatpush1.xpose.msra.mxu0 0.0
    %5906 = vmatprep.subr.mxu0 0.0
    %5907 = vmatpush1.xpose.msra.mxu0 0.0
    %5908 = vmatprep.subr.mxu0 0.0
    %5909 = vmatpush1.xpose.msra.mxu0 0.0
    %5910 = vmatprep.subr.mxu0 0.0
    %5911 = vmatpush1.xpose.msra.mxu0 0.0
    %5912 = vmatprep.subr.mxu0 0.0
    %5913 = vmatpush1.xpose.msra.mxu0 0.0
    %5914 = vmatprep.subr.mxu0 0.0
    %5915 = vmatpush1.xpose.msra.mxu0 0.0
    %5916 = vmatprep.subr.mxu0 0.0
    %5917 = vmatpush1.xpose.msra.mxu0 0.0
    %5918 = vmatprep.subr.mxu0 0.0
    %5919 = vmatpush1.xpose.msra.mxu0 0.0
    %5920 = vmatprep.subr.mxu0 0.0
    %5921 = vmatpush1.xpose.msra.mxu0 0.0
    %5922 = vmatprep.subr.mxu0 0.0
    %5923 = vmatpush1.xpose.msra.mxu0 0.0
    %5924 = vmatprep.subr.mxu0 0.0
    %5925 = vmatpush1.xpose.msra.mxu0 0.0
    %5926 = vmatprep.subr.mxu0 0.0
    %5927 = vmatpush1.xpose.msra.mxu0 0.0
    %5928 = vmatprep.subr.mxu0 0.0
    %5929 = vmatpush1.xpose.msra.mxu0 0.0
    %5930 = vmatprep.subr.mxu0 0.0
    %5931 = vmatpush1.xpose.msra.mxu0 0.0
    %5932 = vmatprep.subr.mxu0 0.0
    %5933 = vmatpush1.xpose.msra.mxu0 0.0
    %5934 = vmatprep.subr.mxu0 0.0
    %5935 = vmatpush1.xpose.msra.mxu0 0.0
    %5936 = vmatprep.subr.mxu0 0.0
    %5937 = vmatpush1.xpose.msra.mxu0 0.0
    %5938 = vmatprep.subr.mxu0 0.0
    %5939 = vmatpush1.xpose.msra.mxu0 0.0
    %5940 = vmatprep.subr.mxu0 0.0
    %5941 = vmatpush1.xpose.msra.mxu0 0.0
    %5942 = vmatprep.subr.mxu0 0.0
    %5943 = vmatpush1.xpose.msra.mxu0 0.0
    %5944 = vmatprep.subr.mxu0 0.0
    %5945 = vmatpush1.xpose.msra.mxu0 0.0
    %5946 = vmatprep.subr.mxu0 0.0
    %5947 = vmatpush1.xpose.msra.mxu0 0.0
    %5948 = vmatprep.subr.mxu0 0.0
    %5949 = vmatpush1.xpose.msra.mxu0 0.0
    %5950 = vmatprep.subr.mxu0 0.0
    %5951 = vmatpush1.xpose.msra.mxu0 0.0
    %5952 = vmatprep.subr.mxu0 0.0
    %5953 = vmatpush1.xpose.msra.mxu0 0.0
    %5954 = vmatprep.subr.mxu0 0.0
    %5955 = vmatpush1.xpose.msra.mxu0 0.0
    %5956 = vmatprep.subr.mxu0 0.0
    %5957 = vmatpush1.xpose.msra.mxu0 0.0
    %5958 = vmatprep.subr.mxu0 0.0
    %5959 = vmatpush1.xpose.msra.mxu0 0.0
    %5960 = vmatprep.subr.mxu0 0.0
    %5961 = vmatpush1.xpose.msra.mxu0 0.0
    %5962 = vmatprep.mubr.f32.mxu0 0.0
    %5963 = vmatmul.mubr.f32.gmra.mrb[0].mxu0 %v5890
    %v5964 = vpop.f32.mrb[0].mxu0
    %v5965 = vadd.f32 0.0, %v5964
    %v5966 = vpop.f32.mrb[0].mxu0
    %5967 = vmatprep.mubr.f32.mxu0 0.0
    %5968 = vmatmul.mubr.f32.gmra.mrb[0].mxu0 %v5892
    %v5969 = vpop.f32.mrb[0].mxu0
    %v5970 = vadd.f32 0.0, %v5969
    %v5971 = vpop.f32.mrb[0].mxu0
    %5972 = vdwg.mxu0
    %v5973 = vmul.f32 %v5965, 0.35355338
    %v5974 = vmul.f32 %v5970, 0.35355338
    %v5975 = vadd.f32 %v5973, %v271
    %v5976 = vadd.f32 %v5974, %v272
    %v5977 = vsel %vm462, %v5975, -inf
    %5978 = vmax.xlane.f32.xlu0 %v5977
    %v5979 = vpop.xlane.xlu0 %5978
    %v5980 = vsel %vm462, %v5976, -inf
    %5981 = vmax.xlane.f32.xlu0 %v5980
    %v5982 = vpop.xlane.xlu0 %5981
    %v5983 = vsub.f32 %v5975, %v5979
    %v5984 = vsub.f32 %v5976, %v5982
    %v5985 = vmul.f32 %v5983, 1.442695
    %v5986 = vpow.pop %v5985
    %v5987 = vmul.f32 %v5984, 1.442695
    %v5988 = vpow.pop %v5987
    %v5989 = vsel %vm462, %v5986, 0.0
    %5990 = vadd.xlane.f32.xlu0 %v5989
    %v5991 = vpop.xlane.xlu0 %5990
    %v5992 = vsel %vm462, %v5988, 0.0
    %5993 = vadd.xlane.f32.xlu0 %v5992
    %v5994 = vpop.xlane.xlu0 %5993
    %v5995 = vrcp.pop %v5991
    %v5996 = vrcp.pop %v5994
    %v5997 = vmul.f32 %v5986, %v5995
    %v5998 = vmul.f32 %v5988, %v5996
    %5999 = vrot.lane.b32.xlu0 %v5463, 48
    %v6000 = vpop.permute.xlu0 %5999
    %6001 = vrot.lane.b32.xlu0 %v5468, 48
    %v6002 = vpop.permute.xlu0 %6001
    %v6006 = vsel %vm462, %v5997, 0
    %v6009 = vsel %vm462, %v5998, 0
    %6011 = vmatprep.subr.mxu0 0.0
    %6012 = vmatpush1.msra.mxu0 %v6000
    %6013 = vmatprep.subr.mxu0 0.0
    %6014 = vmatpush1.msra.mxu0 %v6002
    %6015 = vmatprep.subr.mxu0 0.0
    %6016 = vmatpush1.msra.mxu0 0.0
    %6017 = vmatprep.subr.mxu0 0.0
    %6018 = vmatpush1.msra.mxu0 0.0
    %6019 = vmatprep.subr.mxu0 0.0
    %6020 = vmatpush1.msra.mxu0 0.0
    %6021 = vmatprep.subr.mxu0 0.0
    %6022 = vmatpush1.msra.mxu0 0.0
    %6023 = vmatprep.subr.mxu0 0.0
    %6024 = vmatpush1.msra.mxu0 0.0
    %6025 = vmatprep.subr.mxu0 0.0
    %6026 = vmatpush1.msra.mxu0 0.0
    %6027 = vmatprep.subr.mxu0 0.0
    %6028 = vmatpush1.msra.mxu0 0.0
    %6029 = vmatprep.subr.mxu0 0.0
    %6030 = vmatpush1.msra.mxu0 0.0
    %6031 = vmatprep.subr.mxu0 0.0
    %6032 = vmatpush1.msra.mxu0 0.0
    %6033 = vmatprep.subr.mxu0 0.0
    %6034 = vmatpush1.msra.mxu0 0.0
    %6035 = vmatprep.subr.mxu0 0.0
    %6036 = vmatpush1.msra.mxu0 0.0
    %6037 = vmatprep.subr.mxu0 0.0
    %6038 = vmatpush1.msra.mxu0 0.0
    %6039 = vmatprep.subr.mxu0 0.0
    %6040 = vmatpush1.msra.mxu0 0.0
    %6041 = vmatprep.subr.mxu0 0.0
    %6042 = vmatpush1.msra.mxu0 0.0
    %6043 = vmatprep.subr.mxu0 0.0
    %6044 = vmatpush1.msra.mxu0 0.0
    %6045 = vmatprep.subr.mxu0 0.0
    %6046 = vmatpush1.msra.mxu0 0.0
    %6047 = vmatprep.subr.mxu0 0.0
    %6048 = vmatpush1.msra.mxu0 0.0
    %6049 = vmatprep.subr.mxu0 0.0
    %6050 = vmatpush1.msra.mxu0 0.0
    %6051 = vmatprep.subr.mxu0 0.0
    %6052 = vmatpush1.msra.mxu0 0.0
    %6053 = vmatprep.subr.mxu0 0.0
    %6054 = vmatpush1.msra.mxu0 0.0
    %6055 = vmatprep.subr.mxu0 0.0
    %6056 = vmatpush1.msra.mxu0 0.0
    %6057 = vmatprep.subr.mxu0 0.0
    %6058 = vmatpush1.msra.mxu0 0.0
    %6059 = vmatprep.subr.mxu0 0.0
    %6060 = vmatpush1.msra.mxu0 0.0
    %6061 = vmatprep.subr.mxu0 0.0
    %6062 = vmatpush1.msra.mxu0 0.0
    %6063 = vmatprep.subr.mxu0 0.0
    %6064 = vmatpush1.msra.mxu0 0.0
    %6065 = vmatprep.subr.mxu0 0.0
    %6066 = vmatpush1.msra.mxu0 0.0
    %6067 = vmatprep.subr.mxu0 0.0
    %6068 = vmatpush1.msra.mxu0 0.0
    %6069 = vmatprep.subr.mxu0 0.0
    %6070 = vmatpush1.msra.mxu0 0.0
    %6071 = vmatprep.subr.mxu0 0.0
    %6072 = vmatpush1.msra.mxu0 0.0
    %6073 = vmatprep.subr.mxu0 0.0
    %6074 = vmatpush1.msra.mxu0 0.0
    %6075 = vmatprep.mubr.f32.mxu0 0.0
    %6076 = vmatmul.mubr.f32.gmra.mrb[0].mxu0 %v6006
    %v6077 = vpop.f32.mrb[0].mxu0
    %v6078 = vadd.f32 0.0, %v6077
    %v6079 = vpop.f32.mrb[0].mxu0
    %6080 = vmatprep.mubr.f32.mxu0 0.0
    %6081 = vmatmul.mubr.f32.gmra.mrb[0].mxu0 %v6009
    %v6082 = vpop.f32.mrb[0].mxu0
    %v6083 = vadd.f32 0.0, %v6082
    %v6084 = vpop.f32.mrb[0].mxu0
    %6085 = vdwg.mxu0
    %6086 = vrot.lane.b32.xlu0 %v5463, 104
    %v6087 = vpop.permute.xlu0 %6086
    %6088 = vrot.lane.b32.xlu0 %v5468, 104
    %v6089 = vpop.permute.xlu0 %6088
    %6090 = vrot.lane.b32.xlu0 %v5463, 72
    %v6091 = vpop.permute.xlu0 %6090
    %6092 = vrot.lane.b32.xlu0 %v5468, 72
    %v6093 = vpop.permute.xlu0 %6092
    %v6094 = vsel %vm374, %v6087, 0
    %v6096 = vsel %vm374, %v6089, 0
    %v6098 = vsel %vm374, %v6091, 0
    %v6100 = vsel %vm374, %v6093, 0
    %6102 = vmatprep.subr.mxu0 0.0
    %6103 = vmatpush1.xpose.msra.mxu0 %v6098
    %6104 = vmatprep.subr.mxu0 0.0
    %6105 = vmatpush1.xpose.msra.mxu0 %v6100
    %6106 = vmatprep.subr.mxu0 0.0
    %6107 = vmatpush1.xpose.msra.mxu0 0.0
    %6108 = vmatprep.subr.mxu0 0.0
    %6109 = vmatpush1.xpose.msra.mxu0 0.0
    %6110 = vmatprep.subr.mxu0 0.0
    %6111 = vmatpush1.xpose.msra.mxu0 0.0
    %6112 = vmatprep.subr.mxu0 0.0
    %6113 = vmatpush1.xpose.msra.mxu0 0.0
    %6114 = vmatprep.subr.mxu0 0.0
    %6115 = vmatpush1.xpose.msra.mxu0 0.0
    %6116 = vmatprep.subr.mxu0 0.0
    %6117 = vmatpush1.xpose.msra.mxu0 0.0
    %6118 = vmatprep.subr.mxu0 0.0
    %6119 = vmatpush1.xpose.msra.mxu0 0.0
    %6120 = vmatprep.subr.mxu0 0.0
    %6121 = vmatpush1.xpose.msra.mxu0 0.0
    %6122 = vmatprep.subr.mxu0 0.0
    %6123 = vmatpush1.xpose.msra.mxu0 0.0
    %6124 = vmatprep.subr.mxu0 0.0
    %6125 = vmatpush1.xpose.msra.mxu0 0.0
    %6126 = vmatprep.subr.mxu0 0.0
    %6127 = vmatpush1.xpose.msra.mxu0 0.0
    %6128 = vmatprep.subr.mxu0 0.0
    %6129 = vmatpush1.xpose.msra.mxu0 0.0
    %6130 = vmatprep.subr.mxu0 0.0
    %6131 = vmatpush1.xpose.msra.mxu0 0.0
    %6132 = vmatprep.subr.mxu0 0.0
    %6133 = vmatpush1.xpose.msra.mxu0 0.0
    %6134 = vmatprep.subr.mxu0 0.0
    %6135 = vmatpush1.xpose.msra.mxu0 0.0
    %6136 = vmatprep.subr.mxu0 0.0
    %6137 = vmatpush1.xpose.msra.mxu0 0.0
    %6138 = vmatprep.subr.mxu0 0.0
    %6139 = vmatpush1.xpose.msra.mxu0 0.0
    %6140 = vmatprep.subr.mxu0 0.0
    %6141 = vmatpush1.xpose.msra.mxu0 0.0
    %6142 = vmatprep.subr.mxu0 0.0
    %6143 = vmatpush1.xpose.msra.mxu0 0.0
    %6144 = vmatprep.subr.mxu0 0.0
    %6145 = vmatpush1.xpose.msra.mxu0 0.0
    %6146 = vmatprep.subr.mxu0 0.0
    %6147 = vmatpush1.xpose.msra.mxu0 0.0
    %6148 = vmatprep.subr.mxu0 0.0
    %6149 = vmatpush1.xpose.msra.mxu0 0.0
    %6150 = vmatprep.subr.mxu0 0.0
    %6151 = vmatpush1.xpose.msra.mxu0 0.0
    %6152 = vmatprep.subr.mxu0 0.0
    %6153 = vmatpush1.xpose.msra.mxu0 0.0
    %6154 = vmatprep.subr.mxu0 0.0
    %6155 = vmatpush1.xpose.msra.mxu0 0.0
    %6156 = vmatprep.subr.mxu0 0.0
    %6157 = vmatpush1.xpose.msra.mxu0 0.0
    %6158 = vmatprep.subr.mxu0 0.0
    %6159 = vmatpush1.xpose.msra.mxu0 0.0
    %6160 = vmatprep.subr.mxu0 0.0
    %6161 = vmatpush1.xpose.msra.mxu0 0.0
    %6162 = vmatprep.subr.mxu0 0.0
    %6163 = vmatpush1.xpose.msra.mxu0 0.0
    %6164 = vmatprep.subr.mxu0 0.0
    %6165 = vmatpush1.xpose.msra.mxu0 0.0
    %6166 = vmatprep.mubr.f32.mxu0 0.0
    %6167 = vmatmul.mubr.f32.gmra.mrb[0].mxu0 %v6094
    %v6168 = vpop.f32.mrb[0].mxu0
    %v6169 = vadd.f32 0.0, %v6168
    %v6170 = vpop.f32.mrb[0].mxu0
    %6171 = vmatprep.mubr.f32.mxu0 0.0
    %6172 = vmatmul.mubr.f32.gmra.mrb[0].mxu0 %v6096
    %v6173 = vpop.f32.mrb[0].mxu0
    %v6174 = vadd.f32 0.0, %v6173
    %v6175 = vpop.f32.mrb[0].mxu0
    %6176 = vdwg.mxu0
    %v6177 = vmul.f32 %v6169, 0.35355338
    %v6178 = vmul.f32 %v6174, 0.35355338
    %v6179 = vadd.f32 %v6177, %v271
    %v6180 = vadd.f32 %v6178, %v272
    %v6181 = vsel %vm462, %v6179, -inf
    %6182 = vmax.xlane.f32.xlu0 %v6181
    %v6183 = vpop.xlane.xlu0 %6182
    %v6184 = vsel %vm462, %v6180, -inf
    %6185 = vmax.xlane.f32.xlu0 %v6184
    %v6186 = vpop.xlane.xlu0 %6185
    %v6187 = vsub.f32 %v6179, %v6183
    %v6188 = vsub.f32 %v6180, %v6186
    %v6189 = vmul.f32 %v6187, 1.442695
    %v6190 = vpow.pop %v6189
    %v6191 = vmul.f32 %v6188, 1.442695
    %v6192 = vpow.pop %v6191
    %v6193 = vsel %vm462, %v6190, 0.0
    %6194 = vadd.xlane.f32.xlu0 %v6193
    %v6195 = vpop.xlane.xlu0 %6194
    %v6196 = vsel %vm462, %v6192, 0.0
    %6197 = vadd.xlane.f32.xlu0 %v6196
    %v6198 = vpop.xlane.xlu0 %6197
    %v6199 = vrcp.pop %v6195
    %v6200 = vrcp.pop %v6198
    %v6201 = vmul.f32 %v6190, %v6199
    %v6202 = vmul.f32 %v6192, %v6200
    %6203 = vrot.lane.b32.xlu0 %v5463, 40
    %v6204 = vpop.permute.xlu0 %6203
    %6205 = vrot.lane.b32.xlu0 %v5468, 40
    %v6206 = vpop.permute.xlu0 %6205
    %v6210 = vsel %vm462, %v6201, 0
    %v6213 = vsel %vm462, %v6202, 0
    %6215 = vmatprep.subr.mxu0 0.0
    %6216 = vmatpush1.msra.mxu0 %v6204
    %6217 = vmatprep.subr.mxu0 0.0
    %6218 = vmatpush1.msra.mxu0 %v6206
    %6219 = vmatprep.subr.mxu0 0.0
    %6220 = vmatpush1.msra.mxu0 0.0
    %6221 = vmatprep.subr.mxu0 0.0
    %6222 = vmatpush1.msra.mxu0 0.0
    %6223 = vmatprep.subr.mxu0 0.0
    %6224 = vmatpush1.msra.mxu0 0.0
    %6225 = vmatprep.subr.mxu0 0.0
    %6226 = vmatpush1.msra.mxu0 0.0
    %6227 = vmatprep.subr.mxu0 0.0
    %6228 = vmatpush1.msra.mxu0 0.0
    %6229 = vmatprep.subr.mxu0 0.0
    %6230 = vmatpush1.msra.mxu0 0.0
    %6231 = vmatprep.subr.mxu0 0.0
    %6232 = vmatpush1.msra.mxu0 0.0
    %6233 = vmatprep.subr.mxu0 0.0
    %6234 = vmatpush1.msra.mxu0 0.0
    %6235 = vmatprep.subr.mxu0 0.0
    %6236 = vmatpush1.msra.mxu0 0.0
    %6237 = vmatprep.subr.mxu0 0.0
    %6238 = vmatpush1.msra.mxu0 0.0
    %6239 = vmatprep.subr.mxu0 0.0
    %6240 = vmatpush1.msra.mxu0 0.0
    %6241 = vmatprep.subr.mxu0 0.0
    %6242 = vmatpush1.msra.mxu0 0.0
    %6243 = vmatprep.subr.mxu0 0.0
    %6244 = vmatpush1.msra.mxu0 0.0
    %6245 = vmatprep.subr.mxu0 0.0
    %6246 = vmatpush1.msra.mxu0 0.0
    %6247 = vmatprep.subr.mxu0 0.0
    %6248 = vmatpush1.msra.mxu0 0.0
    %6249 = vmatprep.subr.mxu0 0.0
    %6250 = vmatpush1.msra.mxu0 0.0
    %6251 = vmatprep.subr.mxu0 0.0
    %6252 = vmatpush1.msra.mxu0 0.0
    %6253 = vmatprep.subr.mxu0 0.0
    %6254 = vmatpush1.msra.mxu0 0.0
    %6255 = vmatprep.subr.mxu0 0.0
    %6256 = vmatpush1.msra.mxu0 0.0
    %6257 = vmatprep.subr.mxu0 0.0
    %6258 = vmatpush1.msra.mxu0 0.0
    %6259 = vmatprep.subr.mxu0 0.0
    %6260 = vmatpush1.msra.mxu0 0.0
    %6261 = vmatprep.subr.mxu0 0.0
    %6262 = vmatpush1.msra.mxu0 0.0
    %6263 = vmatprep.subr.mxu0 0.0
    %6264 = vmatpush1.msra.mxu0 0.0
    %6265 = vmatprep.subr.mxu0 0.0
    %6266 = vmatpush1.msra.mxu0 0.0
    %6267 = vmatprep.subr.mxu0 0.0
    %6268 = vmatpush1.msra.mxu0 0.0
    %6269 = vmatprep.subr.mxu0 0.0
    %6270 = vmatpush1.msra.mxu0 0.0
    %6271 = vmatprep.subr.mxu0 0.0
    %6272 = vmatpush1.msra.mxu0 0.0
    %6273 = vmatprep.subr.mxu0 0.0
    %6274 = vmatpush1.msra.mxu0 0.0
    %6275 = vmatprep.subr.mxu0 0.0
    %6276 = vmatpush1.msra.mxu0 0.0
    %6277 = vmatprep.subr.mxu0 0.0
    %6278 = vmatpush1.msra.mxu0 0.0
    %6279 = vmatprep.mubr.f32.mxu0 0.0
    %6280 = vmatmul.mubr.f32.gmra.mrb[0].mxu0 %v6210
    %v6281 = vpop.f32.mrb[0].mxu0
    %v6282 = vadd.f32 0.0, %v6281
    %v6283 = vpop.f32.mrb[0].mxu0
    %6284 = vmatprep.mubr.f32.mxu0 0.0
    %6285 = vmatmul.mubr.f32.gmra.mrb[0].mxu0 %v6213
    %v6286 = vpop.f32.mrb[0].mxu0
    %v6287 = vadd.f32 0.0, %v6286
    %v6288 = vpop.f32.mrb[0].mxu0
    %6289 = vdwg.mxu0
    %6292 = vrot.lane.b32.xlu0 %v5874, 8
    %v6293 = vpop.permute.xlu0 %6292
    %6294 = vrot.lane.b32.xlu0 %v5879, 8
    %v6295 = vpop.permute.xlu0 %6294
    %6300 = vrot.lane.b32.xlu0 %v6078, 16
    %v6301 = vpop.permute.xlu0 %6300
    %6302 = vrot.lane.b32.xlu0 %v6083, 16
    %v6303 = vpop.permute.xlu0 %6302
    %6308 = vrot.lane.b32.xlu0 %v6282, 24
    %v6309 = vpop.permute.xlu0 %6308
    %6310 = vrot.lane.b32.xlu0 %v6287, 24
    %v6311 = vpop.permute.xlu0 %6310
    %v6314 = vsel %vm374, %v5670, %v6293
    %v6315 = vsel %vm374, %v5675, %v6295
    %v6316 = vsel %vm462, %v6314, %v6301
    %v6317 = vsel %vm462, %v6315, %v6303
    %v6318 = vsel %vm1212, %v6316, %v6309
    %v6319 = vsel %vm1212, %v6317, %v6311
    %v6320 = vlaneseq
    %v6321 = vshrl.u32 %v6320, 7
    %v6322 = vsub.s32 0, %v6321
    %v6323 = vrot.slane %v5475, %v6322
    %v6325 = vsel %vm166, %v6318, 0
    %v6328 = vsel %vm166, %v6319, 0
    %6330 = vmatprep.subr.mxu0 0.0
    %6331 = vmatpush1.msra.mxu0 %v5471
    %6332 = vmatprep.subr.mxu0 0.0
    %6333 = vmatpush1.msra.mxu0 %v5472
    %6334 = vmatprep.subr.mxu0 0.0
    %6335 = vmatpush1.msra.mxu0 %v5473
    %6336 = vmatprep.subr.mxu0 0.0
    %6337 = vmatpush1.msra.mxu0 %v5474
    %6338 = vmatprep.subr.mxu0 0.0
    %6339 = vmatpush1.msra.mxu0 0.0
    %6340 = vmatprep.subr.mxu0 0.0
    %6341 = vmatpush1.msra.mxu0 0.0
    %6342 = vmatprep.subr.mxu0 0.0
    %6343 = vmatpush1.msra.mxu0 0.0
    %6344 = vmatprep.subr.mxu0 0.0
    %6345 = vmatpush1.msra.mxu0 0.0
    %6346 = vmatprep.subr.mxu0 0.0
    %6347 = vmatpush1.msra.mxu0 0.0
    %6348 = vmatprep.subr.mxu0 0.0
    %6349 = vmatpush1.msra.mxu0 0.0
    %6350 = vmatprep.subr.mxu0 0.0
    %6351 = vmatpush1.msra.mxu0 0.0
    %6352 = vmatprep.subr.mxu0 0.0
    %6353 = vmatpush1.msra.mxu0 0.0
    %6354 = vmatprep.subr.mxu0 0.0
    %6355 = vmatpush1.msra.mxu0 0.0
    %6356 = vmatprep.subr.mxu0 0.0
    %6357 = vmatpush1.msra.mxu0 0.0
    %6358 = vmatprep.subr.mxu0 0.0
    %6359 = vmatpush1.msra.mxu0 0.0
    %6360 = vmatprep.subr.mxu0 0.0
    %6361 = vmatpush1.msra.mxu0 0.0
    %6362 = vmatprep.subr.mxu0 0.0
    %6363 = vmatpush1.msra.mxu0 0.0
    %6364 = vmatprep.subr.mxu0 0.0
    %6365 = vmatpush1.msra.mxu0 0.0
    %6366 = vmatprep.subr.mxu0 0.0
    %6367 = vmatpush1.msra.mxu0 0.0
    %6368 = vmatprep.subr.mxu0 0.0
    %6369 = vmatpush1.msra.mxu0 0.0
    %6370 = vmatprep.subr.mxu0 0.0
    %6371 = vmatpush1.msra.mxu0 0.0
    %6372 = vmatprep.subr.mxu0 0.0
    %6373 = vmatpush1.msra.mxu0 0.0
    %6374 = vmatprep.subr.mxu0 0.0
    %6375 = vmatpush1.msra.mxu0 0.0
    %6376 = vmatprep.subr.mxu0 0.0
    %6377 = vmatpush1.msra.mxu0 0.0
    %6378 = vmatprep.subr.mxu0 0.0
    %6379 = vmatpush1.msra.mxu0 0.0
    %6380 = vmatprep.subr.mxu0 0.0
    %6381 = vmatpush1.msra.mxu0 0.0
    %6382 = vmatprep.subr.mxu0 0.0
    %6383 = vmatpush1.msra.mxu0 0.0
    %6384 = vmatprep.subr.mxu0 0.0
    %6385 = vmatpush1.msra.mxu0 0.0
    %6386 = vmatprep.subr.mxu0 0.0
    %6387 = vmatpush1.msra.mxu0 0.0
    %6388 = vmatprep.subr.mxu0 0.0
    %6389 = vmatpush1.msra.mxu0 0.0
    %6390 = vmatprep.subr.mxu0 0.0
    %6391 = vmatpush1.msra.mxu0 0.0
    %6392 = vmatprep.subr.mxu0 0.0
    %6393 = vmatpush1.msra.mxu0 0.0
    %6394 = vmatprep.mubr.f32.mxu0 0.0
    %6395 = vmatmul.mubr.f32.gmra.mrb[0].mxu0 %v6325
    %v6396 = vpop.f32.mrb[0].mxu0
    %v6397 = vadd.f32 %v6323, %v6396
    %v6398 = vpop.f32.mrb[0].mxu0
    %6399 = vmatprep.mubr.f32.mxu0 0.0
    %6400 = vmatmul.mubr.f32.gmra.mrb[0].mxu0 %v6328
    %v6401 = vpop.f32.mrb[0].mxu0
    %v6402 = vadd.f32 %v6323, %v6401
    %v6403 = vpop.f32.mrb[0].mxu0
    %6404 = vdwg.mxu0
    %v6405 = vadd.f32 %v6397, %v5379
    %v6406 = vadd.f32 %v6402, %v5380
    %v6407 = vld [vmem:[#allocation2 + $0x3c8] sm:$0x3]
    %v6408 = vsel %vm166, %v6405, 0.0
    %6409 = vadd.xlane.f32.xlu0 %v6408
    %v6410 = vpop.xlane.xlu0 %6409
    %v6411 = vsel %vm166, %v6406, 0.0
    %6412 = vadd.xlane.f32.xlu0 %v6411
    %v6413 = vpop.xlane.xlu0 %6412
    %v6414 = vmul.f32 %v6405, %v6405
    %v6415 = vmul.f32 %v6406, %v6406
    %v6416 = vsel %vm166, %v6414, 0.0
    %6417 = vadd.xlane.f32.xlu0 %v6416
    %v6418 = vpop.xlane.xlu0 %6417
    %v6419 = vsel %vm166, %v6415, 0.0
    %6420 = vadd.xlane.f32.xlu0 %v6419
    %v6421 = vpop.xlane.xlu0 %6420
    %v6422 = vmul.f32 %v6410, 0.03125
    %v6423 = vmul.f32 %v6413, 0.03125
    %v6424 = vmul.f32 %v6418, 0.03125
    %v6425 = vmul.f32 %v6421, 0.03125
    %v6426 = vmul.f32 %v6422, %v6422
    %v6427 = vmul.f32 %v6423, %v6423
    %v6428 = vsub.f32 %v6424, %v6426
    %v6429 = vsub.f32 %v6425, %v6427
    %v6430 = vsub.f32 %v6405, %v6422
    %v6431 = vsub.f32 %v6406, %v6423
    %v6432 = vadd.f32 %v6428, 1e-05
    %v6433 = vadd.f32 %v6429, 1e-05
    %v6434 = vrsqrt.pop %v6432
    %v6435 = vrsqrt.pop %v6433
    %v6436 = vmul.f32 %v6430, %v6434
    %v6437 = vmul.f32 %v6431, %v6435
    %v6438 = vlaneseq
    %v6439 = vshrl.u32 %v6438, 7
    %v6440 = vsub.s32 0, %v6439
    %v6441 = vrot.slane %v6407, %v6440
    %v6442 = vmul.f32 %v6436, %v6441
    %v6443 = vmul.f32 %v6437, %v6441
    %v6444 = vlaneseq
    %v6445 = vshrl.u32 %v6444, 7
    %v6446 = vsub.s32 1, %v6445
    %v6447 = vrot.slane %v6407, %v6446
    %v6448 = vadd.f32 %v6442, %v6447
    %v6449 = vadd.f32 %v6443, %v6447
    %v6450 = vld [vmem:[#allocation2 + $0x3d0] sm:$0xff]
    %v6451 = vld [vmem:[#allocation2 + $0x3d8] sm:$0xff]
    %v6452 = vld [vmem:[#allocation2 + $0x3e0] sm:$0xff]
    %v6453 = vld [vmem:[#allocation2 + $0x3e8] sm:$0xff]
    %v6454 = vld [vmem:[#allocation2 + $0x3f0] sm:$0x1]
    %v6455 = vlaneseq
    %v6456 = vshrl.u32 %v6455, 7
    %v6457 = vsub.s32 0, %v6456
    %v6458 = vrot.slane %v6454, %v6457
    %v6460 = vsel %vm166, %v6448, 0
    %v6463 = vsel %vm166, %v6449, 0
    %6465 = vmatprep.subr.mxu0 0.0
    %6466 = vmatpush1.msra.mxu0 %v6450
    %6467 = vmatprep.subr.mxu0 0.0
    %6468 = vmatpush1.msra.mxu0 %v6451
    %6469 = vmatprep.subr.mxu0 0.0
    %6470 = vmatpush1.msra.mxu0 %v6452
    %6471 = vmatprep.subr.mxu0 0.0
    %6472 = vmatpush1.msra.mxu0 %v6453
    %6473 = vmatprep.subr.mxu0 0.0
    %6474 = vmatpush1.msra.mxu0 0.0
    %6475 = vmatprep.subr.mxu0 0.0
    %6476 = vmatpush1.msra.mxu0 0.0
    %6477 = vmatprep.subr.mxu0 0.0
    %6478 = vmatpush1.msra.mxu0 0.0
    %6479 = vmatprep.subr.mxu0 0.0
    %6480 = vmatpush1.msra.mxu0 0.0
    %6481 = vmatprep.subr.mxu0 0.0
    %6482 = vmatpush1.msra.mxu0 0.0
    %6483 = vmatprep.subr.mxu0 0.0
    %6484 = vmatpush1.msra.mxu0 0.0
    %6485 = vmatprep.subr.mxu0 0.0
    %6486 = vmatpush1.msra.mxu0 0.0
    %6487 = vmatprep.subr.mxu0 0.0
    %6488 = vmatpush1.msra.mxu0 0.0
    %6489 = vmatprep.subr.mxu0 0.0
    %6490 = vmatpush1.msra.mxu0 0.0
    %6491 = vmatprep.subr.mxu0 0.0
    %6492 = vmatpush1.msra.mxu0 0.0
    %6493 = vmatprep.subr.mxu0 0.0
    %6494 = vmatpush1.msra.mxu0 0.0
    %6495 = vmatprep.subr.mxu0 0.0
    %6496 = vmatpush1.msra.mxu0 0.0
    %6497 = vmatprep.subr.mxu0 0.0
    %6498 = vmatpush1.msra.mxu0 0.0
    %6499 = vmatprep.subr.mxu0 0.0
    %6500 = vmatpush1.msra.mxu0 0.0
    %6501 = vmatprep.subr.mxu0 0.0
    %6502 = vmatpush1.msra.mxu0 0.0
    %6503 = vmatprep.subr.mxu0 0.0
    %6504 = vmatpush1.msra.mxu0 0.0
    %6505 = vmatprep.subr.mxu0 0.0
    %6506 = vmatpush1.msra.mxu0 0.0
    %6507 = vmatprep.subr.mxu0 0.0
    %6508 = vmatpush1.msra.mxu0 0.0
    %6509 = vmatprep.subr.mxu0 0.0
    %6510 = vmatpush1.msra.mxu0 0.0
    %6511 = vmatprep.subr.mxu0 0.0
    %6512 = vmatpush1.msra.mxu0 0.0
    %6513 = vmatprep.subr.mxu0 0.0
    %6514 = vmatpush1.msra.mxu0 0.0
    %6515 = vmatprep.subr.mxu0 0.0
    %6516 = vmatpush1.msra.mxu0 0.0
    %6517 = vmatprep.subr.mxu0 0.0
    %6518 = vmatpush1.msra.mxu0 0.0
    %6519 = vmatprep.subr.mxu0 0.0
    %6520 = vmatpush1.msra.mxu0 0.0
    %6521 = vmatprep.subr.mxu0 0.0
    %6522 = vmatpush1.msra.mxu0 0.0
    %6523 = vmatprep.subr.mxu0 0.0
    %6524 = vmatpush1.msra.mxu0 0.0
    %6525 = vmatprep.subr.mxu0 0.0
    %6526 = vmatpush1.msra.mxu0 0.0
    %6527 = vmatprep.subr.mxu0 0.0
    %6528 = vmatpush1.msra.mxu0 0.0
    %6529 = vmatprep.mubr.f32.mxu0 0.0
    %6530 = vmatmul.mubr.f32.gmra.mrb[0].mxu0 %v6460
    %v6531 = vpop.f32.mrb[0].mxu0
    %v6532 = vadd.f32 %v6458, %v6531
    %v6533 = vpop.f32.mrb[0].mxu0
    %6534 = vmatprep.mubr.f32.mxu0 0.0
    %6535 = vmatmul.mubr.f32.gmra.mrb[0].mxu0 %v6463
    %v6536 = vpop.f32.mrb[0].mxu0
    %v6537 = vadd.f32 %v6458, %v6536
    %v6538 = vpop.f32.mrb[0].mxu0
    %6539 = vdwg.mxu0
    %v6540 = vld [vmem:[#allocation2 + $0x3f8] sm:$0xff]
    %v6541 = vld [vmem:[#allocation2 + $0x400] sm:$0xff]
    %v6542 = vld [vmem:[#allocation2 + $0x408] sm:$0xff]
    %v6543 = vld [vmem:[#allocation2 + $0x410] sm:$0xff]
    %v6544 = vld [vmem:[#allocation2 + $0x418] sm:$0x1]
    %v6545 = vlaneseq
    %v6546 = vshrl.u32 %v6545, 7
    %v6547 = vsub.s32 0, %v6546
    %v6548 = vrot.slane %v6544, %v6547
    %6549 = vmatprep.subr.mxu0 0.0
    %6550 = vmatpush1.msra.mxu0 %v6540
    %6551 = vmatprep.subr.mxu0 0.0
    %6552 = vmatpush1.msra.mxu0 %v6541
    %6553 = vmatprep.subr.mxu0 0.0
    %6554 = vmatpush1.msra.mxu0 %v6542
    %6555 = vmatprep.subr.mxu0 0.0
    %6556 = vmatpush1.msra.mxu0 %v6543
    %6557 = vmatprep.subr.mxu0 0.0
    %6558 = vmatpush1.msra.mxu0 0.0
    %6559 = vmatprep.subr.mxu0 0.0
    %6560 = vmatpush1.msra.mxu0 0.0
    %6561 = vmatprep.subr.mxu0 0.0
    %6562 = vmatpush1.msra.mxu0 0.0
    %6563 = vmatprep.subr.mxu0 0.0
    %6564 = vmatpush1.msra.mxu0 0.0
    %6565 = vmatprep.subr.mxu0 0.0
    %6566 = vmatpush1.msra.mxu0 0.0
    %6567 = vmatprep.subr.mxu0 0.0
    %6568 = vmatpush1.msra.mxu0 0.0
    %6569 = vmatprep.subr.mxu0 0.0
    %6570 = vmatpush1.msra.mxu0 0.0
    %6571 = vmatprep.subr.mxu0 0.0
    %6572 = vmatpush1.msra.mxu0 0.0
    %6573 = vmatprep.subr.mxu0 0.0
    %6574 = vmatpush1.msra.mxu0 0.0
    %6575 = vmatprep.subr.mxu0 0.0
    %6576 = vmatpush1.msra.mxu0 0.0
    %6577 = vmatprep.subr.mxu0 0.0
    %6578 = vmatpush1.msra.mxu0 0.0
    %6579 = vmatprep.subr.mxu0 0.0
    %6580 = vmatpush1.msra.mxu0 0.0
    %6581 = vmatprep.subr.mxu0 0.0
    %6582 = vmatpush1.msra.mxu0 0.0
    %6583 = vmatprep.subr.mxu0 0.0
    %6584 = vmatpush1.msra.mxu0 0.0
    %6585 = vmatprep.subr.mxu0 0.0
    %6586 = vmatpush1.msra.mxu0 0.0
    %6587 = vmatprep.subr.mxu0 0.0
    %6588 = vmatpush1.msra.mxu0 0.0
    %6589 = vmatprep.subr.mxu0 0.0
    %6590 = vmatpush1.msra.mxu0 0.0
    %6591 = vmatprep.subr.mxu0 0.0
    %6592 = vmatpush1.msra.mxu0 0.0
    %6593 = vmatprep.subr.mxu0 0.0
    %6594 = vmatpush1.msra.mxu0 0.0
    %6595 = vmatprep.subr.mxu0 0.0
    %6596 = vmatpush1.msra.mxu0 0.0
    %6597 = vmatprep.subr.mxu0 0.0
    %6598 = vmatpush1.msra.mxu0 0.0
    %6599 = vmatprep.subr.mxu0 0.0
    %6600 = vmatpush1.msra.mxu0 0.0
    %6601 = vmatprep.subr.mxu0 0.0
    %6602 = vmatpush1.msra.mxu0 0.0
    %6603 = vmatprep.subr.mxu0 0.0
    %6604 = vmatpush1.msra.mxu0 0.0
    %6605 = vmatprep.subr.mxu0 0.0
    %6606 = vmatpush1.msra.mxu0 0.0
    %6607 = vmatprep.subr.mxu0 0.0
    %6608 = vmatpush1.msra.mxu0 0.0
    %6609 = vmatprep.subr.mxu0 0.0
    %6610 = vmatpush1.msra.mxu0 0.0
    %6611 = vmatprep.subr.mxu0 0.0
    %6612 = vmatpush1.msra.mxu0 0.0
    %6613 = vmatprep.mubr.f32.mxu0 0.0
    %6614 = vmatmul.mubr.f32.gmra.mrb[0].mxu0 %v4077
    %v6615 = vpop.f32.mrb[0].mxu0
    %v6616 = vadd.f32 %v6548, %v6615
    %v6617 = vpop.f32.mrb[0].mxu0
    %6618 = vmatprep.mubr.f32.mxu0 0.0
    %6619 = vmatmul.mubr.f32.gmra.mrb[0].mxu0 %v4080
    %v6620 = vpop.f32.mrb[0].mxu0
    %v6621 = vadd.f32 %v6548, %v6620
    %v6622 = vpop.f32.mrb[0].mxu0
    %6623 = vdwg.mxu0
    %v6624 = vld [vmem:[#allocation2 + $0x420] sm:$0xff]
    %v6625 = vld [vmem:[#allocation2 + $0x428] sm:$0xff]
    %v6626 = vld [vmem:[#allocation2 + $0x430] sm:$0xff]
    %v6627 = vld [vmem:[#allocation2 + $0x438] sm:$0xff]
    %v6628 = vld [vmem:[#allocation2 + $0x440] sm:$0x1]
    %v6630 = vsel %vm374, %v6532, 0
    %v6633 = vsel %vm374, %v6537, 0
    %v6636 = vsel %vm374, %v6616, 0
    %v6639 = vsel %vm374, %v6621, 0
    %6641 = vmatprep.subr.mxu0 0.0
    %6642 = vmatpush1.xpose.msra.mxu0 %v6636
    %6643 = vmatprep.subr.mxu0 0.0
    %6644 = vmatpush1.xpose.msra.mxu0 %v6639
    %6645 = vmatprep.subr.mxu0 0.0
    %6646 = vmatpush1.xpose.msra.mxu0 0.0
    %6647 = vmatprep.subr.mxu0 0.0
    %6648 = vmatpush1.xpose.msra.mxu0 0.0
    %6649 = vmatprep.subr.mxu0 0.0
    %6650 = vmatpush1.xpose.msra.mxu0 0.0
    %6651 = vmatprep.subr.mxu0 0.0
    %6652 = vmatpush1.xpose.msra.mxu0 0.0
    %6653 = vmatprep.subr.mxu0 0.0
    %6654 = vmatpush1.xpose.msra.mxu0 0.0
    %6655 = vmatprep.subr.mxu0 0.0
    %6656 = vmatpush1.xpose.msra.mxu0 0.0
    %6657 = vmatprep.subr.mxu0 0.0
    %6658 = vmatpush1.xpose.msra.mxu0 0.0
    %6659 = vmatprep.subr.mxu0 0.0
    %6660 = vmatpush1.xpose.msra.mxu0 0.0
    %6661 = vmatprep.subr.mxu0 0.0
    %6662 = vmatpush1.xpose.msra.mxu0 0.0
    %6663 = vmatprep.subr.mxu0 0.0
    %6664 = vmatpush1.xpose.msra.mxu0 0.0
    %6665 = vmatprep.subr.mxu0 0.0
    %6666 = vmatpush1.xpose.msra.mxu0 0.0
    %6667 = vmatprep.subr.mxu0 0.0
    %6668 = vmatpush1.xpose.msra.mxu0 0.0
    %6669 = vmatprep.subr.mxu0 0.0
    %6670 = vmatpush1.xpose.msra.mxu0 0.0
    %6671 = vmatprep.subr.mxu0 0.0
    %6672 = vmatpush1.xpose.msra.mxu0 0.0
    %6673 = vmatprep.subr.mxu0 0.0
    %6674 = vmatpush1.xpose.msra.mxu0 0.0
    %6675 = vmatprep.subr.mxu0 0.0
    %6676 = vmatpush1.xpose.msra.mxu0 0.0
    %6677 = vmatprep.subr.mxu0 0.0
    %6678 = vmatpush1.xpose.msra.mxu0 0.0
    %6679 = vmatprep.subr.mxu0 0.0
    %6680 = vmatpush1.xpose.msra.mxu0 0.0
    %6681 = vmatprep.subr.mxu0 0.0
    %6682 = vmatpush1.xpose.msra.mxu0 0.0
    %6683 = vmatprep.subr.mxu0 0.0
    %6684 = vmatpush1.xpose.msra.mxu0 0.0
    %6685 = vmatprep.subr.mxu0 0.0
    %6686 = vmatpush1.xpose.msra.mxu0 0.0
    %6687 = vmatprep.subr.mxu0 0.0
    %6688 = vmatpush1.xpose.msra.mxu0 0.0
    %6689 = vmatprep.subr.mxu0 0.0
    %6690 = vmatpush1.xpose.msra.mxu0 0.0
    %6691 = vmatprep.subr.mxu0 0.0
    %6692 = vmatpush1.xpose.msra.mxu0 0.0
    %6693 = vmatprep.subr.mxu0 0.0
    %6694 = vmatpush1.xpose.msra.mxu0 0.0
    %6695 = vmatprep.subr.mxu0 0.0
    %6696 = vmatpush1.xpose.msra.mxu0 0.0
    %6697 = vmatprep.subr.mxu0 0.0
    %6698 = vmatpush1.xpose.msra.mxu0 0.0
    %6699 = vmatprep.subr.mxu0 0.0
    %6700 = vmatpush1.xpose.msra.mxu0 0.0
    %6701 = vmatprep.subr.mxu0 0.0
    %6702 = vmatpush1.xpose.msra.mxu0 0.0
    %6703 = vmatprep.subr.mxu0 0.0
    %6704 = vmatpush1.xpose.msra.mxu0 0.0
    %6705 = vmatprep.mubr.f32.mxu0 0.0
    %6706 = vmatmul.mubr.f32.gmra.mrb[0].mxu0 %v6630
    %v6707 = vpop.f32.mrb[0].mxu0
    %v6708 = vadd.f32 0.0, %v6707
    %v6709 = vpop.f32.mrb[0].mxu0
    %6710 = vmatprep.mubr.f32.mxu0 0.0
    %6711 = vmatmul.mubr.f32.gmra.mrb[0].mxu0 %v6633
    %v6712 = vpop.f32.mrb[0].mxu0
    %v6713 = vadd.f32 0.0, %v6712
    %v6714 = vpop.f32.mrb[0].mxu0
    %6715 = vdwg.mxu0
    %v6716 = vmul.f32 %v6708, 0.35355338
    %v6717 = vmul.f32 %v6713, 0.35355338
    %v6718 = vadd.f32 %v6716, %v262
    %v6719 = vadd.f32 %v6717, %v263
    %v6720 = vsel %vm462, %v6718, -inf
    %6721 = vmax.xlane.f32.xlu0 %v6720
    %v6722 = vpop.xlane.xlu0 %6721
    %v6723 = vsel %vm462, %v6719, -inf
    %6724 = vmax.xlane.f32.xlu0 %v6723
    %v6725 = vpop.xlane.xlu0 %6724
    %v6726 = vsub.f32 %v6718, %v6722
    %v6727 = vsub.f32 %v6719, %v6725
    %v6728 = vmul.f32 %v6726, 1.442695
    %v6729 = vpow.pop %v6728
    %v6730 = vmul.f32 %v6727, 1.442695
    %v6731 = vpow.pop %v6730
    %v6732 = vsel %vm462, %v6729, 0.0
    %6733 = vadd.xlane.f32.xlu0 %v6732
    %v6734 = vpop.xlane.xlu0 %6733
    %v6735 = vsel %vm462, %v6731, 0.0
    %6736 = vadd.xlane.f32.xlu0 %v6735
    %v6737 = vpop.xlane.xlu0 %6736
    %v6738 = vrcp.pop %v6734
    %v6739 = vrcp.pop %v6737
    %v6740 = vmul.f32 %v6729, %v6738
    %v6741 = vmul.f32 %v6731, %v6739
    %6742 = vrot.lane.b32.xlu0 %v6616, 96
    %v6743 = vpop.permute.xlu0 %6742
    %6744 = vrot.lane.b32.xlu0 %v6621, 96
    %v6745 = vpop.permute.xlu0 %6744
    %v6749 = vsel %vm462, %v6740, 0
    %v6752 = vsel %vm462, %v6741, 0
    %6754 = vmatprep.subr.mxu0 0.0
    %6755 = vmatpush1.msra.mxu0 %v6743
    %6756 = vmatprep.subr.mxu0 0.0
    %6757 = vmatpush1.msra.mxu0 %v6745
    %6758 = vmatprep.subr.mxu0 0.0
    %6759 = vmatpush1.msra.mxu0 0.0
    %6760 = vmatprep.subr.mxu0 0.0
    %6761 = vmatpush1.msra.mxu0 0.0
    %6762 = vmatprep.subr.mxu0 0.0
    %6763 = vmatpush1.msra.mxu0 0.0
    %6764 = vmatprep.subr.mxu0 0.0
    %6765 = vmatpush1.msra.mxu0 0.0
    %6766 = vmatprep.subr.mxu0 0.0
    %6767 = vmatpush1.msra.mxu0 0.0
    %6768 = vmatprep.subr.mxu0 0.0
    %6769 = vmatpush1.msra.mxu0 0.0
    %6770 = vmatprep.subr.mxu0 0.0
    %6771 = vmatpush1.msra.mxu0 0.0
    %6772 = vmatprep.subr.mxu0 0.0
    %6773 = vmatpush1.msra.mxu0 0.0
    %6774 = vmatprep.subr.mxu0 0.0
    %6775 = vmatpush1.msra.mxu0 0.0
    %6776 = vmatprep.subr.mxu0 0.0
    %6777 = vmatpush1.msra.mxu0 0.0
    %6778 = vmatprep.subr.mxu0 0.0
    %6779 = vmatpush1.msra.mxu0 0.0
    %6780 = vmatprep.subr.mxu0 0.0
    %6781 = vmatpush1.msra.mxu0 0.0
    %6782 = vmatprep.subr.mxu0 0.0
    %6783 = vmatpush1.msra.mxu0 0.0
    %6784 = vmatprep.subr.mxu0 0.0
    %6785 = vmatpush1.msra.mxu0 0.0
    %6786 = vmatprep.subr.mxu0 0.0
    %6787 = vmatpush1.msra.mxu0 0.0
    %6788 = vmatprep.subr.mxu0 0.0
    %6789 = vmatpush1.msra.mxu0 0.0
    %6790 = vmatprep.subr.mxu0 0.0
    %6791 = vmatpush1.msra.mxu0 0.0
    %6792 = vmatprep.subr.mxu0 0.0
    %6793 = vmatpush1.msra.mxu0 0.0
    %6794 = vmatprep.subr.mxu0 0.0
    %6795 = vmatpush1.msra.mxu0 0.0
    %6796 = vmatprep.subr.mxu0 0.0
    %6797 = vmatpush1.msra.mxu0 0.0
    %6798 = vmatprep.subr.mxu0 0.0
    %6799 = vmatpush1.msra.mxu0 0.0
    %6800 = vmatprep.subr.mxu0 0.0
    %6801 = vmatpush1.msra.mxu0 0.0
    %6802 = vmatprep.subr.mxu0 0.0
    %6803 = vmatpush1.msra.mxu0 0.0
    %6804 = vmatprep.subr.mxu0 0.0
    %6805 = vmatpush1.msra.mxu0 0.0
    %6806 = vmatprep.subr.mxu0 0.0
    %6807 = vmatpush1.msra.mxu0 0.0
    %6808 = vmatprep.subr.mxu0 0.0
    %6809 = vmatpush1.msra.mxu0 0.0
    %6810 = vmatprep.subr.mxu0 0.0
    %6811 = vmatpush1.msra.mxu0 0.0
    %6812 = vmatprep.subr.mxu0 0.0
    %6813 = vmatpush1.msra.mxu0 0.0
    %6814 = vmatprep.subr.mxu0 0.0
    %6815 = vmatpush1.msra.mxu0 0.0
    %6816 = vmatprep.subr.mxu0 0.0
    %6817 = vmatpush1.msra.mxu0 0.0
    %6818 = vmatprep.mubr.f32.mxu0 0.0
    %6819 = vmatmul.mubr.f32.gmra.mrb[0].mxu0 %v6749
    %v6820 = vpop.f32.mrb[0].mxu0
    %v6821 = vadd.f32 0.0, %v6820
    %v6822 = vpop.f32.mrb[0].mxu0
    %6823 = vmatprep.mubr.f32.mxu0 0.0
    %6824 = vmatmul.mubr.f32.gmra.mrb[0].mxu0 %v6752
    %v6825 = vpop.f32.mrb[0].mxu0
    %v6826 = vadd.f32 0.0, %v6825
    %v6827 = vpop.f32.mrb[0].mxu0
    %6828 = vdwg.mxu0
    %6829 = vrot.lane.b32.xlu0 %v6532, 120
    %v6830 = vpop.permute.xlu0 %6829
    %6831 = vrot.lane.b32.xlu0 %v6537, 120
    %v6832 = vpop.permute.xlu0 %6831
    %6833 = vrot.lane.b32.xlu0 %v6616, 120
    %v6834 = vpop.permute.xlu0 %6833
    %6835 = vrot.lane.b32.xlu0 %v6621, 120
    %v6836 = vpop.permute.xlu0 %6835
    %v6837 = vsel %vm374, %v6830, 0
    %v6839 = vsel %vm374, %v6832, 0
    %v6841 = vsel %vm374, %v6834, 0
    %v6843 = vsel %vm374, %v6836, 0
    %6845 = vmatprep.subr.mxu0 0.0
    %6846 = vmatpush1.xpose.msra.mxu0 %v6841
    %6847 = vmatprep.subr.mxu0 0.0
    %6848 = vmatpush1.xpose.msra.mxu0 %v6843
    %6849 = vmatprep.subr.mxu0 0.0
    %6850 = vmatpush1.xpose.msra.mxu0 0.0
    %6851 = vmatprep.subr.mxu0 0.0
    %6852 = vmatpush1.xpose.msra.mxu0 0.0
    %6853 = vmatprep.subr.mxu0 0.0
    %6854 = vmatpush1.xpose.msra.mxu0 0.0
    %6855 = vmatprep.subr.mxu0 0.0
    %6856 = vmatpush1.xpose.msra.mxu0 0.0
    %6857 = vmatprep.subr.mxu0 0.0
    %6858 = vmatpush1.xpose.msra.mxu0 0.0
    %6859 = vmatprep.subr.mxu0 0.0
    %6860 = vmatpush1.xpose.msra.mxu0 0.0
    %6861 = vmatprep.subr.mxu0 0.0
    %6862 = vmatpush1.xpose.msra.mxu0 0.0
    %6863 = vmatprep.subr.mxu0 0.0
    %6864 = vmatpush1.xpose.msra.mxu0 0.0
    %6865 = vmatprep.subr.mxu0 0.0
    %6866 = vmatpush1.xpose.msra.mxu0 0.0
    %6867 = vmatprep.subr.mxu0 0.0
    %6868 = vmatpush1.xpose.msra.mxu0 0.0
    %6869 = vmatprep.subr.mxu0 0.0
    %6870 = vmatpush1.xpose.msra.mxu0 0.0
    %6871 = vmatprep.subr.mxu0 0.0
    %6872 = vmatpush1.xpose.msra.mxu0 0.0
    %6873 = vmatprep.subr.mxu0 0.0
    %6874 = vmatpush1.xpose.msra.mxu0 0.0
    %6875 = vmatprep.subr.mxu0 0.0
    %6876 = vmatpush1.xpose.msra.mxu0 0.0
    %6877 = vmatprep.subr.mxu0 0.0
    %6878 = vmatpush1.xpose.msra.mxu0 0.0
    %6879 = vmatprep.subr.mxu0 0.0
    %6880 = vmatpush1.xpose.msra.mxu0 0.0
    %6881 = vmatprep.subr.mxu0 0.0
    %6882 = vmatpush1.xpose.msra.mxu0 0.0
    %6883 = vmatprep.subr.mxu0 0.0
    %6884 = vmatpush1.xpose.msra.mxu0 0.0
    %6885 = vmatprep.subr.mxu0 0.0
    %6886 = vmatpush1.xpose.msra.mxu0 0.0
    %6887 = vmatprep.subr.mxu0 0.0
    %6888 = vmatpush1.xpose.msra.mxu0 0.0
    %6889 = vmatprep.subr.mxu0 0.0
    %6890 = vmatpush1.xpose.msra.mxu0 0.0
    %6891 = vmatprep.subr.mxu0 0.0
    %6892 = vmatpush1.xpose.msra.mxu0 0.0
    %6893 = vmatprep.subr.mxu0 0.0
    %6894 = vmatpush1.xpose.msra.mxu0 0.0
    %6895 = vmatprep.subr.mxu0 0.0
    %6896 = vmatpush1.xpose.msra.mxu0 0.0
    %6897 = vmatprep.subr.mxu0 0.0
    %6898 = vmatpush1.xpose.msra.mxu0 0.0
    %6899 = vmatprep.subr.mxu0 0.0
    %6900 = vmatpush1.xpose.msra.mxu0 0.0
    %6901 = vmatprep.subr.mxu0 0.0
    %6902 = vmatpush1.xpose.msra.mxu0 0.0
    %6903 = vmatprep.subr.mxu0 0.0
    %6904 = vmatpush1.xpose.msra.mxu0 0.0
    %6905 = vmatprep.subr.mxu0 0.0
    %6906 = vmatpush1.xpose.msra.mxu0 0.0
    %6907 = vmatprep.subr.mxu0 0.0
    %6908 = vmatpush1.xpose.msra.mxu0 0.0
    %6909 = vmatprep.mubr.f32.mxu0 0.0
    %6910 = vmatmul.mubr.f32.gmra.mrb[0].mxu0 %v6837
    %v6911 = vpop.f32.mrb[0].mxu0
    %v6912 = vadd.f32 0.0, %v6911
    %v6913 = vpop.f32.mrb[0].mxu0
    %6914 = vmatprep.mubr.f32.mxu0 0.0
    %6915 = vmatmul.mubr.f32.gmra.mrb[0].mxu0 %v6839
    %v6916 = vpop.f32.mrb[0].mxu0
    %v6917 = vadd.f32 0.0, %v6916
    %v6918 = vpop.f32.mrb[0].mxu0
    %6919 = vdwg.mxu0
    %v6920 = vmul.f32 %v6912, 0.35355338
    %v6921 = vmul.f32 %v6917, 0.35355338
    %v6922 = vadd.f32 %v6920, %v262
    %v6923 = vadd.f32 %v6921, %v263
    %v6924 = vsel %vm462, %v6922, -inf
    %6925 = vmax.xlane.f32.xlu0 %v6924
    %v6926 = vpop.xlane.xlu0 %6925
    %v6927 = vsel %vm462, %v6923, -inf
    %6928 = vmax.xlane.f32.xlu0 %v6927
    %v6929 = vpop.xlane.xlu0 %6928
    %v6930 = vsub.f32 %v6922, %v6926
    %v6931 = vsub.f32 %v6923, %v6929
    %v6932 = vmul.f32 %v6930, 1.442695
    %v6933 = vpow.pop %v6932
    %v6934 = vmul.f32 %v6931, 1.442695
    %v6935 = vpow.pop %v6934
    %v6936 = vsel %vm462, %v6933, 0.0
    %6937 = vadd.xlane.f32.xlu0 %v6936
    %v6938 = vpop.xlane.xlu0 %6937
    %v6939 = vsel %vm462, %v6935, 0.0
    %6940 = vadd.xlane.f32.xlu0 %v6939
    %v6941 = vpop.xlane.xlu0 %6940
    %v6942 = vrcp.pop %v6938
    %v6943 = vrcp.pop %v6941
    %v6944 = vmul.f32 %v6933, %v6942
    %v6945 = vmul.f32 %v6935, %v6943
    %6946 = vrot.lane.b32.xlu0 %v6616, 88
    %v6947 = vpop.permute.xlu0 %6946
    %6948 = vrot.lane.b32.xlu0 %v6621, 88
    %v6949 = vpop.permute.xlu0 %6948
    %v6953 = vsel %vm462, %v6944, 0
    %v6956 = vsel %vm462, %v6945, 0
    %6958 = vmatprep.subr.mxu0 0.0
    %6959 = vmatpush1.msra.mxu0 %v6947
    %6960 = vmatprep.subr.mxu0 0.0
    %6961 = vmatpush1.msra.mxu0 %v6949
    %6962 = vmatprep.subr.mxu0 0.0
    %6963 = vmatpush1.msra.mxu0 0.0
    %6964 = vmatprep.subr.mxu0 0.0
    %6965 = vmatpush1.msra.mxu0 0.0
    %6966 = vmatprep.subr.mxu0 0.0
    %6967 = vmatpush1.msra.mxu0 0.0
    %6968 = vmatprep.subr.mxu0 0.0
    %6969 = vmatpush1.msra.mxu0 0.0
    %6970 = vmatprep.subr.mxu0 0.0
    %6971 = vmatpush1.msra.mxu0 0.0
    %6972 = vmatprep.subr.mxu0 0.0
    %6973 = vmatpush1.msra.mxu0 0.0
    %6974 = vmatprep.subr.mxu0 0.0
    %6975 = vmatpush1.msra.mxu0 0.0
    %6976 = vmatprep.subr.mxu0 0.0
    %6977 = vmatpush1.msra.mxu0 0.0
    %6978 = vmatprep.subr.mxu0 0.0
    %6979 = vmatpush1.msra.mxu0 0.0
    %6980 = vmatprep.subr.mxu0 0.0
    %6981 = vmatpush1.msra.mxu0 0.0
    %6982 = vmatprep.subr.mxu0 0.0
    %6983 = vmatpush1.msra.mxu0 0.0
    %6984 = vmatprep.subr.mxu0 0.0
    %6985 = vmatpush1.msra.mxu0 0.0
    %6986 = vmatprep.subr.mxu0 0.0
    %6987 = vmatpush1.msra.mxu0 0.0
    %6988 = vmatprep.subr.mxu0 0.0
    %6989 = vmatpush1.msra.mxu0 0.0
    %6990 = vmatprep.subr.mxu0 0.0
    %6991 = vmatpush1.msra.mxu0 0.0
    %6992 = vmatprep.subr.mxu0 0.0
    %6993 = vmatpush1.msra.mxu0 0.0
    %6994 = vmatprep.subr.mxu0 0.0
    %6995 = vmatpush1.msra.mxu0 0.0
    %6996 = vmatprep.subr.mxu0 0.0
    %6997 = vmatpush1.msra.mxu0 0.0
    %6998 = vmatprep.subr.mxu0 0.0
    %6999 = vmatpush1.msra.mxu0 0.0
    %7000 = vmatprep.subr.mxu0 0.0
    %7001 = vmatpush1.msra.mxu0 0.0
    %7002 = vmatprep.subr.mxu0 0.0
    %7003 = vmatpush1.msra.mxu0 0.0
    %7004 = vmatprep.subr.mxu0 0.0
    %7005 = vmatpush1.msra.mxu0 0.0
    %7006 = vmatprep.subr.mxu0 0.0
    %7007 = vmatpush1.msra.mxu0 0.0
    %7008 = vmatprep.subr.mxu0 0.0
    %7009 = vmatpush1.msra.mxu0 0.0
    %7010 = vmatprep.subr.mxu0 0.0
    %7011 = vmatpush1.msra.mxu0 0.0
    %7012 = vmatprep.subr.mxu0 0.0
    %7013 = vmatpush1.msra.mxu0 0.0
    %7014 = vmatprep.subr.mxu0 0.0
    %7015 = vmatpush1.msra.mxu0 0.0
    %7016 = vmatprep.subr.mxu0 0.0
    %7017 = vmatpush1.msra.mxu0 0.0
    %7018 = vmatprep.subr.mxu0 0.0
    %7019 = vmatpush1.msra.mxu0 0.0
    %7020 = vmatprep.subr.mxu0 0.0
    %7021 = vmatpush1.msra.mxu0 0.0
    %7022 = vmatprep.mubr.f32.mxu0 0.0
    %7023 = vmatmul.mubr.f32.gmra.mrb[0].mxu0 %v6953
    %v7024 = vpop.f32.mrb[0].mxu0
    %v7025 = vadd.f32 0.0, %v7024
    %v7026 = vpop.f32.mrb[0].mxu0
    %7027 = vmatprep.mubr.f32.mxu0 0.0
    %7028 = vmatmul.mubr.f32.gmra.mrb[0].mxu0 %v6956
    %v7029 = vpop.f32.mrb[0].mxu0
    %v7030 = vadd.f32 0.0, %v7029
    %v7031 = vpop.f32.mrb[0].mxu0
    %7032 = vdwg.mxu0
    %7033 = vrot.lane.b32.xlu0 %v6532, 112
    %v7034 = vpop.permute.xlu0 %7033
    %7035 = vrot.lane.b32.xlu0 %v6537, 112
    %v7036 = vpop.permute.xlu0 %7035
    %7037 = vrot.lane.b32.xlu0 %v6616, 112
    %v7038 = vpop.permute.xlu0 %7037
    %7039 = vrot.lane.b32.xlu0 %v6621, 112
    %v7040 = vpop.permute.xlu0 %7039
    %v7041 = vsel %vm374, %v7034, 0
    %v7043 = vsel %vm374, %v7036, 0
    %v7045 = vsel %vm374, %v7038, 0
    %v7047 = vsel %vm374, %v7040, 0
    %7049 = vmatprep.subr.mxu0 0.0
    %7050 = vmatpush1.xpose.msra.mxu0 %v7045
    %7051 = vmatprep.subr.mxu0 0.0
    %7052 = vmatpush1.xpose.msra.mxu0 %v7047
    %7053 = vmatprep.subr.mxu0 0.0
    %7054 = vmatpush1.xpose.msra.mxu0 0.0
    %7055 = vmatprep.subr.mxu0 0.0
    %7056 = vmatpush1.xpose.msra.mxu0 0.0
    %7057 = vmatprep.subr.mxu0 0.0
    %7058 = vmatpush1.xpose.msra.mxu0 0.0
    %7059 = vmatprep.subr.mxu0 0.0
    %7060 = vmatpush1.xpose.msra.mxu0 0.0
    %7061 = vmatprep.subr.mxu0 0.0
    %7062 = vmatpush1.xpose.msra.mxu0 0.0
    %7063 = vmatprep.subr.mxu0 0.0
    %7064 = vmatpush1.xpose.msra.mxu0 0.0
    %7065 = vmatprep.subr.mxu0 0.0
    %7066 = vmatpush1.xpose.msra.mxu0 0.0
    %7067 = vmatprep.subr.mxu0 0.0
    %7068 = vmatpush1.xpose.msra.mxu0 0.0
    %7069 = vmatprep.subr.mxu0 0.0
    %7070 = vmatpush1.xpose.msra.mxu0 0.0
    %7071 = vmatprep.subr.mxu0 0.0
    %7072 = vmatpush1.xpose.msra.mxu0 0.0
    %7073 = vmatprep.subr.mxu0 0.0
    %7074 = vmatpush1.xpose.msra.mxu0 0.0
    %7075 = vmatprep.subr.mxu0 0.0
    %7076 = vmatpush1.xpose.msra.mxu0 0.0
    %7077 = vmatprep.subr.mxu0 0.0
    %7078 = vmatpush1.xpose.msra.mxu0 0.0
    %7079 = vmatprep.subr.mxu0 0.0
    %7080 = vmatpush1.xpose.msra.mxu0 0.0
    %7081 = vmatprep.subr.mxu0 0.0
    %7082 = vmatpush1.xpose.msra.mxu0 0.0
    %7083 = vmatprep.subr.mxu0 0.0
    %7084 = vmatpush1.xpose.msra.mxu0 0.0
    %7085 = vmatprep.subr.mxu0 0.0
    %7086 = vmatpush1.xpose.msra.mxu0 0.0
    %7087 = vmatprep.subr.mxu0 0.0
    %7088 = vmatpush1.xpose.msra.mxu0 0.0
    %7089 = vmatprep.subr.mxu0 0.0
    %7090 = vmatpush1.xpose.msra.mxu0 0.0
    %7091 = vmatprep.subr.mxu0 0.0
    %7092 = vmatpush1.xpose.msra.mxu0 0.0
    %7093 = vmatprep.subr.mxu0 0.0
    %7094 = vmatpush1.xpose.msra.mxu0 0.0
    %7095 = vmatprep.subr.mxu0 0.0
    %7096 = vmatpush1.xpose.msra.mxu0 0.0
    %7097 = vmatprep.subr.mxu0 0.0
    %7098 = vmatpush1.xpose.msra.mxu0 0.0
    %7099 = vmatprep.subr.mxu0 0.0
    %7100 = vmatpush1.xpose.msra.mxu0 0.0
    %7101 = vmatprep.subr.mxu0 0.0
    %7102 = vmatpush1.xpose.msra.mxu0 0.0
    %7103 = vmatprep.subr.mxu0 0.0
    %7104 = vmatpush1.xpose.msra.mxu0 0.0
    %7105 = vmatprep.subr.mxu0 0.0
    %7106 = vmatpush1.xpose.msra.mxu0 0.0
    %7107 = vmatprep.subr.mxu0 0.0
    %7108 = vmatpush1.xpose.msra.mxu0 0.0
    %7109 = vmatprep.subr.mxu0 0.0
    %7110 = vmatpush1.xpose.msra.mxu0 0.0
    %7111 = vmatprep.subr.mxu0 0.0
    %7112 = vmatpush1.xpose.msra.mxu0 0.0
    %7113 = vmatprep.mubr.f32.mxu0 0.0
    %7114 = vmatmul.mubr.f32.gmra.mrb[0].mxu0 %v7041
    %v7115 = vpop.f32.mrb[0].mxu0
    %v7116 = vadd.f32 0.0, %v7115
    %v7117 = vpop.f32.mrb[0].mxu0
    %7118 = vmatprep.mubr.f32.mxu0 0.0
    %7119 = vmatmul.mubr.f32.gmra.mrb[0].mxu0 %v7043
    %v7120 = vpop.f32.mrb[0].mxu0
    %v7121 = vadd.f32 0.0, %v7120
    %v7122 = vpop.f32.mrb[0].mxu0
    %7123 = vdwg.mxu0
    %v7124 = vmul.f32 %v7116, 0.35355338
    %v7125 = vmul.f32 %v7121, 0.35355338
    %v7126 = vadd.f32 %v7124, %v262
    %v7127 = vadd.f32 %v7125, %v263
    %v7128 = vsel %vm462, %v7126, -inf
    %7129 = vmax.xlane.f32.xlu0 %v7128
    %v7130 = vpop.xlane.xlu0 %7129
    %v7131 = vsel %vm462, %v7127, -inf
    %7132 = vmax.xlane.f32.xlu0 %v7131
    %v7133 = vpop.xlane.xlu0 %7132
    %v7134 = vsub.f32 %v7126, %v7130
    %v7135 = vsub.f32 %v7127, %v7133
    %v7136 = vmul.f32 %v7134, 1.442695
    %v7137 = vpow.pop %v7136
    %v7138 = vmul.f32 %v7135, 1.442695
    %v7139 = vpow.pop %v7138
    %v7140 = vsel %vm462, %v7137, 0.0
    %7141 = vadd.xlane.f32.xlu0 %v7140
    %v7142 = vpop.xlane.xlu0 %7141
    %v7143 = vsel %vm462, %v7139, 0.0
    %7144 = vadd.xlane.f32.xlu0 %v7143
    %v7145 = vpop.xlane.xlu0 %7144
    %v7146 = vrcp.pop %v7142
    %v7147 = vrcp.pop %v7145
    %v7148 = vmul.f32 %v7137, %v7146
    %v7149 = vmul.f32 %v7139, %v7147
    %7150 = vrot.lane.b32.xlu0 %v6616, 80
    %v7151 = vpop.permute.xlu0 %7150
    %7152 = vrot.lane.b32.xlu0 %v6621, 80
    %v7153 = vpop.permute.xlu0 %7152
    %v7157 = vsel %vm462, %v7148, 0
    %v7160 = vsel %vm462, %v7149, 0
    %7162 = vmatprep.subr.mxu0 0.0
    %7163 = vmatpush1.msra.mxu0 %v7151
    %7164 = vmatprep.subr.mxu0 0.0
    %7165 = vmatpush1.msra.mxu0 %v7153
    %7166 = vmatprep.subr.mxu0 0.0
    %7167 = vmatpush1.msra.mxu0 0.0
    %7168 = vmatprep.subr.mxu0 0.0
    %7169 = vmatpush1.msra.mxu0 0.0
    %7170 = vmatprep.subr.mxu0 0.0
    %7171 = vmatpush1.msra.mxu0 0.0
    %7172 = vmatprep.subr.mxu0 0.0
    %7173 = vmatpush1.msra.mxu0 0.0
    %7174 = vmatprep.subr.mxu0 0.0
    %7175 = vmatpush1.msra.mxu0 0.0
    %7176 = vmatprep.subr.mxu0 0.0
    %7177 = vmatpush1.msra.mxu0 0.0
    %7178 = vmatprep.subr.mxu0 0.0
    %7179 = vmatpush1.msra.mxu0 0.0
    %7180 = vmatprep.subr.mxu0 0.0
    %7181 = vmatpush1.msra.mxu0 0.0
    %7182 = vmatprep.subr.mxu0 0.0
    %7183 = vmatpush1.msra.mxu0 0.0
    %7184 = vmatprep.subr.mxu0 0.0
    %7185 = vmatpush1.msra.mxu0 0.0
    %7186 = vmatprep.subr.mxu0 0.0
    %7187 = vmatpush1.msra.mxu0 0.0
    %7188 = vmatprep.subr.mxu0 0.0
    %7189 = vmatpush1.msra.mxu0 0.0
    %7190 = vmatprep.subr.mxu0 0.0
    %7191 = vmatpush1.msra.mxu0 0.0
    %7192 = vmatprep.subr.mxu0 0.0
    %7193 = vmatpush1.msra.mxu0 0.0
    %7194 = vmatprep.subr.mxu0 0.0
    %7195 = vmatpush1.msra.mxu0 0.0
    %7196 = vmatprep.subr.mxu0 0.0
    %7197 = vmatpush1.msra.mxu0 0.0
    %7198 = vmatprep.subr.mxu0 0.0
    %7199 = vmatpush1.msra.mxu0 0.0
    %7200 = vmatprep.subr.mxu0 0.0
    %7201 = vmatpush1.msra.mxu0 0.0
    %7202 = vmatprep.subr.mxu0 0.0
    %7203 = vmatpush1.msra.mxu0 0.0
    %7204 = vmatprep.subr.mxu0 0.0
    %7205 = vmatpush1.msra.mxu0 0.0
    %7206 = vmatprep.subr.mxu0 0.0
    %7207 = vmatpush1.msra.mxu0 0.0
    %7208 = vmatprep.subr.mxu0 0.0
    %7209 = vmatpush1.msra.mxu0 0.0
    %7210 = vmatprep.subr.mxu0 0.0
    %7211 = vmatpush1.msra.mxu0 0.0
    %7212 = vmatprep.subr.mxu0 0.0
    %7213 = vmatpush1.msra.mxu0 0.0
    %7214 = vmatprep.subr.mxu0 0.0
    %7215 = vmatpush1.msra.mxu0 0.0
    %7216 = vmatprep.subr.mxu0 0.0
    %7217 = vmatpush1.msra.mxu0 0.0
    %7218 = vmatprep.subr.mxu0 0.0
    %7219 = vmatpush1.msra.mxu0 0.0
    %7220 = vmatprep.subr.mxu0 0.0
    %7221 = vmatpush1.msra.mxu0 0.0
    %7222 = vmatprep.subr.mxu0 0.0
    %7223 = vmatpush1.msra.mxu0 0.0
    %7224 = vmatprep.subr.mxu0 0.0
    %7225 = vmatpush1.msra.mxu0 0.0
    %7226 = vmatprep.mubr.f32.mxu0 0.0
    %7227 = vmatmul.mubr.f32.gmra.mrb[0].mxu0 %v7157
    %v7228 = vpop.f32.mrb[0].mxu0
    %v7229 = vadd.f32 0.0, %v7228
    %v7230 = vpop.f32.mrb[0].mxu0
    %7231 = vmatprep.mubr.f32.mxu0 0.0
    %7232 = vmatmul.mubr.f32.gmra.mrb[0].mxu0 %v7160
    %v7233 = vpop.f32.mrb[0].mxu0
    %v7234 = vadd.f32 0.0, %v7233
    %v7235 = vpop.f32.mrb[0].mxu0
    %7236 = vdwg.mxu0
    %7237 = vrot.lane.b32.xlu0 %v6532, 104
    %v7238 = vpop.permute.xlu0 %7237
    %7239 = vrot.lane.b32.xlu0 %v6537, 104
    %v7240 = vpop.permute.xlu0 %7239
    %7241 = vrot.lane.b32.xlu0 %v6616, 104
    %v7242 = vpop.permute.xlu0 %7241
    %7243 = vrot.lane.b32.xlu0 %v6621, 104
    %v7244 = vpop.permute.xlu0 %7243
    %v7245 = vsel %vm374, %v7238, 0
    %v7247 = vsel %vm374, %v7240, 0
    %v7249 = vsel %vm374, %v7242, 0
    %v7251 = vsel %vm374, %v7244, 0
    %7253 = vmatprep.subr.mxu0 0.0
    %7254 = vmatpush1.xpose.msra.mxu0 %v7249
    %7255 = vmatprep.subr.mxu0 0.0
    %7256 = vmatpush1.xpose.msra.mxu0 %v7251
    %7257 = vmatprep.subr.mxu0 0.0
    %7258 = vmatpush1.xpose.msra.mxu0 0.0
    %7259 = vmatprep.subr.mxu0 0.0
    %7260 = vmatpush1.xpose.msra.mxu0 0.0
    %7261 = vmatprep.subr.mxu0 0.0
    %7262 = vmatpush1.xpose.msra.mxu0 0.0
    %7263 = vmatprep.subr.mxu0 0.0
    %7264 = vmatpush1.xpose.msra.mxu0 0.0
    %7265 = vmatprep.subr.mxu0 0.0
    %7266 = vmatpush1.xpose.msra.mxu0 0.0
    %7267 = vmatprep.subr.mxu0 0.0
    %7268 = vmatpush1.xpose.msra.mxu0 0.0
    %7269 = vmatprep.subr.mxu0 0.0
    %7270 = vmatpush1.xpose.msra.mxu0 0.0
    %7271 = vmatprep.subr.mxu0 0.0
    %7272 = vmatpush1.xpose.msra.mxu0 0.0
    %7273 = vmatprep.subr.mxu0 0.0
    %7274 = vmatpush1.xpose.msra.mxu0 0.0
    %7275 = vmatprep.subr.mxu0 0.0
    %7276 = vmatpush1.xpose.msra.mxu0 0.0
    %7277 = vmatprep.subr.mxu0 0.0
    %7278 = vmatpush1.xpose.msra.mxu0 0.0
    %7279 = vmatprep.subr.mxu0 0.0
    %7280 = vmatpush1.xpose.msra.mxu0 0.0
    %7281 = vmatprep.subr.mxu0 0.0
    %7282 = vmatpush1.xpose.msra.mxu0 0.0
    %7283 = vmatprep.subr.mxu0 0.0
    %7284 = vmatpush1.xpose.msra.mxu0 0.0
    %7285 = vmatprep.subr.mxu0 0.0
    %7286 = vmatpush1.xpose.msra.mxu0 0.0
    %7287 = vmatprep.subr.mxu0 0.0
    %7288 = vmatpush1.xpose.msra.mxu0 0.0
    %7289 = vmatprep.subr.mxu0 0.0
    %7290 = vmatpush1.xpose.msra.mxu0 0.0
    %7291 = vmatprep.subr.mxu0 0.0
    %7292 = vmatpush1.xpose.msra.mxu0 0.0
    %7293 = vmatprep.subr.mxu0 0.0
    %7294 = vmatpush1.xpose.msra.mxu0 0.0
    %7295 = vmatprep.subr.mxu0 0.0
    %7296 = vmatpush1.xpose.msra.mxu0 0.0
    %7297 = vmatprep.subr.mxu0 0.0
    %7298 = vmatpush1.xpose.msra.mxu0 0.0
    %7299 = vmatprep.subr.mxu0 0.0
    %7300 = vmatpush1.xpose.msra.mxu0 0.0
    %7301 = vmatprep.subr.mxu0 0.0
    %7302 = vmatpush1.xpose.msra.mxu0 0.0
    %7303 = vmatprep.subr.mxu0 0.0
    %7304 = vmatpush1.xpose.msra.mxu0 0.0
    %7305 = vmatprep.subr.mxu0 0.0
    %7306 = vmatpush1.xpose.msra.mxu0 0.0
    %7307 = vmatprep.subr.mxu0 0.0
    %7308 = vmatpush1.xpose.msra.mxu0 0.0
    %7309 = vmatprep.subr.mxu0 0.0
    %7310 = vmatpush1.xpose.msra.mxu0 0.0
    %7311 = vmatprep.subr.mxu0 0.0
    %7312 = vmatpush1.xpose.msra.mxu0 0.0
    %7313 = vmatprep.subr.mxu0 0.0
    %7314 = vmatpush1.xpose.msra.mxu0 0.0
    %7315 = vmatprep.subr.mxu0 0.0
    %7316 = vmatpush1.xpose.msra.mxu0 0.0
    %7317 = vmatprep.mubr.f32.mxu0 0.0
    %7318 = vmatmul.mubr.f32.gmra.mrb[0].mxu0 %v7245
    %v7319 = vpop.f32.mrb[0].mxu0
    %v7320 = vadd.f32 0.0, %v7319
    %v7321 = vpop.f32.mrb[0].mxu0
    %7322 = vmatprep.mubr.f32.mxu0 0.0
    %7323 = vmatmul.mubr.f32.gmra.mrb[0].mxu0 %v7247
    %v7324 = vpop.f32.mrb[0].mxu0
    %v7325 = vadd.f32 0.0, %v7324
    %v7326 = vpop.f32.mrb[0].mxu0
    %7327 = vdwg.mxu0
    %v7328 = vmul.f32 %v7320, 0.35355338
    %v7329 = vmul.f32 %v7325, 0.35355338
    %v7330 = vadd.f32 %v7328, %v262
    %v7331 = vadd.f32 %v7329, %v263
    %v7332 = vsel %vm462, %v7330, -inf
    %7333 = vmax.xlane.f32.xlu0 %v7332
    %v7334 = vpop.xlane.xlu0 %7333
    %v7335 = vsel %vm462, %v7331, -inf
    %7336 = vmax.xlane.f32.xlu0 %v7335
    %v7337 = vpop.xlane.xlu0 %7336
    %v7338 = vsub.f32 %v7330, %v7334
    %v7339 = vsub.f32 %v7331, %v7337
    %v7340 = vmul.f32 %v7338, 1.442695
    %v7341 = vpow.pop %v7340
    %v7342 = vmul.f32 %v7339, 1.442695
    %v7343 = vpow.pop %v7342
    %v7344 = vsel %vm462, %v7341, 0.0
    %7345 = vadd.xlane.f32.xlu0 %v7344
    %v7346 = vpop.xlane.xlu0 %7345
    %v7347 = vsel %vm462, %v7343, 0.0
    %7348 = vadd.xlane.f32.xlu0 %v7347
    %v7349 = vpop.xlane.xlu0 %7348
    %v7350 = vrcp.pop %v7346
    %v7351 = vrcp.pop %v7349
    %v7352 = vmul.f32 %v7341, %v7350
    %v7353 = vmul.f32 %v7343, %v7351
    %7354 = vrot.lane.b32.xlu0 %v6616, 72
    %v7355 = vpop.permute.xlu0 %7354
    %7356 = vrot.lane.b32.xlu0 %v6621, 72
    %v7357 = vpop.permute.xlu0 %7356
    %v7361 = vsel %vm462, %v7352, 0
    %v7364 = vsel %vm462, %v7353, 0
    %7366 = vmatprep.subr.mxu0 0.0
    %7367 = vmatpush1.msra.mxu0 %v7355
    %7368 = vmatprep.subr.mxu0 0.0
    %7369 = vmatpush1.msra.mxu0 %v7357
    %7370 = vmatprep.subr.mxu0 0.0
    %7371 = vmatpush1.msra.mxu0 0.0
    %7372 = vmatprep.subr.mxu0 0.0
    %7373 = vmatpush1.msra.mxu0 0.0
    %7374 = vmatprep.subr.mxu0 0.0
    %7375 = vmatpush1.msra.mxu0 0.0
    %7376 = vmatprep.subr.mxu0 0.0
    %7377 = vmatpush1.msra.mxu0 0.0
    %7378 = vmatprep.subr.mxu0 0.0
    %7379 = vmatpush1.msra.mxu0 0.0
    %7380 = vmatprep.subr.mxu0 0.0
    %7381 = vmatpush1.msra.mxu0 0.0
    %7382 = vmatprep.subr.mxu0 0.0
    %7383 = vmatpush1.msra.mxu0 0.0
    %7384 = vmatprep.subr.mxu0 0.0
    %7385 = vmatpush1.msra.mxu0 0.0
    %7386 = vmatprep.subr.mxu0 0.0
    %7387 = vmatpush1.msra.mxu0 0.0
    %7388 = vmatprep.subr.mxu0 0.0
    %7389 = vmatpush1.msra.mxu0 0.0
    %7390 = vmatprep.subr.mxu0 0.0
    %7391 = vmatpush1.msra.mxu0 0.0
    %7392 = vmatprep.subr.mxu0 0.0
    %7393 = vmatpush1.msra.mxu0 0.0
    %7394 = vmatprep.subr.mxu0 0.0
    %7395 = vmatpush1.msra.mxu0 0.0
    %7396 = vmatprep.subr.mxu0 0.0
    %7397 = vmatpush1.msra.mxu0 0.0
    %7398 = vmatprep.subr.mxu0 0.0
    %7399 = vmatpush1.msra.mxu0 0.0
    %7400 = vmatprep.subr.mxu0 0.0
    %7401 = vmatpush1.msra.mxu0 0.0
    %7402 = vmatprep.subr.mxu0 0.0
    %7403 = vmatpush1.msra.mxu0 0.0
    %7404 = vmatprep.subr.mxu0 0.0
    %7405 = vmatpush1.msra.mxu0 0.0
    %7406 = vmatprep.subr.mxu0 0.0
    %7407 = vmatpush1.msra.mxu0 0.0
    %7408 = vmatprep.subr.mxu0 0.0
    %7409 = vmatpush1.msra.mxu0 0.0
    %7410 = vmatprep.subr.mxu0 0.0
    %7411 = vmatpush1.msra.mxu0 0.0
    %7412 = vmatprep.subr.mxu0 0.0
    %7413 = vmatpush1.msra.mxu0 0.0
    %7414 = vmatprep.subr.mxu0 0.0
    %7415 = vmatpush1.msra.mxu0 0.0
    %7416 = vmatprep.subr.mxu0 0.0
    %7417 = vmatpush1.msra.mxu0 0.0
    %7418 = vmatprep.subr.mxu0 0.0
    %7419 = vmatpush1.msra.mxu0 0.0
    %7420 = vmatprep.subr.mxu0 0.0
    %7421 = vmatpush1.msra.mxu0 0.0
    %7422 = vmatprep.subr.mxu0 0.0
    %7423 = vmatpush1.msra.mxu0 0.0
    %7424 = vmatprep.subr.mxu0 0.0
    %7425 = vmatpush1.msra.mxu0 0.0
    %7426 = vmatprep.subr.mxu0 0.0
    %7427 = vmatpush1.msra.mxu0 0.0
    %7428 = vmatprep.subr.mxu0 0.0
    %7429 = vmatpush1.msra.mxu0 0.0
    %7430 = vmatprep.mubr.f32.mxu0 0.0
    %7431 = vmatmul.mubr.f32.gmra.mrb[0].mxu0 %v7361
    %v7432 = vpop.f32.mrb[0].mxu0
    %v7433 = vadd.f32 0.0, %v7432
    %v7434 = vpop.f32.mrb[0].mxu0
    %7435 = vmatprep.mubr.f32.mxu0 0.0
    %7436 = vmatmul.mubr.f32.gmra.mrb[0].mxu0 %v7364
    %v7437 = vpop.f32.mrb[0].mxu0
    %v7438 = vadd.f32 0.0, %v7437
    %v7439 = vpop.f32.mrb[0].mxu0
    %7440 = vdwg.mxu0
    %7443 = vrot.lane.b32.xlu0 %v7025, 8
    %v7444 = vpop.permute.xlu0 %7443
    %7445 = vrot.lane.b32.xlu0 %v7030, 8
    %v7446 = vpop.permute.xlu0 %7445
    %7451 = vrot.lane.b32.xlu0 %v7229, 16
    %v7452 = vpop.permute.xlu0 %7451
    %7453 = vrot.lane.b32.xlu0 %v7234, 16
    %v7454 = vpop.permute.xlu0 %7453
    %7459 = vrot.lane.b32.xlu0 %v7433, 24
    %v7460 = vpop.permute.xlu0 %7459
    %7461 = vrot.lane.b32.xlu0 %v7438, 24
    %v7462 = vpop.permute.xlu0 %7461
    %v7465 = vsel %vm374, %v6821, %v7444
    %v7466 = vsel %vm374, %v6826, %v7446
    %v7467 = vsel %vm462, %v7465, %v7452
    %v7468 = vsel %vm462, %v7466, %v7454
    %v7469 = vsel %vm1212, %v7467, %v7460
    %v7470 = vsel %vm1212, %v7468, %v7462
    %v7471 = vlaneseq
    %v7472 = vshrl.u32 %v7471, 7
    %v7473 = vsub.s32 0, %v7472
    %v7474 = vrot.slane %v6628, %v7473
    %v7476 = vsel %vm166, %v7469, 0
    %v7479 = vsel %vm166, %v7470, 0
    %7481 = vmatprep.subr.mxu0 0.0
    %7482 = vmatpush1.msra.mxu0 %v6624
    %7483 = vmatprep.subr.mxu0 0.0
    %7484 = vmatpush1.msra.mxu0 %v6625
    %7485 = vmatprep.subr.mxu0 0.0
    %7486 = vmatpush1.msra.mxu0 %v6626
    %7487 = vmatprep.subr.mxu0 0.0
    %7488 = vmatpush1.msra.mxu0 %v6627
    %7489 = vmatprep.subr.mxu0 0.0
    %7490 = vmatpush1.msra.mxu0 0.0
    %7491 = vmatprep.subr.mxu0 0.0
    %7492 = vmatpush1.msra.mxu0 0.0
    %7493 = vmatprep.subr.mxu0 0.0
    %7494 = vmatpush1.msra.mxu0 0.0
    %7495 = vmatprep.subr.mxu0 0.0
    %7496 = vmatpush1.msra.mxu0 0.0
    %7497 = vmatprep.subr.mxu0 0.0
    %7498 = vmatpush1.msra.mxu0 0.0
    %7499 = vmatprep.subr.mxu0 0.0
    %7500 = vmatpush1.msra.mxu0 0.0
    %7501 = vmatprep.subr.mxu0 0.0
    %7502 = vmatpush1.msra.mxu0 0.0
    %7503 = vmatprep.subr.mxu0 0.0
    %7504 = vmatpush1.msra.mxu0 0.0
    %7505 = vmatprep.subr.mxu0 0.0
    %7506 = vmatpush1.msra.mxu0 0.0
    %7507 = vmatprep.subr.mxu0 0.0
    %7508 = vmatpush1.msra.mxu0 0.0
    %7509 = vmatprep.subr.mxu0 0.0
    %7510 = vmatpush1.msra.mxu0 0.0
    %7511 = vmatprep.subr.mxu0 0.0
    %7512 = vmatpush1.msra.mxu0 0.0
    %7513 = vmatprep.subr.mxu0 0.0
    %7514 = vmatpush1.msra.mxu0 0.0
    %7515 = vmatprep.subr.mxu0 0.0
    %7516 = vmatpush1.msra.mxu0 0.0
    %7517 = vmatprep.subr.mxu0 0.0
    %7518 = vmatpush1.msra.mxu0 0.0
    %7519 = vmatprep.subr.mxu0 0.0
    %7520 = vmatpush1.msra.mxu0 0.0
    %7521 = vmatprep.subr.mxu0 0.0
    %7522 = vmatpush1.msra.mxu0 0.0
    %7523 = vmatprep.subr.mxu0 0.0
    %7524 = vmatpush1.msra.mxu0 0.0
    %7525 = vmatprep.subr.mxu0 0.0
    %7526 = vmatpush1.msra.mxu0 0.0
    %7527 = vmatprep.subr.mxu0 0.0
    %7528 = vmatpush1.msra.mxu0 0.0
    %7529 = vmatprep.subr.mxu0 0.0
    %7530 = vmatpush1.msra.mxu0 0.0
    %7531 = vmatprep.subr.mxu0 0.0
    %7532 = vmatpush1.msra.mxu0 0.0
    %7533 = vmatprep.subr.mxu0 0.0
    %7534 = vmatpush1.msra.mxu0 0.0
    %7535 = vmatprep.subr.mxu0 0.0
    %7536 = vmatpush1.msra.mxu0 0.0
    %7537 = vmatprep.subr.mxu0 0.0
    %7538 = vmatpush1.msra.mxu0 0.0
    %7539 = vmatprep.subr.mxu0 0.0
    %7540 = vmatpush1.msra.mxu0 0.0
    %7541 = vmatprep.subr.mxu0 0.0
    %7542 = vmatpush1.msra.mxu0 0.0
    %7543 = vmatprep.subr.mxu0 0.0
    %7544 = vmatpush1.msra.mxu0 0.0
    %7545 = vmatprep.mubr.f32.mxu0 0.0
    %7546 = vmatmul.mubr.f32.gmra.mrb[0].mxu0 %v7476
    %v7547 = vpop.f32.mrb[0].mxu0
    %v7548 = vadd.f32 %v7474, %v7547
    %v7549 = vpop.f32.mrb[0].mxu0
    %7550 = vmatprep.mubr.f32.mxu0 0.0
    %7551 = vmatmul.mubr.f32.gmra.mrb[0].mxu0 %v7479
    %v7552 = vpop.f32.mrb[0].mxu0
    %v7553 = vadd.f32 %v7474, %v7552
    %v7554 = vpop.f32.mrb[0].mxu0
    %7555 = vdwg.mxu0
    %v7556 = vadd.f32 %v7548, %v6448
    %v7557 = vadd.f32 %v7553, %v6449
    %v7558 = vld [vmem:[#allocation2 + $0x448] sm:$0x3]
    %v7559 = vsel %vm166, %v7556, 0.0
    %7560 = vadd.xlane.f32.xlu0 %v7559
    %v7561 = vpop.xlane.xlu0 %7560
    %v7562 = vsel %vm166, %v7557, 0.0
    %7563 = vadd.xlane.f32.xlu0 %v7562
    %v7564 = vpop.xlane.xlu0 %7563
    %v7565 = vmul.f32 %v7556, %v7556
    %v7566 = vmul.f32 %v7557, %v7557
    %v7567 = vsel %vm166, %v7565, 0.0
    %7568 = vadd.xlane.f32.xlu0 %v7567
    %v7569 = vpop.xlane.xlu0 %7568
    %v7570 = vsel %vm166, %v7566, 0.0
    %7571 = vadd.xlane.f32.xlu0 %v7570
    %v7572 = vpop.xlane.xlu0 %7571
    %v7573 = vmul.f32 %v7561, 0.03125
    %v7574 = vmul.f32 %v7564, 0.03125
    %v7575 = vmul.f32 %v7569, 0.03125
    %v7576 = vmul.f32 %v7572, 0.03125
    %v7577 = vmul.f32 %v7573, %v7573
    %v7578 = vmul.f32 %v7574, %v7574
    %v7579 = vsub.f32 %v7575, %v7577
    %v7580 = vsub.f32 %v7576, %v7578
    %v7581 = vsub.f32 %v7556, %v7573
    %v7582 = vsub.f32 %v7557, %v7574
    %v7583 = vadd.f32 %v7579, 1e-05
    %v7584 = vadd.f32 %v7580, 1e-05
    %v7585 = vrsqrt.pop %v7583
    %v7586 = vrsqrt.pop %v7584
    %v7587 = vmul.f32 %v7581, %v7585
    %v7588 = vmul.f32 %v7582, %v7586
    %v7589 = vlaneseq
    %v7590 = vshrl.u32 %v7589, 7
    %v7591 = vsub.s32 0, %v7590
    %v7592 = vrot.slane %v7558, %v7591
    %v7593 = vmul.f32 %v7587, %v7592
    %v7594 = vmul.f32 %v7588, %v7592
    %v7595 = vlaneseq
    %v7596 = vshrl.u32 %v7595, 7
    %v7597 = vsub.s32 1, %v7596
    %v7598 = vrot.slane %v7558, %v7597
    %v7599 = vadd.f32 %v7593, %v7598
    %v7600 = vadd.f32 %v7594, %v7598
    %v7601 = vld [vmem:[#allocation2 + $0x450] sm:$0xff]
    %v7602 = vld [vmem:[#allocation2 + $0x458] sm:$0xff]
    %v7603 = vld [vmem:[#allocation2 + $0x460] sm:$0xff]
    %v7604 = vld [vmem:[#allocation2 + $0x468] sm:$0xff]
    %v7605 = vld [vmem:[#allocation2 + $0x470] sm:$0x1]
    %v7606 = vlaneseq
    %v7607 = vshrl.u32 %v7606, 7
    %v7608 = vsub.s32 0, %v7607
    %v7609 = vrot.slane %v7605, %v7608
    %v7611 = vsel %vm166, %v7599, 0
    %v7614 = vsel %vm166, %v7600, 0
    %7616 = vmatprep.subr.mxu0 0.0
    %7617 = vmatpush1.msra.mxu0 %v7601
    %7618 = vmatprep.subr.mxu0 0.0
    %7619 = vmatpush1.msra.mxu0 %v7602
    %7620 = vmatprep.subr.mxu0 0.0
    %7621 = vmatpush1.msra.mxu0 %v7603
    %7622 = vmatprep.subr.mxu0 0.0
    %7623 = vmatpush1.msra.mxu0 %v7604
    %7624 = vmatprep.subr.mxu0 0.0
    %7625 = vmatpush1.msra.mxu0 0.0
    %7626 = vmatprep.subr.mxu0 0.0
    %7627 = vmatpush1.msra.mxu0 0.0
    %7628 = vmatprep.subr.mxu0 0.0
    %7629 = vmatpush1.msra.mxu0 0.0
    %7630 = vmatprep.subr.mxu0 0.0
    %7631 = vmatpush1.msra.mxu0 0.0
    %7632 = vmatprep.subr.mxu0 0.0
    %7633 = vmatpush1.msra.mxu0 0.0
    %7634 = vmatprep.subr.mxu0 0.0
    %7635 = vmatpush1.msra.mxu0 0.0
    %7636 = vmatprep.subr.mxu0 0.0
    %7637 = vmatpush1.msra.mxu0 0.0
    %7638 = vmatprep.subr.mxu0 0.0
    %7639 = vmatpush1.msra.mxu0 0.0
    %7640 = vmatprep.subr.mxu0 0.0
    %7641 = vmatpush1.msra.mxu0 0.0
    %7642 = vmatprep.subr.mxu0 0.0
    %7643 = vmatpush1.msra.mxu0 0.0
    %7644 = vmatprep.subr.mxu0 0.0
    %7645 = vmatpush1.msra.mxu0 0.0
    %7646 = vmatprep.subr.mxu0 0.0
    %7647 = vmatpush1.msra.mxu0 0.0
    %7648 = vmatprep.subr.mxu0 0.0
    %7649 = vmatpush1.msra.mxu0 0.0
    %7650 = vmatprep.subr.mxu0 0.0
    %7651 = vmatpush1.msra.mxu0 0.0
    %7652 = vmatprep.subr.mxu0 0.0
    %7653 = vmatpush1.msra.mxu0 0.0
    %7654 = vmatprep.subr.mxu0 0.0
    %7655 = vmatpush1.msra.mxu0 0.0
    %7656 = vmatprep.subr.mxu0 0.0
    %7657 = vmatpush1.msra.mxu0 0.0
    %7658 = vmatprep.subr.mxu0 0.0
    %7659 = vmatpush1.msra.mxu0 0.0
    %7660 = vmatprep.subr.mxu0 0.0
    %7661 = vmatpush1.msra.mxu0 0.0
    %7662 = vmatprep.subr.mxu0 0.0
    %7663 = vmatpush1.msra.mxu0 0.0
    %7664 = vmatprep.subr.mxu0 0.0
    %7665 = vmatpush1.msra.mxu0 0.0
    %7666 = vmatprep.subr.mxu0 0.0
    %7667 = vmatpush1.msra.mxu0 0.0
    %7668 = vmatprep.subr.mxu0 0.0
    %7669 = vmatpush1.msra.mxu0 0.0
    %7670 = vmatprep.subr.mxu0 0.0
    %7671 = vmatpush1.msra.mxu0 0.0
    %7672 = vmatprep.subr.mxu0 0.0
    %7673 = vmatpush1.msra.mxu0 0.0
    %7674 = vmatprep.subr.mxu0 0.0
    %7675 = vmatpush1.msra.mxu0 0.0
    %7676 = vmatprep.subr.mxu0 0.0
    %7677 = vmatpush1.msra.mxu0 0.0
    %7678 = vmatprep.subr.mxu0 0.0
    %7679 = vmatpush1.msra.mxu0 0.0
    %7680 = vmatprep.mubr.f32.mxu0 0.0
    %7681 = vmatmul.mubr.f32.gmra.mrb[0].mxu0 %v7611
    %v7682 = vpop.f32.mrb[0].mxu0
    %v7683 = vadd.f32 %v7609, %v7682
    %v7684 = vpop.f32.mrb[0].mxu0
    %7685 = vmatprep.mubr.f32.mxu0 0.0
    %7686 = vmatmul.mubr.f32.gmra.mrb[0].mxu0 %v7614
    %v7687 = vpop.f32.mrb[0].mxu0
    %v7688 = vadd.f32 %v7609, %v7687
    %v7689 = vpop.f32.mrb[0].mxu0
    %7690 = vdwg.mxu0
    %v7691 = vmul.f32 %v7683, %v7683
    %v7692 = vmul.f32 %v7688, %v7688
    %v7693 = vmul.f32 %v7683, %v7691
    %v7694 = vmul.f32 %v7688, %v7692
    %v7695 = vmul.f32 %v7693, 0.044715
    %v7696 = vmul.f32 %v7694, 0.044715
    %v7697 = vadd.f32 %v7683, %v7695
    %v7698 = vadd.f32 %v7688, %v7696
    %v7699 = vmul.f32 %v7697, 0.7978846
    %v7700 = vmul.f32 %v7698, 0.7978846
    %v7701 = vtanh.pop %v7699
    %v7702 = vtanh.pop %v7700
    %v7703 = vadd.f32 %v7701, 1.0
    %v7704 = vadd.f32 %v7702, 1.0
    %v7705 = vmul.f32 %v7703, 0.5
    %v7706 = vmul.f32 %v7704, 0.5
    %v7707 = vmul.f32 %v7683, %v7705
    %v7708 = vmul.f32 %v7688, %v7706
    %v7709 = vld [vmem:[#allocation2 + $0x478] sm:$0xff]
    %v7710 = vld [vmem:[#allocation2 + $0x480] sm:$0xff]
    %v7711 = vld [vmem:[#allocation2 + $0x488] sm:$0xff]
    %v7712 = vld [vmem:[#allocation2 + $0x490] sm:$0xff]
    %v7713 = vld [vmem:[#allocation2 + $0x498] sm:$0xff]
    %v7714 = vld [vmem:[#allocation2 + $0x4a0] sm:$0xff]
    %v7715 = vld [vmem:[#allocation2 + $0x4a8] sm:$0xff]
    %v7716 = vld [vmem:[#allocation2 + $0x4b0] sm:$0xff]
    %v7717 = vld [vmem:[#allocation2 + $0x4b8] sm:$0x1]
    %v7718 = vlaneseq
    %v7719 = vshrl.u32 %v7718, 7
    %v7720 = vsub.s32 0, %v7719
    %v7721 = vrot.slane %v7717, %v7720
    %v7723 = vsel %vm64, %v7707, 0
    %v7726 = vsel %vm64, %v7708, 0
    %7728 = vmatprep.subr.mxu0 0.0
    %7729 = vmatpush1.msra.mxu0 %v7709
    %7730 = vmatprep.subr.mxu0 0.0
    %7731 = vmatpush1.msra.mxu0 %v7710
    %7732 = vmatprep.subr.mxu0 0.0
    %7733 = vmatpush1.msra.mxu0 %v7711
    %7734 = vmatprep.subr.mxu0 0.0
    %7735 = vmatpush1.msra.mxu0 %v7712
    %7736 = vmatprep.subr.mxu0 0.0
    %7737 = vmatpush1.msra.mxu0 %v7713
    %7738 = vmatprep.subr.mxu0 0.0
    %7739 = vmatpush1.msra.mxu0 %v7714
    %7740 = vmatprep.subr.mxu0 0.0
    %7741 = vmatpush1.msra.mxu0 %v7715
    %7742 = vmatprep.subr.mxu0 0.0
    %7743 = vmatpush1.msra.mxu0 %v7716
    %7744 = vmatprep.subr.mxu0 0.0
    %7745 = vmatpush1.msra.mxu0 0.0
    %7746 = vmatprep.subr.mxu0 0.0
    %7747 = vmatpush1.msra.mxu0 0.0
    %7748 = vmatprep.subr.mxu0 0.0
    %7749 = vmatpush1.msra.mxu0 0.0
    %7750 = vmatprep.subr.mxu0 0.0
    %7751 = vmatpush1.msra.mxu0 0.0
    %7752 = vmatprep.subr.mxu0 0.0
    %7753 = vmatpush1.msra.mxu0 0.0
    %7754 = vmatprep.subr.mxu0 0.0
    %7755 = vmatpush1.msra.mxu0 0.0
    %7756 = vmatprep.subr.mxu0 0.0
    %7757 = vmatpush1.msra.mxu0 0.0
    %7758 = vmatprep.subr.mxu0 0.0
    %7759 = vmatpush1.msra.mxu0 0.0
    %7760 = vmatprep.subr.mxu0 0.0
    %7761 = vmatpush1.msra.mxu0 0.0
    %7762 = vmatprep.subr.mxu0 0.0
    %7763 = vmatpush1.msra.mxu0 0.0
    %7764 = vmatprep.subr.mxu0 0.0
    %7765 = vmatpush1.msra.mxu0 0.0
    %7766 = vmatprep.subr.mxu0 0.0
    %7767 = vmatpush1.msra.mxu0 0.0
    %7768 = vmatprep.subr.mxu0 0.0
    %7769 = vmatpush1.msra.mxu0 0.0
    %7770 = vmatprep.subr.mxu0 0.0
    %7771 = vmatpush1.msra.mxu0 0.0
    %7772 = vmatprep.subr.mxu0 0.0
    %7773 = vmatpush1.msra.mxu0 0.0
    %7774 = vmatprep.subr.mxu0 0.0
    %7775 = vmatpush1.msra.mxu0 0.0
    %7776 = vmatprep.subr.mxu0 0.0
    %7777 = vmatpush1.msra.mxu0 0.0
    %7778 = vmatprep.subr.mxu0 0.0
    %7779 = vmatpush1.msra.mxu0 0.0
    %7780 = vmatprep.subr.mxu0 0.0
    %7781 = vmatpush1.msra.mxu0 0.0
    %7782 = vmatprep.subr.mxu0 0.0
    %7783 = vmatpush1.msra.mxu0 0.0
    %7784 = vmatprep.subr.mxu0 0.0
    %7785 = vmatpush1.msra.mxu0 0.0
    %7786 = vmatprep.subr.mxu0 0.0
    %7787 = vmatpush1.msra.mxu0 0.0
    %7788 = vmatprep.subr.mxu0 0.0
    %7789 = vmatpush1.msra.mxu0 0.0
    %7790 = vmatprep.subr.mxu0 0.0
    %7791 = vmatpush1.msra.mxu0 0.0
    %7792 = vmatprep.mubr.f32.mxu0 0.0
    %7793 = vmatmul.mubr.f32.gmra.mrb[0].mxu0 %v7723
    %v7794 = vpop.f32.mrb[0].mxu0
    %v7795 = vadd.f32 %v7721, %v7794
    %v7796 = vpop.f32.mrb[0].mxu0
    %7797 = vmatprep.mubr.f32.mxu0 0.0
    %7798 = vmatmul.mubr.f32.gmra.mrb[0].mxu0 %v7726
    %v7799 = vpop.f32.mrb[0].mxu0
    %v7800 = vadd.f32 %v7721, %v7799
    %v7801 = vpop.f32.mrb[0].mxu0
    %7802 = vdwg.mxu0
    %v7803 = vadd.f32 %v7795, %v7599
    %v7804 = vadd.f32 %v7800, %v7600
    %v7805 = vld [vmem:[#allocation2 + $0x4c0] sm:$0x3]
    %v7806 = vsel %vm166, %v7803, 0.0
    %7807 = vadd.xlane.f32.xlu0 %v7806
    %v7808 = vpop.xlane.xlu0 %7807
    %v7809 = vsel %vm166, %v7804, 0.0
    %7810 = vadd.xlane.f32.xlu0 %v7809
    %v7811 = vpop.xlane.xlu0 %7810
    %v7812 = vmul.f32 %v7803, %v7803
    %v7813 = vmul.f32 %v7804, %v7804
    %v7814 = vsel %vm166, %v7812, 0.0
    %7815 = vadd.xlane.f32.xlu0 %v7814
    %v7816 = vpop.xlane.xlu0 %7815
    %v7817 = vsel %vm166, %v7813, 0.0
    %7818 = vadd.xlane.f32.xlu0 %v7817
    %v7819 = vpop.xlane.xlu0 %7818
    %v7820 = vmul.f32 %v7808, 0.03125
    %v7821 = vmul.f32 %v7811, 0.03125
    %v7822 = vmul.f32 %v7816, 0.03125
    %v7823 = vmul.f32 %v7819, 0.03125
    %v7824 = vmul.f32 %v7820, %v7820
    %v7825 = vmul.f32 %v7821, %v7821
    %v7826 = vsub.f32 %v7822, %v7824
    %v7827 = vsub.f32 %v7823, %v7825
    %v7828 = vsub.f32 %v7803, %v7820
    %v7829 = vsub.f32 %v7804, %v7821
    %v7830 = vadd.f32 %v7826, 1e-05
    %v7831 = vadd.f32 %v7827, 1e-05
    %v7832 = vrsqrt.pop %v7830
    %v7833 = vrsqrt.pop %v7831
    %v7834 = vmul.f32 %v7828, %v7832
    %v7835 = vmul.f32 %v7829, %v7833
    %v7836 = vlaneseq
    %v7837 = vshrl.u32 %v7836, 7
    %v7838 = vsub.s32 0, %v7837
    %v7839 = vrot.slane %v7805, %v7838
    %v7840 = vmul.f32 %v7834, %v7839
    %v7841 = vmul.f32 %v7835, %v7839
    %v7842 = vlaneseq
    %v7843 = vshrl.u32 %v7842, 7
    %v7844 = vsub.s32 1, %v7843
    %v7845 = vrot.slane %v7805, %v7844
    %v7846 = vadd.f32 %v7840, %v7845
    %v7847 = vadd.f32 %v7841, %v7845
    %v7848 = vld [vmem:[#allocation2 + $0x40] sm:$0xff]
    %v7849 = vld [vmem:[#allocation2 + $0x48] sm:$0xff]
    %v7850 = vld [vmem:[#allocation2 + $0x50] sm:$0xff]
    %v7851 = vld [vmem:[#allocation2 + $0x58] sm:$0xff]
    %v7852 = vld [vmem:[#allocation2 + $0x80] sm:$0x1]
    %v7853 = vlaneseq
    %v7854 = vshrl.u32 %v7853, 7
    %v7855 = vsub.s32 0, %v7854
    %v7856 = vrot.slane %v7852, %v7855
    %v7858 = vsel %vm166, %v7846, 0
    %v7861 = vsel %vm166, %v7847, 0
    %7863 = vmatprep.subr.mxu0 0.0
    %7864 = vmatpush1.msra.mxu0 %v7848
    %7865 = vmatprep.subr.mxu0 0.0
    %7866 = vmatpush1.msra.mxu0 %v7849
    %7867 = vmatprep.subr.mxu0 0.0
    %7868 = vmatpush1.msra.mxu0 %v7850
    %7869 = vmatprep.subr.mxu0 0.0
    %7870 = vmatpush1.msra.mxu0 %v7851
    %7871 = vmatprep.subr.mxu0 0.0
    %7872 = vmatpush1.msra.mxu0 0.0
    %7873 = vmatprep.subr.mxu0 0.0
    %7874 = vmatpush1.msra.mxu0 0.0
    %7875 = vmatprep.subr.mxu0 0.0
    %7876 = vmatpush1.msra.mxu0 0.0
    %7877 = vmatprep.subr.mxu0 0.0
    %7878 = vmatpush1.msra.mxu0 0.0
    %7879 = vmatprep.subr.mxu0 0.0
    %7880 = vmatpush1.msra.mxu0 0.0
    %7881 = vmatprep.subr.mxu0 0.0
    %7882 = vmatpush1.msra.mxu0 0.0
    %7883 = vmatprep.subr.mxu0 0.0
    %7884 = vmatpush1.msra.mxu0 0.0
    %7885 = vmatprep.subr.mxu0 0.0
    %7886 = vmatpush1.msra.mxu0 0.0
    %7887 = vmatprep.subr.mxu0 0.0
    %7888 = vmatpush1.msra.mxu0 0.0
    %7889 = vmatprep.subr.mxu0 0.0
    %7890 = vmatpush1.msra.mxu0 0.0
    %7891 = vmatprep.subr.mxu0 0.0
    %7892 = vmatpush1.msra.mxu0 0.0
    %7893 = vmatprep.subr.mxu0 0.0
    %7894 = vmatpush1.msra.mxu0 0.0
    %7895 = vmatprep.subr.mxu0 0.0
    %7896 = vmatpush1.msra.mxu0 0.0
    %7897 = vmatprep.subr.mxu0 0.0
    %7898 = vmatpush1.msra.mxu0 0.0
    %7899 = vmatprep.subr.mxu0 0.0
    %7900 = vmatpush1.msra.mxu0 0.0
    %7901 = vmatprep.subr.mxu0 0.0
    %7902 = vmatpush1.msra.mxu0 0.0
    %7903 = vmatprep.subr.mxu0 0.0
    %7904 = vmatpush1.msra.mxu0 0.0
    %7905 = vmatprep.subr.mxu0 0.0
    %7906 = vmatpush1.msra.mxu0 0.0
    %7907 = vmatprep.subr.mxu0 0.0
    %7908 = vmatpush1.msra.mxu0 0.0
    %7909 = vmatprep.subr.mxu0 0.0
    %7910 = vmatpush1.msra.mxu0 0.0
    %7911 = vmatprep.subr.mxu0 0.0
    %7912 = vmatpush1.msra.mxu0 0.0
    %7913 = vmatprep.subr.mxu0 0.0
    %7914 = vmatpush1.msra.mxu0 0.0
    %7915 = vmatprep.subr.mxu0 0.0
    %7916 = vmatpush1.msra.mxu0 0.0
    %7917 = vmatprep.subr.mxu0 0.0
    %7918 = vmatpush1.msra.mxu0 0.0
    %7919 = vmatprep.subr.mxu0 0.0
    %7920 = vmatpush1.msra.mxu0 0.0
    %7921 = vmatprep.subr.mxu0 0.0
    %7922 = vmatpush1.msra.mxu0 0.0
    %7923 = vmatprep.subr.mxu0 0.0
    %7924 = vmatpush1.msra.mxu0 0.0
    %7925 = vmatprep.subr.mxu0 0.0
    %7926 = vmatpush1.msra.mxu0 0.0
    %7927 = vmatprep.mubr.f32.mxu0 0.0
    %7928 = vmatmul.mubr.f32.gmra.mrb[0].mxu0 %v7858
    %v7929 = vpop.f32.mrb[0].mxu0
    %v7930 = vadd.f32 %v7856, %v7929
    %v7931 = vpop.f32.mrb[0].mxu0
    %7932 = vmatprep.mubr.f32.mxu0 0.0
    %7933 = vmatmul.mubr.f32.gmra.mrb[0].mxu0 %v7861
    %v7934 = vpop.f32.mrb[0].mxu0
    %v7935 = vadd.f32 %v7856, %v7934
    %v7936 = vpop.f32.mrb[0].mxu0
    %7937 = vdwg.mxu0
    %v7938 = vsel %vm64, %v7930, -inf
    %7939 = vmax.xlane.f32.xlu0 %v7938
    %v7940 = vpop.xlane.xlu0 %7939
    %v7941 = vsel %vm64, %v7935, -inf
    %7942 = vmax.xlane.f32.xlu0 %v7941
    %v7943 = vpop.xlane.xlu0 %7942
    %v7944 = vsub.f32 %v7930, %v7940
    %v7945 = vsub.f32 %v7935, %v7943
    %v7946 = vmul.f32 %v7944, 1.442695
    %v7947 = vpow.pop %v7946
    %v7948 = vmul.f32 %v7945, 1.442695
    %v7949 = vpow.pop %v7948
    %v7950 = vsel %vm64, %v7947, 0.0
    %7951 = vadd.xlane.f32.xlu0 %v7950
    %v7952 = vpop.xlane.xlu0 %7951
    %v7953 = vsel %vm64, %v7949, 0.0
    %7954 = vadd.xlane.f32.xlu0 %v7953
    %v7955 = vpop.xlane.xlu0 %7954
    %v7956 = vlog2.pop %v7952
    %v7957 = vmul.f32 %v7956, 0.6931472
    %v7958 = vlog2.pop %v7955
    %v7959 = vmul.f32 %v7958, 0.6931472
    %v7960 = vadd.f32 %v7957, %v7940
    %v7961 = vadd.f32 %v7959, %v7943
    %v7962 = vmul.f32 %v7930, %v62
    %v7963 = vmul.f32 %v7935, %v63
    %v7964 = vsel %vm64, %v7962, 0.0
    %7965 = vadd.xlane.f32.xlu0 %v7964
    %v7966 = vpop.xlane.xlu0 %7965
    %v7967 = vsel %vm64, %v7963, 0.0
    %7968 = vadd.xlane.f32.xlu0 %v7967
    %v7969 = vpop.xlane.xlu0 %7968
    %v7970 = vsub.f32 %v7960, %v7966
    %v7971 = vsub.f32 %v7961, %v7969
    %v7972 = vadd.f32 %v7970, %v7971
    %v7973 = vrot.slane %v7972, 4
    %v7974 = vadd.f32 %v7972, %v7973
    %v7975 = vrot.slane %v7974, 2
    %v7976 = vadd.f32 %v7974, %v7975
    %v7977 = vrot.slane %v7976, 1
    %v7978 = vadd.f32 %v7976, %v7977
    %v7979 = vmul.f32 %v7978, 0.0625
    %vm7980 = vcmask 0
    %7981 = vst.msk [vmem:[#allocation5] sm:$0x1] %vm7980, %v7979
    // Predicated region
    $region14: #{bart_loss.1} parent=1 // pred_check
      _
    $region15: #{bart_loss.1} parent=1 // pred_check_branch
      %7983 = sbr.rel (0) target = $region17
    $region16: #{bart_loss.1} parent=1 // pred_region
      %s7985 = ssub.s32 16, 16
      %7986 = vsyncadd [#allocation4], %s7985
      %s7988 = sshll.u32 [#allocation5], 4
      %s7989 = int_to_ptr.vmem [resolvable:$true] %s7988
      %7991 = dma.vmem_to_hbm [thread:$0]  %s7989, 16, %s2, [#allocation4]
    $region17: #{bart_loss.1} parent=1 // pred_fallthru
      _
    // Predicated region
    $region18: #{bart_loss.1} parent=1 // pred_check
      _
    $region19: #{bart_loss.1} parent=1 // pred_check_branch
      %7993 = sbr.rel (0) target = $region21
    $region20: #{bart_loss.1} parent=1 // pred_region
      %7994 = dma.done [#allocation4], 16
    $region21: #{bart_loss.1} parent=1 // pred_fallthru
      _
    %7995 = vsyncpa [#allocation3], 1
    %7996 = vsyncpa [#allocation4], 1

</llo_original>
